<compile_context>
chip_gen: v6e
topology: v6e:2x2x1
jax: 0.10.0
libtpu: 0.0.40
codegen_flags: <defaults>
</compile_context>

<pallas_src>
import jax
import jax.numpy as jnp
from jax import lax
from jax.experimental import pallas as pl
from jax.experimental.pallas import tpu as pltpu

# ---------------------------------------------------------------- model geometry
H0, W0, CIN = 32, 32, 3          # input (CIFAR-10); 32x32 is required for Linear(3200,10)
H1, W1, C1 = 30, 30, 64          # conv1 output
P1H, P1W = 14, 14                # pool1 output
H2, W2, C2 = 12, 12, 128         # conv2 output
P2H, P2W = 5, 5                  # pool2 output
FEAT = C2 * P2H * P2W            # 3200
NCLS = 10


# ------------------------------------------------------------------------- kernel
def _pooled_rows(src_ref, win_w, out_h, out_w):
    """MaxPool2d(3, stride=2) rows from a VMEM ref holding an (Hin*Win, C) feature map
    (row index = h*Win + w).  Returns out_h values of shape (out_w, C)."""
    rows = []
    for i in range(out_h):
        r0 = src_ref[pl.ds((2 * i + 0) * win_w, win_w), :]
        r1 = src_ref[pl.ds((2 * i + 1) * win_w, win_w), :]
        r2 = src_ref[pl.ds((2 * i + 2) * win_w, win_w), :]
        hmax = jnp.maximum(jnp.maximum(r0, r1), r2)              # (Win, C): H reduced on VPU
        rows.append(jnp.concatenate(
            [jnp.max(hmax[2 * j:2 * j + 3, :], axis=0, keepdims=True)
             for j in range(out_w)], axis=0))                    # (out_w, C) dense row
    return rows


def _fused_kernel(patches_ref, w1_ref, s1_ref, t1_ref,
                  w2_ref, s2_ref, t2_ref, wl_ref, bl_ref,
                  o_ref, c1_s, p1_s, lhs_s, c2_s):
    # ---- conv1 + BN + ReLU: one im2col matmul (900,27)@(27,64) on the MXU -----------
    c1 = jnp.dot(patches_ref[0], w1_ref[...], preferred_element_type=jnp.float32)
    c1_s[...] = jnp.maximum(c1 * s1_ref[...] + t1_ref[...], 0.0)       # (900, 64)

    # ---- maxpool1 3x3 s2: (30,30,64) -> (14,14,64), kept in VMEM --------------------
    for i, row in enumerate(_pooled_rows(c1_s, W1, P1H, P1W)):
        p1_s[pl.ds(i * P1W, P1W), :] = row                             # dense (14,64) store

    # ---- conv2 im2col slab (144, 576) assembled from the VMEM pool1 scratch ---------
    for oh in range(H2):
        lhs_s[pl.ds(oh * W2, W2), :] = jnp.concatenate(
            [p1_s[pl.ds((oh + kh) * P1W + kw, W2), :]
             for kh in range(3) for kw in range(3)], axis=1)           # (12, 576)

    # ---- conv2 + BN + ReLU: one matmul (144,576)@(576,128) --------------------------
    c2 = jnp.dot(lhs_s[...], w2_ref[...], preferred_element_type=jnp.float32)
    c2_s[...] = jnp.maximum(c2 * s2_ref[...] + t2_ref[...], 0.0)       # (144, 128)

    # ---- maxpool2 3x3 s2 + NHWC flatten: (12,12,128) -> (1, 3200) -------------------
    pieces = []
    for row in _pooled_rows(c2_s, W2, P2H, P2W):                       # row: (5, 128)
        for j in range(P2W):
            pieces.append(row[j:j + 1, :])                             # spatial-major order
    feat = jnp.concatenate(pieces, axis=1)                             # (1, 3200)

    # ---- Linear(3200,10) + softmax (weights pre-permuted to NHWC-flatten order) -----
    logits = jnp.dot(feat, wl_ref[...], preferred_element_type=jnp.float32) + bl_ref[...]
    m = jnp.max(logits, axis=-1, keepdims=True)
    e = jnp.exp(logits - m)
    o_ref[0] = e / jnp.sum(e, axis=-1, keepdims=True)                  # (1, 10)


# ------------------------------------------------------------------- params & glue
def init_params(key):
    ks = jax.random.split(key, 14)
    p = {}
    # Conv2d(3, 64, 3) — weights stored HWIO (torch is OIHW; synthetic init, so direct)
    p["w1"] = 0.1 * jax.random.normal(ks[0], (3, 3, 3, 64), jnp.float32)
    p["b1"] = 0.1 * jax.random.normal(ks[1], (64,), jnp.float32)
    # BatchNorm2d(64) (eval mode)
    p["g1"] = 1.0 + 0.1 * jax.random.normal(ks[2], (64,), jnp.float32)
    p["beta1"] = 0.1 * jax.random.normal(ks[3], (64,), jnp.float32)
    p["m1"] = 0.1 * jax.random.normal(ks[4], (64,), jnp.float32)
    p["v1"] = jax.random.uniform(ks[5], (64,), jnp.float32, 0.5, 1.5)
    # Conv2d(64, 128, 3)
    p["w2"] = 0.05 * jax.random.normal(ks[6], (3, 3, 64, 128), jnp.float32)
    p["b2"] = 0.1 * jax.random.normal(ks[7], (128,), jnp.float32)
    # BatchNorm2d(128) (eval mode)
    p["g2"] = 1.0 + 0.1 * jax.random.normal(ks[8], (128,), jnp.float32)
    p["beta2"] = 0.1 * jax.random.normal(ks[9], (128,), jnp.float32)
    p["m2"] = 0.1 * jax.random.normal(ks[10], (128,), jnp.float32)
    p["v2"] = jax.random.uniform(ks[11], (128,), jnp.float32, 0.5, 1.5)
    # Linear(3200, 10) — stored as (3200, 10) == torch weight (10, 3200) transposed,
    # indexed in torch NCHW-flatten order k = c*25 + (i*5 + j)
    p["wl"] = 0.02 * jax.random.normal(ks[12], (3200, 10), jnp.float32)
    p["bl"] = 0.1 * jax.random.normal(ks[13], (10,), jnp.float32)
    return p


def fold_bn(gamma, beta, mean, var, conv_bias, eps=1e-5):
    scale = gamma / jnp.sqrt(var + eps)
    shift = beta + scale * (conv_bias - mean)
    return scale.reshape(1, -1), shift.reshape(1, -1)


@jax.jit
def plain_cnn_pallas(x_nchw, p):
    N = x_nchw.shape[0]
    x = jnp.transpose(x_nchw, (0, 2, 3, 1)).astype(jnp.float32)        # NCHW -> NHWC (glue)

    # conv1 im2col: cheap one-shot XLA op on the tiny (N,32,32,3) input -> (N, 900, 27)
    patches = jnp.concatenate(
        [x[:, kh:kh + H1, kw:kw + W1, :] for kh in range(3) for kw in range(3)],
        axis=-1).reshape(N, H1 * W1, 9 * CIN)

    s1, t1 = fold_bn(p["g1"], p["beta1"], p["m1"], p["v1"], p["b1"])   # (1,64)
    s2, t2 = fold_bn(p["g2"], p["beta2"], p["m2"], p["v2"], p["b2"])   # (1,128)
    w1r = p["w1"].reshape(9 * CIN, C1)                                 # (27, 64)
    w2r = p["w2"].reshape(9 * C1, C2)                                  # (576, 128)
    # Pre-permute classifier weights from torch NCHW-flatten order (c*25+s) to the
    # NHWC-flatten order (s*128+c) the kernel produces -> no runtime feature transpose.
    wl_nhwc = p["wl"].reshape(C2, P2H * P2W, NCLS).transpose(1, 0, 2).reshape(FEAT, NCLS)
    bl = p["bl"].reshape(1, NCLS)

    out = pl.pallas_call(
        _fused_kernel,
        out_shape=jax.ShapeDtypeStruct((N, 1, NCLS), jnp.float32),
        grid=(N,),
        in_specs=[
            pl.BlockSpec((1, H1 * W1, 9 * CIN), lambda n: (n, 0, 0)),  # conv1 patches
            pl.BlockSpec((9 * CIN, C1), lambda n: (0, 0)),             # w1 (27,64)
            pl.BlockSpec((1, C1), lambda n: (0, 0)),                   # bn1 scale
            pl.BlockSpec((1, C1), lambda n: (0, 0)),                   # bn1 shift
            pl.BlockSpec((9 * C1, C2), lambda n: (0, 0)),              # w2 (576,128)
            pl.BlockSpec((1, C2), lambda n: (0, 0)),                   # bn2 scale
            pl.BlockSpec((1, C2), lambda n: (0, 0)),                   # bn2 shift
            pl.BlockSpec((FEAT, NCLS), lambda n: (0, 0)),              # linear W (3200,10)
            pl.BlockSpec((1, NCLS), lambda n: (0, 0)),                 # linear b
        ],
        out_specs=pl.BlockSpec((1, 1, NCLS), lambda n: (n, 0, 0)),
        scratch_shapes=[
            pltpu.VMEM((H1 * W1, C1), jnp.float32),      # conv1 out, flat (900, 64)
            pltpu.VMEM((P1H * P1W, C1), jnp.float32),    # pool1 out, flat (196, 64)
            pltpu.VMEM((H2 * W2, 9 * C1), jnp.float32),  # conv2 im2col lhs (144, 576)
            pltpu.VMEM((H2 * W2, C2), jnp.float32),      # conv2 out, flat (144, 128)
        ],
        compiler_params=pltpu.CompilerParams(
            dimension_semantics=("parallel",)),          # batch split across TCs on v7x
    )(patches, w1r, s1, t1, w2r, s2, t2, wl_nhwc, bl)
    return out.reshape(N, NCLS)


@jax.jit
def plain_cnn_reference(x_nchw, p):
    """Pure-JAX reference with identical (eval-mode BN) semantics."""
    x = jnp.transpose(x_nchw, (0, 2, 3, 1))
    s1, t1 = fold_bn(p["g1"], p["beta1"], p["m1"], p["v1"], p["b1"])
    s2, t2 = fold_bn(p["g2"], p["beta2"], p["m2"], p["v2"], p["b2"])

    def conv_block(x, w, scale, shift):
        y = lax.conv_general_dilated(
            x, w, window_strides=(1, 1), padding="VALID",
            dimension_numbers=("NHWC", "HWIO", "NHWC"),
            precision=lax.Precision.HIGHEST)
        return jnp.maximum(y * scale + shift, 0.0)

    def pool(x):
        return lax.reduce_window(x, -jnp.inf, lax.max,
                                 (1, 3, 3, 1), (1, 2, 2, 1), "VALID")

    y = pool(conv_block(x, p["w1"], s1, t1))
    y = pool(conv_block(y, p["w2"], s2, t2))
    feat = jnp.transpose(y, (0, 3, 1, 2)).reshape(y.shape[0], -1)      # torch NCHW flatten
    logits = jnp.dot(feat, p["wl"], precision=lax.Precision.HIGHEST) + p["bl"]
    return jax.nn.softmax(logits, axis=1)


if __name__ == "__main__":
    key = jax.random.PRNGKey(0)
    k_params, k_x = jax.random.split(key)
    params = init_params(k_params)

    # CIFAR10-shaped input, NCHW like the PyTorch module (batch=2); 32x32 is required
    # so the flattened feature size is 128*5*5 = 3200 for the Linear(3200, 10).
    x = jax.random.normal(k_x, (2, 3, 32, 32), jnp.float32)

    out = jax.block_until_ready(plain_cnn_pallas(x, params))
    ref = jax.block_until_ready(plain_cnn_reference(x, params))

    assert out.shape == (2, 10), out.shape
    assert jnp.allclose(jnp.sum(out, axis=1), 1.0, atol=1e-5)
    assert jnp.allclose(out, ref, atol=2e-3, rtol=2e-3)
    print("KERNEL_OK")
</pallas_src>

<mosaic_0001>
module attributes {stable_mosaic.version = 11 : i64} {
  func.func @_fused_kernel(%arg0: i32, %arg1: memref<1x900x27xf32, #tpu.memory_space<vmem>>, %arg2: memref<27x64xf32, #tpu.memory_space<vmem>>, %arg3: memref<1x64xf32, #tpu.memory_space<vmem>>, %arg4: memref<1x64xf32, #tpu.memory_space<vmem>>, %arg5: memref<576x128xf32, #tpu.memory_space<vmem>>, %arg6: memref<1x128xf32, #tpu.memory_space<vmem>>, %arg7: memref<1x128xf32, #tpu.memory_space<vmem>>, %arg8: memref<3200x10xf32, #tpu.memory_space<vmem>>, %arg9: memref<1x10xf32, #tpu.memory_space<vmem>>, %arg10: memref<1x1x10xf32, #tpu.memory_space<vmem>>, %arg11: memref<900x64xf32, #tpu.memory_space<vmem>>, %arg12: memref<196x64xf32, #tpu.memory_space<vmem>>, %arg13: memref<144x576xf32, #tpu.memory_space<vmem>>, %arg14: memref<144x128xf32, #tpu.memory_space<vmem>>) attributes {dimension_semantics = [#tpu.dimension_semantics<parallel>], iteration_bounds = array<i64: 2>, scalar_prefetch = 0 : i64, scratch_operands = 4 : i64, tpu.core_type = #tpu.core_type<tc>, window_params = [{transform_indices = @transform_0, window_bounds = array<i64: 1, 900, 27>}, {pipeline_mode = #tpu.pipeline_mode<synchronous>, transform_indices = @transform_1, window_bounds = array<i64: 27, 64>}, {pipeline_mode = #tpu.pipeline_mode<synchronous>, transform_indices = @transform_2, window_bounds = array<i64: 1, 64>}, {pipeline_mode = #tpu.pipeline_mode<synchronous>, transform_indices = @transform_3, window_bounds = array<i64: 1, 64>}, {pipeline_mode = #tpu.pipeline_mode<synchronous>, transform_indices = @transform_4, window_bounds = array<i64: 576, 128>}, {pipeline_mode = #tpu.pipeline_mode<synchronous>, transform_indices = @transform_5, window_bounds = array<i64: 1, 128>}, {pipeline_mode = #tpu.pipeline_mode<synchronous>, transform_indices = @transform_6, window_bounds = array<i64: 1, 128>}, {pipeline_mode = #tpu.pipeline_mode<synchronous>, transform_indices = @transform_7, window_bounds = array<i64: 3200, 10>}, {pipeline_mode = #tpu.pipeline_mode<synchronous>, transform_indices = @transform_8, window_bounds = array<i64: 1, 10>}, {transform_indices = @transform_9, window_bounds = array<i64: 1, 1, 10>}]} {
    %c0 = arith.constant 0 : index
    %c0_0 = arith.constant 0 : index
    %c0_1 = arith.constant 0 : index
    %0 = vector.load %arg1[%c0, %c0_0, %c0_1] : memref<1x900x27xf32, #tpu.memory_space<vmem>>, vector<1x900x27xf32>
    %1 = vector.shape_cast %0 : vector<1x900x27xf32> to vector<900x27xf32>
    %c0_2 = arith.constant 0 : index
    %c0_3 = arith.constant 0 : index
    %2 = vector.load %arg2[%c0_2, %c0_3] : memref<27x64xf32, #tpu.memory_space<vmem>>, vector<27x64xf32>
    %cst = arith.constant dense<0.000000e+00> : vector<900x64xf32>
    %3 = tpu.matmul %1, %2, %cst {dimension_numbers = #tpu.dot_dimension_numbers<[1], [0], [0], [1], [0, 0, 1, 1], [], []>} : vector<900x27xf32>, vector<27x64xf32>, vector<900x64xf32> -> vector<900x64xf32>
    %c0_4 = arith.constant 0 : index
    %c0_5 = arith.constant 0 : index
    %4 = vector.load %arg3[%c0_4, %c0_5] : memref<1x64xf32, #tpu.memory_space<vmem>>, vector<1x64xf32>
    %5 = vector.broadcast %4 : vector<1x64xf32> to vector<900x64xf32>
    %6 = arith.mulf %3, %5 : vector<900x64xf32>
    %c0_6 = arith.constant 0 : index
    %c0_7 = arith.constant 0 : index
    %7 = vector.load %arg4[%c0_6, %c0_7] : memref<1x64xf32, #tpu.memory_space<vmem>>, vector<1x64xf32>
    %8 = vector.broadcast %7 : vector<1x64xf32> to vector<900x64xf32>
    %9 = arith.addf %6, %8 : vector<900x64xf32>
    %cst_8 = arith.constant 0.000000e+00 : f32
    %10 = vector.broadcast %cst_8 : f32 to vector<900x64xf32>
    %11 = arith.maximumf %9, %10 : vector<900x64xf32>
    %c0_9 = arith.constant 0 : index
    %c0_10 = arith.constant 0 : index
    %12 = vector.load %arg11[%c0_9, %c0_10] : memref<900x64xf32, #tpu.memory_space<vmem>>, vector<900x64xf32>
    tpu.vector_store %arg11[%c0_9, %c0_10], %11 {strides = array<i32>} : memref<900x64xf32, #tpu.memory_space<vmem>>, vector<900x64xf32>,
    %c0_11 = arith.constant 0 : index
    %c0_12 = arith.constant 0 : index
    %13 = vector.load %arg11[%c0_11, %c0_12] : memref<900x64xf32, #tpu.memory_space<vmem>>, vector<30x64xf32>
    %c30 = arith.constant 30 : index
    %c0_13 = arith.constant 0 : index
    %14 = vector.load %arg11[%c30, %c0_13] : memref<900x64xf32, #tpu.memory_space<vmem>>, vector<30x64xf32>
    %c60 = arith.constant 60 : index
    %c0_14 = arith.constant 0 : index
    %15 = vector.load %arg11[%c60, %c0_14] : memref<900x64xf32, #tpu.memory_space<vmem>>, vector<30x64xf32>
    %16 = arith.maximumf %13, %14 : vector<30x64xf32>
    %17 = arith.maximumf %16, %15 : vector<30x64xf32>
    %18 = vector.extract_strided_slice %17 {offsets = [0, 0], sizes = [3, 64], strides = [1, 1]} : vector<30x64xf32> to vector<3x64xf32>
    %cst_15 = arith.constant dense<0xFF800000> : vector<64xf32>
    %19 = vector.multi_reduction <maximumf>, %18, %cst_15 [0] : vector<3x64xf32> to vector<64xf32>
    %20 = vector.shape_cast %19 : vector<64xf32> to vector<1x64xf32>
    %21 = vector.extract_strided_slice %17 {offsets = [2, 0], sizes = [3, 64], strides = [1, 1]} : vector<30x64xf32> to vector<3x64xf32>
    %cst_16 = arith.constant dense<0xFF800000> : vector<64xf32>
    %22 = vector.multi_reduction <maximumf>, %21, %cst_16 [0] : vector<3x64xf32> to vector<64xf32>
    %23 = vector.shape_cast %22 : vector<64xf32> to vector<1x64xf32>
    %24 = vector.extract_strided_slice %17 {offsets = [4, 0], sizes = [3, 64], strides = [1, 1]} : vector<30x64xf32> to vector<3x64xf32>
    %cst_17 = arith.constant dense<0xFF800000> : vector<64xf32>
    %25 = vector.multi_reduction <maximumf>, %24, %cst_17 [0] : vector<3x64xf32> to vector<64xf32>
    %26 = vector.shape_cast %25 : vector<64xf32> to vector<1x64xf32>
    %27 = vector.extract_strided_slice %17 {offsets = [6, 0], sizes = [3, 64], strides = [1, 1]} : vector<30x64xf32> to vector<3x64xf32>
    %cst_18 = arith.constant dense<0xFF800000> : vector<64xf32>
    %28 = vector.multi_reduction <maximumf>, %27, %cst_18 [0] : vector<3x64xf32> to vector<64xf32>
    %29 = vector.shape_cast %28 : vector<64xf32> to vector<1x64xf32>
    %30 = vector.extract_strided_slice %17 {offsets = [8, 0], sizes = [3, 64], strides = [1, 1]} : vector<30x64xf32> to vector<3x64xf32>
    %cst_19 = arith.constant dense<0xFF800000> : vector<64xf32>
    %31 = vector.multi_reduction <maximumf>, %30, %cst_19 [0] : vector<3x64xf32> to vector<64xf32>
    %32 = vector.shape_cast %31 : vector<64xf32> to vector<1x64xf32>
    %33 = vector.extract_strided_slice %17 {offsets = [10, 0], sizes = [3, 64], strides = [1, 1]} : vector<30x64xf32> to vector<3x64xf32>
    %cst_20 = arith.constant dense<0xFF800000> : vector<64xf32>
    %34 = vector.multi_reduction <maximumf>, %33, %cst_20 [0] : vector<3x64xf32> to vector<64xf32>
    %35 = vector.shape_cast %34 : vector<64xf32> to vector<1x64xf32>
    %36 = vector.extract_strided_slice %17 {offsets = [12, 0], sizes = [3, 64], strides = [1, 1]} : vector<30x64xf32> to vector<3x64xf32>
    %cst_21 = arith.constant dense<0xFF800000> : vector<64xf32>
    %37 = vector.multi_reduction <maximumf>, %36, %cst_21 [0] : vector<3x64xf32> to vector<64xf32>
    %38 = vector.shape_cast %37 : vector<64xf32> to vector<1x64xf32>
    %39 = vector.extract_strided_slice %17 {offsets = [14, 0], sizes = [3, 64], strides = [1, 1]} : vector<30x64xf32> to vector<3x64xf32>
    %cst_22 = arith.constant dense<0xFF800000> : vector<64xf32>
    %40 = vector.multi_reduction <maximumf>, %39, %cst_22 [0] : vector<3x64xf32> to vector<64xf32>
    %41 = vector.shape_cast %40 : vector<64xf32> to vector<1x64xf32>
    %42 = vector.extract_strided_slice %17 {offsets = [16, 0], sizes = [3, 64], strides = [1, 1]} : vector<30x64xf32> to vector<3x64xf32>
    %cst_23 = arith.constant dense<0xFF800000> : vector<64xf32>
    %43 = vector.multi_reduction <maximumf>, %42, %cst_23 [0] : vector<3x64xf32> to vector<64xf32>
    %44 = vector.shape_cast %43 : vector<64xf32> to vector<1x64xf32>
    %45 = vector.extract_strided_slice %17 {offsets = [18, 0], sizes = [3, 64], strides = [1, 1]} : vector<30x64xf32> to vector<3x64xf32>
    %cst_24 = arith.constant dense<0xFF800000> : vector<64xf32>
    %46 = vector.multi_reduction <maximumf>, %45, %cst_24 [0] : vector<3x64xf32> to vector<64xf32>
    %47 = vector.shape_cast %46 : vector<64xf32> to vector<1x64xf32>
    %48 = vector.extract_strided_slice %17 {offsets = [20, 0], sizes = [3, 64], strides = [1, 1]} : vector<30x64xf32> to vector<3x64xf32>
    %cst_25 = arith.constant dense<0xFF800000> : vector<64xf32>
    %49 = vector.multi_reduction <maximumf>, %48, %cst_25 [0] : vector<3x64xf32> to vector<64xf32>
    %50 = vector.shape_cast %49 : vector<64xf32> to vector<1x64xf32>
    %51 = vector.extract_strided_slice %17 {offsets = [22, 0], sizes = [3, 64], strides = [1, 1]} : vector<30x64xf32> to vector<3x64xf32>
    %cst_26 = arith.constant dense<0xFF800000> : vector<64xf32>
    %52 = vector.multi_reduction <maximumf>, %51, %cst_26 [0] : vector<3x64xf32> to vector<64xf32>
    %53 = vector.shape_cast %52 : vector<64xf32> to vector<1x64xf32>
    %54 = vector.extract_strided_slice %17 {offsets = [24, 0], sizes = [3, 64], strides = [1, 1]} : vector<30x64xf32> to vector<3x64xf32>
    %cst_27 = arith.constant dense<0xFF800000> : vector<64xf32>
    %55 = vector.multi_reduction <maximumf>, %54, %cst_27 [0] : vector<3x64xf32> to vector<64xf32>
    %56 = vector.shape_cast %55 : vector<64xf32> to vector<1x64xf32>
    %57 = vector.extract_strided_slice %17 {offsets = [26, 0], sizes = [3, 64], strides = [1, 1]} : vector<30x64xf32> to vector<3x64xf32>
    %cst_28 = arith.constant dense<0xFF800000> : vector<64xf32>
    %58 = vector.multi_reduction <maximumf>, %57, %cst_28 [0] : vector<3x64xf32> to vector<64xf32>
    %59 = vector.shape_cast %58 : vector<64xf32> to vector<1x64xf32>
    %60 = tpu.concatenate %20, %23, %26, %29, %32, %35, %38, %41, %44, %47, %50, %53, %56, %59 in 0 : vector<1x64xf32>, vector<1x64xf32>, vector<1x64xf32>, vector<1x64xf32>, vector<1x64xf32>, vector<1x64xf32>, vector<1x64xf32>, vector<1x64xf32>, vector<1x64xf32>, vector<1x64xf32>, vector<1x64xf32>, vector<1x64xf32>, vector<1x64xf32>, vector<1x64xf32> -> vector<14x64xf32>
    %c60_29 = arith.constant 60 : index
    %c0_30 = arith.constant 0 : index
    %61 = vector.load %arg11[%c60_29, %c0_30] : memref<900x64xf32, #tpu.memory_space<vmem>>, vector<30x64xf32>
    %c90 = arith.constant 90 : index
    %c0_31 = arith.constant 0 : index
    %62 = vector.load %arg11[%c90, %c0_31] : memref<900x64xf32, #tpu.memory_space<vmem>>, vector<30x64xf32>
    %c120 = arith.constant 120 : index
    %c0_32 = arith.constant 0 : index
    %63 = vector.load %arg11[%c120, %c0_32] : memref<900x64xf32, #tpu.memory_space<vmem>>, vector<30x64xf32>
    %64 = arith.maximumf %61, %62 : vector<30x64xf32>
    %65 = arith.maximumf %64, %63 : vector<30x64xf32>
    %66 = vector.extract_strided_slice %65 {offsets = [0, 0], sizes = [3, 64], strides = [1, 1]} : vector<30x64xf32> to vector<3x64xf32>
    %cst_33 = arith.constant dense<0xFF800000> : vector<64xf32>
    %67 = vector.multi_reduction <maximumf>, %66, %cst_33 [0] : vector<3x64xf32> to vector<64xf32>
    %68 = vector.shape_cast %67 : vector<64xf32> to vector<1x64xf32>
    %69 = vector.extract_strided_slice %65 {offsets = [2, 0], sizes = [3, 64], strides = [1, 1]} : vector<30x64xf32> to vector<3x64xf32>
    %cst_34 = arith.constant dense<0xFF800000> : vector<64xf32>
    %70 = vector.multi_reduction <maximumf>, %69, %cst_34 [0] : vector<3x64xf32> to vector<64xf32>
    %71 = vector.shape_cast %70 : vector<64xf32> to vector<1x64xf32>
    %72 = vector.extract_strided_slice %65 {offsets = [4, 0], sizes = [3, 64], strides = [1, 1]} : vector<30x64xf32> to vector<3x64xf32>
    %cst_35 = arith.constant dense<0xFF800000> : vector<64xf32>
    %73 = vector.multi_reduction <maximumf>, %72, %cst_35 [0] : vector<3x64xf32> to vector<64xf32>
    %74 = vector.shape_cast %73 : vector<64xf32> to vector<1x64xf32>
    %75 = vector.extract_strided_slice %65 {offsets = [6, 0], sizes = [3, 64], strides = [1, 1]} : vector<30x64xf32> to vector<3x64xf32>
    %cst_36 = arith.constant dense<0xFF800000> : vector<64xf32>
    %76 = vector.multi_reduction <maximumf>, %75, %cst_36 [0] : vector<3x64xf32> to vector<64xf32>
    %77 = vector.shape_cast %76 : vector<64xf32> to vector<1x64xf32>
    %78 = vector.extract_strided_slice %65 {offsets = [8, 0], sizes = [3, 64], strides = [1, 1]} : vector<30x64xf32> to vector<3x64xf32>
    %cst_37 = arith.constant dense<0xFF800000> : vector<64xf32>
    %79 = vector.multi_reduction <maximumf>, %78, %cst_37 [0] : vector<3x64xf32> to vector<64xf32>
    %80 = vector.shape_cast %79 : vector<64xf32> to vector<1x64xf32>
    %81 = vector.extract_strided_slice %65 {offsets = [10, 0], sizes = [3, 64], strides = [1, 1]} : vector<30x64xf32> to vector<3x64xf32>
    %cst_38 = arith.constant dense<0xFF800000> : vector<64xf32>
    %82 = vector.multi_reduction <maximumf>, %81, %cst_38 [0] : vector<3x64xf32> to vector<64xf32>
    %83 = vector.shape_cast %82 : vector<64xf32> to vector<1x64xf32>
    %84 = vector.extract_strided_slice %65 {offsets = [12, 0], sizes = [3, 64], strides = [1, 1]} : vector<30x64xf32> to vector<3x64xf32>
    %cst_39 = arith.constant dense<0xFF800000> : vector<64xf32>
    %85 = vector.multi_reduction <maximumf>, %84, %cst_39 [0] : vector<3x64xf32> to vector<64xf32>
    %86 = vector.shape_cast %85 : vector<64xf32> to vector<1x64xf32>
    %87 = vector.extract_strided_slice %65 {offsets = [14, 0], sizes = [3, 64], strides = [1, 1]} : vector<30x64xf32> to vector<3x64xf32>
    %cst_40 = arith.constant dense<0xFF800000> : vector<64xf32>
    %88 = vector.multi_reduction <maximumf>, %87, %cst_40 [0] : vector<3x64xf32> to vector<64xf32>
    %89 = vector.shape_cast %88 : vector<64xf32> to vector<1x64xf32>
    %90 = vector.extract_strided_slice %65 {offsets = [16, 0], sizes = [3, 64], strides = [1, 1]} : vector<30x64xf32> to vector<3x64xf32>
    %cst_41 = arith.constant dense<0xFF800000> : vector<64xf32>
    %91 = vector.multi_reduction <maximumf>, %90, %cst_41 [0] : vector<3x64xf32> to vector<64xf32>
    %92 = vector.shape_cast %91 : vector<64xf32> to vector<1x64xf32>
    %93 = vector.extract_strided_slice %65 {offsets = [18, 0], sizes = [3, 64], strides = [1, 1]} : vector<30x64xf32> to vector<3x64xf32>
    %cst_42 = arith.constant dense<0xFF800000> : vector<64xf32>
    %94 = vector.multi_reduction <maximumf>, %93, %cst_42 [0] : vector<3x64xf32> to vector<64xf32>
    %95 = vector.shape_cast %94 : vector<64xf32> to vector<1x64xf32>
    %96 = vector.extract_strided_slice %65 {offsets = [20, 0], sizes = [3, 64], strides = [1, 1]} : vector<30x64xf32> to vector<3x64xf32>
    %cst_43 = arith.constant dense<0xFF800000> : vector<64xf32>
    %97 = vector.multi_reduction <maximumf>, %96, %cst_43 [0] : vector<3x64xf32> to vector<64xf32>
    %98 = vector.shape_cast %97 : vector<64xf32> to vector<1x64xf32>
    %99 = vector.extract_strided_slice %65 {offsets = [22, 0], sizes = [3, 64], strides = [1, 1]} : vector<30x64xf32> to vector<3x64xf32>
    %cst_44 = arith.constant dense<0xFF800000> : vector<64xf32>
    %100 = vector.multi_reduction <maximumf>, %99, %cst_44 [0] : vector<3x64xf32> to vector<64xf32>
    %101 = vector.shape_cast %100 : vector<64xf32> to vector<1x64xf32>
    %102 = vector.extract_strided_slice %65 {offsets = [24, 0], sizes = [3, 64], strides = [1, 1]} : vector<30x64xf32> to vector<3x64xf32>
    %cst_45 = arith.constant dense<0xFF800000> : vector<64xf32>
    %103 = vector.multi_reduction <maximumf>, %102, %cst_45 [0] : vector<3x64xf32> to vector<64xf32>
    %104 = vector.shape_cast %103 : vector<64xf32> to vector<1x64xf32>
    %105 = vector.extract_strided_slice %65 {offsets = [26, 0], sizes = [3, 64], strides = [1, 1]} : vector<30x64xf32> to vector<3x64xf32>
    %cst_46 = arith.constant dense<0xFF800000> : vector<64xf32>
    %106 = vector.multi_reduction <maximumf>, %105, %cst_46 [0] : vector<3x64xf32> to vector<64xf32>
    %107 = vector.shape_cast %106 : vector<64xf32> to vector<1x64xf32>
    %108 = tpu.concatenate %68, %71, %74, %77, %80, %83, %86, %89, %92, %95, %98, %101, %104, %107 in 0 : vector<1x64xf32>, vector<1x64xf32>, vector<1x64xf32>, vector<1x64xf32>, vector<1x64xf32>, vector<1x64xf32>, vector<1x64xf32>, vector<1x64xf32>, vector<1x64xf32>, vector<1x64xf32>, vector<1x64xf32>, vector<1x64xf32>, vector<1x64xf32>, vector<1x64xf32> -> vector<14x64xf32>
    %c120_47 = arith.constant 120 : index
    %c0_48 = arith.constant 0 : index
    %109 = vector.load %arg11[%c120_47, %c0_48] : memref<900x64xf32, #tpu.memory_space<vmem>>, vector<30x64xf32>
    %c150 = arith.constant 150 : index
    %c0_49 = arith.constant 0 : index
    %110 = vector.load %arg11[%c150, %c0_49] : memref<900x64xf32, #tpu.memory_space<vmem>>, vector<30x64xf32>
    %c180 = arith.constant 180 : index
    %c0_50 = arith.constant 0 : index
    %111 = vector.load %arg11[%c180, %c0_50] : memref<900x64xf32, #tpu.memory_space<vmem>>, vector<30x64xf32>
    %112 = arith.maximumf %109, %110 : vector<30x64xf32>
    %113 = arith.maximumf %112, %111 : vector<30x64xf32>
    %114 = vector.extract_strided_slice %113 {offsets = [0, 0], sizes = [3, 64], strides = [1, 1]} : vector<30x64xf32> to vector<3x64xf32>
    %cst_51 = arith.constant dense<0xFF800000> : vector<64xf32>
    %115 = vector.multi_reduction <maximumf>, %114, %cst_51 [0] : vector<3x64xf32> to vector<64xf32>
    %116 = vector.shape_cast %115 : vector<64xf32> to vector<1x64xf32>
    %117 = vector.extract_strided_slice %113 {offsets = [2, 0], sizes = [3, 64], strides = [1, 1]} : vector<30x64xf32> to vector<3x64xf32>
    %cst_52 = arith.constant dense<0xFF800000> : vector<64xf32>
    %118 = vector.multi_reduction <maximumf>, %117, %cst_52 [0] : vector<3x64xf32> to vector<64xf32>
    %119 = vector.shape_cast %118 : vector<64xf32> to vector<1x64xf32>
    %120 = vector.extract_strided_slice %113 {offsets = [4, 0], sizes = [3, 64], strides = [1, 1]} : vector<30x64xf32> to vector<3x64xf32>
    %cst_53 = arith.constant dense<0xFF800000> : vector<64xf32>
    %121 = vector.multi_reduction <maximumf>, %120, %cst_53 [0] : vector<3x64xf32> to vector<64xf32>
    %122 = vector.shape_cast %121 : vector<64xf32> to vector<1x64xf32>
    %123 = vector.extract_strided_slice %113 {offsets = [6, 0], sizes = [3, 64], strides = [1, 1]} : vector<30x64xf32> to vector<3x64xf32>
    %cst_54 = arith.constant dense<0xFF800000> : vector<64xf32>
    %124 = vector.multi_reduction <maximumf>, %123, %cst_54 [0] : vector<3x64xf32> to vector<64xf32>
    %125 = vector.shape_cast %124 : vector<64xf32> to vector<1x64xf32>
    %126 = vector.extract_strided_slice %113 {offsets = [8, 0], sizes = [3, 64], strides = [1, 1]} : vector<30x64xf32> to vector<3x64xf32>
    %cst_55 = arith.constant dense<0xFF800000> : vector<64xf32>
    %127 = vector.multi_reduction <maximumf>, %126, %cst_55 [0] : vector<3x64xf32> to vector<64xf32>
    %128 = vector.shape_cast %127 : vector<64xf32> to vector<1x64xf32>
    %129 = vector.extract_strided_slice %113 {offsets = [10, 0], sizes = [3, 64], strides = [1, 1]} : vector<30x64xf32> to vector<3x64xf32>
    %cst_56 = arith.constant dense<0xFF800000> : vector<64xf32>
    %130 = vector.multi_reduction <maximumf>, %129, %cst_56 [0] : vector<3x64xf32> to vector<64xf32>
    %131 = vector.shape_cast %130 : vector<64xf32> to vector<1x64xf32>
    %132 = vector.extract_strided_slice %113 {offsets = [12, 0], sizes = [3, 64], strides = [1, 1]} : vector<30x64xf32> to vector<3x64xf32>
    %cst_57 = arith.constant dense<0xFF800000> : vector<64xf32>
    %133 = vector.multi_reduction <maximumf>, %132, %cst_57 [0] : vector<3x64xf32> to vector<64xf32>
    %134 = vector.shape_cast %133 : vector<64xf32> to vector<1x64xf32>
    %135 = vector.extract_strided_slice %113 {offsets = [14, 0], sizes = [3, 64], strides = [1, 1]} : vector<30x64xf32> to vector<3x64xf32>
    %cst_58 = arith.constant dense<0xFF800000> : vector<64xf32>
    %136 = vector.multi_reduction <maximumf>, %135, %cst_58 [0] : vector<3x64xf32> to vector<64xf32>
    %137 = vector.shape_cast %136 : vector<64xf32> to vector<1x64xf32>
    %138 = vector.extract_strided_slice %113 {offsets = [16, 0], sizes = [3, 64], strides = [1, 1]} : vector<30x64xf32> to vector<3x64xf32>
    %cst_59 = arith.constant dense<0xFF800000> : vector<64xf32>
    %139 = vector.multi_reduction <maximumf>, %138, %cst_59 [0] : vector<3x64xf32> to vector<64xf32>
    %140 = vector.shape_cast %139 : vector<64xf32> to vector<1x64xf32>
    %141 = vector.extract_strided_slice %113 {offsets = [18, 0], sizes = [3, 64], strides = [1, 1]} : vector<30x64xf32> to vector<3x64xf32>
    %cst_60 = arith.constant dense<0xFF800000> : vector<64xf32>
    %142 = vector.multi_reduction <maximumf>, %141, %cst_60 [0] : vector<3x64xf32> to vector<64xf32>
    %143 = vector.shape_cast %142 : vector<64xf32> to vector<1x64xf32>
    %144 = vector.extract_strided_slice %113 {offsets = [20, 0], sizes = [3, 64], strides = [1, 1]} : vector<30x64xf32> to vector<3x64xf32>
    %cst_61 = arith.constant dense<0xFF800000> : vector<64xf32>
    %145 = vector.multi_reduction <maximumf>, %144, %cst_61 [0] : vector<3x64xf32> to vector<64xf32>
    %146 = vector.shape_cast %145 : vector<64xf32> to vector<1x64xf32>
    %147 = vector.extract_strided_slice %113 {offsets = [22, 0], sizes = [3, 64], strides = [1, 1]} : vector<30x64xf32> to vector<3x64xf32>
    %cst_62 = arith.constant dense<0xFF800000> : vector<64xf32>
    %148 = vector.multi_reduction <maximumf>, %147, %cst_62 [0] : vector<3x64xf32> to vector<64xf32>
    %149 = vector.shape_cast %148 : vector<64xf32> to vector<1x64xf32>
    %150 = vector.extract_strided_slice %113 {offsets = [24, 0], sizes = [3, 64], strides = [1, 1]} : vector<30x64xf32> to vector<3x64xf32>
    %cst_63 = arith.constant dense<0xFF800000> : vector<64xf32>
    %151 = vector.multi_reduction <maximumf>, %150, %cst_63 [0] : vector<3x64xf32> to vector<64xf32>
    %152 = vector.shape_cast %151 : vector<64xf32> to vector<1x64xf32>
    %153 = vector.extract_strided_slice %113 {offsets = [26, 0], sizes = [3, 64], strides = [1, 1]} : vector<30x64xf32> to vector<3x64xf32>
    %cst_64 = arith.constant dense<0xFF800000> : vector<64xf32>
    %154 = vector.multi_reduction <maximumf>, %153, %cst_64 [0] : vector<3x64xf32> to vector<64xf32>
    %155 = vector.shape_cast %154 : vector<64xf32> to vector<1x64xf32>
    %156 = tpu.concatenate %116, %119, %122, %125, %128, %131, %134, %137, %140, %143, %146, %149, %152, %155 in 0 : vector<1x64xf32>, vector<1x64xf32>, vector<1x64xf32>, vector<1x64xf32>, vector<1x64xf32>, vector<1x64xf32>, vector<1x64xf32>, vector<1x64xf32>, vector<1x64xf32>, vector<1x64xf32>, vector<1x64xf32>, vector<1x64xf32>, vector<1x64xf32>, vector<1x64xf32> -> vector<14x64xf32>
    %c180_65 = arith.constant 180 : index
    %c0_66 = arith.constant 0 : index
    %157 = vector.load %arg11[%c180_65, %c0_66] : memref<900x64xf32, #tpu.memory_space<vmem>>, vector<30x64xf32>
    %c210 = arith.constant 210 : index
    %c0_67 = arith.constant 0 : index
    %158 = vector.load %arg11[%c210, %c0_67] : memref<900x64xf32, #tpu.memory_space<vmem>>, vector<30x64xf32>
    %c240 = arith.constant 240 : index
    %c0_68 = arith.constant 0 : index
    %159 = vector.load %arg11[%c240, %c0_68] : memref<900x64xf32, #tpu.memory_space<vmem>>, vector<30x64xf32>
    %160 = arith.maximumf %157, %158 : vector<30x64xf32>
    %161 = arith.maximumf %160, %159 : vector<30x64xf32>
    %162 = vector.extract_strided_slice %161 {offsets = [0, 0], sizes = [3, 64], strides = [1, 1]} : vector<30x64xf32> to vector<3x64xf32>
    %cst_69 = arith.constant dense<0xFF800000> : vector<64xf32>
    %163 = vector.multi_reduction <maximumf>, %162, %cst_69 [0] : vector<3x64xf32> to vector<64xf32>
    %164 = vector.shape_cast %163 : vector<64xf32> to vector<1x64xf32>
    %165 = vector.extract_strided_slice %161 {offsets = [2, 0], sizes = [3, 64], strides = [1, 1]} : vector<30x64xf32> to vector<3x64xf32>
    %cst_70 = arith.constant dense<0xFF800000> : vector<64xf32>
    %166 = vector.multi_reduction <maximumf>, %165, %cst_70 [0] : vector<3x64xf32> to vector<64xf32>
    %167 = vector.shape_cast %166 : vector<64xf32> to vector<1x64xf32>
    %168 = vector.extract_strided_slice %161 {offsets = [4, 0], sizes = [3, 64], strides = [1, 1]} : vector<30x64xf32> to vector<3x64xf32>
    %cst_71 = arith.constant dense<0xFF800000> : vector<64xf32>
    %169 = vector.multi_reduction <maximumf>, %168, %cst_71 [0] : vector<3x64xf32> to vector<64xf32>
    %170 = vector.shape_cast %169 : vector<64xf32> to vector<1x64xf32>
    %171 = vector.extract_strided_slice %161 {offsets = [6, 0], sizes = [3, 64], strides = [1, 1]} : vector<30x64xf32> to vector<3x64xf32>
    %cst_72 = arith.constant dense<0xFF800000> : vector<64xf32>
    %172 = vector.multi_reduction <maximumf>, %171, %cst_72 [0] : vector<3x64xf32> to vector<64xf32>
    %173 = vector.shape_cast %172 : vector<64xf32> to vector<1x64xf32>
    %174 = vector.extract_strided_slice %161 {offsets = [8, 0], sizes = [3, 64], strides = [1, 1]} : vector<30x64xf32> to vector<3x64xf32>
    %cst_73 = arith.constant dense<0xFF800000> : vector<64xf32>
    %175 = vector.multi_reduction <maximumf>, %174, %cst_73 [0] : vector<3x64xf32> to vector<64xf32>
    %176 = vector.shape_cast %175 : vector<64xf32> to vector<1x64xf32>
    %177 = vector.extract_strided_slice %161 {offsets = [10, 0], sizes = [3, 64], strides = [1, 1]} : vector<30x64xf32> to vector<3x64xf32>
    %cst_74 = arith.constant dense<0xFF800000> : vector<64xf32>
    %178 = vector.multi_reduction <maximumf>, %177, %cst_74 [0] : vector<3x64xf32> to vector<64xf32>
    %179 = vector.shape_cast %178 : vector<64xf32> to vector<1x64xf32>
    %180 = vector.extract_strided_slice %161 {offsets = [12, 0], sizes = [3, 64], strides = [1, 1]} : vector<30x64xf32> to vector<3x64xf32>
    %cst_75 = arith.constant dense<0xFF800000> : vector<64xf32>
    %181 = vector.multi_reduction <maximumf>, %180, %cst_75 [0] : vector<3x64xf32> to vector<64xf32>
    %182 = vector.shape_cast %181 : vector<64xf32> to vector<1x64xf32>
    %183 = vector.extract_strided_slice %161 {offsets = [14, 0], sizes = [3, 64], strides = [1, 1]} : vector<30x64xf32> to vector<3x64xf32>
    %cst_76 = arith.constant dense<0xFF800000> : vector<64xf32>
    %184 = vector.multi_reduction <maximumf>, %183, %cst_76 [0] : vector<3x64xf32> to vector<64xf32>
    %185 = vector.shape_cast %184 : vector<64xf32> to vector<1x64xf32>
    %186 = vector.extract_strided_slice %161 {offsets = [16, 0], sizes = [3, 64], strides = [1, 1]} : vector<30x64xf32> to vector<3x64xf32>
    %cst_77 = arith.constant dense<0xFF800000> : vector<64xf32>
    %187 = vector.multi_reduction <maximumf>, %186, %cst_77 [0] : vector<3x64xf32> to vector<64xf32>
    %188 = vector.shape_cast %187 : vector<64xf32> to vector<1x64xf32>
    %189 = vector.extract_strided_slice %161 {offsets = [18, 0], sizes = [3, 64], strides = [1, 1]} : vector<30x64xf32> to vector<3x64xf32>
    %cst_78 = arith.constant dense<0xFF800000> : vector<64xf32>
    %190 = vector.multi_reduction <maximumf>, %189, %cst_78 [0] : vector<3x64xf32> to vector<64xf32>
    %191 = vector.shape_cast %190 : vector<64xf32> to vector<1x64xf32>
    %192 = vector.extract_strided_slice %161 {offsets = [20, 0], sizes = [3, 64], strides = [1, 1]} : vector<30x64xf32> to vector<3x64xf32>
    %cst_79 = arith.constant dense<0xFF800000> : vector<64xf32>
    %193 = vector.multi_reduction <maximumf>, %192, %cst_79 [0] : vector<3x64xf32> to vector<64xf32>
    %194 = vector.shape_cast %193 : vector<64xf32> to vector<1x64xf32>
    %195 = vector.extract_strided_slice %161 {offsets = [22, 0], sizes = [3, 64], strides = [1, 1]} : vector<30x64xf32> to vector<3x64xf32>
    %cst_80 = arith.constant dense<0xFF800000> : vector<64xf32>
    %196 = vector.multi_reduction <maximumf>, %195, %cst_80 [0] : vector<3x64xf32> to vector<64xf32>
    %197 = vector.shape_cast %196 : vector<64xf32> to vector<1x64xf32>
    %198 = vector.extract_strided_slice %161 {offsets = [24, 0], sizes = [3, 64], strides = [1, 1]} : vector<30x64xf32> to vector<3x64xf32>
    %cst_81 = arith.constant dense<0xFF800000> : vector<64xf32>
    %199 = vector.multi_reduction <maximumf>, %198, %cst_81 [0] : vector<3x64xf32> to vector<64xf32>
    %200 = vector.shape_cast %199 : vector<64xf32> to vector<1x64xf32>
    %201 = vector.extract_strided_slice %161 {offsets = [26, 0], sizes = [3, 64], strides = [1, 1]} : vector<30x64xf32> to vector<3x64xf32>
    %cst_82 = arith.constant dense<0xFF800000> : vector<64xf32>
    %202 = vector.multi_reduction <maximumf>, %201, %cst_82 [0] : vector<3x64xf32> to vector<64xf32>
    %203 = vector.shape_cast %202 : vector<64xf32> to vector<1x64xf32>
    %204 = tpu.concatenate %164, %167, %170, %173, %176, %179, %182, %185, %188, %191, %194, %197, %200, %203 in 0 : vector<1x64xf32>, vector<1x64xf32>, vector<1x64xf32>, vector<1x64xf32>, vector<1x64xf32>, vector<1x64xf32>, vector<1x64xf32>, vector<1x64xf32>, vector<1x64xf32>, vector<1x64xf32>, vector<1x64xf32>, vector<1x64xf32>, vector<1x64xf32>, vector<1x64xf32> -> vector<14x64xf32>
    %c240_83 = arith.constant 240 : index
    %c0_84 = arith.constant 0 : index
    %205 = vector.load %arg11[%c240_83, %c0_84] : memref<900x64xf32, #tpu.memory_space<vmem>>, vector<30x64xf32>
    %c270 = arith.constant 270 : index
    %c0_85 = arith.constant 0 : index
    %206 = vector.load %arg11[%c270, %c0_85] : memref<900x64xf32, #tpu.memory_space<vmem>>, vector<30x64xf32>
    %c300 = arith.constant 300 : index
    %c0_86 = arith.constant 0 : index
    %207 = vector.load %arg11[%c300, %c0_86] : memref<900x64xf32, #tpu.memory_space<vmem>>, vector<30x64xf32>
    %208 = arith.maximumf %205, %206 : vector<30x64xf32>
    %209 = arith.maximumf %208, %207 : vector<30x64xf32>
    %210 = vector.extract_strided_slice %209 {offsets = [0, 0], sizes = [3, 64], strides = [1, 1]} : vector<30x64xf32> to vector<3x64xf32>
    %cst_87 = arith.constant dense<0xFF800000> : vector<64xf32>
    %211 = vector.multi_reduction <maximumf>, %210, %cst_87 [0] : vector<3x64xf32> to vector<64xf32>
    %212 = vector.shape_cast %211 : vector<64xf32> to vector<1x64xf32>
    %213 = vector.extract_strided_slice %209 {offsets = [2, 0], sizes = [3, 64], strides = [1, 1]} : vector<30x64xf32> to vector<3x64xf32>
    %cst_88 = arith.constant dense<0xFF800000> : vector<64xf32>
    %214 = vector.multi_reduction <maximumf>, %213, %cst_88 [0] : vector<3x64xf32> to vector<64xf32>
    %215 = vector.shape_cast %214 : vector<64xf32> to vector<1x64xf32>
    %216 = vector.extract_strided_slice %209 {offsets = [4, 0], sizes = [3, 64], strides = [1, 1]} : vector<30x64xf32> to vector<3x64xf32>
    %cst_89 = arith.constant dense<0xFF800000> : vector<64xf32>
    %217 = vector.multi_reduction <maximumf>, %216, %cst_89 [0] : vector<3x64xf32> to vector<64xf32>
    %218 = vector.shape_cast %217 : vector<64xf32> to vector<1x64xf32>
    %219 = vector.extract_strided_slice %209 {offsets = [6, 0], sizes = [3, 64], strides = [1, 1]} : vector<30x64xf32> to vector<3x64xf32>
    %cst_90 = arith.constant dense<0xFF800000> : vector<64xf32>
    %220 = vector.multi_reduction <maximumf>, %219, %cst_90 [0] : vector<3x64xf32> to vector<64xf32>
    %221 = vector.shape_cast %220 : vector<64xf32> to vector<1x64xf32>
    %222 = vector.extract_strided_slice %209 {offsets = [8, 0], sizes = [3, 64], strides = [1, 1]} : vector<30x64xf32> to vector<3x64xf32>
    %cst_91 = arith.constant dense<0xFF800000> : vector<64xf32>
    %223 = vector.multi_reduction <maximumf>, %222, %cst_91 [0] : vector<3x64xf32> to vector<64xf32>
    %224 = vector.shape_cast %223 : vector<64xf32> to vector<1x64xf32>
    %225 = vector.extract_strided_slice %209 {offsets = [10, 0], sizes = [3, 64], strides = [1, 1]} : vector<30x64xf32> to vector<3x64xf32>
    %cst_92 = arith.constant dense<0xFF800000> : vector<64xf32>
    %226 = vector.multi_reduction <maximumf>, %225, %cst_92 [0] : vector<3x64xf32> to vector<64xf32>
    %227 = vector.shape_cast %226 : vector<64xf32> to vector<1x64xf32>
    %228 = vector.extract_strided_slice %209 {offsets = [12, 0], sizes = [3, 64], strides = [1, 1]} : vector<30x64xf32> to vector<3x64xf32>
    %cst_93 = arith.constant dense<0xFF800000> : vector<64xf32>
    %229 = vector.multi_reduction <maximumf>, %228, %cst_93 [0] : vector<3x64xf32> to vector<64xf32>
    %230 = vector.shape_cast %229 : vector<64xf32> to vector<1x64xf32>
    %231 = vector.extract_strided_slice %209 {offsets = [14, 0], sizes = [3, 64], strides = [1, 1]} : vector<30x64xf32> to vector<3x64xf32>
    %cst_94 = arith.constant dense<0xFF800000> : vector<64xf32>
    %232 = vector.multi_reduction <maximumf>, %231, %cst_94 [0] : vector<3x64xf32> to vector<64xf32>
    %233 = vector.shape_cast %232 : vector<64xf32> to vector<1x64xf32>
    %234 = vector.extract_strided_slice %209 {offsets = [16, 0], sizes = [3, 64], strides = [1, 1]} : vector<30x64xf32> to vector<3x64xf32>
    %cst_95 = arith.constant dense<0xFF800000> : vector<64xf32>
    %235 = vector.multi_reduction <maximumf>, %234, %cst_95 [0] : vector<3x64xf32> to vector<64xf32>
    %236 = vector.shape_cast %235 : vector<64xf32> to vector<1x64xf32>
    %237 = vector.extract_strided_slice %209 {offsets = [18, 0], sizes = [3, 64], strides = [1, 1]} : vector<30x64xf32> to vector<3x64xf32>
    %cst_96 = arith.constant dense<0xFF800000> : vector<64xf32>
    %238 = vector.multi_reduction <maximumf>, %237, %cst_96 [0] : vector<3x64xf32> to vector<64xf32>
    %239 = vector.shape_cast %238 : vector<64xf32> to vector<1x64xf32>
    %240 = vector.extract_strided_slice %209 {offsets = [20, 0], sizes = [3, 64], strides = [1, 1]} : vector<30x64xf32> to vector<3x64xf32>
    %cst_97 = arith.constant dense<0xFF800000> : vector<64xf32>
    %241 = vector.multi_reduction <maximumf>, %240, %cst_97 [0] : vector<3x64xf32> to vector<64xf32>
    %242 = vector.shape_cast %241 : vector<64xf32> to vector<1x64xf32>
    %243 = vector.extract_strided_slice %209 {offsets = [22, 0], sizes = [3, 64], strides = [1, 1]} : vector<30x64xf32> to vector<3x64xf32>
    %cst_98 = arith.constant dense<0xFF800000> : vector<64xf32>
    %244 = vector.multi_reduction <maximumf>, %243, %cst_98 [0] : vector<3x64xf32> to vector<64xf32>
    %245 = vector.shape_cast %244 : vector<64xf32> to vector<1x64xf32>
    %246 = vector.extract_strided_slice %209 {offsets = [24, 0], sizes = [3, 64], strides = [1, 1]} : vector<30x64xf32> to vector<3x64xf32>
    %cst_99 = arith.constant dense<0xFF800000> : vector<64xf32>
    %247 = vector.multi_reduction <maximumf>, %246, %cst_99 [0] : vector<3x64xf32> to vector<64xf32>
    %248 = vector.shape_cast %247 : vector<64xf32> to vector<1x64xf32>
    %249 = vector.extract_strided_slice %209 {offsets = [26, 0], sizes = [3, 64], strides = [1, 1]} : vector<30x64xf32> to vector<3x64xf32>
    %cst_100 = arith.constant dense<0xFF800000> : vector<64xf32>
    %250 = vector.multi_reduction <maximumf>, %249, %cst_100 [0] : vector<3x64xf32> to vector<64xf32>
    %251 = vector.shape_cast %250 : vector<64xf32> to vector<1x64xf32>
    %252 = tpu.concatenate %212, %215, %218, %221, %224, %227, %230, %233, %236, %239, %242, %245, %248, %251 in 0 : vector<1x64xf32>, vector<1x64xf32>, vector<1x64xf32>, vector<1x64xf32>, vector<1x64xf32>, vector<1x64xf32>, vector<1x64xf32>, vector<1x64xf32>, vector<1x64xf32>, vector<1x64xf32>, vector<1x64xf32>, vector<1x64xf32>, vector<1x64xf32>, vector<1x64xf32> -> vector<14x64xf32>
    %c300_101 = arith.constant 300 : index
    %c0_102 = arith.constant 0 : index
    %253 = vector.load %arg11[%c300_101, %c0_102] : memref<900x64xf32, #tpu.memory_space<vmem>>, vector<30x64xf32>
    %c330 = arith.constant 330 : index
    %c0_103 = arith.constant 0 : index
    %254 = vector.load %arg11[%c330, %c0_103] : memref<900x64xf32, #tpu.memory_space<vmem>>, vector<30x64xf32>
    %c360 = arith.constant 360 : index
    %c0_104 = arith.constant 0 : index
    %255 = vector.load %arg11[%c360, %c0_104] : memref<900x64xf32, #tpu.memory_space<vmem>>, vector<30x64xf32>
    %256 = arith.maximumf %253, %254 : vector<30x64xf32>
    %257 = arith.maximumf %256, %255 : vector<30x64xf32>
    %258 = vector.extract_strided_slice %257 {offsets = [0, 0], sizes = [3, 64], strides = [1, 1]} : vector<30x64xf32> to vector<3x64xf32>
    %cst_105 = arith.constant dense<0xFF800000> : vector<64xf32>
    %259 = vector.multi_reduction <maximumf>, %258, %cst_105 [0] : vector<3x64xf32> to vector<64xf32>
    %260 = vector.shape_cast %259 : vector<64xf32> to vector<1x64xf32>
    %261 = vector.extract_strided_slice %257 {offsets = [2, 0], sizes = [3, 64], strides = [1, 1]} : vector<30x64xf32> to vector<3x64xf32>
    %cst_106 = arith.constant dense<0xFF800000> : vector<64xf32>
    %262 = vector.multi_reduction <maximumf>, %261, %cst_106 [0] : vector<3x64xf32> to vector<64xf32>
    %263 = vector.shape_cast %262 : vector<64xf32> to vector<1x64xf32>
    %264 = vector.extract_strided_slice %257 {offsets = [4, 0], sizes = [3, 64], strides = [1, 1]} : vector<30x64xf32> to vector<3x64xf32>
    %cst_107 = arith.constant dense<0xFF800000> : vector<64xf32>
    %265 = vector.multi_reduction <maximumf>, %264, %cst_107 [0] : vector<3x64xf32> to vector<64xf32>
    %266 = vector.shape_cast %265 : vector<64xf32> to vector<1x64xf32>
    %267 = vector.extract_strided_slice %257 {offsets = [6, 0], sizes = [3, 64], strides = [1, 1]} : vector<30x64xf32> to vector<3x64xf32>
    %cst_108 = arith.constant dense<0xFF800000> : vector<64xf32>
    %268 = vector.multi_reduction <maximumf>, %267, %cst_108 [0] : vector<3x64xf32> to vector<64xf32>
    %269 = vector.shape_cast %268 : vector<64xf32> to vector<1x64xf32>
    %270 = vector.extract_strided_slice %257 {offsets = [8, 0], sizes = [3, 64], strides = [1, 1]} : vector<30x64xf32> to vector<3x64xf32>
    %cst_109 = arith.constant dense<0xFF800000> : vector<64xf32>
    %271 = vector.multi_reduction <maximumf>, %270, %cst_109 [0] : vector<3x64xf32> to vector<64xf32>
    %272 = vector.shape_cast %271 : vector<64xf32> to vector<1x64xf32>
    %273 = vector.extract_strided_slice %257 {offsets = [10, 0], sizes = [3, 64], strides = [1, 1]} : vector<30x64xf32> to vector<3x64xf32>
    %cst_110 = arith.constant dense<0xFF800000> : vector<64xf32>
    %274 = vector.multi_reduction <maximumf>, %273, %cst_110 [0] : vector<3x64xf32> to vector<64xf32>
    %275 = vector.shape_cast %274 : vector<64xf32> to vector<1x64xf32>
    %276 = vector.extract_strided_slice %257 {offsets = [12, 0], sizes = [3, 64], strides = [1, 1]} : vector<30x64xf32> to vector<3x64xf32>
    %cst_111 = arith.constant dense<0xFF800000> : vector<64xf32>
    %277 = vector.multi_reduction <maximumf>, %276, %cst_111 [0] : vector<3x64xf32> to vector<64xf32>
    %278 = vector.shape_cast %277 : vector<64xf32> to vector<1x64xf32>
    %279 = vector.extract_strided_slice %257 {offsets = [14, 0], sizes = [3, 64], strides = [1, 1]} : vector<30x64xf32> to vector<3x64xf32>
    %cst_112 = arith.constant dense<0xFF800000> : vector<64xf32>
    %280 = vector.multi_reduction <maximumf>, %279, %cst_112 [0] : vector<3x64xf32> to vector<64xf32>
    %281 = vector.shape_cast %280 : vector<64xf32> to vector<1x64xf32>
    %282 = vector.extract_strided_slice %257 {offsets = [16, 0], sizes = [3, 64], strides = [1, 1]} : vector<30x64xf32> to vector<3x64xf32>
    %cst_113 = arith.constant dense<0xFF800000> : vector<64xf32>
    %283 = vector.multi_reduction <maximumf>, %282, %cst_113 [0] : vector<3x64xf32> to vector<64xf32>
    %284 = vector.shape_cast %283 : vector<64xf32> to vector<1x64xf32>
    %285 = vector.extract_strided_slice %257 {offsets = [18, 0], sizes = [3, 64], strides = [1, 1]} : vector<30x64xf32> to vector<3x64xf32>
    %cst_114 = arith.constant dense<0xFF800000> : vector<64xf32>
    %286 = vector.multi_reduction <maximumf>, %285, %cst_114 [0] : vector<3x64xf32> to vector<64xf32>
    %287 = vector.shape_cast %286 : vector<64xf32> to vector<1x64xf32>
    %288 = vector.extract_strided_slice %257 {offsets = [20, 0], sizes = [3, 64], strides = [1, 1]} : vector<30x64xf32> to vector<3x64xf32>
    %cst_115 = arith.constant dense<0xFF800000> : vector<64xf32>
    %289 = vector.multi_reduction <maximumf>, %288, %cst_115 [0] : vector<3x64xf32> to vector<64xf32>
    %290 = vector.shape_cast %289 : vector<64xf32> to vector<1x64xf32>
    %291 = vector.extract_strided_slice %257 {offsets = [22, 0], sizes = [3, 64], strides = [1, 1]} : vector<30x64xf32> to vector<3x64xf32>
    %cst_116 = arith.constant dense<0xFF800000> : vector<64xf32>
    %292 = vector.multi_reduction <maximumf>, %291, %cst_116 [0] : vector<3x64xf32> to vector<64xf32>
    %293 = vector.shape_cast %292 : vector<64xf32> to vector<1x64xf32>
    %294 = vector.extract_strided_slice %257 {offsets = [24, 0], sizes = [3, 64], strides = [1, 1]} : vector<30x64xf32> to vector<3x64xf32>
    %cst_117 = arith.constant dense<0xFF800000> : vector<64xf32>
    %295 = vector.multi_reduction <maximumf>, %294, %cst_117 [0] : vector<3x64xf32> to vector<64xf32>
    %296 = vector.shape_cast %295 : vector<64xf32> to vector<1x64xf32>
    %297 = vector.extract_strided_slice %257 {offsets = [26, 0], sizes = [3, 64], strides = [1, 1]} : vector<30x64xf32> to vector<3x64xf32>
    %cst_118 = arith.constant dense<0xFF800000> : vector<64xf32>
    %298 = vector.multi_reduction <maximumf>, %297, %cst_118 [0] : vector<3x64xf32> to vector<64xf32>
    %299 = vector.shape_cast %298 : vector<64xf32> to vector<1x64xf32>
    %300 = tpu.concatenate %260, %263, %266, %269, %272, %275, %278, %281, %284, %287, %290, %293, %296, %299 in 0 : vector<1x64xf32>, vector<1x64xf32>, vector<1x64xf32>, vector<1x64xf32>, vector<1x64xf32>, vector<1x64xf32>, vector<1x64xf32>, vector<1x64xf32>, vector<1x64xf32>, vector<1x64xf32>, vector<1x64xf32>, vector<1x64xf32>, vector<1x64xf32>, vector<1x64xf32> -> vector<14x64xf32>
    %c360_119 = arith.constant 360 : index
    %c0_120 = arith.constant 0 : index
    %301 = vector.load %arg11[%c360_119, %c0_120] : memref<900x64xf32, #tpu.memory_space<vmem>>, vector<30x64xf32>
    %c390 = arith.constant 390 : index
    %c0_121 = arith.constant 0 : index
    %302 = vector.load %arg11[%c390, %c0_121] : memref<900x64xf32, #tpu.memory_space<vmem>>, vector<30x64xf32>
    %c420 = arith.constant 420 : index
    %c0_122 = arith.constant 0 : index
    %303 = vector.load %arg11[%c420, %c0_122] : memref<900x64xf32, #tpu.memory_space<vmem>>, vector<30x64xf32>
    %304 = arith.maximumf %301, %302 : vector<30x64xf32>
    %305 = arith.maximumf %304, %303 : vector<30x64xf32>
    %306 = vector.extract_strided_slice %305 {offsets = [0, 0], sizes = [3, 64], strides = [1, 1]} : vector<30x64xf32> to vector<3x64xf32>
    %cst_123 = arith.constant dense<0xFF800000> : vector<64xf32>
    %307 = vector.multi_reduction <maximumf>, %306, %cst_123 [0] : vector<3x64xf32> to vector<64xf32>
    %308 = vector.shape_cast %307 : vector<64xf32> to vector<1x64xf32>
    %309 = vector.extract_strided_slice %305 {offsets = [2, 0], sizes = [3, 64], strides = [1, 1]} : vector<30x64xf32> to vector<3x64xf32>
    %cst_124 = arith.constant dense<0xFF800000> : vector<64xf32>
    %310 = vector.multi_reduction <maximumf>, %309, %cst_124 [0] : vector<3x64xf32> to vector<64xf32>
    %311 = vector.shape_cast %310 : vector<64xf32> to vector<1x64xf32>
    %312 = vector.extract_strided_slice %305 {offsets = [4, 0], sizes = [3, 64], strides = [1, 1]} : vector<30x64xf32> to vector<3x64xf32>
    %cst_125 = arith.constant dense<0xFF800000> : vector<64xf32>
    %313 = vector.multi_reduction <maximumf>, %312, %cst_125 [0] : vector<3x64xf32> to vector<64xf32>
    %314 = vector.shape_cast %313 : vector<64xf32> to vector<1x64xf32>
    %315 = vector.extract_strided_slice %305 {offsets = [6, 0], sizes = [3, 64], strides = [1, 1]} : vector<30x64xf32> to vector<3x64xf32>
    %cst_126 = arith.constant dense<0xFF800000> : vector<64xf32>
    %316 = vector.multi_reduction <maximumf>, %315, %cst_126 [0] : vector<3x64xf32> to vector<64xf32>
    %317 = vector.shape_cast %316 : vector<64xf32> to vector<1x64xf32>
    %318 = vector.extract_strided_slice %305 {offsets = [8, 0], sizes = [3, 64], strides = [1, 1]} : vector<30x64xf32> to vector<3x64xf32>
    %cst_127 = arith.constant dense<0xFF800000> : vector<64xf32>
    %319 = vector.multi_reduction <maximumf>, %318, %cst_127 [0] : vector<3x64xf32> to vector<64xf32>
    %320 = vector.shape_cast %319 : vector<64xf32> to vector<1x64xf32>
    %321 = vector.extract_strided_slice %305 {offsets = [10, 0], sizes = [3, 64], strides = [1, 1]} : vector<30x64xf32> to vector<3x64xf32>
    %cst_128 = arith.constant dense<0xFF800000> : vector<64xf32>
    %322 = vector.multi_reduction <maximumf>, %321, %cst_128 [0] : vector<3x64xf32> to vector<64xf32>
    %323 = vector.shape_cast %322 : vector<64xf32> to vector<1x64xf32>
    %324 = vector.extract_strided_slice %305 {offsets = [12, 0], sizes = [3, 64], strides = [1, 1]} : vector<30x64xf32> to vector<3x64xf32>
    %cst_129 = arith.constant dense<0xFF800000> : vector<64xf32>
    %325 = vector.multi_reduction <maximumf>, %324, %cst_129 [0] : vector<3x64xf32> to vector<64xf32>
    %326 = vector.shape_cast %325 : vector<64xf32> to vector<1x64xf32>
    %327 = vector.extract_strided_slice %305 {offsets = [14, 0], sizes = [3, 64], strides = [1, 1]} : vector<30x64xf32> to vector<3x64xf32>
    %cst_130 = arith.constant dense<0xFF800000> : vector<64xf32>
    %328 = vector.multi_reduction <maximumf>, %327, %cst_130 [0] : vector<3x64xf32> to vector<64xf32>
    %329 = vector.shape_cast %328 : vector<64xf32> to vector<1x64xf32>
    %330 = vector.extract_strided_slice %305 {offsets = [16, 0], sizes = [3, 64], strides = [1, 1]} : vector<30x64xf32> to vector<3x64xf32>
    %cst_131 = arith.constant dense<0xFF800000> : vector<64xf32>
    %331 = vector.multi_reduction <maximumf>, %330, %cst_131 [0] : vector<3x64xf32> to vector<64xf32>
    %332 = vector.shape_cast %331 : vector<64xf32> to vector<1x64xf32>
    %333 = vector.extract_strided_slice %305 {offsets = [18, 0], sizes = [3, 64], strides = [1, 1]} : vector<30x64xf32> to vector<3x64xf32>
    %cst_132 = arith.constant dense<0xFF800000> : vector<64xf32>
    %334 = vector.multi_reduction <maximumf>, %333, %cst_132 [0] : vector<3x64xf32> to vector<64xf32>
    %335 = vector.shape_cast %334 : vector<64xf32> to vector<1x64xf32>
    %336 = vector.extract_strided_slice %305 {offsets = [20, 0], sizes = [3, 64], strides = [1, 1]} : vector<30x64xf32> to vector<3x64xf32>
    %cst_133 = arith.constant dense<0xFF800000> : vector<64xf32>
    %337 = vector.multi_reduction <maximumf>, %336, %cst_133 [0] : vector<3x64xf32> to vector<64xf32>
    %338 = vector.shape_cast %337 : vector<64xf32> to vector<1x64xf32>
    %339 = vector.extract_strided_slice %305 {offsets = [22, 0], sizes = [3, 64], strides = [1, 1]} : vector<30x64xf32> to vector<3x64xf32>
    %cst_134 = arith.constant dense<0xFF800000> : vector<64xf32>
    %340 = vector.multi_reduction <maximumf>, %339, %cst_134 [0] : vector<3x64xf32> to vector<64xf32>
    %341 = vector.shape_cast %340 : vector<64xf32> to vector<1x64xf32>
    %342 = vector.extract_strided_slice %305 {offsets = [24, 0], sizes = [3, 64], strides = [1, 1]} : vector<30x64xf32> to vector<3x64xf32>
    %cst_135 = arith.constant dense<0xFF800000> : vector<64xf32>
    %343 = vector.multi_reduction <maximumf>, %342, %cst_135 [0] : vector<3x64xf32> to vector<64xf32>
    %344 = vector.shape_cast %343 : vector<64xf32> to vector<1x64xf32>
    %345 = vector.extract_strided_slice %305 {offsets = [26, 0], sizes = [3, 64], strides = [1, 1]} : vector<30x64xf32> to vector<3x64xf32>
    %cst_136 = arith.constant dense<0xFF800000> : vector<64xf32>
    %346 = vector.multi_reduction <maximumf>, %345, %cst_136 [0] : vector<3x64xf32> to vector<64xf32>
    %347 = vector.shape_cast %346 : vector<64xf32> to vector<1x64xf32>
    %348 = tpu.concatenate %308, %311, %314, %317, %320, %323, %326, %329, %332, %335, %338, %341, %344, %347 in 0 : vector<1x64xf32>, vector<1x64xf32>, vector<1x64xf32>, vector<1x64xf32>, vector<1x64xf32>, vector<1x64xf32>, vector<1x64xf32>, vector<1x64xf32>, vector<1x64xf32>, vector<1x64xf32>, vector<1x64xf32>, vector<1x64xf32>, vector<1x64xf32>, vector<1x64xf32> -> vector<14x64xf32>
    %c420_137 = arith.constant 420 : index
    %c0_138 = arith.constant 0 : index
    %349 = vector.load %arg11[%c420_137, %c0_138] : memref<900x64xf32, #tpu.memory_space<vmem>>, vector<30x64xf32>
    %c450 = arith.constant 450 : index
    %c0_139 = arith.constant 0 : index
    %350 = vector.load %arg11[%c450, %c0_139] : memref<900x64xf32, #tpu.memory_space<vmem>>, vector<30x64xf32>
    %c480 = arith.constant 480 : index
    %c0_140 = arith.constant 0 : index
    %351 = vector.load %arg11[%c480, %c0_140] : memref<900x64xf32, #tpu.memory_space<vmem>>, vector<30x64xf32>
    %352 = arith.maximumf %349, %350 : vector<30x64xf32>
    %353 = arith.maximumf %352, %351 : vector<30x64xf32>
    %354 = vector.extract_strided_slice %353 {offsets = [0, 0], sizes = [3, 64], strides = [1, 1]} : vector<30x64xf32> to vector<3x64xf32>
    %cst_141 = arith.constant dense<0xFF800000> : vector<64xf32>
    %355 = vector.multi_reduction <maximumf>, %354, %cst_141 [0] : vector<3x64xf32> to vector<64xf32>
    %356 = vector.shape_cast %355 : vector<64xf32> to vector<1x64xf32>
    %357 = vector.extract_strided_slice %353 {offsets = [2, 0], sizes = [3, 64], strides = [1, 1]} : vector<30x64xf32> to vector<3x64xf32>
    %cst_142 = arith.constant dense<0xFF800000> : vector<64xf32>
    %358 = vector.multi_reduction <maximumf>, %357, %cst_142 [0] : vector<3x64xf32> to vector<64xf32>
    %359 = vector.shape_cast %358 : vector<64xf32> to vector<1x64xf32>
    %360 = vector.extract_strided_slice %353 {offsets = [4, 0], sizes = [3, 64], strides = [1, 1]} : vector<30x64xf32> to vector<3x64xf32>
    %cst_143 = arith.constant dense<0xFF800000> : vector<64xf32>
    %361 = vector.multi_reduction <maximumf>, %360, %cst_143 [0] : vector<3x64xf32> to vector<64xf32>
    %362 = vector.shape_cast %361 : vector<64xf32> to vector<1x64xf32>
    %363 = vector.extract_strided_slice %353 {offsets = [6, 0], sizes = [3, 64], strides = [1, 1]} : vector<30x64xf32> to vector<3x64xf32>
    %cst_144 = arith.constant dense<0xFF800000> : vector<64xf32>
    %364 = vector.multi_reduction <maximumf>, %363, %cst_144 [0] : vector<3x64xf32> to vector<64xf32>
    %365 = vector.shape_cast %364 : vector<64xf32> to vector<1x64xf32>
    %366 = vector.extract_strided_slice %353 {offsets = [8, 0], sizes = [3, 64], strides = [1, 1]} : vector<30x64xf32> to vector<3x64xf32>
    %cst_145 = arith.constant dense<0xFF800000> : vector<64xf32>
    %367 = vector.multi_reduction <maximumf>, %366, %cst_145 [0] : vector<3x64xf32> to vector<64xf32>
    %368 = vector.shape_cast %367 : vector<64xf32> to vector<1x64xf32>
    %369 = vector.extract_strided_slice %353 {offsets = [10, 0], sizes = [3, 64], strides = [1, 1]} : vector<30x64xf32> to vector<3x64xf32>
    %cst_146 = arith.constant dense<0xFF800000> : vector<64xf32>
    %370 = vector.multi_reduction <maximumf>, %369, %cst_146 [0] : vector<3x64xf32> to vector<64xf32>
    %371 = vector.shape_cast %370 : vector<64xf32> to vector<1x64xf32>
    %372 = vector.extract_strided_slice %353 {offsets = [12, 0], sizes = [3, 64], strides = [1, 1]} : vector<30x64xf32> to vector<3x64xf32>
    %cst_147 = arith.constant dense<0xFF800000> : vector<64xf32>
    %373 = vector.multi_reduction <maximumf>, %372, %cst_147 [0] : vector<3x64xf32> to vector<64xf32>
    %374 = vector.shape_cast %373 : vector<64xf32> to vector<1x64xf32>
    %375 = vector.extract_strided_slice %353 {offsets = [14, 0], sizes = [3, 64], strides = [1, 1]} : vector<30x64xf32> to vector<3x64xf32>
    %cst_148 = arith.constant dense<0xFF800000> : vector<64xf32>
    %376 = vector.multi_reduction <maximumf>, %375, %cst_148 [0] : vector<3x64xf32> to vector<64xf32>
    %377 = vector.shape_cast %376 : vector<64xf32> to vector<1x64xf32>
    %378 = vector.extract_strided_slice %353 {offsets = [16, 0], sizes = [3, 64], strides = [1, 1]} : vector<30x64xf32> to vector<3x64xf32>
    %cst_149 = arith.constant dense<0xFF800000> : vector<64xf32>
    %379 = vector.multi_reduction <maximumf>, %378, %cst_149 [0] : vector<3x64xf32> to vector<64xf32>
    %380 = vector.shape_cast %379 : vector<64xf32> to vector<1x64xf32>
    %381 = vector.extract_strided_slice %353 {offsets = [18, 0], sizes = [3, 64], strides = [1, 1]} : vector<30x64xf32> to vector<3x64xf32>
    %cst_150 = arith.constant dense<0xFF800000> : vector<64xf32>
    %382 = vector.multi_reduction <maximumf>, %381, %cst_150 [0] : vector<3x64xf32> to vector<64xf32>
    %383 = vector.shape_cast %382 : vector<64xf32> to vector<1x64xf32>
    %384 = vector.extract_strided_slice %353 {offsets = [20, 0], sizes = [3, 64], strides = [1, 1]} : vector<30x64xf32> to vector<3x64xf32>
    %cst_151 = arith.constant dense<0xFF800000> : vector<64xf32>
    %385 = vector.multi_reduction <maximumf>, %384, %cst_151 [0] : vector<3x64xf32> to vector<64xf32>
    %386 = vector.shape_cast %385 : vector<64xf32> to vector<1x64xf32>
    %387 = vector.extract_strided_slice %353 {offsets = [22, 0], sizes = [3, 64], strides = [1, 1]} : vector<30x64xf32> to vector<3x64xf32>
    %cst_152 = arith.constant dense<0xFF800000> : vector<64xf32>
    %388 = vector.multi_reduction <maximumf>, %387, %cst_152 [0] : vector<3x64xf32> to vector<64xf32>
    %389 = vector.shape_cast %388 : vector<64xf32> to vector<1x64xf32>
    %390 = vector.extract_strided_slice %353 {offsets = [24, 0], sizes = [3, 64], strides = [1, 1]} : vector<30x64xf32> to vector<3x64xf32>
    %cst_153 = arith.constant dense<0xFF800000> : vector<64xf32>
    %391 = vector.multi_reduction <maximumf>, %390, %cst_153 [0] : vector<3x64xf32> to vector<64xf32>
    %392 = vector.shape_cast %391 : vector<64xf32> to vector<1x64xf32>
    %393 = vector.extract_strided_slice %353 {offsets = [26, 0], sizes = [3, 64], strides = [1, 1]} : vector<30x64xf32> to vector<3x64xf32>
    %cst_154 = arith.constant dense<0xFF800000> : vector<64xf32>
    %394 = vector.multi_reduction <maximumf>, %393, %cst_154 [0] : vector<3x64xf32> to vector<64xf32>
    %395 = vector.shape_cast %394 : vector<64xf32> to vector<1x64xf32>
    %396 = tpu.concatenate %356, %359, %362, %365, %368, %371, %374, %377, %380, %383, %386, %389, %392, %395 in 0 : vector<1x64xf32>, vector<1x64xf32>, vector<1x64xf32>, vector<1x64xf32>, vector<1x64xf32>, vector<1x64xf32>, vector<1x64xf32>, vector<1x64xf32>, vector<1x64xf32>, vector<1x64xf32>, vector<1x64xf32>, vector<1x64xf32>, vector<1x64xf32>, vector<1x64xf32> -> vector<14x64xf32>
    %c480_155 = arith.constant 480 : index
    %c0_156 = arith.constant 0 : index
    %397 = vector.load %arg11[%c480_155, %c0_156] : memref<900x64xf32, #tpu.memory_space<vmem>>, vector<30x64xf32>
    %c510 = arith.constant 510 : index
    %c0_157 = arith.constant 0 : index
    %398 = vector.load %arg11[%c510, %c0_157] : memref<900x64xf32, #tpu.memory_space<vmem>>, vector<30x64xf32>
    %c540 = arith.constant 540 : index
    %c0_158 = arith.constant 0 : index
    %399 = vector.load %arg11[%c540, %c0_158] : memref<900x64xf32, #tpu.memory_space<vmem>>, vector<30x64xf32>
    %400 = arith.maximumf %397, %398 : vector<30x64xf32>
    %401 = arith.maximumf %400, %399 : vector<30x64xf32>
    %402 = vector.extract_strided_slice %401 {offsets = [0, 0], sizes = [3, 64], strides = [1, 1]} : vector<30x64xf32> to vector<3x64xf32>
    %cst_159 = arith.constant dense<0xFF800000> : vector<64xf32>
    %403 = vector.multi_reduction <maximumf>, %402, %cst_159 [0] : vector<3x64xf32> to vector<64xf32>
    %404 = vector.shape_cast %403 : vector<64xf32> to vector<1x64xf32>
    %405 = vector.extract_strided_slice %401 {offsets = [2, 0], sizes = [3, 64], strides = [1, 1]} : vector<30x64xf32> to vector<3x64xf32>
    %cst_160 = arith.constant dense<0xFF800000> : vector<64xf32>
    %406 = vector.multi_reduction <maximumf>, %405, %cst_160 [0] : vector<3x64xf32> to vector<64xf32>
    %407 = vector.shape_cast %406 : vector<64xf32> to vector<1x64xf32>
    %408 = vector.extract_strided_slice %401 {offsets = [4, 0], sizes = [3, 64], strides = [1, 1]} : vector<30x64xf32> to vector<3x64xf32>
    %cst_161 = arith.constant dense<0xFF800000> : vector<64xf32>
    %409 = vector.multi_reduction <maximumf>, %408, %cst_161 [0] : vector<3x64xf32> to vector<64xf32>
    %410 = vector.shape_cast %409 : vector<64xf32> to vector<1x64xf32>
    %411 = vector.extract_strided_slice %401 {offsets = [6, 0], sizes = [3, 64], strides = [1, 1]} : vector<30x64xf32> to vector<3x64xf32>
    %cst_162 = arith.constant dense<0xFF800000> : vector<64xf32>
    %412 = vector.multi_reduction <maximumf>, %411, %cst_162 [0] : vector<3x64xf32> to vector<64xf32>
    %413 = vector.shape_cast %412 : vector<64xf32> to vector<1x64xf32>
    %414 = vector.extract_strided_slice %401 {offsets = [8, 0], sizes = [3, 64], strides = [1, 1]} : vector<30x64xf32> to vector<3x64xf32>
    %cst_163 = arith.constant dense<0xFF800000> : vector<64xf32>
    %415 = vector.multi_reduction <maximumf>, %414, %cst_163 [0] : vector<3x64xf32> to vector<64xf32>
    %416 = vector.shape_cast %415 : vector<64xf32> to vector<1x64xf32>
    %417 = vector.extract_strided_slice %401 {offsets = [10, 0], sizes = [3, 64], strides = [1, 1]} : vector<30x64xf32> to vector<3x64xf32>
    %cst_164 = arith.constant dense<0xFF800000> : vector<64xf32>
    %418 = vector.multi_reduction <maximumf>, %417, %cst_164 [0] : vector<3x64xf32> to vector<64xf32>
    %419 = vector.shape_cast %418 : vector<64xf32> to vector<1x64xf32>
    %420 = vector.extract_strided_slice %401 {offsets = [12, 0], sizes = [3, 64], strides = [1, 1]} : vector<30x64xf32> to vector<3x64xf32>
    %cst_165 = arith.constant dense<0xFF800000> : vector<64xf32>
    %421 = vector.multi_reduction <maximumf>, %420, %cst_165 [0] : vector<3x64xf32> to vector<64xf32>
    %422 = vector.shape_cast %421 : vector<64xf32> to vector<1x64xf32>
    %423 = vector.extract_strided_slice %401 {offsets = [14, 0], sizes = [3, 64], strides = [1, 1]} : vector<30x64xf32> to vector<3x64xf32>
    %cst_166 = arith.constant dense<0xFF800000> : vector<64xf32>
    %424 = vector.multi_reduction <maximumf>, %423, %cst_166 [0] : vector<3x64xf32> to vector<64xf32>
    %425 = vector.shape_cast %424 : vector<64xf32> to vector<1x64xf32>
    %426 = vector.extract_strided_slice %401 {offsets = [16, 0], sizes = [3, 64], strides = [1, 1]} : vector<30x64xf32> to vector<3x64xf32>
    %cst_167 = arith.constant dense<0xFF800000> : vector<64xf32>
    %427 = vector.multi_reduction <maximumf>, %426, %cst_167 [0] : vector<3x64xf32> to vector<64xf32>
    %428 = vector.shape_cast %427 : vector<64xf32> to vector<1x64xf32>
    %429 = vector.extract_strided_slice %401 {offsets = [18, 0], sizes = [3, 64], strides = [1, 1]} : vector<30x64xf32> to vector<3x64xf32>
    %cst_168 = arith.constant dense<0xFF800000> : vector<64xf32>
    %430 = vector.multi_reduction <maximumf>, %429, %cst_168 [0] : vector<3x64xf32> to vector<64xf32>
    %431 = vector.shape_cast %430 : vector<64xf32> to vector<1x64xf32>
    %432 = vector.extract_strided_slice %401 {offsets = [20, 0], sizes = [3, 64], strides = [1, 1]} : vector<30x64xf32> to vector<3x64xf32>
    %cst_169 = arith.constant dense<0xFF800000> : vector<64xf32>
    %433 = vector.multi_reduction <maximumf>, %432, %cst_169 [0] : vector<3x64xf32> to vector<64xf32>
    %434 = vector.shape_cast %433 : vector<64xf32> to vector<1x64xf32>
    %435 = vector.extract_strided_slice %401 {offsets = [22, 0], sizes = [3, 64], strides = [1, 1]} : vector<30x64xf32> to vector<3x64xf32>
    %cst_170 = arith.constant dense<0xFF800000> : vector<64xf32>
    %436 = vector.multi_reduction <maximumf>, %435, %cst_170 [0] : vector<3x64xf32> to vector<64xf32>
    %437 = vector.shape_cast %436 : vector<64xf32> to vector<1x64xf32>
    %438 = vector.extract_strided_slice %401 {offsets = [24, 0], sizes = [3, 64], strides = [1, 1]} : vector<30x64xf32> to vector<3x64xf32>
    %cst_171 = arith.constant dense<0xFF800000> : vector<64xf32>
    %439 = vector.multi_reduction <maximumf>, %438, %cst_171 [0] : vector<3x64xf32> to vector<64xf32>
    %440 = vector.shape_cast %439 : vector<64xf32> to vector<1x64xf32>
    %441 = vector.extract_strided_slice %401 {offsets = [26, 0], sizes = [3, 64], strides = [1, 1]} : vector<30x64xf32> to vector<3x64xf32>
    %cst_172 = arith.constant dense<0xFF800000> : vector<64xf32>
    %442 = vector.multi_reduction <maximumf>, %441, %cst_172 [0] : vector<3x64xf32> to vector<64xf32>
    %443 = vector.shape_cast %442 : vector<64xf32> to vector<1x64xf32>
    %444 = tpu.concatenate %404, %407, %410, %413, %416, %419, %422, %425, %428, %431, %434, %437, %440, %443 in 0 : vector<1x64xf32>, vector<1x64xf32>, vector<1x64xf32>, vector<1x64xf32>, vector<1x64xf32>, vector<1x64xf32>, vector<1x64xf32>, vector<1x64xf32>, vector<1x64xf32>, vector<1x64xf32>, vector<1x64xf32>, vector<1x64xf32>, vector<1x64xf32>, vector<1x64xf32> -> vector<14x64xf32>
    %c540_173 = arith.constant 540 : index
    %c0_174 = arith.constant 0 : index
    %445 = vector.load %arg11[%c540_173, %c0_174] : memref<900x64xf32, #tpu.memory_space<vmem>>, vector<30x64xf32>
    %c570 = arith.constant 570 : index
    %c0_175 = arith.constant 0 : index
    %446 = vector.load %arg11[%c570, %c0_175] : memref<900x64xf32, #tpu.memory_space<vmem>>, vector<30x64xf32>
    %c600 = arith.constant 600 : index
    %c0_176 = arith.constant 0 : index
    %447 = vector.load %arg11[%c600, %c0_176] : memref<900x64xf32, #tpu.memory_space<vmem>>, vector<30x64xf32>
    %448 = arith.maximumf %445, %446 : vector<30x64xf32>
    %449 = arith.maximumf %448, %447 : vector<30x64xf32>
    %450 = vector.extract_strided_slice %449 {offsets = [0, 0], sizes = [3, 64], strides = [1, 1]} : vector<30x64xf32> to vector<3x64xf32>
    %cst_177 = arith.constant dense<0xFF800000> : vector<64xf32>
    %451 = vector.multi_reduction <maximumf>, %450, %cst_177 [0] : vector<3x64xf32> to vector<64xf32>
    %452 = vector.shape_cast %451 : vector<64xf32> to vector<1x64xf32>
    %453 = vector.extract_strided_slice %449 {offsets = [2, 0], sizes = [3, 64], strides = [1, 1]} : vector<30x64xf32> to vector<3x64xf32>
    %cst_178 = arith.constant dense<0xFF800000> : vector<64xf32>
    %454 = vector.multi_reduction <maximumf>, %453, %cst_178 [0] : vector<3x64xf32> to vector<64xf32>
    %455 = vector.shape_cast %454 : vector<64xf32> to vector<1x64xf32>
    %456 = vector.extract_strided_slice %449 {offsets = [4, 0], sizes = [3, 64], strides = [1, 1]} : vector<30x64xf32> to vector<3x64xf32>
    %cst_179 = arith.constant dense<0xFF800000> : vector<64xf32>
    %457 = vector.multi_reduction <maximumf>, %456, %cst_179 [0] : vector<3x64xf32> to vector<64xf32>
    %458 = vector.shape_cast %457 : vector<64xf32> to vector<1x64xf32>
    %459 = vector.extract_strided_slice %449 {offsets = [6, 0], sizes = [3, 64], strides = [1, 1]} : vector<30x64xf32> to vector<3x64xf32>
    %cst_180 = arith.constant dense<0xFF800000> : vector<64xf32>
    %460 = vector.multi_reduction <maximumf>, %459, %cst_180 [0] : vector<3x64xf32> to vector<64xf32>
    %461 = vector.shape_cast %460 : vector<64xf32> to vector<1x64xf32>
    %462 = vector.extract_strided_slice %449 {offsets = [8, 0], sizes = [3, 64], strides = [1, 1]} : vector<30x64xf32> to vector<3x64xf32>
    %cst_181 = arith.constant dense<0xFF800000> : vector<64xf32>
    %463 = vector.multi_reduction <maximumf>, %462, %cst_181 [0] : vector<3x64xf32> to vector<64xf32>
    %464 = vector.shape_cast %463 : vector<64xf32> to vector<1x64xf32>
    %465 = vector.extract_strided_slice %449 {offsets = [10, 0], sizes = [3, 64], strides = [1, 1]} : vector<30x64xf32> to vector<3x64xf32>
    %cst_182 = arith.constant dense<0xFF800000> : vector<64xf32>
    %466 = vector.multi_reduction <maximumf>, %465, %cst_182 [0] : vector<3x64xf32> to vector<64xf32>
    %467 = vector.shape_cast %466 : vector<64xf32> to vector<1x64xf32>
    %468 = vector.extract_strided_slice %449 {offsets = [12, 0], sizes = [3, 64], strides = [1, 1]} : vector<30x64xf32> to vector<3x64xf32>
    %cst_183 = arith.constant dense<0xFF800000> : vector<64xf32>
    %469 = vector.multi_reduction <maximumf>, %468, %cst_183 [0] : vector<3x64xf32> to vector<64xf32>
    %470 = vector.shape_cast %469 : vector<64xf32> to vector<1x64xf32>
    %471 = vector.extract_strided_slice %449 {offsets = [14, 0], sizes = [3, 64], strides = [1, 1]} : vector<30x64xf32> to vector<3x64xf32>
    %cst_184 = arith.constant dense<0xFF800000> : vector<64xf32>
    %472 = vector.multi_reduction <maximumf>, %471, %cst_184 [0] : vector<3x64xf32> to vector<64xf32>
    %473 = vector.shape_cast %472 : vector<64xf32> to vector<1x64xf32>
    %474 = vector.extract_strided_slice %449 {offsets = [16, 0], sizes = [3, 64], strides = [1, 1]} : vector<30x64xf32> to vector<3x64xf32>
    %cst_185 = arith.constant dense<0xFF800000> : vector<64xf32>
    %475 = vector.multi_reduction <maximumf>, %474, %cst_185 [0] : vector<3x64xf32> to vector<64xf32>
    %476 = vector.shape_cast %475 : vector<64xf32> to vector<1x64xf32>
    %477 = vector.extract_strided_slice %449 {offsets = [18, 0], sizes = [3, 64], strides = [1, 1]} : vector<30x64xf32> to vector<3x64xf32>
    %cst_186 = arith.constant dense<0xFF800000> : vector<64xf32>
    %478 = vector.multi_reduction <maximumf>, %477, %cst_186 [0] : vector<3x64xf32> to vector<64xf32>
    %479 = vector.shape_cast %478 : vector<64xf32> to vector<1x64xf32>
    %480 = vector.extract_strided_slice %449 {offsets = [20, 0], sizes = [3, 64], strides = [1, 1]} : vector<30x64xf32> to vector<3x64xf32>
    %cst_187 = arith.constant dense<0xFF800000> : vector<64xf32>
    %481 = vector.multi_reduction <maximumf>, %480, %cst_187 [0] : vector<3x64xf32> to vector<64xf32>
    %482 = vector.shape_cast %481 : vector<64xf32> to vector<1x64xf32>
    %483 = vector.extract_strided_slice %449 {offsets = [22, 0], sizes = [3, 64], strides = [1, 1]} : vector<30x64xf32> to vector<3x64xf32>
    %cst_188 = arith.constant dense<0xFF800000> : vector<64xf32>
    %484 = vector.multi_reduction <maximumf>, %483, %cst_188 [0] : vector<3x64xf32> to vector<64xf32>
    %485 = vector.shape_cast %484 : vector<64xf32> to vector<1x64xf32>
    %486 = vector.extract_strided_slice %449 {offsets = [24, 0], sizes = [3, 64], strides = [1, 1]} : vector<30x64xf32> to vector<3x64xf32>
    %cst_189 = arith.constant dense<0xFF800000> : vector<64xf32>
    %487 = vector.multi_reduction <maximumf>, %486, %cst_189 [0] : vector<3x64xf32> to vector<64xf32>
    %488 = vector.shape_cast %487 : vector<64xf32> to vector<1x64xf32>
    %489 = vector.extract_strided_slice %449 {offsets = [26, 0], sizes = [3, 64], strides = [1, 1]} : vector<30x64xf32> to vector<3x64xf32>
    %cst_190 = arith.constant dense<0xFF800000> : vector<64xf32>
    %490 = vector.multi_reduction <maximumf>, %489, %cst_190 [0] : vector<3x64xf32> to vector<64xf32>
    %491 = vector.shape_cast %490 : vector<64xf32> to vector<1x64xf32>
    %492 = tpu.concatenate %452, %455, %458, %461, %464, %467, %470, %473, %476, %479, %482, %485, %488, %491 in 0 : vector<1x64xf32>, vector<1x64xf32>, vector<1x64xf32>, vector<1x64xf32>, vector<1x64xf32>, vector<1x64xf32>, vector<1x64xf32>, vector<1x64xf32>, vector<1x64xf32>, vector<1x64xf32>, vector<1x64xf32>, vector<1x64xf32>, vector<1x64xf32>, vector<1x64xf32> -> vector<14x64xf32>
    %c600_191 = arith.constant 600 : index
    %c0_192 = arith.constant 0 : index
    %493 = vector.load %arg11[%c600_191, %c0_192] : memref<900x64xf32, #tpu.memory_space<vmem>>, vector<30x64xf32>
    %c630 = arith.constant 630 : index
    %c0_193 = arith.constant 0 : index
    %494 = vector.load %arg11[%c630, %c0_193] : memref<900x64xf32, #tpu.memory_space<vmem>>, vector<30x64xf32>
    %c660 = arith.constant 660 : index
    %c0_194 = arith.constant 0 : index
    %495 = vector.load %arg11[%c660, %c0_194] : memref<900x64xf32, #tpu.memory_space<vmem>>, vector<30x64xf32>
    %496 = arith.maximumf %493, %494 : vector<30x64xf32>
    %497 = arith.maximumf %496, %495 : vector<30x64xf32>
    %498 = vector.extract_strided_slice %497 {offsets = [0, 0], sizes = [3, 64], strides = [1, 1]} : vector<30x64xf32> to vector<3x64xf32>
    %cst_195 = arith.constant dense<0xFF800000> : vector<64xf32>
    %499 = vector.multi_reduction <maximumf>, %498, %cst_195 [0] : vector<3x64xf32> to vector<64xf32>
    %500 = vector.shape_cast %499 : vector<64xf32> to vector<1x64xf32>
    %501 = vector.extract_strided_slice %497 {offsets = [2, 0], sizes = [3, 64], strides = [1, 1]} : vector<30x64xf32> to vector<3x64xf32>
    %cst_196 = arith.constant dense<0xFF800000> : vector<64xf32>
    %502 = vector.multi_reduction <maximumf>, %501, %cst_196 [0] : vector<3x64xf32> to vector<64xf32>
    %503 = vector.shape_cast %502 : vector<64xf32> to vector<1x64xf32>
    %504 = vector.extract_strided_slice %497 {offsets = [4, 0], sizes = [3, 64], strides = [1, 1]} : vector<30x64xf32> to vector<3x64xf32>
    %cst_197 = arith.constant dense<0xFF800000> : vector<64xf32>
    %505 = vector.multi_reduction <maximumf>, %504, %cst_197 [0] : vector<3x64xf32> to vector<64xf32>
    %506 = vector.shape_cast %505 : vector<64xf32> to vector<1x64xf32>
    %507 = vector.extract_strided_slice %497 {offsets = [6, 0], sizes = [3, 64], strides = [1, 1]} : vector<30x64xf32> to vector<3x64xf32>
    %cst_198 = arith.constant dense<0xFF800000> : vector<64xf32>
    %508 = vector.multi_reduction <maximumf>, %507, %cst_198 [0] : vector<3x64xf32> to vector<64xf32>
    %509 = vector.shape_cast %508 : vector<64xf32> to vector<1x64xf32>
    %510 = vector.extract_strided_slice %497 {offsets = [8, 0], sizes = [3, 64], strides = [1, 1]} : vector<30x64xf32> to vector<3x64xf32>
    %cst_199 = arith.constant dense<0xFF800000> : vector<64xf32>
    %511 = vector.multi_reduction <maximumf>, %510, %cst_199 [0] : vector<3x64xf32> to vector<64xf32>
    %512 = vector.shape_cast %511 : vector<64xf32> to vector<1x64xf32>
    %513 = vector.extract_strided_slice %497 {offsets = [10, 0], sizes = [3, 64], strides = [1, 1]} : vector<30x64xf32> to vector<3x64xf32>
    %cst_200 = arith.constant dense<0xFF800000> : vector<64xf32>
    %514 = vector.multi_reduction <maximumf>, %513, %cst_200 [0] : vector<3x64xf32> to vector<64xf32>
    %515 = vector.shape_cast %514 : vector<64xf32> to vector<1x64xf32>
    %516 = vector.extract_strided_slice %497 {offsets = [12, 0], sizes = [3, 64], strides = [1, 1]} : vector<30x64xf32> to vector<3x64xf32>
    %cst_201 = arith.constant dense<0xFF800000> : vector<64xf32>
    %517 = vector.multi_reduction <maximumf>, %516, %cst_201 [0] : vector<3x64xf32> to vector<64xf32>
    %518 = vector.shape_cast %517 : vector<64xf32> to vector<1x64xf32>
    %519 = vector.extract_strided_slice %497 {offsets = [14, 0], sizes = [3, 64], strides = [1, 1]} : vector<30x64xf32> to vector<3x64xf32>
    %cst_202 = arith.constant dense<0xFF800000> : vector<64xf32>
    %520 = vector.multi_reduction <maximumf>, %519, %cst_202 [0] : vector<3x64xf32> to vector<64xf32>
    %521 = vector.shape_cast %520 : vector<64xf32> to vector<1x64xf32>
    %522 = vector.extract_strided_slice %497 {offsets = [16, 0], sizes = [3, 64], strides = [1, 1]} : vector<30x64xf32> to vector<3x64xf32>
    %cst_203 = arith.constant dense<0xFF800000> : vector<64xf32>
    %523 = vector.multi_reduction <maximumf>, %522, %cst_203 [0] : vector<3x64xf32> to vector<64xf32>
    %524 = vector.shape_cast %523 : vector<64xf32> to vector<1x64xf32>
    %525 = vector.extract_strided_slice %497 {offsets = [18, 0], sizes = [3, 64], strides = [1, 1]} : vector<30x64xf32> to vector<3x64xf32>
    %cst_204 = arith.constant dense<0xFF800000> : vector<64xf32>
    %526 = vector.multi_reduction <maximumf>, %525, %cst_204 [0] : vector<3x64xf32> to vector<64xf32>
    %527 = vector.shape_cast %526 : vector<64xf32> to vector<1x64xf32>
    %528 = vector.extract_strided_slice %497 {offsets = [20, 0], sizes = [3, 64], strides = [1, 1]} : vector<30x64xf32> to vector<3x64xf32>
    %cst_205 = arith.constant dense<0xFF800000> : vector<64xf32>
    %529 = vector.multi_reduction <maximumf>, %528, %cst_205 [0] : vector<3x64xf32> to vector<64xf32>
    %530 = vector.shape_cast %529 : vector<64xf32> to vector<1x64xf32>
    %531 = vector.extract_strided_slice %497 {offsets = [22, 0], sizes = [3, 64], strides = [1, 1]} : vector<30x64xf32> to vector<3x64xf32>
    %cst_206 = arith.constant dense<0xFF800000> : vector<64xf32>
    %532 = vector.multi_reduction <maximumf>, %531, %cst_206 [0] : vector<3x64xf32> to vector<64xf32>
    %533 = vector.shape_cast %532 : vector<64xf32> to vector<1x64xf32>
    %534 = vector.extract_strided_slice %497 {offsets = [24, 0], sizes = [3, 64], strides = [1, 1]} : vector<30x64xf32> to vector<3x64xf32>
    %cst_207 = arith.constant dense<0xFF800000> : vector<64xf32>
    %535 = vector.multi_reduction <maximumf>, %534, %cst_207 [0] : vector<3x64xf32> to vector<64xf32>
    %536 = vector.shape_cast %535 : vector<64xf32> to vector<1x64xf32>
    %537 = vector.extract_strided_slice %497 {offsets = [26, 0], sizes = [3, 64], strides = [1, 1]} : vector<30x64xf32> to vector<3x64xf32>
    %cst_208 = arith.constant dense<0xFF800000> : vector<64xf32>
    %538 = vector.multi_reduction <maximumf>, %537, %cst_208 [0] : vector<3x64xf32> to vector<64xf32>
    %539 = vector.shape_cast %538 : vector<64xf32> to vector<1x64xf32>
    %540 = tpu.concatenate %500, %503, %506, %509, %512, %515, %518, %521, %524, %527, %530, %533, %536, %539 in 0 : vector<1x64xf32>, vector<1x64xf32>, vector<1x64xf32>, vector<1x64xf32>, vector<1x64xf32>, vector<1x64xf32>, vector<1x64xf32>, vector<1x64xf32>, vector<1x64xf32>, vector<1x64xf32>, vector<1x64xf32>, vector<1x64xf32>, vector<1x64xf32>, vector<1x64xf32> -> vector<14x64xf32>
    %c660_209 = arith.constant 660 : index
    %c0_210 = arith.constant 0 : index
    %541 = vector.load %arg11[%c660_209, %c0_210] : memref<900x64xf32, #tpu.memory_space<vmem>>, vector<30x64xf32>
    %c690 = arith.constant 690 : index
    %c0_211 = arith.constant 0 : index
    %542 = vector.load %arg11[%c690, %c0_211] : memref<900x64xf32, #tpu.memory_space<vmem>>, vector<30x64xf32>
    %c720 = arith.constant 720 : index
    %c0_212 = arith.constant 0 : index
    %543 = vector.load %arg11[%c720, %c0_212] : memref<900x64xf32, #tpu.memory_space<vmem>>, vector<30x64xf32>
    %544 = arith.maximumf %541, %542 : vector<30x64xf32>
    %545 = arith.maximumf %544, %543 : vector<30x64xf32>
    %546 = vector.extract_strided_slice %545 {offsets = [0, 0], sizes = [3, 64], strides = [1, 1]} : vector<30x64xf32> to vector<3x64xf32>
    %cst_213 = arith.constant dense<0xFF800000> : vector<64xf32>
    %547 = vector.multi_reduction <maximumf>, %546, %cst_213 [0] : vector<3x64xf32> to vector<64xf32>
    %548 = vector.shape_cast %547 : vector<64xf32> to vector<1x64xf32>
    %549 = vector.extract_strided_slice %545 {offsets = [2, 0], sizes = [3, 64], strides = [1, 1]} : vector<30x64xf32> to vector<3x64xf32>
    %cst_214 = arith.constant dense<0xFF800000> : vector<64xf32>
    %550 = vector.multi_reduction <maximumf>, %549, %cst_214 [0] : vector<3x64xf32> to vector<64xf32>
    %551 = vector.shape_cast %550 : vector<64xf32> to vector<1x64xf32>
    %552 = vector.extract_strided_slice %545 {offsets = [4, 0], sizes = [3, 64], strides = [1, 1]} : vector<30x64xf32> to vector<3x64xf32>
    %cst_215 = arith.constant dense<0xFF800000> : vector<64xf32>
    %553 = vector.multi_reduction <maximumf>, %552, %cst_215 [0] : vector<3x64xf32> to vector<64xf32>
    %554 = vector.shape_cast %553 : vector<64xf32> to vector<1x64xf32>
    %555 = vector.extract_strided_slice %545 {offsets = [6, 0], sizes = [3, 64], strides = [1, 1]} : vector<30x64xf32> to vector<3x64xf32>
    %cst_216 = arith.constant dense<0xFF800000> : vector<64xf32>
    %556 = vector.multi_reduction <maximumf>, %555, %cst_216 [0] : vector<3x64xf32> to vector<64xf32>
    %557 = vector.shape_cast %556 : vector<64xf32> to vector<1x64xf32>
    %558 = vector.extract_strided_slice %545 {offsets = [8, 0], sizes = [3, 64], strides = [1, 1]} : vector<30x64xf32> to vector<3x64xf32>
    %cst_217 = arith.constant dense<0xFF800000> : vector<64xf32>
    %559 = vector.multi_reduction <maximumf>, %558, %cst_217 [0] : vector<3x64xf32> to vector<64xf32>
    %560 = vector.shape_cast %559 : vector<64xf32> to vector<1x64xf32>
    %561 = vector.extract_strided_slice %545 {offsets = [10, 0], sizes = [3, 64], strides = [1, 1]} : vector<30x64xf32> to vector<3x64xf32>
    %cst_218 = arith.constant dense<0xFF800000> : vector<64xf32>
    %562 = vector.multi_reduction <maximumf>, %561, %cst_218 [0] : vector<3x64xf32> to vector<64xf32>
    %563 = vector.shape_cast %562 : vector<64xf32> to vector<1x64xf32>
    %564 = vector.extract_strided_slice %545 {offsets = [12, 0], sizes = [3, 64], strides = [1, 1]} : vector<30x64xf32> to vector<3x64xf32>
    %cst_219 = arith.constant dense<0xFF800000> : vector<64xf32>
    %565 = vector.multi_reduction <maximumf>, %564, %cst_219 [0] : vector<3x64xf32> to vector<64xf32>
    %566 = vector.shape_cast %565 : vector<64xf32> to vector<1x64xf32>
    %567 = vector.extract_strided_slice %545 {offsets = [14, 0], sizes = [3, 64], strides = [1, 1]} : vector<30x64xf32> to vector<3x64xf32>
    %cst_220 = arith.constant dense<0xFF800000> : vector<64xf32>
    %568 = vector.multi_reduction <maximumf>, %567, %cst_220 [0] : vector<3x64xf32> to vector<64xf32>
    %569 = vector.shape_cast %568 : vector<64xf32> to vector<1x64xf32>
    %570 = vector.extract_strided_slice %545 {offsets = [16, 0], sizes = [3, 64], strides = [1, 1]} : vector<30x64xf32> to vector<3x64xf32>
    %cst_221 = arith.constant dense<0xFF800000> : vector<64xf32>
    %571 = vector.multi_reduction <maximumf>, %570, %cst_221 [0] : vector<3x64xf32> to vector<64xf32>
    %572 = vector.shape_cast %571 : vector<64xf32> to vector<1x64xf32>
    %573 = vector.extract_strided_slice %545 {offsets = [18, 0], sizes = [3, 64], strides = [1, 1]} : vector<30x64xf32> to vector<3x64xf32>
    %cst_222 = arith.constant dense<0xFF800000> : vector<64xf32>
    %574 = vector.multi_reduction <maximumf>, %573, %cst_222 [0] : vector<3x64xf32> to vector<64xf32>
    %575 = vector.shape_cast %574 : vector<64xf32> to vector<1x64xf32>
    %576 = vector.extract_strided_slice %545 {offsets = [20, 0], sizes = [3, 64], strides = [1, 1]} : vector<30x64xf32> to vector<3x64xf32>
    %cst_223 = arith.constant dense<0xFF800000> : vector<64xf32>
    %577 = vector.multi_reduction <maximumf>, %576, %cst_223 [0] : vector<3x64xf32> to vector<64xf32>
    %578 = vector.shape_cast %577 : vector<64xf32> to vector<1x64xf32>
    %579 = vector.extract_strided_slice %545 {offsets = [22, 0], sizes = [3, 64], strides = [1, 1]} : vector<30x64xf32> to vector<3x64xf32>
    %cst_224 = arith.constant dense<0xFF800000> : vector<64xf32>
    %580 = vector.multi_reduction <maximumf>, %579, %cst_224 [0] : vector<3x64xf32> to vector<64xf32>
    %581 = vector.shape_cast %580 : vector<64xf32> to vector<1x64xf32>
    %582 = vector.extract_strided_slice %545 {offsets = [24, 0], sizes = [3, 64], strides = [1, 1]} : vector<30x64xf32> to vector<3x64xf32>
    %cst_225 = arith.constant dense<0xFF800000> : vector<64xf32>
    %583 = vector.multi_reduction <maximumf>, %582, %cst_225 [0] : vector<3x64xf32> to vector<64xf32>
    %584 = vector.shape_cast %583 : vector<64xf32> to vector<1x64xf32>
    %585 = vector.extract_strided_slice %545 {offsets = [26, 0], sizes = [3, 64], strides = [1, 1]} : vector<30x64xf32> to vector<3x64xf32>
    %cst_226 = arith.constant dense<0xFF800000> : vector<64xf32>
    %586 = vector.multi_reduction <maximumf>, %585, %cst_226 [0] : vector<3x64xf32> to vector<64xf32>
    %587 = vector.shape_cast %586 : vector<64xf32> to vector<1x64xf32>
    %588 = tpu.concatenate %548, %551, %554, %557, %560, %563, %566, %569, %572, %575, %578, %581, %584, %587 in 0 : vector<1x64xf32>, vector<1x64xf32>, vector<1x64xf32>, vector<1x64xf32>, vector<1x64xf32>, vector<1x64xf32>, vector<1x64xf32>, vector<1x64xf32>, vector<1x64xf32>, vector<1x64xf32>, vector<1x64xf32>, vector<1x64xf32>, vector<1x64xf32>, vector<1x64xf32> -> vector<14x64xf32>
    %c720_227 = arith.constant 720 : index
    %c0_228 = arith.constant 0 : index
    %589 = vector.load %arg11[%c720_227, %c0_228] : memref<900x64xf32, #tpu.memory_space<vmem>>, vector<30x64xf32>
    %c750 = arith.constant 750 : index
    %c0_229 = arith.constant 0 : index
    %590 = vector.load %arg11[%c750, %c0_229] : memref<900x64xf32, #tpu.memory_space<vmem>>, vector<30x64xf32>
    %c780 = arith.constant 780 : index
    %c0_230 = arith.constant 0 : index
    %591 = vector.load %arg11[%c780, %c0_230] : memref<900x64xf32, #tpu.memory_space<vmem>>, vector<30x64xf32>
    %592 = arith.maximumf %589, %590 : vector<30x64xf32>
    %593 = arith.maximumf %592, %591 : vector<30x64xf32>
    %594 = vector.extract_strided_slice %593 {offsets = [0, 0], sizes = [3, 64], strides = [1, 1]} : vector<30x64xf32> to vector<3x64xf32>
    %cst_231 = arith.constant dense<0xFF800000> : vector<64xf32>
    %595 = vector.multi_reduction <maximumf>, %594, %cst_231 [0] : vector<3x64xf32> to vector<64xf32>
    %596 = vector.shape_cast %595 : vector<64xf32> to vector<1x64xf32>
    %597 = vector.extract_strided_slice %593 {offsets = [2, 0], sizes = [3, 64], strides = [1, 1]} : vector<30x64xf32> to vector<3x64xf32>
    %cst_232 = arith.constant dense<0xFF800000> : vector<64xf32>
    %598 = vector.multi_reduction <maximumf>, %597, %cst_232 [0] : vector<3x64xf32> to vector<64xf32>
    %599 = vector.shape_cast %598 : vector<64xf32> to vector<1x64xf32>
    %600 = vector.extract_strided_slice %593 {offsets = [4, 0], sizes = [3, 64], strides = [1, 1]} : vector<30x64xf32> to vector<3x64xf32>
    %cst_233 = arith.constant dense<0xFF800000> : vector<64xf32>
    %601 = vector.multi_reduction <maximumf>, %600, %cst_233 [0] : vector<3x64xf32> to vector<64xf32>
    %602 = vector.shape_cast %601 : vector<64xf32> to vector<1x64xf32>
    %603 = vector.extract_strided_slice %593 {offsets = [6, 0], sizes = [3, 64], strides = [1, 1]} : vector<30x64xf32> to vector<3x64xf32>
    %cst_234 = arith.constant dense<0xFF800000> : vector<64xf32>
    %604 = vector.multi_reduction <maximumf>, %603, %cst_234 [0] : vector<3x64xf32> to vector<64xf32>
    %605 = vector.shape_cast %604 : vector<64xf32> to vector<1x64xf32>
    %606 = vector.extract_strided_slice %593 {offsets = [8, 0], sizes = [3, 64], strides = [1, 1]} : vector<30x64xf32> to vector<3x64xf32>
    %cst_235 = arith.constant dense<0xFF800000> : vector<64xf32>
    %607 = vector.multi_reduction <maximumf>, %606, %cst_235 [0] : vector<3x64xf32> to vector<64xf32>
    %608 = vector.shape_cast %607 : vector<64xf32> to vector<1x64xf32>
    %609 = vector.extract_strided_slice %593 {offsets = [10, 0], sizes = [3, 64], strides = [1, 1]} : vector<30x64xf32> to vector<3x64xf32>
    %cst_236 = arith.constant dense<0xFF800000> : vector<64xf32>
    %610 = vector.multi_reduction <maximumf>, %609, %cst_236 [0] : vector<3x64xf32> to vector<64xf32>
    %611 = vector.shape_cast %610 : vector<64xf32> to vector<1x64xf32>
    %612 = vector.extract_strided_slice %593 {offsets = [12, 0], sizes = [3, 64], strides = [1, 1]} : vector<30x64xf32> to vector<3x64xf32>
    %cst_237 = arith.constant dense<0xFF800000> : vector<64xf32>
    %613 = vector.multi_reduction <maximumf>, %612, %cst_237 [0] : vector<3x64xf32> to vector<64xf32>
    %614 = vector.shape_cast %613 : vector<64xf32> to vector<1x64xf32>
    %615 = vector.extract_strided_slice %593 {offsets = [14, 0], sizes = [3, 64], strides = [1, 1]} : vector<30x64xf32> to vector<3x64xf32>
    %cst_238 = arith.constant dense<0xFF800000> : vector<64xf32>
    %616 = vector.multi_reduction <maximumf>, %615, %cst_238 [0] : vector<3x64xf32> to vector<64xf32>
    %617 = vector.shape_cast %616 : vector<64xf32> to vector<1x64xf32>
    %618 = vector.extract_strided_slice %593 {offsets = [16, 0], sizes = [3, 64], strides = [1, 1]} : vector<30x64xf32> to vector<3x64xf32>
    %cst_239 = arith.constant dense<0xFF800000> : vector<64xf32>
    %619 = vector.multi_reduction <maximumf>, %618, %cst_239 [0] : vector<3x64xf32> to vector<64xf32>
    %620 = vector.shape_cast %619 : vector<64xf32> to vector<1x64xf32>
    %621 = vector.extract_strided_slice %593 {offsets = [18, 0], sizes = [3, 64], strides = [1, 1]} : vector<30x64xf32> to vector<3x64xf32>
    %cst_240 = arith.constant dense<0xFF800000> : vector<64xf32>
    %622 = vector.multi_reduction <maximumf>, %621, %cst_240 [0] : vector<3x64xf32> to vector<64xf32>
    %623 = vector.shape_cast %622 : vector<64xf32> to vector<1x64xf32>
    %624 = vector.extract_strided_slice %593 {offsets = [20, 0], sizes = [3, 64], strides = [1, 1]} : vector<30x64xf32> to vector<3x64xf32>
    %cst_241 = arith.constant dense<0xFF800000> : vector<64xf32>
    %625 = vector.multi_reduction <maximumf>, %624, %cst_241 [0] : vector<3x64xf32> to vector<64xf32>
    %626 = vector.shape_cast %625 : vector<64xf32> to vector<1x64xf32>
    %627 = vector.extract_strided_slice %593 {offsets = [22, 0], sizes = [3, 64], strides = [1, 1]} : vector<30x64xf32> to vector<3x64xf32>
    %cst_242 = arith.constant dense<0xFF800000> : vector<64xf32>
    %628 = vector.multi_reduction <maximumf>, %627, %cst_242 [0] : vector<3x64xf32> to vector<64xf32>
    %629 = vector.shape_cast %628 : vector<64xf32> to vector<1x64xf32>
    %630 = vector.extract_strided_slice %593 {offsets = [24, 0], sizes = [3, 64], strides = [1, 1]} : vector<30x64xf32> to vector<3x64xf32>
    %cst_243 = arith.constant dense<0xFF800000> : vector<64xf32>
    %631 = vector.multi_reduction <maximumf>, %630, %cst_243 [0] : vector<3x64xf32> to vector<64xf32>
    %632 = vector.shape_cast %631 : vector<64xf32> to vector<1x64xf32>
    %633 = vector.extract_strided_slice %593 {offsets = [26, 0], sizes = [3, 64], strides = [1, 1]} : vector<30x64xf32> to vector<3x64xf32>
    %cst_244 = arith.constant dense<0xFF800000> : vector<64xf32>
    %634 = vector.multi_reduction <maximumf>, %633, %cst_244 [0] : vector<3x64xf32> to vector<64xf32>
    %635 = vector.shape_cast %634 : vector<64xf32> to vector<1x64xf32>
    %636 = tpu.concatenate %596, %599, %602, %605, %608, %611, %614, %617, %620, %623, %626, %629, %632, %635 in 0 : vector<1x64xf32>, vector<1x64xf32>, vector<1x64xf32>, vector<1x64xf32>, vector<1x64xf32>, vector<1x64xf32>, vector<1x64xf32>, vector<1x64xf32>, vector<1x64xf32>, vector<1x64xf32>, vector<1x64xf32>, vector<1x64xf32>, vector<1x64xf32>, vector<1x64xf32> -> vector<14x64xf32>
    %c780_245 = arith.constant 780 : index
    %c0_246 = arith.constant 0 : index
    %637 = vector.load %arg11[%c780_245, %c0_246] : memref<900x64xf32, #tpu.memory_space<vmem>>, vector<30x64xf32>
    %c810 = arith.constant 810 : index
    %c0_247 = arith.constant 0 : index
    %638 = vector.load %arg11[%c810, %c0_247] : memref<900x64xf32, #tpu.memory_space<vmem>>, vector<30x64xf32>
    %c840 = arith.constant 840 : index
    %c0_248 = arith.constant 0 : index
    %639 = vector.load %arg11[%c840, %c0_248] : memref<900x64xf32, #tpu.memory_space<vmem>>, vector<30x64xf32>
    %640 = arith.maximumf %637, %638 : vector<30x64xf32>
    %641 = arith.maximumf %640, %639 : vector<30x64xf32>
    %642 = vector.extract_strided_slice %641 {offsets = [0, 0], sizes = [3, 64], strides = [1, 1]} : vector<30x64xf32> to vector<3x64xf32>
    %cst_249 = arith.constant dense<0xFF800000> : vector<64xf32>
    %643 = vector.multi_reduction <maximumf>, %642, %cst_249 [0] : vector<3x64xf32> to vector<64xf32>
    %644 = vector.shape_cast %643 : vector<64xf32> to vector<1x64xf32>
    %645 = vector.extract_strided_slice %641 {offsets = [2, 0], sizes = [3, 64], strides = [1, 1]} : vector<30x64xf32> to vector<3x64xf32>
    %cst_250 = arith.constant dense<0xFF800000> : vector<64xf32>
    %646 = vector.multi_reduction <maximumf>, %645, %cst_250 [0] : vector<3x64xf32> to vector<64xf32>
    %647 = vector.shape_cast %646 : vector<64xf32> to vector<1x64xf32>
    %648 = vector.extract_strided_slice %641 {offsets = [4, 0], sizes = [3, 64], strides = [1, 1]} : vector<30x64xf32> to vector<3x64xf32>
    %cst_251 = arith.constant dense<0xFF800000> : vector<64xf32>
    %649 = vector.multi_reduction <maximumf>, %648, %cst_251 [0] : vector<3x64xf32> to vector<64xf32>
    %650 = vector.shape_cast %649 : vector<64xf32> to vector<1x64xf32>
    %651 = vector.extract_strided_slice %641 {offsets = [6, 0], sizes = [3, 64], strides = [1, 1]} : vector<30x64xf32> to vector<3x64xf32>
    %cst_252 = arith.constant dense<0xFF800000> : vector<64xf32>
    %652 = vector.multi_reduction <maximumf>, %651, %cst_252 [0] : vector<3x64xf32> to vector<64xf32>
    %653 = vector.shape_cast %652 : vector<64xf32> to vector<1x64xf32>
    %654 = vector.extract_strided_slice %641 {offsets = [8, 0], sizes = [3, 64], strides = [1, 1]} : vector<30x64xf32> to vector<3x64xf32>
    %cst_253 = arith.constant dense<0xFF800000> : vector<64xf32>
    %655 = vector.multi_reduction <maximumf>, %654, %cst_253 [0] : vector<3x64xf32> to vector<64xf32>
    %656 = vector.shape_cast %655 : vector<64xf32> to vector<1x64xf32>
    %657 = vector.extract_strided_slice %641 {offsets = [10, 0], sizes = [3, 64], strides = [1, 1]} : vector<30x64xf32> to vector<3x64xf32>
    %cst_254 = arith.constant dense<0xFF800000> : vector<64xf32>
    %658 = vector.multi_reduction <maximumf>, %657, %cst_254 [0] : vector<3x64xf32> to vector<64xf32>
    %659 = vector.shape_cast %658 : vector<64xf32> to vector<1x64xf32>
    %660 = vector.extract_strided_slice %641 {offsets = [12, 0], sizes = [3, 64], strides = [1, 1]} : vector<30x64xf32> to vector<3x64xf32>
    %cst_255 = arith.constant dense<0xFF800000> : vector<64xf32>
    %661 = vector.multi_reduction <maximumf>, %660, %cst_255 [0] : vector<3x64xf32> to vector<64xf32>
    %662 = vector.shape_cast %661 : vector<64xf32> to vector<1x64xf32>
    %663 = vector.extract_strided_slice %641 {offsets = [14, 0], sizes = [3, 64], strides = [1, 1]} : vector<30x64xf32> to vector<3x64xf32>
    %cst_256 = arith.constant dense<0xFF800000> : vector<64xf32>
    %664 = vector.multi_reduction <maximumf>, %663, %cst_256 [0] : vector<3x64xf32> to vector<64xf32>
    %665 = vector.shape_cast %664 : vector<64xf32> to vector<1x64xf32>
    %666 = vector.extract_strided_slice %641 {offsets = [16, 0], sizes = [3, 64], strides = [1, 1]} : vector<30x64xf32> to vector<3x64xf32>
    %cst_257 = arith.constant dense<0xFF800000> : vector<64xf32>
    %667 = vector.multi_reduction <maximumf>, %666, %cst_257 [0] : vector<3x64xf32> to vector<64xf32>
    %668 = vector.shape_cast %667 : vector<64xf32> to vector<1x64xf32>
    %669 = vector.extract_strided_slice %641 {offsets = [18, 0], sizes = [3, 64], strides = [1, 1]} : vector<30x64xf32> to vector<3x64xf32>
    %cst_258 = arith.constant dense<0xFF800000> : vector<64xf32>
    %670 = vector.multi_reduction <maximumf>, %669, %cst_258 [0] : vector<3x64xf32> to vector<64xf32>
    %671 = vector.shape_cast %670 : vector<64xf32> to vector<1x64xf32>
    %672 = vector.extract_strided_slice %641 {offsets = [20, 0], sizes = [3, 64], strides = [1, 1]} : vector<30x64xf32> to vector<3x64xf32>
    %cst_259 = arith.constant dense<0xFF800000> : vector<64xf32>
    %673 = vector.multi_reduction <maximumf>, %672, %cst_259 [0] : vector<3x64xf32> to vector<64xf32>
    %674 = vector.shape_cast %673 : vector<64xf32> to vector<1x64xf32>
    %675 = vector.extract_strided_slice %641 {offsets = [22, 0], sizes = [3, 64], strides = [1, 1]} : vector<30x64xf32> to vector<3x64xf32>
    %cst_260 = arith.constant dense<0xFF800000> : vector<64xf32>
    %676 = vector.multi_reduction <maximumf>, %675, %cst_260 [0] : vector<3x64xf32> to vector<64xf32>
    %677 = vector.shape_cast %676 : vector<64xf32> to vector<1x64xf32>
    %678 = vector.extract_strided_slice %641 {offsets = [24, 0], sizes = [3, 64], strides = [1, 1]} : vector<30x64xf32> to vector<3x64xf32>
    %cst_261 = arith.constant dense<0xFF800000> : vector<64xf32>
    %679 = vector.multi_reduction <maximumf>, %678, %cst_261 [0] : vector<3x64xf32> to vector<64xf32>
    %680 = vector.shape_cast %679 : vector<64xf32> to vector<1x64xf32>
    %681 = vector.extract_strided_slice %641 {offsets = [26, 0], sizes = [3, 64], strides = [1, 1]} : vector<30x64xf32> to vector<3x64xf32>
    %cst_262 = arith.constant dense<0xFF800000> : vector<64xf32>
    %682 = vector.multi_reduction <maximumf>, %681, %cst_262 [0] : vector<3x64xf32> to vector<64xf32>
    %683 = vector.shape_cast %682 : vector<64xf32> to vector<1x64xf32>
    %684 = tpu.concatenate %644, %647, %650, %653, %656, %659, %662, %665, %668, %671, %674, %677, %680, %683 in 0 : vector<1x64xf32>, vector<1x64xf32>, vector<1x64xf32>, vector<1x64xf32>, vector<1x64xf32>, vector<1x64xf32>, vector<1x64xf32>, vector<1x64xf32>, vector<1x64xf32>, vector<1x64xf32>, vector<1x64xf32>, vector<1x64xf32>, vector<1x64xf32>, vector<1x64xf32> -> vector<14x64xf32>
    %c0_263 = arith.constant 0 : index
    %c0_264 = arith.constant 0 : index
    %685 = vector.load %arg12[%c0_263, %c0_264] : memref<196x64xf32, #tpu.memory_space<vmem>>, vector<14x64xf32>
    tpu.vector_store %arg12[%c0_263, %c0_264], %60 {strides = array<i32>} : memref<196x64xf32, #tpu.memory_space<vmem>>, vector<14x64xf32>,
    %c14 = arith.constant 14 : index
    %c0_265 = arith.constant 0 : index
    %686 = vector.load %arg12[%c14, %c0_265] : memref<196x64xf32, #tpu.memory_space<vmem>>, vector<14x64xf32>
    tpu.vector_store %arg12[%c14, %c0_265], %108 {strides = array<i32>} : memref<196x64xf32, #tpu.memory_space<vmem>>, vector<14x64xf32>,
    %c28 = arith.constant 28 : index
    %c0_266 = arith.constant 0 : index
    %687 = vector.load %arg12[%c28, %c0_266] : memref<196x64xf32, #tpu.memory_space<vmem>>, vector<14x64xf32>
    tpu.vector_store %arg12[%c28, %c0_266], %156 {strides = array<i32>} : memref<196x64xf32, #tpu.memory_space<vmem>>, vector<14x64xf32>,
    %c42 = arith.constant 42 : index
    %c0_267 = arith.constant 0 : index
    %688 = vector.load %arg12[%c42, %c0_267] : memref<196x64xf32, #tpu.memory_space<vmem>>, vector<14x64xf32>
    tpu.vector_store %arg12[%c42, %c0_267], %204 {strides = array<i32>} : memref<196x64xf32, #tpu.memory_space<vmem>>, vector<14x64xf32>,
    %c56 = arith.constant 56 : index
    %c0_268 = arith.constant 0 : index
    %689 = vector.load %arg12[%c56, %c0_268] : memref<196x64xf32, #tpu.memory_space<vmem>>, vector<14x64xf32>
    tpu.vector_store %arg12[%c56, %c0_268], %252 {strides = array<i32>} : memref<196x64xf32, #tpu.memory_space<vmem>>, vector<14x64xf32>,
    %c70 = arith.constant 70 : index
    %c0_269 = arith.constant 0 : index
    %690 = vector.load %arg12[%c70, %c0_269] : memref<196x64xf32, #tpu.memory_space<vmem>>, vector<14x64xf32>
    tpu.vector_store %arg12[%c70, %c0_269], %300 {strides = array<i32>} : memref<196x64xf32, #tpu.memory_space<vmem>>, vector<14x64xf32>,
    %c84 = arith.constant 84 : index
    %c0_270 = arith.constant 0 : index
    %691 = vector.load %arg12[%c84, %c0_270] : memref<196x64xf32, #tpu.memory_space<vmem>>, vector<14x64xf32>
    tpu.vector_store %arg12[%c84, %c0_270], %348 {strides = array<i32>} : memref<196x64xf32, #tpu.memory_space<vmem>>, vector<14x64xf32>,
    %c98 = arith.constant 98 : index
    %c0_271 = arith.constant 0 : index
    %692 = vector.load %arg12[%c98, %c0_271] : memref<196x64xf32, #tpu.memory_space<vmem>>, vector<14x64xf32>
    tpu.vector_store %arg12[%c98, %c0_271], %396 {strides = array<i32>} : memref<196x64xf32, #tpu.memory_space<vmem>>, vector<14x64xf32>,
    %c112 = arith.constant 112 : index
    %c0_272 = arith.constant 0 : index
    %693 = vector.load %arg12[%c112, %c0_272] : memref<196x64xf32, #tpu.memory_space<vmem>>, vector<14x64xf32>
    tpu.vector_store %arg12[%c112, %c0_272], %444 {strides = array<i32>} : memref<196x64xf32, #tpu.memory_space<vmem>>, vector<14x64xf32>,
    %c126 = arith.constant 126 : index
    %c0_273 = arith.constant 0 : index
    %694 = vector.load %arg12[%c126, %c0_273] : memref<196x64xf32, #tpu.memory_space<vmem>>, vector<14x64xf32>
    tpu.vector_store %arg12[%c126, %c0_273], %492 {strides = array<i32>} : memref<196x64xf32, #tpu.memory_space<vmem>>, vector<14x64xf32>,
    %c140 = arith.constant 140 : index
    %c0_274 = arith.constant 0 : index
    %695 = vector.load %arg12[%c140, %c0_274] : memref<196x64xf32, #tpu.memory_space<vmem>>, vector<14x64xf32>
    tpu.vector_store %arg12[%c140, %c0_274], %540 {strides = array<i32>} : memref<196x64xf32, #tpu.memory_space<vmem>>, vector<14x64xf32>,
    %c154 = arith.constant 154 : index
    %c0_275 = arith.constant 0 : index
    %696 = vector.load %arg12[%c154, %c0_275] : memref<196x64xf32, #tpu.memory_space<vmem>>, vector<14x64xf32>
    tpu.vector_store %arg12[%c154, %c0_275], %588 {strides = array<i32>} : memref<196x64xf32, #tpu.memory_space<vmem>>, vector<14x64xf32>,
    %c168 = arith.constant 168 : index
    %c0_276 = arith.constant 0 : index
    %697 = vector.load %arg12[%c168, %c0_276] : memref<196x64xf32, #tpu.memory_space<vmem>>, vector<14x64xf32>
    tpu.vector_store %arg12[%c168, %c0_276], %636 {strides = array<i32>} : memref<196x64xf32, #tpu.memory_space<vmem>>, vector<14x64xf32>,
    %c182 = arith.constant 182 : index
    %c0_277 = arith.constant 0 : index
    %698 = vector.load %arg12[%c182, %c0_277] : memref<196x64xf32, #tpu.memory_space<vmem>>, vector<14x64xf32>
    tpu.vector_store %arg12[%c182, %c0_277], %684 {strides = array<i32>} : memref<196x64xf32, #tpu.memory_space<vmem>>, vector<14x64xf32>,
    %c0_278 = arith.constant 0 : index
    %c0_279 = arith.constant 0 : index
    %699 = vector.load %arg12[%c0_278, %c0_279] : memref<196x64xf32, #tpu.memory_space<vmem>>, vector<12x64xf32>
    %c1 = arith.constant 1 : index
    %c0_280 = arith.constant 0 : index
    %700 = vector.load %arg12[%c1, %c0_280] : memref<196x64xf32, #tpu.memory_space<vmem>>, vector<12x64xf32>
    %c2 = arith.constant 2 : index
    %c0_281 = arith.constant 0 : index
    %701 = vector.load %arg12[%c2, %c0_281] : memref<196x64xf32, #tpu.memory_space<vmem>>, vector<12x64xf32>
    %c14_282 = arith.constant 14 : index
    %c0_283 = arith.constant 0 : index
    %702 = vector.load %arg12[%c14_282, %c0_283] : memref<196x64xf32, #tpu.memory_space<vmem>>, vector<12x64xf32>
    %c15 = arith.constant 15 : index
    %c0_284 = arith.constant 0 : index
    %703 = vector.load %arg12[%c15, %c0_284] : memref<196x64xf32, #tpu.memory_space<vmem>>, vector<12x64xf32>
    %c16 = arith.constant 16 : index
    %c0_285 = arith.constant 0 : index
    %704 = vector.load %arg12[%c16, %c0_285] : memref<196x64xf32, #tpu.memory_space<vmem>>, vector<12x64xf32>
    %c28_286 = arith.constant 28 : index
    %c0_287 = arith.constant 0 : index
    %705 = vector.load %arg12[%c28_286, %c0_287] : memref<196x64xf32, #tpu.memory_space<vmem>>, vector<12x64xf32>
    %c29 = arith.constant 29 : index
    %c0_288 = arith.constant 0 : index
    %706 = vector.load %arg12[%c29, %c0_288] : memref<196x64xf32, #tpu.memory_space<vmem>>, vector<12x64xf32>
    %c30_289 = arith.constant 30 : index
    %c0_290 = arith.constant 0 : index
    %707 = vector.load %arg12[%c30_289, %c0_290] : memref<196x64xf32, #tpu.memory_space<vmem>>, vector<12x64xf32>
    %708 = tpu.concatenate %699, %700, %701, %702, %703, %704, %705, %706, %707 in 1 : vector<12x64xf32>, vector<12x64xf32>, vector<12x64xf32>, vector<12x64xf32>, vector<12x64xf32>, vector<12x64xf32>, vector<12x64xf32>, vector<12x64xf32>, vector<12x64xf32> -> vector<12x576xf32>
    %c0_291 = arith.constant 0 : index
    %c0_292 = arith.constant 0 : index
    %709 = vector.load %arg13[%c0_291, %c0_292] : memref<144x576xf32, #tpu.memory_space<vmem>>, vector<12x576xf32>
    tpu.vector_store %arg13[%c0_291, %c0_292], %708 {strides = array<i32>} : memref<144x576xf32, #tpu.memory_space<vmem>>, vector<12x576xf32>,
    %c14_293 = arith.constant 14 : index
    %c0_294 = arith.constant 0 : index
    %710 = vector.load %arg12[%c14_293, %c0_294] : memref<196x64xf32, #tpu.memory_space<vmem>>, vector<12x64xf32>
    %c15_295 = arith.constant 15 : index
    %c0_296 = arith.constant 0 : index
    %711 = vector.load %arg12[%c15_295, %c0_296] : memref<196x64xf32, #tpu.memory_space<vmem>>, vector<12x64xf32>
    %c16_297 = arith.constant 16 : index
    %c0_298 = arith.constant 0 : index
    %712 = vector.load %arg12[%c16_297, %c0_298] : memref<196x64xf32, #tpu.memory_space<vmem>>, vector<12x64xf32>
    %c28_299 = arith.constant 28 : index
    %c0_300 = arith.constant 0 : index
    %713 = vector.load %arg12[%c28_299, %c0_300] : memref<196x64xf32, #tpu.memory_space<vmem>>, vector<12x64xf32>
    %c29_301 = arith.constant 29 : index
    %c0_302 = arith.constant 0 : index
    %714 = vector.load %arg12[%c29_301, %c0_302] : memref<196x64xf32, #tpu.memory_space<vmem>>, vector<12x64xf32>
    %c30_303 = arith.constant 30 : index
    %c0_304 = arith.constant 0 : index
    %715 = vector.load %arg12[%c30_303, %c0_304] : memref<196x64xf32, #tpu.memory_space<vmem>>, vector<12x64xf32>
    %c42_305 = arith.constant 42 : index
    %c0_306 = arith.constant 0 : index
    %716 = vector.load %arg12[%c42_305, %c0_306] : memref<196x64xf32, #tpu.memory_space<vmem>>, vector<12x64xf32>
    %c43 = arith.constant 43 : index
    %c0_307 = arith.constant 0 : index
    %717 = vector.load %arg12[%c43, %c0_307] : memref<196x64xf32, #tpu.memory_space<vmem>>, vector<12x64xf32>
    %c44 = arith.constant 44 : index
    %c0_308 = arith.constant 0 : index
    %718 = vector.load %arg12[%c44, %c0_308] : memref<196x64xf32, #tpu.memory_space<vmem>>, vector<12x64xf32>
    %719 = tpu.concatenate %710, %711, %712, %713, %714, %715, %716, %717, %718 in 1 : vector<12x64xf32>, vector<12x64xf32>, vector<12x64xf32>, vector<12x64xf32>, vector<12x64xf32>, vector<12x64xf32>, vector<12x64xf32>, vector<12x64xf32>, vector<12x64xf32> -> vector<12x576xf32>
    %c12 = arith.constant 12 : index
    %c0_309 = arith.constant 0 : index
    %720 = vector.load %arg13[%c12, %c0_309] : memref<144x576xf32, #tpu.memory_space<vmem>>, vector<12x576xf32>
    tpu.vector_store %arg13[%c12, %c0_309], %719 {strides = array<i32>} : memref<144x576xf32, #tpu.memory_space<vmem>>, vector<12x576xf32>,
    %c28_310 = arith.constant 28 : index
    %c0_311 = arith.constant 0 : index
    %721 = vector.load %arg12[%c28_310, %c0_311] : memref<196x64xf32, #tpu.memory_space<vmem>>, vector<12x64xf32>
    %c29_312 = arith.constant 29 : index
    %c0_313 = arith.constant 0 : index
    %722 = vector.load %arg12[%c29_312, %c0_313] : memref<196x64xf32, #tpu.memory_space<vmem>>, vector<12x64xf32>
    %c30_314 = arith.constant 30 : index
    %c0_315 = arith.constant 0 : index
    %723 = vector.load %arg12[%c30_314, %c0_315] : memref<196x64xf32, #tpu.memory_space<vmem>>, vector<12x64xf32>
    %c42_316 = arith.constant 42 : index
    %c0_317 = arith.constant 0 : index
    %724 = vector.load %arg12[%c42_316, %c0_317] : memref<196x64xf32, #tpu.memory_space<vmem>>, vector<12x64xf32>
    %c43_318 = arith.constant 43 : index
    %c0_319 = arith.constant 0 : index
    %725 = vector.load %arg12[%c43_318, %c0_319] : memref<196x64xf32, #tpu.memory_space<vmem>>, vector<12x64xf32>
    %c44_320 = arith.constant 44 : index
    %c0_321 = arith.constant 0 : index
    %726 = vector.load %arg12[%c44_320, %c0_321] : memref<196x64xf32, #tpu.memory_space<vmem>>, vector<12x64xf32>
    %c56_322 = arith.constant 56 : index
    %c0_323 = arith.constant 0 : index
    %727 = vector.load %arg12[%c56_322, %c0_323] : memref<196x64xf32, #tpu.memory_space<vmem>>, vector<12x64xf32>
    %c57 = arith.constant 57 : index
    %c0_324 = arith.constant 0 : index
    %728 = vector.load %arg12[%c57, %c0_324] : memref<196x64xf32, #tpu.memory_space<vmem>>, vector<12x64xf32>
    %c58 = arith.constant 58 : index
    %c0_325 = arith.constant 0 : index
    %729 = vector.load %arg12[%c58, %c0_325] : memref<196x64xf32, #tpu.memory_space<vmem>>, vector<12x64xf32>
    %730 = tpu.concatenate %721, %722, %723, %724, %725, %726, %727, %728, %729 in 1 : vector<12x64xf32>, vector<12x64xf32>, vector<12x64xf32>, vector<12x64xf32>, vector<12x64xf32>, vector<12x64xf32>, vector<12x64xf32>, vector<12x64xf32>, vector<12x64xf32> -> vector<12x576xf32>
    %c24 = arith.constant 24 : index
    %c0_326 = arith.constant 0 : index
    %731 = vector.load %arg13[%c24, %c0_326] : memref<144x576xf32, #tpu.memory_space<vmem>>, vector<12x576xf32>
    tpu.vector_store %arg13[%c24, %c0_326], %730 {strides = array<i32>} : memref<144x576xf32, #tpu.memory_space<vmem>>, vector<12x576xf32>,
    %c42_327 = arith.constant 42 : index
    %c0_328 = arith.constant 0 : index
    %732 = vector.load %arg12[%c42_327, %c0_328] : memref<196x64xf32, #tpu.memory_space<vmem>>, vector<12x64xf32>
    %c43_329 = arith.constant 43 : index
    %c0_330 = arith.constant 0 : index
    %733 = vector.load %arg12[%c43_329, %c0_330] : memref<196x64xf32, #tpu.memory_space<vmem>>, vector<12x64xf32>
    %c44_331 = arith.constant 44 : index
    %c0_332 = arith.constant 0 : index
    %734 = vector.load %arg12[%c44_331, %c0_332] : memref<196x64xf32, #tpu.memory_space<vmem>>, vector<12x64xf32>
    %c56_333 = arith.constant 56 : index
    %c0_334 = arith.constant 0 : index
    %735 = vector.load %arg12[%c56_333, %c0_334] : memref<196x64xf32, #tpu.memory_space<vmem>>, vector<12x64xf32>
    %c57_335 = arith.constant 57 : index
    %c0_336 = arith.constant 0 : index
    %736 = vector.load %arg12[%c57_335, %c0_336] : memref<196x64xf32, #tpu.memory_space<vmem>>, vector<12x64xf32>
    %c58_337 = arith.constant 58 : index
    %c0_338 = arith.constant 0 : index
    %737 = vector.load %arg12[%c58_337, %c0_338] : memref<196x64xf32, #tpu.memory_space<vmem>>, vector<12x64xf32>
    %c70_339 = arith.constant 70 : index
    %c0_340 = arith.constant 0 : index
    %738 = vector.load %arg12[%c70_339, %c0_340] : memref<196x64xf32, #tpu.memory_space<vmem>>, vector<12x64xf32>
    %c71 = arith.constant 71 : index
    %c0_341 = arith.constant 0 : index
    %739 = vector.load %arg12[%c71, %c0_341] : memref<196x64xf32, #tpu.memory_space<vmem>>, vector<12x64xf32>
    %c72 = arith.constant 72 : index
    %c0_342 = arith.constant 0 : index
    %740 = vector.load %arg12[%c72, %c0_342] : memref<196x64xf32, #tpu.memory_space<vmem>>, vector<12x64xf32>
    %741 = tpu.concatenate %732, %733, %734, %735, %736, %737, %738, %739, %740 in 1 : vector<12x64xf32>, vector<12x64xf32>, vector<12x64xf32>, vector<12x64xf32>, vector<12x64xf32>, vector<12x64xf32>, vector<12x64xf32>, vector<12x64xf32>, vector<12x64xf32> -> vector<12x576xf32>
    %c36 = arith.constant 36 : index
    %c0_343 = arith.constant 0 : index
    %742 = vector.load %arg13[%c36, %c0_343] : memref<144x576xf32, #tpu.memory_space<vmem>>, vector<12x576xf32>
    tpu.vector_store %arg13[%c36, %c0_343], %741 {strides = array<i32>} : memref<144x576xf32, #tpu.memory_space<vmem>>, vector<12x576xf32>,
    %c56_344 = arith.constant 56 : index
    %c0_345 = arith.constant 0 : index
    %743 = vector.load %arg12[%c56_344, %c0_345] : memref<196x64xf32, #tpu.memory_space<vmem>>, vector<12x64xf32>
    %c57_346 = arith.constant 57 : index
    %c0_347 = arith.constant 0 : index
    %744 = vector.load %arg12[%c57_346, %c0_347] : memref<196x64xf32, #tpu.memory_space<vmem>>, vector<12x64xf32>
    %c58_348 = arith.constant 58 : index
    %c0_349 = arith.constant 0 : index
    %745 = vector.load %arg12[%c58_348, %c0_349] : memref<196x64xf32, #tpu.memory_space<vmem>>, vector<12x64xf32>
    %c70_350 = arith.constant 70 : index
    %c0_351 = arith.constant 0 : index
    %746 = vector.load %arg12[%c70_350, %c0_351] : memref<196x64xf32, #tpu.memory_space<vmem>>, vector<12x64xf32>
    %c71_352 = arith.constant 71 : index
    %c0_353 = arith.constant 0 : index
    %747 = vector.load %arg12[%c71_352, %c0_353] : memref<196x64xf32, #tpu.memory_space<vmem>>, vector<12x64xf32>
    %c72_354 = arith.constant 72 : index
    %c0_355 = arith.constant 0 : index
    %748 = vector.load %arg12[%c72_354, %c0_355] : memref<196x64xf32, #tpu.memory_space<vmem>>, vector<12x64xf32>
    %c84_356 = arith.constant 84 : index
    %c0_357 = arith.constant 0 : index
    %749 = vector.load %arg12[%c84_356, %c0_357] : memref<196x64xf32, #tpu.memory_space<vmem>>, vector<12x64xf32>
    %c85 = arith.constant 85 : index
    %c0_358 = arith.constant 0 : index
    %750 = vector.load %arg12[%c85, %c0_358] : memref<196x64xf32, #tpu.memory_space<vmem>>, vector<12x64xf32>
    %c86 = arith.constant 86 : index
    %c0_359 = arith.constant 0 : index
    %751 = vector.load %arg12[%c86, %c0_359] : memref<196x64xf32, #tpu.memory_space<vmem>>, vector<12x64xf32>
    %752 = tpu.concatenate %743, %744, %745, %746, %747, %748, %749, %750, %751 in 1 : vector<12x64xf32>, vector<12x64xf32>, vector<12x64xf32>, vector<12x64xf32>, vector<12x64xf32>, vector<12x64xf32>, vector<12x64xf32>, vector<12x64xf32>, vector<12x64xf32> -> vector<12x576xf32>
    %c48 = arith.constant 48 : index
    %c0_360 = arith.constant 0 : index
    %753 = vector.load %arg13[%c48, %c0_360] : memref<144x576xf32, #tpu.memory_space<vmem>>, vector<12x576xf32>
    tpu.vector_store %arg13[%c48, %c0_360], %752 {strides = array<i32>} : memref<144x576xf32, #tpu.memory_space<vmem>>, vector<12x576xf32>,
    %c70_361 = arith.constant 70 : index
    %c0_362 = arith.constant 0 : index
    %754 = vector.load %arg12[%c70_361, %c0_362] : memref<196x64xf32, #tpu.memory_space<vmem>>, vector<12x64xf32>
    %c71_363 = arith.constant 71 : index
    %c0_364 = arith.constant 0 : index
    %755 = vector.load %arg12[%c71_363, %c0_364] : memref<196x64xf32, #tpu.memory_space<vmem>>, vector<12x64xf32>
    %c72_365 = arith.constant 72 : index
    %c0_366 = arith.constant 0 : index
    %756 = vector.load %arg12[%c72_365, %c0_366] : memref<196x64xf32, #tpu.memory_space<vmem>>, vector<12x64xf32>
    %c84_367 = arith.constant 84 : index
    %c0_368 = arith.constant 0 : index
    %757 = vector.load %arg12[%c84_367, %c0_368] : memref<196x64xf32, #tpu.memory_space<vmem>>, vector<12x64xf32>
    %c85_369 = arith.constant 85 : index
    %c0_370 = arith.constant 0 : index
    %758 = vector.load %arg12[%c85_369, %c0_370] : memref<196x64xf32, #tpu.memory_space<vmem>>, vector<12x64xf32>
    %c86_371 = arith.constant 86 : index
    %c0_372 = arith.constant 0 : index
    %759 = vector.load %arg12[%c86_371, %c0_372] : memref<196x64xf32, #tpu.memory_space<vmem>>, vector<12x64xf32>
    %c98_373 = arith.constant 98 : index
    %c0_374 = arith.constant 0 : index
    %760 = vector.load %arg12[%c98_373, %c0_374] : memref<196x64xf32, #tpu.memory_space<vmem>>, vector<12x64xf32>
    %c99 = arith.constant 99 : index
    %c0_375 = arith.constant 0 : index
    %761 = vector.load %arg12[%c99, %c0_375] : memref<196x64xf32, #tpu.memory_space<vmem>>, vector<12x64xf32>
    %c100 = arith.constant 100 : index
    %c0_376 = arith.constant 0 : index
    %762 = vector.load %arg12[%c100, %c0_376] : memref<196x64xf32, #tpu.memory_space<vmem>>, vector<12x64xf32>
    %763 = tpu.concatenate %754, %755, %756, %757, %758, %759, %760, %761, %762 in 1 : vector<12x64xf32>, vector<12x64xf32>, vector<12x64xf32>, vector<12x64xf32>, vector<12x64xf32>, vector<12x64xf32>, vector<12x64xf32>, vector<12x64xf32>, vector<12x64xf32> -> vector<12x576xf32>
    %c60_377 = arith.constant 60 : index
    %c0_378 = arith.constant 0 : index
    %764 = vector.load %arg13[%c60_377, %c0_378] : memref<144x576xf32, #tpu.memory_space<vmem>>, vector<12x576xf32>
    tpu.vector_store %arg13[%c60_377, %c0_378], %763 {strides = array<i32>} : memref<144x576xf32, #tpu.memory_space<vmem>>, vector<12x576xf32>,
    %c84_379 = arith.constant 84 : index
    %c0_380 = arith.constant 0 : index
    %765 = vector.load %arg12[%c84_379, %c0_380] : memref<196x64xf32, #tpu.memory_space<vmem>>, vector<12x64xf32>
    %c85_381 = arith.constant 85 : index
    %c0_382 = arith.constant 0 : index
    %766 = vector.load %arg12[%c85_381, %c0_382] : memref<196x64xf32, #tpu.memory_space<vmem>>, vector<12x64xf32>
    %c86_383 = arith.constant 86 : index
    %c0_384 = arith.constant 0 : index
    %767 = vector.load %arg12[%c86_383, %c0_384] : memref<196x64xf32, #tpu.memory_space<vmem>>, vector<12x64xf32>
    %c98_385 = arith.constant 98 : index
    %c0_386 = arith.constant 0 : index
    %768 = vector.load %arg12[%c98_385, %c0_386] : memref<196x64xf32, #tpu.memory_space<vmem>>, vector<12x64xf32>
    %c99_387 = arith.constant 99 : index
    %c0_388 = arith.constant 0 : index
    %769 = vector.load %arg12[%c99_387, %c0_388] : memref<196x64xf32, #tpu.memory_space<vmem>>, vector<12x64xf32>
    %c100_389 = arith.constant 100 : index
    %c0_390 = arith.constant 0 : index
    %770 = vector.load %arg12[%c100_389, %c0_390] : memref<196x64xf32, #tpu.memory_space<vmem>>, vector<12x64xf32>
    %c112_391 = arith.constant 112 : index
    %c0_392 = arith.constant 0 : index
    %771 = vector.load %arg12[%c112_391, %c0_392] : memref<196x64xf32, #tpu.memory_space<vmem>>, vector<12x64xf32>
    %c113 = arith.constant 113 : index
    %c0_393 = arith.constant 0 : index
    %772 = vector.load %arg12[%c113, %c0_393] : memref<196x64xf32, #tpu.memory_space<vmem>>, vector<12x64xf32>
    %c114 = arith.constant 114 : index
    %c0_394 = arith.constant 0 : index
    %773 = vector.load %arg12[%c114, %c0_394] : memref<196x64xf32, #tpu.memory_space<vmem>>, vector<12x64xf32>
    %774 = tpu.concatenate %765, %766, %767, %768, %769, %770, %771, %772, %773 in 1 : vector<12x64xf32>, vector<12x64xf32>, vector<12x64xf32>, vector<12x64xf32>, vector<12x64xf32>, vector<12x64xf32>, vector<12x64xf32>, vector<12x64xf32>, vector<12x64xf32> -> vector<12x576xf32>
    %c72_395 = arith.constant 72 : index
    %c0_396 = arith.constant 0 : index
    %775 = vector.load %arg13[%c72_395, %c0_396] : memref<144x576xf32, #tpu.memory_space<vmem>>, vector<12x576xf32>
    tpu.vector_store %arg13[%c72_395, %c0_396], %774 {strides = array<i32>} : memref<144x576xf32, #tpu.memory_space<vmem>>, vector<12x576xf32>,
    %c98_397 = arith.constant 98 : index
    %c0_398 = arith.constant 0 : index
    %776 = vector.load %arg12[%c98_397, %c0_398] : memref<196x64xf32, #tpu.memory_space<vmem>>, vector<12x64xf32>
    %c99_399 = arith.constant 99 : index
    %c0_400 = arith.constant 0 : index
    %777 = vector.load %arg12[%c99_399, %c0_400] : memref<196x64xf32, #tpu.memory_space<vmem>>, vector<12x64xf32>
    %c100_401 = arith.constant 100 : index
    %c0_402 = arith.constant 0 : index
    %778 = vector.load %arg12[%c100_401, %c0_402] : memref<196x64xf32, #tpu.memory_space<vmem>>, vector<12x64xf32>
    %c112_403 = arith.constant 112 : index
    %c0_404 = arith.constant 0 : index
    %779 = vector.load %arg12[%c112_403, %c0_404] : memref<196x64xf32, #tpu.memory_space<vmem>>, vector<12x64xf32>
    %c113_405 = arith.constant 113 : index
    %c0_406 = arith.constant 0 : index
    %780 = vector.load %arg12[%c113_405, %c0_406] : memref<196x64xf32, #tpu.memory_space<vmem>>, vector<12x64xf32>
    %c114_407 = arith.constant 114 : index
    %c0_408 = arith.constant 0 : index
    %781 = vector.load %arg12[%c114_407, %c0_408] : memref<196x64xf32, #tpu.memory_space<vmem>>, vector<12x64xf32>
    %c126_409 = arith.constant 126 : index
    %c0_410 = arith.constant 0 : index
    %782 = vector.load %arg12[%c126_409, %c0_410] : memref<196x64xf32, #tpu.memory_space<vmem>>, vector<12x64xf32>
    %c127 = arith.constant 127 : index
    %c0_411 = arith.constant 0 : index
    %783 = vector.load %arg12[%c127, %c0_411] : memref<196x64xf32, #tpu.memory_space<vmem>>, vector<12x64xf32>
    %c128 = arith.constant 128 : index
    %c0_412 = arith.constant 0 : index
    %784 = vector.load %arg12[%c128, %c0_412] : memref<196x64xf32, #tpu.memory_space<vmem>>, vector<12x64xf32>
    %785 = tpu.concatenate %776, %777, %778, %779, %780, %781, %782, %783, %784 in 1 : vector<12x64xf32>, vector<12x64xf32>, vector<12x64xf32>, vector<12x64xf32>, vector<12x64xf32>, vector<12x64xf32>, vector<12x64xf32>, vector<12x64xf32>, vector<12x64xf32> -> vector<12x576xf32>
    %c84_413 = arith.constant 84 : index
    %c0_414 = arith.constant 0 : index
    %786 = vector.load %arg13[%c84_413, %c0_414] : memref<144x576xf32, #tpu.memory_space<vmem>>, vector<12x576xf32>
    tpu.vector_store %arg13[%c84_413, %c0_414], %785 {strides = array<i32>} : memref<144x576xf32, #tpu.memory_space<vmem>>, vector<12x576xf32>,
    %c112_415 = arith.constant 112 : index
    %c0_416 = arith.constant 0 : index
    %787 = vector.load %arg12[%c112_415, %c0_416] : memref<196x64xf32, #tpu.memory_space<vmem>>, vector<12x64xf32>
    %c113_417 = arith.constant 113 : index
    %c0_418 = arith.constant 0 : index
    %788 = vector.load %arg12[%c113_417, %c0_418] : memref<196x64xf32, #tpu.memory_space<vmem>>, vector<12x64xf32>
    %c114_419 = arith.constant 114 : index
    %c0_420 = arith.constant 0 : index
    %789 = vector.load %arg12[%c114_419, %c0_420] : memref<196x64xf32, #tpu.memory_space<vmem>>, vector<12x64xf32>
    %c126_421 = arith.constant 126 : index
    %c0_422 = arith.constant 0 : index
    %790 = vector.load %arg12[%c126_421, %c0_422] : memref<196x64xf32, #tpu.memory_space<vmem>>, vector<12x64xf32>
    %c127_423 = arith.constant 127 : index
    %c0_424 = arith.constant 0 : index
    %791 = vector.load %arg12[%c127_423, %c0_424] : memref<196x64xf32, #tpu.memory_space<vmem>>, vector<12x64xf32>
    %c128_425 = arith.constant 128 : index
    %c0_426 = arith.constant 0 : index
    %792 = vector.load %arg12[%c128_425, %c0_426] : memref<196x64xf32, #tpu.memory_space<vmem>>, vector<12x64xf32>
    %c140_427 = arith.constant 140 : index
    %c0_428 = arith.constant 0 : index
    %793 = vector.load %arg12[%c140_427, %c0_428] : memref<196x64xf32, #tpu.memory_space<vmem>>, vector<12x64xf32>
    %c141 = arith.constant 141 : index
    %c0_429 = arith.constant 0 : index
    %794 = vector.load %arg12[%c141, %c0_429] : memref<196x64xf32, #tpu.memory_space<vmem>>, vector<12x64xf32>
    %c142 = arith.constant 142 : index
    %c0_430 = arith.constant 0 : index
    %795 = vector.load %arg12[%c142, %c0_430] : memref<196x64xf32, #tpu.memory_space<vmem>>, vector<12x64xf32>
    %796 = tpu.concatenate %787, %788, %789, %790, %791, %792, %793, %794, %795 in 1 : vector<12x64xf32>, vector<12x64xf32>, vector<12x64xf32>, vector<12x64xf32>, vector<12x64xf32>, vector<12x64xf32>, vector<12x64xf32>, vector<12x64xf32>, vector<12x64xf32> -> vector<12x576xf32>
    %c96 = arith.constant 96 : index
    %c0_431 = arith.constant 0 : index
    %797 = vector.load %arg13[%c96, %c0_431] : memref<144x576xf32, #tpu.memory_space<vmem>>, vector<12x576xf32>
    tpu.vector_store %arg13[%c96, %c0_431], %796 {strides = array<i32>} : memref<144x576xf32, #tpu.memory_space<vmem>>, vector<12x576xf32>,
    %c126_432 = arith.constant 126 : index
    %c0_433 = arith.constant 0 : index
    %798 = vector.load %arg12[%c126_432, %c0_433] : memref<196x64xf32, #tpu.memory_space<vmem>>, vector<12x64xf32>
    %c127_434 = arith.constant 127 : index
    %c0_435 = arith.constant 0 : index
    %799 = vector.load %arg12[%c127_434, %c0_435] : memref<196x64xf32, #tpu.memory_space<vmem>>, vector<12x64xf32>
    %c128_436 = arith.constant 128 : index
    %c0_437 = arith.constant 0 : index
    %800 = vector.load %arg12[%c128_436, %c0_437] : memref<196x64xf32, #tpu.memory_space<vmem>>, vector<12x64xf32>
    %c140_438 = arith.constant 140 : index
    %c0_439 = arith.constant 0 : index
    %801 = vector.load %arg12[%c140_438, %c0_439] : memref<196x64xf32, #tpu.memory_space<vmem>>, vector<12x64xf32>
    %c141_440 = arith.constant 141 : index
    %c0_441 = arith.constant 0 : index
    %802 = vector.load %arg12[%c141_440, %c0_441] : memref<196x64xf32, #tpu.memory_space<vmem>>, vector<12x64xf32>
    %c142_442 = arith.constant 142 : index
    %c0_443 = arith.constant 0 : index
    %803 = vector.load %arg12[%c142_442, %c0_443] : memref<196x64xf32, #tpu.memory_space<vmem>>, vector<12x64xf32>
    %c154_444 = arith.constant 154 : index
    %c0_445 = arith.constant 0 : index
    %804 = vector.load %arg12[%c154_444, %c0_445] : memref<196x64xf32, #tpu.memory_space<vmem>>, vector<12x64xf32>
    %c155 = arith.constant 155 : index
    %c0_446 = arith.constant 0 : index
    %805 = vector.load %arg12[%c155, %c0_446] : memref<196x64xf32, #tpu.memory_space<vmem>>, vector<12x64xf32>
    %c156 = arith.constant 156 : index
    %c0_447 = arith.constant 0 : index
    %806 = vector.load %arg12[%c156, %c0_447] : memref<196x64xf32, #tpu.memory_space<vmem>>, vector<12x64xf32>
    %807 = tpu.concatenate %798, %799, %800, %801, %802, %803, %804, %805, %806 in 1 : vector<12x64xf32>, vector<12x64xf32>, vector<12x64xf32>, vector<12x64xf32>, vector<12x64xf32>, vector<12x64xf32>, vector<12x64xf32>, vector<12x64xf32>, vector<12x64xf32> -> vector<12x576xf32>
    %c108 = arith.constant 108 : index
    %c0_448 = arith.constant 0 : index
    %808 = vector.load %arg13[%c108, %c0_448] : memref<144x576xf32, #tpu.memory_space<vmem>>, vector<12x576xf32>
    tpu.vector_store %arg13[%c108, %c0_448], %807 {strides = array<i32>} : memref<144x576xf32, #tpu.memory_space<vmem>>, vector<12x576xf32>,
    %c140_449 = arith.constant 140 : index
    %c0_450 = arith.constant 0 : index
    %809 = vector.load %arg12[%c140_449, %c0_450] : memref<196x64xf32, #tpu.memory_space<vmem>>, vector<12x64xf32>
    %c141_451 = arith.constant 141 : index
    %c0_452 = arith.constant 0 : index
    %810 = vector.load %arg12[%c141_451, %c0_452] : memref<196x64xf32, #tpu.memory_space<vmem>>, vector<12x64xf32>
    %c142_453 = arith.constant 142 : index
    %c0_454 = arith.constant 0 : index
    %811 = vector.load %arg12[%c142_453, %c0_454] : memref<196x64xf32, #tpu.memory_space<vmem>>, vector<12x64xf32>
    %c154_455 = arith.constant 154 : index
    %c0_456 = arith.constant 0 : index
    %812 = vector.load %arg12[%c154_455, %c0_456] : memref<196x64xf32, #tpu.memory_space<vmem>>, vector<12x64xf32>
    %c155_457 = arith.constant 155 : index
    %c0_458 = arith.constant 0 : index
    %813 = vector.load %arg12[%c155_457, %c0_458] : memref<196x64xf32, #tpu.memory_space<vmem>>, vector<12x64xf32>
    %c156_459 = arith.constant 156 : index
    %c0_460 = arith.constant 0 : index
    %814 = vector.load %arg12[%c156_459, %c0_460] : memref<196x64xf32, #tpu.memory_space<vmem>>, vector<12x64xf32>
    %c168_461 = arith.constant 168 : index
    %c0_462 = arith.constant 0 : index
    %815 = vector.load %arg12[%c168_461, %c0_462] : memref<196x64xf32, #tpu.memory_space<vmem>>, vector<12x64xf32>
    %c169 = arith.constant 169 : index
    %c0_463 = arith.constant 0 : index
    %816 = vector.load %arg12[%c169, %c0_463] : memref<196x64xf32, #tpu.memory_space<vmem>>, vector<12x64xf32>
    %c170 = arith.constant 170 : index
    %c0_464 = arith.constant 0 : index
    %817 = vector.load %arg12[%c170, %c0_464] : memref<196x64xf32, #tpu.memory_space<vmem>>, vector<12x64xf32>
    %818 = tpu.concatenate %809, %810, %811, %812, %813, %814, %815, %816, %817 in 1 : vector<12x64xf32>, vector<12x64xf32>, vector<12x64xf32>, vector<12x64xf32>, vector<12x64xf32>, vector<12x64xf32>, vector<12x64xf32>, vector<12x64xf32>, vector<12x64xf32> -> vector<12x576xf32>
    %c120_465 = arith.constant 120 : index
    %c0_466 = arith.constant 0 : index
    %819 = vector.load %arg13[%c120_465, %c0_466] : memref<144x576xf32, #tpu.memory_space<vmem>>, vector<12x576xf32>
    tpu.vector_store %arg13[%c120_465, %c0_466], %818 {strides = array<i32>} : memref<144x576xf32, #tpu.memory_space<vmem>>, vector<12x576xf32>,
    %c154_467 = arith.constant 154 : index
    %c0_468 = arith.constant 0 : index
    %820 = vector.load %arg12[%c154_467, %c0_468] : memref<196x64xf32, #tpu.memory_space<vmem>>, vector<12x64xf32>
    %c155_469 = arith.constant 155 : index
    %c0_470 = arith.constant 0 : index
    %821 = vector.load %arg12[%c155_469, %c0_470] : memref<196x64xf32, #tpu.memory_space<vmem>>, vector<12x64xf32>
    %c156_471 = arith.constant 156 : index
    %c0_472 = arith.constant 0 : index
    %822 = vector.load %arg12[%c156_471, %c0_472] : memref<196x64xf32, #tpu.memory_space<vmem>>, vector<12x64xf32>
    %c168_473 = arith.constant 168 : index
    %c0_474 = arith.constant 0 : index
    %823 = vector.load %arg12[%c168_473, %c0_474] : memref<196x64xf32, #tpu.memory_space<vmem>>, vector<12x64xf32>
    %c169_475 = arith.constant 169 : index
    %c0_476 = arith.constant 0 : index
    %824 = vector.load %arg12[%c169_475, %c0_476] : memref<196x64xf32, #tpu.memory_space<vmem>>, vector<12x64xf32>
    %c170_477 = arith.constant 170 : index
    %c0_478 = arith.constant 0 : index
    %825 = vector.load %arg12[%c170_477, %c0_478] : memref<196x64xf32, #tpu.memory_space<vmem>>, vector<12x64xf32>
    %c182_479 = arith.constant 182 : index
    %c0_480 = arith.constant 0 : index
    %826 = vector.load %arg12[%c182_479, %c0_480] : memref<196x64xf32, #tpu.memory_space<vmem>>, vector<12x64xf32>
    %c183 = arith.constant 183 : index
    %c0_481 = arith.constant 0 : index
    %827 = vector.load %arg12[%c183, %c0_481] : memref<196x64xf32, #tpu.memory_space<vmem>>, vector<12x64xf32>
    %c184 = arith.constant 184 : index
    %c0_482 = arith.constant 0 : index
    %828 = vector.load %arg12[%c184, %c0_482] : memref<196x64xf32, #tpu.memory_space<vmem>>, vector<12x64xf32>
    %829 = tpu.concatenate %820, %821, %822, %823, %824, %825, %826, %827, %828 in 1 : vector<12x64xf32>, vector<12x64xf32>, vector<12x64xf32>, vector<12x64xf32>, vector<12x64xf32>, vector<12x64xf32>, vector<12x64xf32>, vector<12x64xf32>, vector<12x64xf32> -> vector<12x576xf32>
    %c132 = arith.constant 132 : index
    %c0_483 = arith.constant 0 : index
    %830 = vector.load %arg13[%c132, %c0_483] : memref<144x576xf32, #tpu.memory_space<vmem>>, vector<12x576xf32>
    tpu.vector_store %arg13[%c132, %c0_483], %829 {strides = array<i32>} : memref<144x576xf32, #tpu.memory_space<vmem>>, vector<12x576xf32>,
    %c0_484 = arith.constant 0 : index
    %c0_485 = arith.constant 0 : index
    %831 = vector.load %arg13[%c0_484, %c0_485] : memref<144x576xf32, #tpu.memory_space<vmem>>, vector<144x576xf32>
    %c0_486 = arith.constant 0 : index
    %c0_487 = arith.constant 0 : index
    %832 = vector.load %arg5[%c0_486, %c0_487] : memref<576x128xf32, #tpu.memory_space<vmem>>, vector<576x128xf32>
    %cst_488 = arith.constant dense<0.000000e+00> : vector<144x128xf32>
    %833 = tpu.matmul %831, %832, %cst_488 {dimension_numbers = #tpu.dot_dimension_numbers<[1], [0], [0], [1], [0, 0, 1, 1], [], []>} : vector<144x576xf32>, vector<576x128xf32>, vector<144x128xf32> -> vector<144x128xf32>
    %c0_489 = arith.constant 0 : index
    %c0_490 = arith.constant 0 : index
    %834 = vector.load %arg6[%c0_489, %c0_490] : memref<1x128xf32, #tpu.memory_space<vmem>>, vector<1x128xf32>
    %835 = vector.broadcast %834 : vector<1x128xf32> to vector<144x128xf32>
    %836 = arith.mulf %833, %835 : vector<144x128xf32>
    %c0_491 = arith.constant 0 : index
    %c0_492 = arith.constant 0 : index
    %837 = vector.load %arg7[%c0_491, %c0_492] : memref<1x128xf32, #tpu.memory_space<vmem>>, vector<1x128xf32>
    %838 = vector.broadcast %837 : vector<1x128xf32> to vector<144x128xf32>
    %839 = arith.addf %836, %838 : vector<144x128xf32>
    %cst_493 = arith.constant 0.000000e+00 : f32
    %840 = vector.broadcast %cst_493 : f32 to vector<144x128xf32>
    %841 = arith.maximumf %839, %840 : vector<144x128xf32>
    %c0_494 = arith.constant 0 : index
    %c0_495 = arith.constant 0 : index
    %842 = vector.load %arg14[%c0_494, %c0_495] : memref<144x128xf32, #tpu.memory_space<vmem>>, vector<144x128xf32>
    tpu.vector_store %arg14[%c0_494, %c0_495], %841 {strides = array<i32>} : memref<144x128xf32, #tpu.memory_space<vmem>>, vector<144x128xf32>,
    %c0_496 = arith.constant 0 : index
    %c0_497 = arith.constant 0 : index
    %843 = vector.load %arg14[%c0_496, %c0_497] : memref<144x128xf32, #tpu.memory_space<vmem>>, vector<12x128xf32>
    %c12_498 = arith.constant 12 : index
    %c0_499 = arith.constant 0 : index
    %844 = vector.load %arg14[%c12_498, %c0_499] : memref<144x128xf32, #tpu.memory_space<vmem>>, vector<12x128xf32>
    %c24_500 = arith.constant 24 : index
    %c0_501 = arith.constant 0 : index
    %845 = vector.load %arg14[%c24_500, %c0_501] : memref<144x128xf32, #tpu.memory_space<vmem>>, vector<12x128xf32>
    %846 = arith.maximumf %843, %844 : vector<12x128xf32>
    %847 = arith.maximumf %846, %845 : vector<12x128xf32>
    %848 = vector.extract_strided_slice %847 {offsets = [0, 0], sizes = [3, 128], strides = [1, 1]} : vector<12x128xf32> to vector<3x128xf32>
    %cst_502 = arith.constant dense<0xFF800000> : vector<128xf32>
    %849 = vector.multi_reduction <maximumf>, %848, %cst_502 [0] : vector<3x128xf32> to vector<128xf32>
    %850 = vector.shape_cast %849 : vector<128xf32> to vector<1x128xf32>
    %851 = vector.extract_strided_slice %847 {offsets = [2, 0], sizes = [3, 128], strides = [1, 1]} : vector<12x128xf32> to vector<3x128xf32>
    %cst_503 = arith.constant dense<0xFF800000> : vector<128xf32>
    %852 = vector.multi_reduction <maximumf>, %851, %cst_503 [0] : vector<3x128xf32> to vector<128xf32>
    %853 = vector.shape_cast %852 : vector<128xf32> to vector<1x128xf32>
    %854 = vector.extract_strided_slice %847 {offsets = [4, 0], sizes = [3, 128], strides = [1, 1]} : vector<12x128xf32> to vector<3x128xf32>
    %cst_504 = arith.constant dense<0xFF800000> : vector<128xf32>
    %855 = vector.multi_reduction <maximumf>, %854, %cst_504 [0] : vector<3x128xf32> to vector<128xf32>
    %856 = vector.shape_cast %855 : vector<128xf32> to vector<1x128xf32>
    %857 = vector.extract_strided_slice %847 {offsets = [6, 0], sizes = [3, 128], strides = [1, 1]} : vector<12x128xf32> to vector<3x128xf32>
    %cst_505 = arith.constant dense<0xFF800000> : vector<128xf32>
    %858 = vector.multi_reduction <maximumf>, %857, %cst_505 [0] : vector<3x128xf32> to vector<128xf32>
    %859 = vector.shape_cast %858 : vector<128xf32> to vector<1x128xf32>
    %860 = vector.extract_strided_slice %847 {offsets = [8, 0], sizes = [3, 128], strides = [1, 1]} : vector<12x128xf32> to vector<3x128xf32>
    %cst_506 = arith.constant dense<0xFF800000> : vector<128xf32>
    %861 = vector.multi_reduction <maximumf>, %860, %cst_506 [0] : vector<3x128xf32> to vector<128xf32>
    %862 = vector.shape_cast %861 : vector<128xf32> to vector<1x128xf32>
    %863 = tpu.concatenate %850, %853, %856, %859, %862 in 0 : vector<1x128xf32>, vector<1x128xf32>, vector<1x128xf32>, vector<1x128xf32>, vector<1x128xf32> -> vector<5x128xf32>
    %c24_507 = arith.constant 24 : index
    %c0_508 = arith.constant 0 : index
    %864 = vector.load %arg14[%c24_507, %c0_508] : memref<144x128xf32, #tpu.memory_space<vmem>>, vector<12x128xf32>
    %c36_509 = arith.constant 36 : index
    %c0_510 = arith.constant 0 : index
    %865 = vector.load %arg14[%c36_509, %c0_510] : memref<144x128xf32, #tpu.memory_space<vmem>>, vector<12x128xf32>
    %c48_511 = arith.constant 48 : index
    %c0_512 = arith.constant 0 : index
    %866 = vector.load %arg14[%c48_511, %c0_512] : memref<144x128xf32, #tpu.memory_space<vmem>>, vector<12x128xf32>
    %867 = arith.maximumf %864, %865 : vector<12x128xf32>
    %868 = arith.maximumf %867, %866 : vector<12x128xf32>
    %869 = vector.extract_strided_slice %868 {offsets = [0, 0], sizes = [3, 128], strides = [1, 1]} : vector<12x128xf32> to vector<3x128xf32>
    %cst_513 = arith.constant dense<0xFF800000> : vector<128xf32>
    %870 = vector.multi_reduction <maximumf>, %869, %cst_513 [0] : vector<3x128xf32> to vector<128xf32>
    %871 = vector.shape_cast %870 : vector<128xf32> to vector<1x128xf32>
    %872 = vector.extract_strided_slice %868 {offsets = [2, 0], sizes = [3, 128], strides = [1, 1]} : vector<12x128xf32> to vector<3x128xf32>
    %cst_514 = arith.constant dense<0xFF800000> : vector<128xf32>
    %873 = vector.multi_reduction <maximumf>, %872, %cst_514 [0] : vector<3x128xf32> to vector<128xf32>
    %874 = vector.shape_cast %873 : vector<128xf32> to vector<1x128xf32>
    %875 = vector.extract_strided_slice %868 {offsets = [4, 0], sizes = [3, 128], strides = [1, 1]} : vector<12x128xf32> to vector<3x128xf32>
    %cst_515 = arith.constant dense<0xFF800000> : vector<128xf32>
    %876 = vector.multi_reduction <maximumf>, %875, %cst_515 [0] : vector<3x128xf32> to vector<128xf32>
    %877 = vector.shape_cast %876 : vector<128xf32> to vector<1x128xf32>
    %878 = vector.extract_strided_slice %868 {offsets = [6, 0], sizes = [3, 128], strides = [1, 1]} : vector<12x128xf32> to vector<3x128xf32>
    %cst_516 = arith.constant dense<0xFF800000> : vector<128xf32>
    %879 = vector.multi_reduction <maximumf>, %878, %cst_516 [0] : vector<3x128xf32> to vector<128xf32>
    %880 = vector.shape_cast %879 : vector<128xf32> to vector<1x128xf32>
    %881 = vector.extract_strided_slice %868 {offsets = [8, 0], sizes = [3, 128], strides = [1, 1]} : vector<12x128xf32> to vector<3x128xf32>
    %cst_517 = arith.constant dense<0xFF800000> : vector<128xf32>
    %882 = vector.multi_reduction <maximumf>, %881, %cst_517 [0] : vector<3x128xf32> to vector<128xf32>
    %883 = vector.shape_cast %882 : vector<128xf32> to vector<1x128xf32>
    %884 = tpu.concatenate %871, %874, %877, %880, %883 in 0 : vector<1x128xf32>, vector<1x128xf32>, vector<1x128xf32>, vector<1x128xf32>, vector<1x128xf32> -> vector<5x128xf32>
    %c48_518 = arith.constant 48 : index
    %c0_519 = arith.constant 0 : index
    %885 = vector.load %arg14[%c48_518, %c0_519] : memref<144x128xf32, #tpu.memory_space<vmem>>, vector<12x128xf32>
    %c60_520 = arith.constant 60 : index
    %c0_521 = arith.constant 0 : index
    %886 = vector.load %arg14[%c60_520, %c0_521] : memref<144x128xf32, #tpu.memory_space<vmem>>, vector<12x128xf32>
    %c72_522 = arith.constant 72 : index
    %c0_523 = arith.constant 0 : index
    %887 = vector.load %arg14[%c72_522, %c0_523] : memref<144x128xf32, #tpu.memory_space<vmem>>, vector<12x128xf32>
    %888 = arith.maximumf %885, %886 : vector<12x128xf32>
    %889 = arith.maximumf %888, %887 : vector<12x128xf32>
    %890 = vector.extract_strided_slice %889 {offsets = [0, 0], sizes = [3, 128], strides = [1, 1]} : vector<12x128xf32> to vector<3x128xf32>
    %cst_524 = arith.constant dense<0xFF800000> : vector<128xf32>
    %891 = vector.multi_reduction <maximumf>, %890, %cst_524 [0] : vector<3x128xf32> to vector<128xf32>
    %892 = vector.shape_cast %891 : vector<128xf32> to vector<1x128xf32>
    %893 = vector.extract_strided_slice %889 {offsets = [2, 0], sizes = [3, 128], strides = [1, 1]} : vector<12x128xf32> to vector<3x128xf32>
    %cst_525 = arith.constant dense<0xFF800000> : vector<128xf32>
    %894 = vector.multi_reduction <maximumf>, %893, %cst_525 [0] : vector<3x128xf32> to vector<128xf32>
    %895 = vector.shape_cast %894 : vector<128xf32> to vector<1x128xf32>
    %896 = vector.extract_strided_slice %889 {offsets = [4, 0], sizes = [3, 128], strides = [1, 1]} : vector<12x128xf32> to vector<3x128xf32>
    %cst_526 = arith.constant dense<0xFF800000> : vector<128xf32>
    %897 = vector.multi_reduction <maximumf>, %896, %cst_526 [0] : vector<3x128xf32> to vector<128xf32>
    %898 = vector.shape_cast %897 : vector<128xf32> to vector<1x128xf32>
    %899 = vector.extract_strided_slice %889 {offsets = [6, 0], sizes = [3, 128], strides = [1, 1]} : vector<12x128xf32> to vector<3x128xf32>
    %cst_527 = arith.constant dense<0xFF800000> : vector<128xf32>
    %900 = vector.multi_reduction <maximumf>, %899, %cst_527 [0] : vector<3x128xf32> to vector<128xf32>
    %901 = vector.shape_cast %900 : vector<128xf32> to vector<1x128xf32>
    %902 = vector.extract_strided_slice %889 {offsets = [8, 0], sizes = [3, 128], strides = [1, 1]} : vector<12x128xf32> to vector<3x128xf32>
    %cst_528 = arith.constant dense<0xFF800000> : vector<128xf32>
    %903 = vector.multi_reduction <maximumf>, %902, %cst_528 [0] : vector<3x128xf32> to vector<128xf32>
    %904 = vector.shape_cast %903 : vector<128xf32> to vector<1x128xf32>
    %905 = tpu.concatenate %892, %895, %898, %901, %904 in 0 : vector<1x128xf32>, vector<1x128xf32>, vector<1x128xf32>, vector<1x128xf32>, vector<1x128xf32> -> vector<5x128xf32>
    %c72_529 = arith.constant 72 : index
    %c0_530 = arith.constant 0 : index
    %906 = vector.load %arg14[%c72_529, %c0_530] : memref<144x128xf32, #tpu.memory_space<vmem>>, vector<12x128xf32>
    %c84_531 = arith.constant 84 : index
    %c0_532 = arith.constant 0 : index
    %907 = vector.load %arg14[%c84_531, %c0_532] : memref<144x128xf32, #tpu.memory_space<vmem>>, vector<12x128xf32>
    %c96_533 = arith.constant 96 : index
    %c0_534 = arith.constant 0 : index
    %908 = vector.load %arg14[%c96_533, %c0_534] : memref<144x128xf32, #tpu.memory_space<vmem>>, vector<12x128xf32>
    %909 = arith.maximumf %906, %907 : vector<12x128xf32>
    %910 = arith.maximumf %909, %908 : vector<12x128xf32>
    %911 = vector.extract_strided_slice %910 {offsets = [0, 0], sizes = [3, 128], strides = [1, 1]} : vector<12x128xf32> to vector<3x128xf32>
    %cst_535 = arith.constant dense<0xFF800000> : vector<128xf32>
    %912 = vector.multi_reduction <maximumf>, %911, %cst_535 [0] : vector<3x128xf32> to vector<128xf32>
    %913 = vector.shape_cast %912 : vector<128xf32> to vector<1x128xf32>
    %914 = vector.extract_strided_slice %910 {offsets = [2, 0], sizes = [3, 128], strides = [1, 1]} : vector<12x128xf32> to vector<3x128xf32>
    %cst_536 = arith.constant dense<0xFF800000> : vector<128xf32>
    %915 = vector.multi_reduction <maximumf>, %914, %cst_536 [0] : vector<3x128xf32> to vector<128xf32>
    %916 = vector.shape_cast %915 : vector<128xf32> to vector<1x128xf32>
    %917 = vector.extract_strided_slice %910 {offsets = [4, 0], sizes = [3, 128], strides = [1, 1]} : vector<12x128xf32> to vector<3x128xf32>
    %cst_537 = arith.constant dense<0xFF800000> : vector<128xf32>
    %918 = vector.multi_reduction <maximumf>, %917, %cst_537 [0] : vector<3x128xf32> to vector<128xf32>
    %919 = vector.shape_cast %918 : vector<128xf32> to vector<1x128xf32>
    %920 = vector.extract_strided_slice %910 {offsets = [6, 0], sizes = [3, 128], strides = [1, 1]} : vector<12x128xf32> to vector<3x128xf32>
    %cst_538 = arith.constant dense<0xFF800000> : vector<128xf32>
    %921 = vector.multi_reduction <maximumf>, %920, %cst_538 [0] : vector<3x128xf32> to vector<128xf32>
    %922 = vector.shape_cast %921 : vector<128xf32> to vector<1x128xf32>
    %923 = vector.extract_strided_slice %910 {offsets = [8, 0], sizes = [3, 128], strides = [1, 1]} : vector<12x128xf32> to vector<3x128xf32>
    %cst_539 = arith.constant dense<0xFF800000> : vector<128xf32>
    %924 = vector.multi_reduction <maximumf>, %923, %cst_539 [0] : vector<3x128xf32> to vector<128xf32>
    %925 = vector.shape_cast %924 : vector<128xf32> to vector<1x128xf32>
    %926 = tpu.concatenate %913, %916, %919, %922, %925 in 0 : vector<1x128xf32>, vector<1x128xf32>, vector<1x128xf32>, vector<1x128xf32>, vector<1x128xf32> -> vector<5x128xf32>
    %c96_540 = arith.constant 96 : index
    %c0_541 = arith.constant 0 : index
    %927 = vector.load %arg14[%c96_540, %c0_541] : memref<144x128xf32, #tpu.memory_space<vmem>>, vector<12x128xf32>
    %c108_542 = arith.constant 108 : index
    %c0_543 = arith.constant 0 : index
    %928 = vector.load %arg14[%c108_542, %c0_543] : memref<144x128xf32, #tpu.memory_space<vmem>>, vector<12x128xf32>
    %c120_544 = arith.constant 120 : index
    %c0_545 = arith.constant 0 : index
    %929 = vector.load %arg14[%c120_544, %c0_545] : memref<144x128xf32, #tpu.memory_space<vmem>>, vector<12x128xf32>
    %930 = arith.maximumf %927, %928 : vector<12x128xf32>
    %931 = arith.maximumf %930, %929 : vector<12x128xf32>
    %932 = vector.extract_strided_slice %931 {offsets = [0, 0], sizes = [3, 128], strides = [1, 1]} : vector<12x128xf32> to vector<3x128xf32>
    %cst_546 = arith.constant dense<0xFF800000> : vector<128xf32>
    %933 = vector.multi_reduction <maximumf>, %932, %cst_546 [0] : vector<3x128xf32> to vector<128xf32>
    %934 = vector.shape_cast %933 : vector<128xf32> to vector<1x128xf32>
    %935 = vector.extract_strided_slice %931 {offsets = [2, 0], sizes = [3, 128], strides = [1, 1]} : vector<12x128xf32> to vector<3x128xf32>
    %cst_547 = arith.constant dense<0xFF800000> : vector<128xf32>
    %936 = vector.multi_reduction <maximumf>, %935, %cst_547 [0] : vector<3x128xf32> to vector<128xf32>
    %937 = vector.shape_cast %936 : vector<128xf32> to vector<1x128xf32>
    %938 = vector.extract_strided_slice %931 {offsets = [4, 0], sizes = [3, 128], strides = [1, 1]} : vector<12x128xf32> to vector<3x128xf32>
    %cst_548 = arith.constant dense<0xFF800000> : vector<128xf32>
    %939 = vector.multi_reduction <maximumf>, %938, %cst_548 [0] : vector<3x128xf32> to vector<128xf32>
    %940 = vector.shape_cast %939 : vector<128xf32> to vector<1x128xf32>
    %941 = vector.extract_strided_slice %931 {offsets = [6, 0], sizes = [3, 128], strides = [1, 1]} : vector<12x128xf32> to vector<3x128xf32>
    %cst_549 = arith.constant dense<0xFF800000> : vector<128xf32>
    %942 = vector.multi_reduction <maximumf>, %941, %cst_549 [0] : vector<3x128xf32> to vector<128xf32>
    %943 = vector.shape_cast %942 : vector<128xf32> to vector<1x128xf32>
    %944 = vector.extract_strided_slice %931 {offsets = [8, 0], sizes = [3, 128], strides = [1, 1]} : vector<12x128xf32> to vector<3x128xf32>
    %cst_550 = arith.constant dense<0xFF800000> : vector<128xf32>
    %945 = vector.multi_reduction <maximumf>, %944, %cst_550 [0] : vector<3x128xf32> to vector<128xf32>
    %946 = vector.shape_cast %945 : vector<128xf32> to vector<1x128xf32>
    %947 = tpu.concatenate %934, %937, %940, %943, %946 in 0 : vector<1x128xf32>, vector<1x128xf32>, vector<1x128xf32>, vector<1x128xf32>, vector<1x128xf32> -> vector<5x128xf32>
    %948 = vector.extract_strided_slice %863 {offsets = [0, 0], sizes = [1, 128], strides = [1, 1]} : vector<5x128xf32> to vector<1x128xf32>
    %949 = vector.extract_strided_slice %863 {offsets = [1, 0], sizes = [1, 128], strides = [1, 1]} : vector<5x128xf32> to vector<1x128xf32>
    %950 = vector.extract_strided_slice %863 {offsets = [2, 0], sizes = [1, 128], strides = [1, 1]} : vector<5x128xf32> to vector<1x128xf32>
    %951 = vector.extract_strided_slice %863 {offsets = [3, 0], sizes = [1, 128], strides = [1, 1]} : vector<5x128xf32> to vector<1x128xf32>
    %952 = vector.extract_strided_slice %863 {offsets = [4, 0], sizes = [1, 128], strides = [1, 1]} : vector<5x128xf32> to vector<1x128xf32>
    %953 = vector.extract_strided_slice %884 {offsets = [0, 0], sizes = [1, 128], strides = [1, 1]} : vector<5x128xf32> to vector<1x128xf32>
    %954 = vector.extract_strided_slice %884 {offsets = [1, 0], sizes = [1, 128], strides = [1, 1]} : vector<5x128xf32> to vector<1x128xf32>
    %955 = vector.extract_strided_slice %884 {offsets = [2, 0], sizes = [1, 128], strides = [1, 1]} : vector<5x128xf32> to vector<1x128xf32>
    %956 = vector.extract_strided_slice %884 {offsets = [3, 0], sizes = [1, 128], strides = [1, 1]} : vector<5x128xf32> to vector<1x128xf32>
    %957 = vector.extract_strided_slice %884 {offsets = [4, 0], sizes = [1, 128], strides = [1, 1]} : vector<5x128xf32> to vector<1x128xf32>
    %958 = vector.extract_strided_slice %905 {offsets = [0, 0], sizes = [1, 128], strides = [1, 1]} : vector<5x128xf32> to vector<1x128xf32>
    %959 = vector.extract_strided_slice %905 {offsets = [1, 0], sizes = [1, 128], strides = [1, 1]} : vector<5x128xf32> to vector<1x128xf32>
    %960 = vector.extract_strided_slice %905 {offsets = [2, 0], sizes = [1, 128], strides = [1, 1]} : vector<5x128xf32> to vector<1x128xf32>
    %961 = vector.extract_strided_slice %905 {offsets = [3, 0], sizes = [1, 128], strides = [1, 1]} : vector<5x128xf32> to vector<1x128xf32>
    %962 = vector.extract_strided_slice %905 {offsets = [4, 0], sizes = [1, 128], strides = [1, 1]} : vector<5x128xf32> to vector<1x128xf32>
    %963 = vector.extract_strided_slice %926 {offsets = [0, 0], sizes = [1, 128], strides = [1, 1]} : vector<5x128xf32> to vector<1x128xf32>
    %964 = vector.extract_strided_slice %926 {offsets = [1, 0], sizes = [1, 128], strides = [1, 1]} : vector<5x128xf32> to vector<1x128xf32>
    %965 = vector.extract_strided_slice %926 {offsets = [2, 0], sizes = [1, 128], strides = [1, 1]} : vector<5x128xf32> to vector<1x128xf32>
    %966 = vector.extract_strided_slice %926 {offsets = [3, 0], sizes = [1, 128], strides = [1, 1]} : vector<5x128xf32> to vector<1x128xf32>
    %967 = vector.extract_strided_slice %926 {offsets = [4, 0], sizes = [1, 128], strides = [1, 1]} : vector<5x128xf32> to vector<1x128xf32>
    %968 = vector.extract_strided_slice %947 {offsets = [0, 0], sizes = [1, 128], strides = [1, 1]} : vector<5x128xf32> to vector<1x128xf32>
    %969 = vector.extract_strided_slice %947 {offsets = [1, 0], sizes = [1, 128], strides = [1, 1]} : vector<5x128xf32> to vector<1x128xf32>
    %970 = vector.extract_strided_slice %947 {offsets = [2, 0], sizes = [1, 128], strides = [1, 1]} : vector<5x128xf32> to vector<1x128xf32>
    %971 = vector.extract_strided_slice %947 {offsets = [3, 0], sizes = [1, 128], strides = [1, 1]} : vector<5x128xf32> to vector<1x128xf32>
    %972 = vector.extract_strided_slice %947 {offsets = [4, 0], sizes = [1, 128], strides = [1, 1]} : vector<5x128xf32> to vector<1x128xf32>
    %973 = tpu.concatenate %948, %949, %950, %951, %952, %953, %954, %955, %956, %957, %958, %959, %960, %961, %962, %963 in 1 : vector<1x128xf32>, vector<1x128xf32>, vector<1x128xf32>, vector<1x128xf32>, vector<1x128xf32>, vector<1x128xf32>, vector<1x128xf32>, vector<1x128xf32>, vector<1x128xf32>, vector<1x128xf32>, vector<1x128xf32>, vector<1x128xf32>, vector<1x128xf32>, vector<1x128xf32>, vector<1x128xf32>, vector<1x128xf32> -> vector<1x2048xf32>
    %974 = tpu.concatenate %964, %965, %966, %967, %968, %969, %970, %971, %972 in 1 : vector<1x128xf32>, vector<1x128xf32>, vector<1x128xf32>, vector<1x128xf32>, vector<1x128xf32>, vector<1x128xf32>, vector<1x128xf32>, vector<1x128xf32>, vector<1x128xf32> -> vector<1x1152xf32>
    %975 = tpu.concatenate %973, %974 in 1 : vector<1x2048xf32>, vector<1x1152xf32> -> vector<1x3200xf32>
    %c0_551 = arith.constant 0 : index
    %c0_552 = arith.constant 0 : index
    %976 = vector.load %arg8[%c0_551, %c0_552] : memref<3200x10xf32, #tpu.memory_space<vmem>>, vector<3200x10xf32>
    %cst_553 = arith.constant dense<0.000000e+00> : vector<1x10xf32>
    %977 = tpu.matmul %975, %976, %cst_553 {dimension_numbers = #tpu.dot_dimension_numbers<[1], [0], [0], [1], [0, 0, 1, 1], [], []>} : vector<1x3200xf32>, vector<3200x10xf32>, vector<1x10xf32> -> vector<1x10xf32>
    %c0_554 = arith.constant 0 : index
    %c0_555 = arith.constant 0 : index
    %978 = vector.load %arg9[%c0_554, %c0_555] : memref<1x10xf32, #tpu.memory_space<vmem>>, vector<1x10xf32>
    %979 = arith.addf %977, %978 : vector<1x10xf32>
    %cst_556 = arith.constant dense<0xFF800000> : vector<1xf32>
    %980 = vector.multi_reduction <maximumf>, %979, %cst_556 [1] : vector<1x10xf32> to vector<1xf32>
    %981 = vector.shape_cast %980 : vector<1xf32> to vector<1x1xf32>
    %982 = vector.broadcast %981 : vector<1x1xf32> to vector<1x10xf32>
    %983 = arith.subf %979, %982 : vector<1x10xf32>
    %984 = math.exp %983 : vector<1x10xf32>
    %cst_557 = arith.constant dense<0.000000e+00> : vector<1xf32>
    %985 = vector.multi_reduction <add>, %984, %cst_557 [1] : vector<1x10xf32> to vector<1xf32>
    %986 = vector.shape_cast %985 : vector<1xf32> to vector<1x1xf32>
    %987 = vector.broadcast %986 : vector<1x1xf32> to vector<1x10xf32>
    %988 = arith.divf %984, %987 : vector<1x10xf32>
    %c0_558 = arith.constant 0 : index
    %c0_559 = arith.constant 0 : index
    %c0_560 = arith.constant 0 : index
    %989 = vector.load %arg10[%c0_558, %c0_559, %c0_560] : memref<1x1x10xf32, #tpu.memory_space<vmem>>, vector<1x1x10xf32>
    %990 = vector.shape_cast %989 : vector<1x1x10xf32> to vector<1x10xf32>
    %991 = vector.shape_cast %988 : vector<1x10xf32> to vector<1x1x10xf32>
    tpu.vector_store %arg10[%c0_558, %c0_559, %c0_560], %991 {strides = array<i32>} : memref<1x1x10xf32, #tpu.memory_space<vmem>>, vector<1x1x10xf32>,
    return
  }
  func.func @transform_0(%arg0: i32) -> (i32, i32, i32) {
    %c0_i32 = arith.constant 0 : i32
    %c0_i32_0 = arith.constant 0 : i32
    %c0_i32_1 = arith.constant 0 : i32
    return %arg0, %c0_i32, %c0_i32_0 : i32, i32, i32
  }
  func.func @transform_1(%arg0: i32) -> (i32, i32) {
    %c0_i32 = arith.constant 0 : i32
    %c0_i32_0 = arith.constant 0 : i32
    %c0_i32_1 = arith.constant 0 : i32
    return %c0_i32, %c0_i32_0 : i32, i32
  }
  func.func @transform_2(%arg0: i32) -> (i32, i32) {
    %c0_i32 = arith.constant 0 : i32
    %c0_i32_0 = arith.constant 0 : i32
    %c0_i32_1 = arith.constant 0 : i32
    return %c0_i32, %c0_i32_0 : i32, i32
  }
  func.func @transform_3(%arg0: i32) -> (i32, i32) {
    %c0_i32 = arith.constant 0 : i32
    %c0_i32_0 = arith.constant 0 : i32
    %c0_i32_1 = arith.constant 0 : i32
    return %c0_i32, %c0_i32_0 : i32, i32
  }
  func.func @transform_4(%arg0: i32) -> (i32, i32) {
    %c0_i32 = arith.constant 0 : i32
    %c0_i32_0 = arith.constant 0 : i32
    %c0_i32_1 = arith.constant 0 : i32
    return %c0_i32, %c0_i32_0 : i32, i32
  }
  func.func @transform_5(%arg0: i32) -> (i32, i32) {
    %c0_i32 = arith.constant 0 : i32
    %c0_i32_0 = arith.constant 0 : i32
    %c0_i32_1 = arith.constant 0 : i32
    return %c0_i32, %c0_i32_0 : i32, i32
  }
  func.func @transform_6(%arg0: i32) -> (i32, i32) {
    %c0_i32 = arith.constant 0 : i32
    %c0_i32_0 = arith.constant 0 : i32
    %c0_i32_1 = arith.constant 0 : i32
    return %c0_i32, %c0_i32_0 : i32, i32
  }
  func.func @transform_7(%arg0: i32) -> (i32, i32) {
    %c0_i32 = arith.constant 0 : i32
    %c0_i32_0 = arith.constant 0 : i32
    %c0_i32_1 = arith.constant 0 : i32
    return %c0_i32, %c0_i32_0 : i32, i32
  }
  func.func @transform_8(%arg0: i32) -> (i32, i32) {
    %c0_i32 = arith.constant 0 : i32
    %c0_i32_0 = arith.constant 0 : i32
    %c0_i32_1 = arith.constant 0 : i32
    return %c0_i32, %c0_i32_0 : i32, i32
  }
  func.func @transform_9(%arg0: i32) -> (i32, i32, i32) {
    %c0_i32 = arith.constant 0 : i32
    %c0_i32_0 = arith.constant 0 : i32
    %c0_i32_1 = arith.constant 0 : i32
    return %arg0, %c0_i32, %c0_i32_0 : i32, i32, i32
  }
}

</mosaic_0001>

<llo_original>
// kernel: plain_cnn_pallas.1
$region0: #{plain_cnn_pallas.1}
  #allocation0 [shape = 'u32[]', space=smem, size = 0x4, offset = 0x4, fixed_abs, tag = 'smem constant byte address 0x4 - core index']
  #allocation1 [shape = 'u32[144,128]{1,0:T(1,128)}', space=vmem, size = 0x12000, scoped, tag = 'internal scratch']
  #allocation2 [shape = 'f32[900,64]{1,0:T(8,128)}', space=vmem, size = 0x71000, scoped, tag = 'scratch operand']
  #allocation3 [shape = 'f32[196,64]{1,0:T(8,128)}', space=vmem, size = 0x19000, scoped, tag = 'scratch operand']
  #allocation4 [shape = 'f32[144,576]{1,0:T(8,128)}', space=vmem, size = 0x5a000, scoped, tag = 'scratch operand']
  #allocation5 [shape = 'f32[144,128]{1,0:T(8,128)}', space=vmem, size = 0x12000, scoped, tag = 'scratch operand']
  %s0 = inlined_call_operand.vmem [shape: f32[2,900,27], index: 0, kind: input, shape index: {}]
  %s1 = inlined_call_operand.vmem [shape: f32[27,64], index: 1, kind: input, shape index: {}]
  %s2 = inlined_call_operand.vmem [shape: f32[1,64], index: 2, kind: input, shape index: {}]
  %s3 = inlined_call_operand.vmem [shape: f32[1,64], index: 3, kind: input, shape index: {}]
  %s4 = inlined_call_operand.vmem [shape: f32[576,128], index: 4, kind: input, shape index: {}]
  %s5 = inlined_call_operand.vmem [shape: f32[1,128], index: 5, kind: input, shape index: {}]
  %s6 = inlined_call_operand.vmem [shape: f32[1,128], index: 6, kind: input, shape index: {}]
  %s7 = inlined_call_operand.vmem [shape: f32[3200,10], index: 7, kind: input, shape index: {}]
  %s8 = inlined_call_operand.vmem [shape: f32[1,10], index: 8, kind: input, shape index: {}]
  %s9 = inlined_call_operand.hbm [shape: f32[2,1,10], index: 9, kind: output, shape index: {}]
  %s10 = sld [smem:[#allocation0]]
  $region69: #{plain_cnn_pallas.1} parent=0
    _
  %s12 = ssub.s32 1, %s10
  %s13 = scalar_select 0, %s12, %s10
  $region1: #{plain_cnn_pallas.1} parent=0
    #allocation6 [shape = 'u8[1024]{0}', space=vmem, size = 0x400, scoped, tag = 'output window, operand 0']
    #allocation7 [shape = 's32[2]{0}', space=sflag, size = 0x8, scoped, tag = 'scoped memory for plain_cnn_pallas.1']
    %14 = vsyncpa [#allocation7], 0
    %s15 = scalar_lea.sflag [#allocation7], 1
    %16 = vsyncpa %s15, 0
    loop: start=0, step=1, limit=4
    $region2: #{plain_cnn_pallas.1} parent=1 // loop_pre_header
      _
    $region3: #{plain_cnn_pallas.1} parent=1 // loop_header
      %s18 = sphi 0, %s22
      %p19 = scmp.ge.s32.totalorder %s18, 4
      %s28 = sphi 0, %s30
      %s31 = sphi 0, %s28
      %s32 = sphi 0, %s31
      %s48 = sphi 0, %s32
      %s52 = sphi 0, %s52
      %s54 = sphi 0, %s52
      %s55 = sphi 0, %s54
      %s69 = sphi 0, %s55
      %s73 = sphi 0, %s73
      %s75 = sphi 0, %s73
      %s76 = sphi 0, %s75
      %s90 = sphi 0, %s76
      %s94 = sphi 0, %s94
      %s96 = sphi 0, %s94
      %s97 = sphi 0, %s96
      %s111 = sphi 0, %s97
      %s115 = sphi 0, %s115
      %s117 = sphi 0, %s115
      %s118 = sphi 0, %s117
      %s132 = sphi 0, %s118
      %s136 = sphi 0, %s136
      %s138 = sphi 0, %s136
      %s139 = sphi 0, %s138
      %s153 = sphi 0, %s139
      %s157 = sphi 0, %s157
      %s159 = sphi 0, %s157
      %s160 = sphi 0, %s159
      %s174 = sphi 0, %s160
      %s178 = sphi 0, %s178
      %s180 = sphi 0, %s178
      %s181 = sphi 0, %s180
      %s195 = sphi 0, %s181
      %s199 = sphi 0, %s199
      %s201 = sphi 0, %s199
      %s202 = sphi 0, %s201
      %s216 = sphi 0, %s202
      %s222 = sphi 0, %s224
      %s225 = sphi 0, %s222
      %s226 = sphi 0, %s225
      %s242 = sphi 0, %s226
    $region4: #{plain_cnn_pallas.1} parent=1 // loop_header_branch
      %21 = sbr.rel (%p19) target = $region8
    $region5: #{plain_cnn_pallas.1} parent=1 // loop_body
      %s23 = ssub.s32 %s18, 1
      %s24 = ssub.s32 %s18, 2
      %s25 = sadd.s32 %s18, 1
      %s26 = ssub.s32 %s18, %s25
      %p27 = scmp.eq.s32.totalorder %s26, 0
      %s29 = sadd.s32 %s28, 1
      %s30 = scalar_select %p27, %s28, %s29
      %p33 = pneg %p27
      %p34 = scmp.eq.s32.totalorder %s18, 1
      %p35 = por %p33, %p34
      %p36 = scmp.ne.s32.totalorder %s28, %s31
      %p37 = scmp.eq.s32.totalorder %s18, 0
      %p38 = por %p36, %p37
      %p39 = scmp.ne.s32.totalorder %s28, %s31
      %p40 = scmp.eq.s32.totalorder %s23, 1
      %p41 = por %p39, %p40
      %p42 = scmp.ne.s32.totalorder %s31, %s32
      %p43 = scmp.eq.s32.totalorder %s23, 0
      %p44 = por %p42, %p43
      %p45 = scmp.ne.s32.totalorder %s31, %s32
      %p46 = scmp.eq.s32.totalorder %s24, 1
      %p47 = por %p45, %p46
      %p49 = scmp.ne.s32.totalorder %s32, %s48
      %p50 = scmp.eq.s32.totalorder %s24, 0
      %p51 = por %p49, %p50
      %s53 = sadd.s32 %s52, 1
      %p56 = scmp.eq.s32.totalorder %s18, 1
      %p57 = scmp.ne.s32.totalorder %s52, %s54
      %p58 = scmp.eq.s32.totalorder %s18, 0
      %p59 = por %p57, %p58
      %p60 = scmp.ne.s32.totalorder %s52, %s54
      %p61 = scmp.eq.s32.totalorder %s23, 1
      %p62 = por %p60, %p61
      %p63 = scmp.ne.s32.totalorder %s54, %s55
      %p64 = scmp.eq.s32.totalorder %s23, 0
      %p65 = por %p63, %p64
      %p66 = scmp.ne.s32.totalorder %s54, %s55
      %p67 = scmp.eq.s32.totalorder %s24, 1
      %p68 = por %p66, %p67
      %p70 = scmp.ne.s32.totalorder %s55, %s69
      %p71 = scmp.eq.s32.totalorder %s24, 0
      %p72 = por %p70, %p71
      %s74 = sadd.s32 %s73, 1
      %p77 = scmp.eq.s32.totalorder %s18, 1
      %p78 = scmp.ne.s32.totalorder %s73, %s75
      %p79 = scmp.eq.s32.totalorder %s18, 0
      %p80 = por %p78, %p79
      %p81 = scmp.ne.s32.totalorder %s73, %s75
      %p82 = scmp.eq.s32.totalorder %s23, 1
      %p83 = por %p81, %p82
      %p84 = scmp.ne.s32.totalorder %s75, %s76
      %p85 = scmp.eq.s32.totalorder %s23, 0
      %p86 = por %p84, %p85
      %p87 = scmp.ne.s32.totalorder %s75, %s76
      %p88 = scmp.eq.s32.totalorder %s24, 1
      %p89 = por %p87, %p88
      %p91 = scmp.ne.s32.totalorder %s76, %s90
      %p92 = scmp.eq.s32.totalorder %s24, 0
      %p93 = por %p91, %p92
      %s95 = sadd.s32 %s94, 1
      %p98 = scmp.eq.s32.totalorder %s18, 1
      %p99 = scmp.ne.s32.totalorder %s94, %s96
      %p100 = scmp.eq.s32.totalorder %s18, 0
      %p101 = por %p99, %p100
      %p102 = scmp.ne.s32.totalorder %s94, %s96
      %p103 = scmp.eq.s32.totalorder %s23, 1
      %p104 = por %p102, %p103
      %p105 = scmp.ne.s32.totalorder %s96, %s97
      %p106 = scmp.eq.s32.totalorder %s23, 0
      %p107 = por %p105, %p106
      %p108 = scmp.ne.s32.totalorder %s96, %s97
      %p109 = scmp.eq.s32.totalorder %s24, 1
      %p110 = por %p108, %p109
      %p112 = scmp.ne.s32.totalorder %s97, %s111
      %p113 = scmp.eq.s32.totalorder %s24, 0
      %p114 = por %p112, %p113
      %s116 = sadd.s32 %s115, 1
      %p119 = scmp.eq.s32.totalorder %s18, 1
      %p120 = scmp.ne.s32.totalorder %s115, %s117
      %p121 = scmp.eq.s32.totalorder %s18, 0
      %p122 = por %p120, %p121
      %p123 = scmp.ne.s32.totalorder %s115, %s117
      %p124 = scmp.eq.s32.totalorder %s23, 1
      %p125 = por %p123, %p124
      %p126 = scmp.ne.s32.totalorder %s117, %s118
      %p127 = scmp.eq.s32.totalorder %s23, 0
      %p128 = por %p126, %p127
      %p129 = scmp.ne.s32.totalorder %s117, %s118
      %p130 = scmp.eq.s32.totalorder %s24, 1
      %p131 = por %p129, %p130
      %p133 = scmp.ne.s32.totalorder %s118, %s132
      %p134 = scmp.eq.s32.totalorder %s24, 0
      %p135 = por %p133, %p134
      %s137 = sadd.s32 %s136, 1
      %p140 = scmp.eq.s32.totalorder %s18, 1
      %p141 = scmp.ne.s32.totalorder %s136, %s138
      %p142 = scmp.eq.s32.totalorder %s18, 0
      %p143 = por %p141, %p142
      %p144 = scmp.ne.s32.totalorder %s136, %s138
      %p145 = scmp.eq.s32.totalorder %s23, 1
      %p146 = por %p144, %p145
      %p147 = scmp.ne.s32.totalorder %s138, %s139
      %p148 = scmp.eq.s32.totalorder %s23, 0
      %p149 = por %p147, %p148
      %p150 = scmp.ne.s32.totalorder %s138, %s139
      %p151 = scmp.eq.s32.totalorder %s24, 1
      %p152 = por %p150, %p151
      %p154 = scmp.ne.s32.totalorder %s139, %s153
      %p155 = scmp.eq.s32.totalorder %s24, 0
      %p156 = por %p154, %p155
      %s158 = sadd.s32 %s157, 1
      %p161 = scmp.eq.s32.totalorder %s18, 1
      %p162 = scmp.ne.s32.totalorder %s157, %s159
      %p163 = scmp.eq.s32.totalorder %s18, 0
      %p164 = por %p162, %p163
      %p165 = scmp.ne.s32.totalorder %s157, %s159
      %p166 = scmp.eq.s32.totalorder %s23, 1
      %p167 = por %p165, %p166
      %p168 = scmp.ne.s32.totalorder %s159, %s160
      %p169 = scmp.eq.s32.totalorder %s23, 0
      %p170 = por %p168, %p169
      %p171 = scmp.ne.s32.totalorder %s159, %s160
      %p172 = scmp.eq.s32.totalorder %s24, 1
      %p173 = por %p171, %p172
      %p175 = scmp.ne.s32.totalorder %s160, %s174
      %p176 = scmp.eq.s32.totalorder %s24, 0
      %p177 = por %p175, %p176
      %s179 = sadd.s32 %s178, 1
      %p182 = scmp.eq.s32.totalorder %s18, 1
      %p183 = scmp.ne.s32.totalorder %s178, %s180
      %p184 = scmp.eq.s32.totalorder %s18, 0
      %p185 = por %p183, %p184
      %p186 = scmp.ne.s32.totalorder %s178, %s180
      %p187 = scmp.eq.s32.totalorder %s23, 1
      %p188 = por %p186, %p187
      %p189 = scmp.ne.s32.totalorder %s180, %s181
      %p190 = scmp.eq.s32.totalorder %s23, 0
      %p191 = por %p189, %p190
      %p192 = scmp.ne.s32.totalorder %s180, %s181
      %p193 = scmp.eq.s32.totalorder %s24, 1
      %p194 = por %p192, %p193
      %p196 = scmp.ne.s32.totalorder %s181, %s195
      %p197 = scmp.eq.s32.totalorder %s24, 0
      %p198 = por %p196, %p197
      %s200 = sadd.s32 %s199, 1
      %p203 = scmp.eq.s32.totalorder %s18, 1
      %p204 = scmp.ne.s32.totalorder %s199, %s201
      %p205 = scmp.eq.s32.totalorder %s18, 0
      %p206 = por %p204, %p205
      %p207 = scmp.ne.s32.totalorder %s199, %s201
      %p208 = scmp.eq.s32.totalorder %s23, 1
      %p209 = por %p207, %p208
      %p210 = scmp.ne.s32.totalorder %s201, %s202
      %p211 = scmp.eq.s32.totalorder %s23, 0
      %p212 = por %p210, %p211
      %p213 = scmp.ne.s32.totalorder %s201, %s202
      %p214 = scmp.eq.s32.totalorder %s24, 1
      %p215 = por %p213, %p214
      %p217 = scmp.ne.s32.totalorder %s202, %s216
      %p218 = scmp.eq.s32.totalorder %s24, 0
      %p219 = por %p217, %p218
      %s220 = ssub.s32 %s18, %s25
      %p221 = scmp.eq.s32.totalorder %s220, 0
      %s223 = sadd.s32 %s222, 1
      %s224 = scalar_select %p221, %s222, %s223
      %p227 = pneg %p221
      %p228 = scmp.eq.s32.totalorder %s18, 1
      %p229 = por %p227, %p228
      %p230 = scmp.ne.s32.totalorder %s222, %s225
      %p231 = scmp.eq.s32.totalorder %s18, 0
      %p232 = por %p230, %p231
      %p233 = scmp.ne.s32.totalorder %s222, %s225
      %p234 = scmp.eq.s32.totalorder %s23, 1
      %p235 = por %p233, %p234
      %p236 = scmp.ne.s32.totalorder %s225, %s226
      %p237 = scmp.eq.s32.totalorder %s23, 0
      %p238 = por %p236, %p237
      %p239 = scmp.ne.s32.totalorder %s225, %s226
      %p240 = scmp.eq.s32.totalorder %s24, 1
      %p241 = por %p239, %p240
      %p243 = scmp.ne.s32.totalorder %s226, %s242
      %p244 = scmp.eq.s32.totalorder %s24, 0
      %p245 = por %p243, %p244
      %p246 = scmp.le.s32.totalorder 1, %s18
      %p247 = scmp.lt.s32.totalorder %s18, 3
      %p248 = pnand %p246, %p247
      %p249 = pneg %p248
      // Predicated region
      $region9: #{plain_cnn_pallas.1} parent=5 // pred_check
        _
      $region10: #{plain_cnn_pallas.1} parent=5 // pred_check_branch
        %251 = sbr.rel (%p248) target = $region12
      $region11: #{plain_cnn_pallas.1} parent=5 // pred_region
        %s252 = ssub.s32 %s18, 1
        // Predicated region
        $region13: #{plain_cnn_pallas.1} parent=11 // pred_check
          %p253 = pneg %p65
        $region14: #{plain_cnn_pallas.1} parent=11 // pred_check_branch
          %255 = sbr.rel (%p253) target = $region16
        $region15: #{plain_cnn_pallas.1} parent=11 // pred_region
          _
        $region16: #{plain_cnn_pallas.1} parent=11 // pred_fallthru
          _
        // Predicated region
        $region17: #{plain_cnn_pallas.1} parent=11 // pred_check
          %p256 = pneg %p86
        $region18: #{plain_cnn_pallas.1} parent=11 // pred_check_branch
          %258 = sbr.rel (%p256) target = $region20
        $region19: #{plain_cnn_pallas.1} parent=11 // pred_region
          _
        $region20: #{plain_cnn_pallas.1} parent=11 // pred_fallthru
          _
        // Predicated region
        $region21: #{plain_cnn_pallas.1} parent=11 // pred_check
          %p259 = pneg %p107
        $region22: #{plain_cnn_pallas.1} parent=11 // pred_check_branch
          %261 = sbr.rel (%p259) target = $region24
        $region23: #{plain_cnn_pallas.1} parent=11 // pred_region
          _
        $region24: #{plain_cnn_pallas.1} parent=11 // pred_fallthru
          _
        // Predicated region
        $region25: #{plain_cnn_pallas.1} parent=11 // pred_check
          %p262 = pneg %p128
        $region26: #{plain_cnn_pallas.1} parent=11 // pred_check_branch
          %264 = sbr.rel (%p262) target = $region28
        $region27: #{plain_cnn_pallas.1} parent=11 // pred_region
          _
        $region28: #{plain_cnn_pallas.1} parent=11 // pred_fallthru
          _
        // Predicated region
        $region29: #{plain_cnn_pallas.1} parent=11 // pred_check
          %p265 = pneg %p149
        $region30: #{plain_cnn_pallas.1} parent=11 // pred_check_branch
          %267 = sbr.rel (%p265) target = $region32
        $region31: #{plain_cnn_pallas.1} parent=11 // pred_region
          _
        $region32: #{plain_cnn_pallas.1} parent=11 // pred_fallthru
          _
        // Predicated region
        $region33: #{plain_cnn_pallas.1} parent=11 // pred_check
          %p268 = pneg %p170
        $region34: #{plain_cnn_pallas.1} parent=11 // pred_check_branch
          %270 = sbr.rel (%p268) target = $region36
        $region35: #{plain_cnn_pallas.1} parent=11 // pred_region
          _
        $region36: #{plain_cnn_pallas.1} parent=11 // pred_fallthru
          _
        // Predicated region
        $region37: #{plain_cnn_pallas.1} parent=11 // pred_check
          %p271 = pneg %p191
        $region38: #{plain_cnn_pallas.1} parent=11 // pred_check_branch
          %273 = sbr.rel (%p271) target = $region40
        $region39: #{plain_cnn_pallas.1} parent=11 // pred_region
          _
        $region40: #{plain_cnn_pallas.1} parent=11 // pred_fallthru
          _
        // Predicated region
        $region41: #{plain_cnn_pallas.1} parent=11 // pred_check
          %p274 = pneg %p212
        $region42: #{plain_cnn_pallas.1} parent=11 // pred_check_branch
          %276 = sbr.rel (%p274) target = $region44
        $region43: #{plain_cnn_pallas.1} parent=11 // pred_region
          _
        $region44: #{plain_cnn_pallas.1} parent=11 // pred_fallthru
          _
      $region12: #{plain_cnn_pallas.1} parent=5 // pred_fallthru
        _
      %p277 = scmp.lt.s32.totalorder %s18, 2
      // Predicated region
      $region45: #{plain_cnn_pallas.1} parent=5 // pred_check
        %p278 = pneg %p277
      $region46: #{plain_cnn_pallas.1} parent=5 // pred_check_branch
        %280 = sbr.rel (%p278) target = $region48
      $region47: #{plain_cnn_pallas.1} parent=5 // pred_region
        // Predicated region
        $region49: #{plain_cnn_pallas.1} parent=47 // pred_check
          %p281 = pneg %p38
        $region50: #{plain_cnn_pallas.1} parent=47 // pred_check_branch
          %283 = sbr.rel (%p281) target = $region52
        $region51: #{plain_cnn_pallas.1} parent=47 // pred_region
          %p284 = scmp.lt.s32.totalorder %s18, 1
          %s285 = scalar_select %p284, %s18, 1
          %s286 = smul.addr %s285, 113
          %s287 = smul.addr %s286, 8
          %s288 = scalar_lea.vmem %s0, %s287
        $region52: #{plain_cnn_pallas.1} parent=47 // pred_fallthru
          _
      $region48: #{plain_cnn_pallas.1} parent=5 // pred_fallthru
        _
      %p289 = scmp.le.s32.totalorder 1, %s18
      %p290 = scmp.lt.s32.totalorder %s18, 3
      %p291 = pnand %p289, %p290
      %p292 = pneg %p291
      // Predicated region
      $region53: #{plain_cnn_pallas.1} parent=5 // pred_check
        _
      $region54: #{plain_cnn_pallas.1} parent=5 // pred_check_branch
        %294 = sbr.rel (%p291) target = $region56
      $region55: #{plain_cnn_pallas.1} parent=5 // pred_region
        %s295 = ssub.s32 %s18, 1
        %p296 = scmp.lt.s32.totalorder %s23, 1
        %s297 = scalar_select %p296, %s23, 1
        %s298 = smul.addr %s297, 113
        %s299 = smul.addr %s298, 8
        %s300 = scalar_lea.vmem %s0, %s299
        %p301 = pneg %p44
        %p302 = pneg %p41
        %p303 = pneg %p65
        %p304 = pneg %p62
        %p305 = pneg %p86
        %p306 = pneg %p83
        %p307 = pneg %p107
        %p308 = pneg %p104
        %p309 = pneg %p128
        %p310 = pneg %p125
        %p311 = pneg %p149
        %p312 = pneg %p146
        %p313 = pneg %p170
        %p314 = pneg %p167
        %p315 = pneg %p191
        %p316 = pneg %p188
        %p317 = pneg %p212
        %p318 = pneg %p209
        %p319 = pneg %p238
        %p320 = pneg %p235
        %s321 = sand.u32 %s225, 1
        %s322 = scalar_lea.sflag [#allocation7], %s321
        %s323 = sand.u32 %s225, 1
        %s324 = scalar_lea.vmem [#allocation6], %s323
        %p325 = scmp.lt.s32.totalorder %s23, 1
        %s326 = scalar_select %p325, %s23, 1
        %s327 = smul.addr %s326, 113
        %s328 = smul.addr %s327, 8
        %s329 = scalar_lea.vmem %s0, %s328
        %v330 = vld [vmem:[%s329] sm:$0xff]
        %v331 = vld [vmem:[%s329 + $0x8] sm:$0xff]
        %v332 = vld [vmem:[%s329 + $0x10] sm:$0xff]
        %v333 = vld [vmem:[%s329 + $0x18] sm:$0xff]
        %v334 = vld [vmem:[%s329 + $0x20] sm:$0xff]
        %v335 = vld [vmem:[%s329 + $0x28] sm:$0xff]
        %v336 = vld [vmem:[%s329 + $0x30] sm:$0xff]
        %v337 = vld [vmem:[%s329 + $0x38] sm:$0xff]
        %v338 = vld [vmem:[%s329 + $0x40] sm:$0xff]
        %v339 = vld [vmem:[%s329 + $0x48] sm:$0xff]
        %v340 = vld [vmem:[%s329 + $0x50] sm:$0xff]
        %v341 = vld [vmem:[%s329 + $0x58] sm:$0xff]
        %v342 = vld [vmem:[%s329 + $0x60] sm:$0xff]
        %v343 = vld [vmem:[%s329 + $0x68] sm:$0xff]
        %v344 = vld [vmem:[%s329 + $0x70] sm:$0xff]
        %v345 = vld [vmem:[%s329 + $0x78] sm:$0xff]
        %v346 = vld [vmem:[%s329 + $0x80] sm:$0xff]
        %v347 = vld [vmem:[%s329 + $0x88] sm:$0xff]
        %v348 = vld [vmem:[%s329 + $0x90] sm:$0xff]
        %v349 = vld [vmem:[%s329 + $0x98] sm:$0xff]
        %v350 = vld [vmem:[%s329 + $0xa0] sm:$0xff]
        %v351 = vld [vmem:[%s329 + $0xa8] sm:$0xff]
        %v352 = vld [vmem:[%s329 + $0xb0] sm:$0xff]
        %v353 = vld [vmem:[%s329 + $0xb8] sm:$0xff]
        %v354 = vld [vmem:[%s329 + $0xc0] sm:$0xff]
        %v355 = vld [vmem:[%s329 + $0xc8] sm:$0xff]
        %v356 = vld [vmem:[%s329 + $0xd0] sm:$0xff]
        %v357 = vld [vmem:[%s329 + $0xd8] sm:$0xff]
        %v358 = vld [vmem:[%s329 + $0xe0] sm:$0xff]
        %v359 = vld [vmem:[%s329 + $0xe8] sm:$0xff]
        %v360 = vld [vmem:[%s329 + $0xf0] sm:$0xff]
        %v361 = vld [vmem:[%s329 + $0xf8] sm:$0xff]
        %v362 = vld [vmem:[%s329 + $0x100] sm:$0xff]
        %v363 = vld [vmem:[%s329 + $0x108] sm:$0xff]
        %v364 = vld [vmem:[%s329 + $0x110] sm:$0xff]
        %v365 = vld [vmem:[%s329 + $0x118] sm:$0xff]
        %v366 = vld [vmem:[%s329 + $0x120] sm:$0xff]
        %v367 = vld [vmem:[%s329 + $0x128] sm:$0xff]
        %v368 = vld [vmem:[%s329 + $0x130] sm:$0xff]
        %v369 = vld [vmem:[%s329 + $0x138] sm:$0xff]
        %v370 = vld [vmem:[%s329 + $0x140] sm:$0xff]
        %v371 = vld [vmem:[%s329 + $0x148] sm:$0xff]
        %v372 = vld [vmem:[%s329 + $0x150] sm:$0xff]
        %v373 = vld [vmem:[%s329 + $0x158] sm:$0xff]
        %v374 = vld [vmem:[%s329 + $0x160] sm:$0xff]
        %v375 = vld [vmem:[%s329 + $0x168] sm:$0xff]
        %v376 = vld [vmem:[%s329 + $0x170] sm:$0xff]
        %v377 = vld [vmem:[%s329 + $0x178] sm:$0xff]
        %v378 = vld [vmem:[%s329 + $0x180] sm:$0xff]
        %v379 = vld [vmem:[%s329 + $0x188] sm:$0xff]
        %v380 = vld [vmem:[%s329 + $0x190] sm:$0xff]
        %v381 = vld [vmem:[%s329 + $0x198] sm:$0xff]
        %v382 = vld [vmem:[%s329 + $0x1a0] sm:$0xff]
        %v383 = vld [vmem:[%s329 + $0x1a8] sm:$0xff]
        %v384 = vld [vmem:[%s329 + $0x1b0] sm:$0xff]
        %v385 = vld [vmem:[%s329 + $0x1b8] sm:$0xff]
        %v386 = vld [vmem:[%s329 + $0x1c0] sm:$0xff]
        %v387 = vld [vmem:[%s329 + $0x1c8] sm:$0xff]
        %v388 = vld [vmem:[%s329 + $0x1d0] sm:$0xff]
        %v389 = vld [vmem:[%s329 + $0x1d8] sm:$0xff]
        %v390 = vld [vmem:[%s329 + $0x1e0] sm:$0xff]
        %v391 = vld [vmem:[%s329 + $0x1e8] sm:$0xff]
        %v392 = vld [vmem:[%s329 + $0x1f0] sm:$0xff]
        %v393 = vld [vmem:[%s329 + $0x1f8] sm:$0xff]
        %v394 = vld [vmem:[%s329 + $0x200] sm:$0xff]
        %v395 = vld [vmem:[%s329 + $0x208] sm:$0xff]
        %v396 = vld [vmem:[%s329 + $0x210] sm:$0xff]
        %v397 = vld [vmem:[%s329 + $0x218] sm:$0xff]
        %v398 = vld [vmem:[%s329 + $0x220] sm:$0xff]
        %v399 = vld [vmem:[%s329 + $0x228] sm:$0xff]
        %v400 = vld [vmem:[%s329 + $0x230] sm:$0xff]
        %v401 = vld [vmem:[%s329 + $0x238] sm:$0xff]
        %v402 = vld [vmem:[%s329 + $0x240] sm:$0xff]
        %v403 = vld [vmem:[%s329 + $0x248] sm:$0xff]
        %v404 = vld [vmem:[%s329 + $0x250] sm:$0xff]
        %v405 = vld [vmem:[%s329 + $0x258] sm:$0xff]
        %v406 = vld [vmem:[%s329 + $0x260] sm:$0xff]
        %v407 = vld [vmem:[%s329 + $0x268] sm:$0xff]
        %v408 = vld [vmem:[%s329 + $0x270] sm:$0xff]
        %v409 = vld [vmem:[%s329 + $0x278] sm:$0xff]
        %v410 = vld [vmem:[%s329 + $0x280] sm:$0xff]
        %v411 = vld [vmem:[%s329 + $0x288] sm:$0xff]
        %v412 = vld [vmem:[%s329 + $0x290] sm:$0xff]
        %v413 = vld [vmem:[%s329 + $0x298] sm:$0xff]
        %v414 = vld [vmem:[%s329 + $0x2a0] sm:$0xff]
        %v415 = vld [vmem:[%s329 + $0x2a8] sm:$0xff]
        %v416 = vld [vmem:[%s329 + $0x2b0] sm:$0xff]
        %v417 = vld [vmem:[%s329 + $0x2b8] sm:$0xff]
        %v418 = vld [vmem:[%s329 + $0x2c0] sm:$0xff]
        %v419 = vld [vmem:[%s329 + $0x2c8] sm:$0xff]
        %v420 = vld [vmem:[%s329 + $0x2d0] sm:$0xff]
        %v421 = vld [vmem:[%s329 + $0x2d8] sm:$0xff]
        %v422 = vld [vmem:[%s329 + $0x2e0] sm:$0xff]
        %v423 = vld [vmem:[%s329 + $0x2e8] sm:$0xff]
        %v424 = vld [vmem:[%s329 + $0x2f0] sm:$0xff]
        %v425 = vld [vmem:[%s329 + $0x2f8] sm:$0xff]
        %v426 = vld [vmem:[%s329 + $0x300] sm:$0xff]
        %v427 = vld [vmem:[%s329 + $0x308] sm:$0xff]
        %v428 = vld [vmem:[%s329 + $0x310] sm:$0xff]
        %v429 = vld [vmem:[%s329 + $0x318] sm:$0xff]
        %v430 = vld [vmem:[%s329 + $0x320] sm:$0xff]
        %v431 = vld [vmem:[%s329 + $0x328] sm:$0xff]
        %v432 = vld [vmem:[%s329 + $0x330] sm:$0xff]
        %v433 = vld [vmem:[%s329 + $0x338] sm:$0xff]
        %v434 = vld [vmem:[%s329 + $0x340] sm:$0xff]
        %v435 = vld [vmem:[%s329 + $0x348] sm:$0xff]
        %v436 = vld [vmem:[%s329 + $0x350] sm:$0xff]
        %v437 = vld [vmem:[%s329 + $0x358] sm:$0xff]
        %v438 = vld [vmem:[%s329 + $0x360] sm:$0xff]
        %v439 = vld [vmem:[%s329 + $0x368] sm:$0xff]
        %v440 = vld [vmem:[%s329 + $0x370] sm:$0xff]
        %v441 = vld [vmem:[%s329 + $0x378] sm:$0xff]
        %v442 = vld [vmem:[%s329 + $0x380] sm:$0xf]
        %v443 = vld [vmem:[%s1] sm:$0xff]
        %v444 = vld [vmem:[%s1 + $0x8] sm:$0xff]
        %v445 = vld [vmem:[%s1 + $0x10] sm:$0xff]
        %v446 = vld [vmem:[%s1 + $0x18] sm:$0x7]
        %vm447 = vcmask 220160
        %v449 = vsel %vm447, %v330, 0
        %v452 = vsel %vm447, %v331, 0
        %v455 = vsel %vm447, %v332, 0
        %v458 = vsel %vm447, %v333, 0
        %v461 = vsel %vm447, %v334, 0
        %v464 = vsel %vm447, %v335, 0
        %v467 = vsel %vm447, %v336, 0
        %v470 = vsel %vm447, %v337, 0
        %v473 = vsel %vm447, %v338, 0
        %v476 = vsel %vm447, %v339, 0
        %v479 = vsel %vm447, %v340, 0
        %v482 = vsel %vm447, %v341, 0
        %v485 = vsel %vm447, %v342, 0
        %v488 = vsel %vm447, %v343, 0
        %v491 = vsel %vm447, %v344, 0
        %v494 = vsel %vm447, %v345, 0
        %v497 = vsel %vm447, %v346, 0
        %v500 = vsel %vm447, %v347, 0
        %v503 = vsel %vm447, %v348, 0
        %v506 = vsel %vm447, %v349, 0
        %v509 = vsel %vm447, %v350, 0
        %v512 = vsel %vm447, %v351, 0
        %v515 = vsel %vm447, %v352, 0
        %v518 = vsel %vm447, %v353, 0
        %v521 = vsel %vm447, %v354, 0
        %v524 = vsel %vm447, %v355, 0
        %v527 = vsel %vm447, %v356, 0
        %v530 = vsel %vm447, %v357, 0
        %v533 = vsel %vm447, %v358, 0
        %v536 = vsel %vm447, %v359, 0
        %v539 = vsel %vm447, %v360, 0
        %v542 = vsel %vm447, %v361, 0
        %v545 = vsel %vm447, %v362, 0
        %v548 = vsel %vm447, %v363, 0
        %v551 = vsel %vm447, %v364, 0
        %v554 = vsel %vm447, %v365, 0
        %v557 = vsel %vm447, %v366, 0
        %v560 = vsel %vm447, %v367, 0
        %v563 = vsel %vm447, %v368, 0
        %v566 = vsel %vm447, %v369, 0
        %v569 = vsel %vm447, %v370, 0
        %v572 = vsel %vm447, %v371, 0
        %v575 = vsel %vm447, %v372, 0
        %v578 = vsel %vm447, %v373, 0
        %v581 = vsel %vm447, %v374, 0
        %v584 = vsel %vm447, %v375, 0
        %v587 = vsel %vm447, %v376, 0
        %v590 = vsel %vm447, %v377, 0
        %v593 = vsel %vm447, %v378, 0
        %v596 = vsel %vm447, %v379, 0
        %v599 = vsel %vm447, %v380, 0
        %v602 = vsel %vm447, %v381, 0
        %v605 = vsel %vm447, %v382, 0
        %v608 = vsel %vm447, %v383, 0
        %v611 = vsel %vm447, %v384, 0
        %v614 = vsel %vm447, %v385, 0
        %v617 = vsel %vm447, %v386, 0
        %v620 = vsel %vm447, %v387, 0
        %v623 = vsel %vm447, %v388, 0
        %v626 = vsel %vm447, %v389, 0
        %v629 = vsel %vm447, %v390, 0
        %v632 = vsel %vm447, %v391, 0
        %v635 = vsel %vm447, %v392, 0
        %v638 = vsel %vm447, %v393, 0
        %v641 = vsel %vm447, %v394, 0
        %v644 = vsel %vm447, %v395, 0
        %v647 = vsel %vm447, %v396, 0
        %v650 = vsel %vm447, %v397, 0
        %v653 = vsel %vm447, %v398, 0
        %v656 = vsel %vm447, %v399, 0
        %v659 = vsel %vm447, %v400, 0
        %v662 = vsel %vm447, %v401, 0
        %v665 = vsel %vm447, %v402, 0
        %v668 = vsel %vm447, %v403, 0
        %v671 = vsel %vm447, %v404, 0
        %v674 = vsel %vm447, %v405, 0
        %v677 = vsel %vm447, %v406, 0
        %v680 = vsel %vm447, %v407, 0
        %v683 = vsel %vm447, %v408, 0
        %v686 = vsel %vm447, %v409, 0
        %v689 = vsel %vm447, %v410, 0
        %v692 = vsel %vm447, %v411, 0
        %v695 = vsel %vm447, %v412, 0
        %v698 = vsel %vm447, %v413, 0
        %v701 = vsel %vm447, %v414, 0
        %v704 = vsel %vm447, %v415, 0
        %v707 = vsel %vm447, %v416, 0
        %v710 = vsel %vm447, %v417, 0
        %v713 = vsel %vm447, %v418, 0
        %v716 = vsel %vm447, %v419, 0
        %v719 = vsel %vm447, %v420, 0
        %v722 = vsel %vm447, %v421, 0
        %v725 = vsel %vm447, %v422, 0
        %v728 = vsel %vm447, %v423, 0
        %v731 = vsel %vm447, %v424, 0
        %v734 = vsel %vm447, %v425, 0
        %v737 = vsel %vm447, %v426, 0
        %v740 = vsel %vm447, %v427, 0
        %v743 = vsel %vm447, %v428, 0
        %v746 = vsel %vm447, %v429, 0
        %v749 = vsel %vm447, %v430, 0
        %v752 = vsel %vm447, %v431, 0
        %v755 = vsel %vm447, %v432, 0
        %v758 = vsel %vm447, %v433, 0
        %v761 = vsel %vm447, %v434, 0
        %v764 = vsel %vm447, %v435, 0
        %v767 = vsel %vm447, %v436, 0
        %v770 = vsel %vm447, %v437, 0
        %v773 = vsel %vm447, %v438, 0
        %v776 = vsel %vm447, %v439, 0
        %v779 = vsel %vm447, %v440, 0
        %v782 = vsel %vm447, %v441, 0
        %v785 = vsel %vm447, %v442, 0
        %vm787 = vcmask 1042432
        %v789 = vsel %vm787, %v446, 0
        %791 = vmatprep.subr.mxu0 0.0
        %792 = vmatpush1.msra.mxu0 0.0
        %793 = vmatprep.subr.mxu0 0.0
        %794 = vmatpush1.msra.mxu0 0.0
        %795 = vmatprep.subr.mxu0 0.0
        %796 = vmatpush1.msra.mxu0 0.0
        %797 = vmatprep.subr.mxu0 0.0
        %798 = vmatpush1.msra.mxu0 0.0
        %799 = vmatprep.subr.mxu0 0.0
        %800 = vmatpush1.msra.mxu0 0.0
        %801 = vmatprep.subr.mxu0 0.0
        %802 = vmatpush1.msra.mxu0 0.0
        %803 = vmatprep.subr.mxu0 0.0
        %804 = vmatpush1.msra.mxu0 0.0
        %805 = vmatprep.subr.mxu0 0.0
        %806 = vmatpush1.msra.mxu0 0.0
        %807 = vmatprep.subr.mxu0 0.0
        %808 = vmatpush1.msra.mxu0 0.0
        %809 = vmatprep.subr.mxu0 0.0
        %810 = vmatpush1.msra.mxu0 0.0
        %811 = vmatprep.subr.mxu0 0.0
        %812 = vmatpush1.msra.mxu0 0.0
        %813 = vmatprep.subr.mxu0 0.0
        %814 = vmatpush1.msra.mxu0 0.0
        %815 = vmatprep.subr.mxu0 0.0
        %816 = vmatpush1.msra.mxu0 %v789
        %817 = vmatprep.subr.mxu0 0.0
        %818 = vmatpush1.msra.mxu0 %v445
        %819 = vmatprep.subr.mxu0 0.0
        %820 = vmatpush1.msra.mxu0 %v444
        %821 = vmatprep.subr.mxu0 0.0
        %822 = vmatpush1.msra.mxu0 %v443
        %823 = vmatprep.subr.mxu0 0.0
        %824 = vmatpush2.msra.mxu0 0.0
        %825 = vmatprep.subr.mxu0 0.0
        %826 = vmatpush2.msra.mxu0 0.0
        %827 = vmatprep.subr.mxu0 0.0
        %828 = vmatpush2.msra.mxu0 0.0
        %829 = vmatprep.subr.mxu0 0.0
        %830 = vmatpush2.msra.mxu0 0.0
        %831 = vmatprep.subr.mxu0 0.0
        %832 = vmatpush2.msra.mxu0 0.0
        %833 = vmatprep.subr.mxu0 0.0
        %834 = vmatpush2.msra.mxu0 0.0
        %835 = vmatprep.subr.mxu0 0.0
        %836 = vmatpush2.msra.mxu0 0.0
        %837 = vmatprep.subr.mxu0 0.0
        %838 = vmatpush2.msra.mxu0 0.0
        %839 = vmatprep.subr.mxu0 0.0
        %840 = vmatpush2.msra.mxu0 0.0
        %841 = vmatprep.subr.mxu0 0.0
        %842 = vmatpush2.msra.mxu0 0.0
        %843 = vmatprep.subr.mxu0 0.0
        %844 = vmatpush2.msra.mxu0 0.0
        %845 = vmatprep.subr.mxu0 0.0
        %846 = vmatpush2.msra.mxu0 0.0
        %847 = vmatprep.subr.mxu0 0.0
        %848 = vmatpush2.msra.mxu0 0.0
        %849 = vmatprep.subr.mxu0 0.0
        %850 = vmatpush2.msra.mxu0 0.0
        %851 = vmatprep.subr.mxu0 0.0
        %852 = vmatpush2.msra.mxu0 0.0
        %853 = vmatprep.subr.mxu0 0.0
        %854 = vmatpush2.msra.mxu0 0.0
        %855 = vmatprep.mubr.f32.mxu0 0.0
        %856 = vmatmul.mubr.f32.gmra.mxu0 %v449
        %v857 = vpop.f32.mrf.mxu0
        %v858 = vadd.f32 0.0, %v857
        %v859 = vpop.f32.mrf.mxu0
        %860 = vmatprep.mubr.f32.mxu0 0.0
        %861 = vmatmul.mubr.f32.gmra.mxu0 %v452
        %v862 = vpop.f32.mrf.mxu0
        %v863 = vadd.f32 0.0, %v862
        %v864 = vpop.f32.mrf.mxu0
        %865 = vmatprep.mubr.f32.mxu0 0.0
        %866 = vmatmul.mubr.f32.gmra.mxu0 %v455
        %v867 = vpop.f32.mrf.mxu0
        %v868 = vadd.f32 0.0, %v867
        %v869 = vpop.f32.mrf.mxu0
        %870 = vmatprep.mubr.f32.mxu0 0.0
        %871 = vmatmul.mubr.f32.gmra.mxu0 %v458
        %v872 = vpop.f32.mrf.mxu0
        %v873 = vadd.f32 0.0, %v872
        %v874 = vpop.f32.mrf.mxu0
        %875 = vmatprep.mubr.f32.mxu0 0.0
        %876 = vmatmul.mubr.f32.gmra.mxu0 %v461
        %v877 = vpop.f32.mrf.mxu0
        %v878 = vadd.f32 0.0, %v877
        %v879 = vpop.f32.mrf.mxu0
        %880 = vmatprep.mubr.f32.mxu0 0.0
        %881 = vmatmul.mubr.f32.gmra.mxu0 %v464
        %v882 = vpop.f32.mrf.mxu0
        %v883 = vadd.f32 0.0, %v882
        %v884 = vpop.f32.mrf.mxu0
        %885 = vmatprep.mubr.f32.mxu0 0.0
        %886 = vmatmul.mubr.f32.gmra.mxu0 %v467
        %v887 = vpop.f32.mrf.mxu0
        %v888 = vadd.f32 0.0, %v887
        %v889 = vpop.f32.mrf.mxu0
        %890 = vmatprep.mubr.f32.mxu0 0.0
        %891 = vmatmul.mubr.f32.gmra.mxu0 %v470
        %v892 = vpop.f32.mrf.mxu0
        %v893 = vadd.f32 0.0, %v892
        %v894 = vpop.f32.mrf.mxu0
        %895 = vmatprep.mubr.f32.mxu0 0.0
        %896 = vmatmul.mubr.f32.gmra.mxu0 %v473
        %v897 = vpop.f32.mrf.mxu0
        %v898 = vadd.f32 0.0, %v897
        %v899 = vpop.f32.mrf.mxu0
        %900 = vmatprep.mubr.f32.mxu0 0.0
        %901 = vmatmul.mubr.f32.gmra.mxu0 %v476
        %v902 = vpop.f32.mrf.mxu0
        %v903 = vadd.f32 0.0, %v902
        %v904 = vpop.f32.mrf.mxu0
        %905 = vmatprep.mubr.f32.mxu0 0.0
        %906 = vmatmul.mubr.f32.gmra.mxu0 %v479
        %v907 = vpop.f32.mrf.mxu0
        %v908 = vadd.f32 0.0, %v907
        %v909 = vpop.f32.mrf.mxu0
        %910 = vmatprep.mubr.f32.mxu0 0.0
        %911 = vmatmul.mubr.f32.gmra.mxu0 %v482
        %v912 = vpop.f32.mrf.mxu0
        %v913 = vadd.f32 0.0, %v912
        %v914 = vpop.f32.mrf.mxu0
        %915 = vmatprep.mubr.f32.mxu0 0.0
        %916 = vmatmul.mubr.f32.gmra.mxu0 %v485
        %v917 = vpop.f32.mrf.mxu0
        %v918 = vadd.f32 0.0, %v917
        %v919 = vpop.f32.mrf.mxu0
        %920 = vmatprep.mubr.f32.mxu0 0.0
        %921 = vmatmul.mubr.f32.gmra.mxu0 %v488
        %v922 = vpop.f32.mrf.mxu0
        %v923 = vadd.f32 0.0, %v922
        %v924 = vpop.f32.mrf.mxu0
        %925 = vmatprep.mubr.f32.mxu0 0.0
        %926 = vmatmul.mubr.f32.gmra.mxu0 %v491
        %v927 = vpop.f32.mrf.mxu0
        %v928 = vadd.f32 0.0, %v927
        %v929 = vpop.f32.mrf.mxu0
        %930 = vmatprep.mubr.f32.mxu0 0.0
        %931 = vmatmul.mubr.f32.gmra.mxu0 %v494
        %v932 = vpop.f32.mrf.mxu0
        %v933 = vadd.f32 0.0, %v932
        %v934 = vpop.f32.mrf.mxu0
        %935 = vmatprep.mubr.f32.mxu0 0.0
        %936 = vmatmul.mubr.f32.gmra.mxu0 %v497
        %v937 = vpop.f32.mrf.mxu0
        %v938 = vadd.f32 0.0, %v937
        %v939 = vpop.f32.mrf.mxu0
        %940 = vmatprep.mubr.f32.mxu0 0.0
        %941 = vmatmul.mubr.f32.gmra.mxu0 %v500
        %v942 = vpop.f32.mrf.mxu0
        %v943 = vadd.f32 0.0, %v942
        %v944 = vpop.f32.mrf.mxu0
        %945 = vmatprep.mubr.f32.mxu0 0.0
        %946 = vmatmul.mubr.f32.gmra.mxu0 %v503
        %v947 = vpop.f32.mrf.mxu0
        %v948 = vadd.f32 0.0, %v947
        %v949 = vpop.f32.mrf.mxu0
        %950 = vmatprep.mubr.f32.mxu0 0.0
        %951 = vmatmul.mubr.f32.gmra.mxu0 %v506
        %v952 = vpop.f32.mrf.mxu0
        %v953 = vadd.f32 0.0, %v952
        %v954 = vpop.f32.mrf.mxu0
        %955 = vmatprep.mubr.f32.mxu0 0.0
        %956 = vmatmul.mubr.f32.gmra.mxu0 %v509
        %v957 = vpop.f32.mrf.mxu0
        %v958 = vadd.f32 0.0, %v957
        %v959 = vpop.f32.mrf.mxu0
        %960 = vmatprep.mubr.f32.mxu0 0.0
        %961 = vmatmul.mubr.f32.gmra.mxu0 %v512
        %v962 = vpop.f32.mrf.mxu0
        %v963 = vadd.f32 0.0, %v962
        %v964 = vpop.f32.mrf.mxu0
        %965 = vmatprep.mubr.f32.mxu0 0.0
        %966 = vmatmul.mubr.f32.gmra.mxu0 %v515
        %v967 = vpop.f32.mrf.mxu0
        %v968 = vadd.f32 0.0, %v967
        %v969 = vpop.f32.mrf.mxu0
        %970 = vmatprep.mubr.f32.mxu0 0.0
        %971 = vmatmul.mubr.f32.gmra.mxu0 %v518
        %v972 = vpop.f32.mrf.mxu0
        %v973 = vadd.f32 0.0, %v972
        %v974 = vpop.f32.mrf.mxu0
        %975 = vmatprep.mubr.f32.mxu0 0.0
        %976 = vmatmul.mubr.f32.gmra.mxu0 %v521
        %v977 = vpop.f32.mrf.mxu0
        %v978 = vadd.f32 0.0, %v977
        %v979 = vpop.f32.mrf.mxu0
        %980 = vmatprep.mubr.f32.mxu0 0.0
        %981 = vmatmul.mubr.f32.gmra.mxu0 %v524
        %v982 = vpop.f32.mrf.mxu0
        %v983 = vadd.f32 0.0, %v982
        %v984 = vpop.f32.mrf.mxu0
        %985 = vmatprep.mubr.f32.mxu0 0.0
        %986 = vmatmul.mubr.f32.gmra.mxu0 %v527
        %v987 = vpop.f32.mrf.mxu0
        %v988 = vadd.f32 0.0, %v987
        %v989 = vpop.f32.mrf.mxu0
        %990 = vmatprep.mubr.f32.mxu0 0.0
        %991 = vmatmul.mubr.f32.gmra.mxu0 %v530
        %v992 = vpop.f32.mrf.mxu0
        %v993 = vadd.f32 0.0, %v992
        %v994 = vpop.f32.mrf.mxu0
        %995 = vmatprep.mubr.f32.mxu0 0.0
        %996 = vmatmul.mubr.f32.gmra.mxu0 %v533
        %v997 = vpop.f32.mrf.mxu0
        %v998 = vadd.f32 0.0, %v997
        %v999 = vpop.f32.mrf.mxu0
        %1000 = vmatprep.mubr.f32.mxu0 0.0
        %1001 = vmatmul.mubr.f32.gmra.mxu0 %v536
        %v1002 = vpop.f32.mrf.mxu0
        %v1003 = vadd.f32 0.0, %v1002
        %v1004 = vpop.f32.mrf.mxu0
        %1005 = vmatprep.mubr.f32.mxu0 0.0
        %1006 = vmatmul.mubr.f32.gmra.mxu0 %v539
        %v1007 = vpop.f32.mrf.mxu0
        %v1008 = vadd.f32 0.0, %v1007
        %v1009 = vpop.f32.mrf.mxu0
        %1010 = vmatprep.mubr.f32.mxu0 0.0
        %1011 = vmatmul.mubr.f32.gmra.mxu0 %v542
        %v1012 = vpop.f32.mrf.mxu0
        %v1013 = vadd.f32 0.0, %v1012
        %v1014 = vpop.f32.mrf.mxu0
        %1015 = vmatprep.mubr.f32.mxu0 0.0
        %1016 = vmatmul.mubr.f32.gmra.mxu0 %v545
        %v1017 = vpop.f32.mrf.mxu0
        %v1018 = vadd.f32 0.0, %v1017
        %v1019 = vpop.f32.mrf.mxu0
        %1020 = vmatprep.mubr.f32.mxu0 0.0
        %1021 = vmatmul.mubr.f32.gmra.mxu0 %v548
        %v1022 = vpop.f32.mrf.mxu0
        %v1023 = vadd.f32 0.0, %v1022
        %v1024 = vpop.f32.mrf.mxu0
        %1025 = vmatprep.mubr.f32.mxu0 0.0
        %1026 = vmatmul.mubr.f32.gmra.mxu0 %v551
        %v1027 = vpop.f32.mrf.mxu0
        %v1028 = vadd.f32 0.0, %v1027
        %v1029 = vpop.f32.mrf.mxu0
        %1030 = vmatprep.mubr.f32.mxu0 0.0
        %1031 = vmatmul.mubr.f32.gmra.mxu0 %v554
        %v1032 = vpop.f32.mrf.mxu0
        %v1033 = vadd.f32 0.0, %v1032
        %v1034 = vpop.f32.mrf.mxu0
        %1035 = vmatprep.mubr.f32.mxu0 0.0
        %1036 = vmatmul.mubr.f32.gmra.mxu0 %v557
        %v1037 = vpop.f32.mrf.mxu0
        %v1038 = vadd.f32 0.0, %v1037
        %v1039 = vpop.f32.mrf.mxu0
        %1040 = vmatprep.mubr.f32.mxu0 0.0
        %1041 = vmatmul.mubr.f32.gmra.mxu0 %v560
        %v1042 = vpop.f32.mrf.mxu0
        %v1043 = vadd.f32 0.0, %v1042
        %v1044 = vpop.f32.mrf.mxu0
        %1045 = vmatprep.mubr.f32.mxu0 0.0
        %1046 = vmatmul.mubr.f32.gmra.mxu0 %v563
        %v1047 = vpop.f32.mrf.mxu0
        %v1048 = vadd.f32 0.0, %v1047
        %v1049 = vpop.f32.mrf.mxu0
        %1050 = vmatprep.mubr.f32.mxu0 0.0
        %1051 = vmatmul.mubr.f32.gmra.mxu0 %v566
        %v1052 = vpop.f32.mrf.mxu0
        %v1053 = vadd.f32 0.0, %v1052
        %v1054 = vpop.f32.mrf.mxu0
        %1055 = vmatprep.mubr.f32.mxu0 0.0
        %1056 = vmatmul.mubr.f32.gmra.mxu0 %v569
        %v1057 = vpop.f32.mrf.mxu0
        %v1058 = vadd.f32 0.0, %v1057
        %v1059 = vpop.f32.mrf.mxu0
        %1060 = vmatprep.mubr.f32.mxu0 0.0
        %1061 = vmatmul.mubr.f32.gmra.mxu0 %v572
        %v1062 = vpop.f32.mrf.mxu0
        %v1063 = vadd.f32 0.0, %v1062
        %v1064 = vpop.f32.mrf.mxu0
        %1065 = vmatprep.mubr.f32.mxu0 0.0
        %1066 = vmatmul.mubr.f32.gmra.mxu0 %v575
        %v1067 = vpop.f32.mrf.mxu0
        %v1068 = vadd.f32 0.0, %v1067
        %v1069 = vpop.f32.mrf.mxu0
        %1070 = vmatprep.mubr.f32.mxu0 0.0
        %1071 = vmatmul.mubr.f32.gmra.mxu0 %v578
        %v1072 = vpop.f32.mrf.mxu0
        %v1073 = vadd.f32 0.0, %v1072
        %v1074 = vpop.f32.mrf.mxu0
        %1075 = vmatprep.mubr.f32.mxu0 0.0
        %1076 = vmatmul.mubr.f32.gmra.mxu0 %v581
        %v1077 = vpop.f32.mrf.mxu0
        %v1078 = vadd.f32 0.0, %v1077
        %v1079 = vpop.f32.mrf.mxu0
        %1080 = vmatprep.mubr.f32.mxu0 0.0
        %1081 = vmatmul.mubr.f32.gmra.mxu0 %v584
        %v1082 = vpop.f32.mrf.mxu0
        %v1083 = vadd.f32 0.0, %v1082
        %v1084 = vpop.f32.mrf.mxu0
        %1085 = vmatprep.mubr.f32.mxu0 0.0
        %1086 = vmatmul.mubr.f32.gmra.mxu0 %v587
        %v1087 = vpop.f32.mrf.mxu0
        %v1088 = vadd.f32 0.0, %v1087
        %v1089 = vpop.f32.mrf.mxu0
        %1090 = vmatprep.mubr.f32.mxu0 0.0
        %1091 = vmatmul.mubr.f32.gmra.mxu0 %v590
        %v1092 = vpop.f32.mrf.mxu0
        %v1093 = vadd.f32 0.0, %v1092
        %v1094 = vpop.f32.mrf.mxu0
        %1095 = vmatprep.mubr.f32.mxu0 0.0
        %1096 = vmatmul.mubr.f32.gmra.mxu0 %v593
        %v1097 = vpop.f32.mrf.mxu0
        %v1098 = vadd.f32 0.0, %v1097
        %v1099 = vpop.f32.mrf.mxu0
        %1100 = vmatprep.mubr.f32.mxu0 0.0
        %1101 = vmatmul.mubr.f32.gmra.mxu0 %v596
        %v1102 = vpop.f32.mrf.mxu0
        %v1103 = vadd.f32 0.0, %v1102
        %v1104 = vpop.f32.mrf.mxu0
        %1105 = vmatprep.mubr.f32.mxu0 0.0
        %1106 = vmatmul.mubr.f32.gmra.mxu0 %v599
        %v1107 = vpop.f32.mrf.mxu0
        %v1108 = vadd.f32 0.0, %v1107
        %v1109 = vpop.f32.mrf.mxu0
        %1110 = vmatprep.mubr.f32.mxu0 0.0
        %1111 = vmatmul.mubr.f32.gmra.mxu0 %v602
        %v1112 = vpop.f32.mrf.mxu0
        %v1113 = vadd.f32 0.0, %v1112
        %v1114 = vpop.f32.mrf.mxu0
        %1115 = vmatprep.mubr.f32.mxu0 0.0
        %1116 = vmatmul.mubr.f32.gmra.mxu0 %v605
        %v1117 = vpop.f32.mrf.mxu0
        %v1118 = vadd.f32 0.0, %v1117
        %v1119 = vpop.f32.mrf.mxu0
        %1120 = vmatprep.mubr.f32.mxu0 0.0
        %1121 = vmatmul.mubr.f32.gmra.mxu0 %v608
        %v1122 = vpop.f32.mrf.mxu0
        %v1123 = vadd.f32 0.0, %v1122
        %v1124 = vpop.f32.mrf.mxu0
        %1125 = vmatprep.mubr.f32.mxu0 0.0
        %1126 = vmatmul.mubr.f32.gmra.mxu0 %v611
        %v1127 = vpop.f32.mrf.mxu0
        %v1128 = vadd.f32 0.0, %v1127
        %v1129 = vpop.f32.mrf.mxu0
        %1130 = vmatprep.mubr.f32.mxu0 0.0
        %1131 = vmatmul.mubr.f32.gmra.mxu0 %v614
        %v1132 = vpop.f32.mrf.mxu0
        %v1133 = vadd.f32 0.0, %v1132
        %v1134 = vpop.f32.mrf.mxu0
        %1135 = vmatprep.mubr.f32.mxu0 0.0
        %1136 = vmatmul.mubr.f32.gmra.mxu0 %v617
        %v1137 = vpop.f32.mrf.mxu0
        %v1138 = vadd.f32 0.0, %v1137
        %v1139 = vpop.f32.mrf.mxu0
        %1140 = vmatprep.mubr.f32.mxu0 0.0
        %1141 = vmatmul.mubr.f32.gmra.mxu0 %v620
        %v1142 = vpop.f32.mrf.mxu0
        %v1143 = vadd.f32 0.0, %v1142
        %v1144 = vpop.f32.mrf.mxu0
        %1145 = vmatprep.mubr.f32.mxu0 0.0
        %1146 = vmatmul.mubr.f32.gmra.mxu0 %v623
        %v1147 = vpop.f32.mrf.mxu0
        %v1148 = vadd.f32 0.0, %v1147
        %v1149 = vpop.f32.mrf.mxu0
        %1150 = vmatprep.mubr.f32.mxu0 0.0
        %1151 = vmatmul.mubr.f32.gmra.mxu0 %v626
        %v1152 = vpop.f32.mrf.mxu0
        %v1153 = vadd.f32 0.0, %v1152
        %v1154 = vpop.f32.mrf.mxu0
        %1155 = vmatprep.mubr.f32.mxu0 0.0
        %1156 = vmatmul.mubr.f32.gmra.mxu0 %v629
        %v1157 = vpop.f32.mrf.mxu0
        %v1158 = vadd.f32 0.0, %v1157
        %v1159 = vpop.f32.mrf.mxu0
        %1160 = vmatprep.mubr.f32.mxu0 0.0
        %1161 = vmatmul.mubr.f32.gmra.mxu0 %v632
        %v1162 = vpop.f32.mrf.mxu0
        %v1163 = vadd.f32 0.0, %v1162
        %v1164 = vpop.f32.mrf.mxu0
        %1165 = vmatprep.mubr.f32.mxu0 0.0
        %1166 = vmatmul.mubr.f32.gmra.mxu0 %v635
        %v1167 = vpop.f32.mrf.mxu0
        %v1168 = vadd.f32 0.0, %v1167
        %v1169 = vpop.f32.mrf.mxu0
        %1170 = vmatprep.mubr.f32.mxu0 0.0
        %1171 = vmatmul.mubr.f32.gmra.mxu0 %v638
        %v1172 = vpop.f32.mrf.mxu0
        %v1173 = vadd.f32 0.0, %v1172
        %v1174 = vpop.f32.mrf.mxu0
        %1175 = vmatprep.mubr.f32.mxu0 0.0
        %1176 = vmatmul.mubr.f32.gmra.mxu0 %v641
        %v1177 = vpop.f32.mrf.mxu0
        %v1178 = vadd.f32 0.0, %v1177
        %v1179 = vpop.f32.mrf.mxu0
        %1180 = vmatprep.mubr.f32.mxu0 0.0
        %1181 = vmatmul.mubr.f32.gmra.mxu0 %v644
        %v1182 = vpop.f32.mrf.mxu0
        %v1183 = vadd.f32 0.0, %v1182
        %v1184 = vpop.f32.mrf.mxu0
        %1185 = vmatprep.mubr.f32.mxu0 0.0
        %1186 = vmatmul.mubr.f32.gmra.mxu0 %v647
        %v1187 = vpop.f32.mrf.mxu0
        %v1188 = vadd.f32 0.0, %v1187
        %v1189 = vpop.f32.mrf.mxu0
        %1190 = vmatprep.mubr.f32.mxu0 0.0
        %1191 = vmatmul.mubr.f32.gmra.mxu0 %v650
        %v1192 = vpop.f32.mrf.mxu0
        %v1193 = vadd.f32 0.0, %v1192
        %v1194 = vpop.f32.mrf.mxu0
        %1195 = vmatprep.mubr.f32.mxu0 0.0
        %1196 = vmatmul.mubr.f32.gmra.mxu0 %v653
        %v1197 = vpop.f32.mrf.mxu0
        %v1198 = vadd.f32 0.0, %v1197
        %v1199 = vpop.f32.mrf.mxu0
        %1200 = vmatprep.mubr.f32.mxu0 0.0
        %1201 = vmatmul.mubr.f32.gmra.mxu0 %v656
        %v1202 = vpop.f32.mrf.mxu0
        %v1203 = vadd.f32 0.0, %v1202
        %v1204 = vpop.f32.mrf.mxu0
        %1205 = vmatprep.mubr.f32.mxu0 0.0
        %1206 = vmatmul.mubr.f32.gmra.mxu0 %v659
        %v1207 = vpop.f32.mrf.mxu0
        %v1208 = vadd.f32 0.0, %v1207
        %v1209 = vpop.f32.mrf.mxu0
        %1210 = vmatprep.mubr.f32.mxu0 0.0
        %1211 = vmatmul.mubr.f32.gmra.mxu0 %v662
        %v1212 = vpop.f32.mrf.mxu0
        %v1213 = vadd.f32 0.0, %v1212
        %v1214 = vpop.f32.mrf.mxu0
        %1215 = vmatprep.mubr.f32.mxu0 0.0
        %1216 = vmatmul.mubr.f32.gmra.mxu0 %v665
        %v1217 = vpop.f32.mrf.mxu0
        %v1218 = vadd.f32 0.0, %v1217
        %v1219 = vpop.f32.mrf.mxu0
        %1220 = vmatprep.mubr.f32.mxu0 0.0
        %1221 = vmatmul.mubr.f32.gmra.mxu0 %v668
        %v1222 = vpop.f32.mrf.mxu0
        %v1223 = vadd.f32 0.0, %v1222
        %v1224 = vpop.f32.mrf.mxu0
        %1225 = vmatprep.mubr.f32.mxu0 0.0
        %1226 = vmatmul.mubr.f32.gmra.mxu0 %v671
        %v1227 = vpop.f32.mrf.mxu0
        %v1228 = vadd.f32 0.0, %v1227
        %v1229 = vpop.f32.mrf.mxu0
        %1230 = vmatprep.mubr.f32.mxu0 0.0
        %1231 = vmatmul.mubr.f32.gmra.mxu0 %v674
        %v1232 = vpop.f32.mrf.mxu0
        %v1233 = vadd.f32 0.0, %v1232
        %v1234 = vpop.f32.mrf.mxu0
        %1235 = vmatprep.mubr.f32.mxu0 0.0
        %1236 = vmatmul.mubr.f32.gmra.mxu0 %v677
        %v1237 = vpop.f32.mrf.mxu0
        %v1238 = vadd.f32 0.0, %v1237
        %v1239 = vpop.f32.mrf.mxu0
        %1240 = vmatprep.mubr.f32.mxu0 0.0
        %1241 = vmatmul.mubr.f32.gmra.mxu0 %v680
        %v1242 = vpop.f32.mrf.mxu0
        %v1243 = vadd.f32 0.0, %v1242
        %v1244 = vpop.f32.mrf.mxu0
        %1245 = vmatprep.mubr.f32.mxu0 0.0
        %1246 = vmatmul.mubr.f32.gmra.mxu0 %v683
        %v1247 = vpop.f32.mrf.mxu0
        %v1248 = vadd.f32 0.0, %v1247
        %v1249 = vpop.f32.mrf.mxu0
        %1250 = vmatprep.mubr.f32.mxu0 0.0
        %1251 = vmatmul.mubr.f32.gmra.mxu0 %v686
        %v1252 = vpop.f32.mrf.mxu0
        %v1253 = vadd.f32 0.0, %v1252
        %v1254 = vpop.f32.mrf.mxu0
        %1255 = vmatprep.mubr.f32.mxu0 0.0
        %1256 = vmatmul.mubr.f32.gmra.mxu0 %v689
        %v1257 = vpop.f32.mrf.mxu0
        %v1258 = vadd.f32 0.0, %v1257
        %v1259 = vpop.f32.mrf.mxu0
        %1260 = vmatprep.mubr.f32.mxu0 0.0
        %1261 = vmatmul.mubr.f32.gmra.mxu0 %v692
        %v1262 = vpop.f32.mrf.mxu0
        %v1263 = vadd.f32 0.0, %v1262
        %v1264 = vpop.f32.mrf.mxu0
        %1265 = vmatprep.mubr.f32.mxu0 0.0
        %1266 = vmatmul.mubr.f32.gmra.mxu0 %v695
        %v1267 = vpop.f32.mrf.mxu0
        %v1268 = vadd.f32 0.0, %v1267
        %v1269 = vpop.f32.mrf.mxu0
        %1270 = vmatprep.mubr.f32.mxu0 0.0
        %1271 = vmatmul.mubr.f32.gmra.mxu0 %v698
        %v1272 = vpop.f32.mrf.mxu0
        %v1273 = vadd.f32 0.0, %v1272
        %v1274 = vpop.f32.mrf.mxu0
        %1275 = vmatprep.mubr.f32.mxu0 0.0
        %1276 = vmatmul.mubr.f32.gmra.mxu0 %v701
        %v1277 = vpop.f32.mrf.mxu0
        %v1278 = vadd.f32 0.0, %v1277
        %v1279 = vpop.f32.mrf.mxu0
        %1280 = vmatprep.mubr.f32.mxu0 0.0
        %1281 = vmatmul.mubr.f32.gmra.mxu0 %v704
        %v1282 = vpop.f32.mrf.mxu0
        %v1283 = vadd.f32 0.0, %v1282
        %v1284 = vpop.f32.mrf.mxu0
        %1285 = vmatprep.mubr.f32.mxu0 0.0
        %1286 = vmatmul.mubr.f32.gmra.mxu0 %v707
        %v1287 = vpop.f32.mrf.mxu0
        %v1288 = vadd.f32 0.0, %v1287
        %v1289 = vpop.f32.mrf.mxu0
        %1290 = vmatprep.mubr.f32.mxu0 0.0
        %1291 = vmatmul.mubr.f32.gmra.mxu0 %v710
        %v1292 = vpop.f32.mrf.mxu0
        %v1293 = vadd.f32 0.0, %v1292
        %v1294 = vpop.f32.mrf.mxu0
        %1295 = vmatprep.mubr.f32.mxu0 0.0
        %1296 = vmatmul.mubr.f32.gmra.mxu0 %v713
        %v1297 = vpop.f32.mrf.mxu0
        %v1298 = vadd.f32 0.0, %v1297
        %v1299 = vpop.f32.mrf.mxu0
        %1300 = vmatprep.mubr.f32.mxu0 0.0
        %1301 = vmatmul.mubr.f32.gmra.mxu0 %v716
        %v1302 = vpop.f32.mrf.mxu0
        %v1303 = vadd.f32 0.0, %v1302
        %v1304 = vpop.f32.mrf.mxu0
        %1305 = vmatprep.mubr.f32.mxu0 0.0
        %1306 = vmatmul.mubr.f32.gmra.mxu0 %v719
        %v1307 = vpop.f32.mrf.mxu0
        %v1308 = vadd.f32 0.0, %v1307
        %v1309 = vpop.f32.mrf.mxu0
        %1310 = vmatprep.mubr.f32.mxu0 0.0
        %1311 = vmatmul.mubr.f32.gmra.mxu0 %v722
        %v1312 = vpop.f32.mrf.mxu0
        %v1313 = vadd.f32 0.0, %v1312
        %v1314 = vpop.f32.mrf.mxu0
        %1315 = vmatprep.mubr.f32.mxu0 0.0
        %1316 = vmatmul.mubr.f32.gmra.mxu0 %v725
        %v1317 = vpop.f32.mrf.mxu0
        %v1318 = vadd.f32 0.0, %v1317
        %v1319 = vpop.f32.mrf.mxu0
        %1320 = vmatprep.mubr.f32.mxu0 0.0
        %1321 = vmatmul.mubr.f32.gmra.mxu0 %v728
        %v1322 = vpop.f32.mrf.mxu0
        %v1323 = vadd.f32 0.0, %v1322
        %v1324 = vpop.f32.mrf.mxu0
        %1325 = vmatprep.mubr.f32.mxu0 0.0
        %1326 = vmatmul.mubr.f32.gmra.mxu0 %v731
        %v1327 = vpop.f32.mrf.mxu0
        %v1328 = vadd.f32 0.0, %v1327
        %v1329 = vpop.f32.mrf.mxu0
        %1330 = vmatprep.mubr.f32.mxu0 0.0
        %1331 = vmatmul.mubr.f32.gmra.mxu0 %v734
        %v1332 = vpop.f32.mrf.mxu0
        %v1333 = vadd.f32 0.0, %v1332
        %v1334 = vpop.f32.mrf.mxu0
        %1335 = vmatprep.mubr.f32.mxu0 0.0
        %1336 = vmatmul.mubr.f32.gmra.mxu0 %v737
        %v1337 = vpop.f32.mrf.mxu0
        %v1338 = vadd.f32 0.0, %v1337
        %v1339 = vpop.f32.mrf.mxu0
        %1340 = vmatprep.mubr.f32.mxu0 0.0
        %1341 = vmatmul.mubr.f32.gmra.mxu0 %v740
        %v1342 = vpop.f32.mrf.mxu0
        %v1343 = vadd.f32 0.0, %v1342
        %v1344 = vpop.f32.mrf.mxu0
        %1345 = vmatprep.mubr.f32.mxu0 0.0
        %1346 = vmatmul.mubr.f32.gmra.mxu0 %v743
        %v1347 = vpop.f32.mrf.mxu0
        %v1348 = vadd.f32 0.0, %v1347
        %v1349 = vpop.f32.mrf.mxu0
        %1350 = vmatprep.mubr.f32.mxu0 0.0
        %1351 = vmatmul.mubr.f32.gmra.mxu0 %v746
        %v1352 = vpop.f32.mrf.mxu0
        %v1353 = vadd.f32 0.0, %v1352
        %v1354 = vpop.f32.mrf.mxu0
        %1355 = vmatprep.mubr.f32.mxu0 0.0
        %1356 = vmatmul.mubr.f32.gmra.mxu0 %v749
        %v1357 = vpop.f32.mrf.mxu0
        %v1358 = vadd.f32 0.0, %v1357
        %v1359 = vpop.f32.mrf.mxu0
        %1360 = vmatprep.mubr.f32.mxu0 0.0
        %1361 = vmatmul.mubr.f32.gmra.mxu0 %v752
        %v1362 = vpop.f32.mrf.mxu0
        %v1363 = vadd.f32 0.0, %v1362
        %v1364 = vpop.f32.mrf.mxu0
        %1365 = vmatprep.mubr.f32.mxu0 0.0
        %1366 = vmatmul.mubr.f32.gmra.mxu0 %v755
        %v1367 = vpop.f32.mrf.mxu0
        %v1368 = vadd.f32 0.0, %v1367
        %v1369 = vpop.f32.mrf.mxu0
        %1370 = vmatprep.mubr.f32.mxu0 0.0
        %1371 = vmatmul.mubr.f32.gmra.mxu0 %v758
        %v1372 = vpop.f32.mrf.mxu0
        %v1373 = vadd.f32 0.0, %v1372
        %v1374 = vpop.f32.mrf.mxu0
        %1375 = vmatprep.mubr.f32.mxu0 0.0
        %1376 = vmatmul.mubr.f32.gmra.mxu0 %v761
        %v1377 = vpop.f32.mrf.mxu0
        %v1378 = vadd.f32 0.0, %v1377
        %v1379 = vpop.f32.mrf.mxu0
        %1380 = vmatprep.mubr.f32.mxu0 0.0
        %1381 = vmatmul.mubr.f32.gmra.mxu0 %v764
        %v1382 = vpop.f32.mrf.mxu0
        %v1383 = vadd.f32 0.0, %v1382
        %v1384 = vpop.f32.mrf.mxu0
        %1385 = vmatprep.mubr.f32.mxu0 0.0
        %1386 = vmatmul.mubr.f32.gmra.mxu0 %v767
        %v1387 = vpop.f32.mrf.mxu0
        %v1388 = vadd.f32 0.0, %v1387
        %v1389 = vpop.f32.mrf.mxu0
        %1390 = vmatprep.mubr.f32.mxu0 0.0
        %1391 = vmatmul.mubr.f32.gmra.mxu0 %v770
        %v1392 = vpop.f32.mrf.mxu0
        %v1393 = vadd.f32 0.0, %v1392
        %v1394 = vpop.f32.mrf.mxu0
        %1395 = vmatprep.mubr.f32.mxu0 0.0
        %1396 = vmatmul.mubr.f32.gmra.mxu0 %v773
        %v1397 = vpop.f32.mrf.mxu0
        %v1398 = vadd.f32 0.0, %v1397
        %v1399 = vpop.f32.mrf.mxu0
        %1400 = vmatprep.mubr.f32.mxu0 0.0
        %1401 = vmatmul.mubr.f32.gmra.mxu0 %v776
        %v1402 = vpop.f32.mrf.mxu0
        %v1403 = vadd.f32 0.0, %v1402
        %v1404 = vpop.f32.mrf.mxu0
        %1405 = vmatprep.mubr.f32.mxu0 0.0
        %1406 = vmatmul.mubr.f32.gmra.mxu0 %v779
        %v1407 = vpop.f32.mrf.mxu0
        %v1408 = vadd.f32 0.0, %v1407
        %v1409 = vpop.f32.mrf.mxu0
        %1410 = vmatprep.mubr.f32.mxu0 0.0
        %1411 = vmatmul.mubr.f32.gmra.mxu0 %v782
        %v1412 = vpop.f32.mrf.mxu0
        %v1413 = vadd.f32 0.0, %v1412
        %v1414 = vpop.f32.mrf.mxu0
        %1415 = vmatprep.mubr.f32.mxu0 0.0
        %1416 = vmatmul.mubr.f32.gmra.mxu0 %v785
        %v1417 = vpop.f32.mrf.mxu0
        %v1418 = vadd.f32 0.0, %v1417
        %v1419 = vpop.f32.mrf.mxu0
        %1420 = vdwg.mxu0
        %v1421 = vld [vmem:[%s2] sm:$0x1]
        %v1423 = vlaneseq
        %v1424 = vshrl.u32 %v1423, 7
        %v1425 = vsub.s32 0, %v1424
        %v1426 = vrot.slane %v1421, %v1425
        %v1428 = vmul.f32 %v858, %v1426
        %v1429 = vmul.f32 %v863, %v1426
        %v1430 = vmul.f32 %v868, %v1426
        %v1431 = vmul.f32 %v873, %v1426
        %v1432 = vmul.f32 %v878, %v1426
        %v1433 = vmul.f32 %v883, %v1426
        %v1434 = vmul.f32 %v888, %v1426
        %v1435 = vmul.f32 %v893, %v1426
        %v1436 = vmul.f32 %v898, %v1426
        %v1437 = vmul.f32 %v903, %v1426
        %v1438 = vmul.f32 %v908, %v1426
        %v1439 = vmul.f32 %v913, %v1426
        %v1440 = vmul.f32 %v918, %v1426
        %v1441 = vmul.f32 %v923, %v1426
        %v1442 = vmul.f32 %v928, %v1426
        %v1443 = vmul.f32 %v933, %v1426
        %v1444 = vmul.f32 %v938, %v1426
        %v1445 = vmul.f32 %v943, %v1426
        %v1446 = vmul.f32 %v948, %v1426
        %v1447 = vmul.f32 %v953, %v1426
        %v1448 = vmul.f32 %v958, %v1426
        %v1449 = vmul.f32 %v963, %v1426
        %v1450 = vmul.f32 %v968, %v1426
        %v1451 = vmul.f32 %v973, %v1426
        %v1452 = vmul.f32 %v978, %v1426
        %v1453 = vmul.f32 %v983, %v1426
        %v1454 = vmul.f32 %v988, %v1426
        %v1455 = vmul.f32 %v993, %v1426
        %v1456 = vmul.f32 %v998, %v1426
        %v1457 = vmul.f32 %v1003, %v1426
        %v1458 = vmul.f32 %v1008, %v1426
        %v1459 = vmul.f32 %v1013, %v1426
        %v1460 = vmul.f32 %v1018, %v1426
        %v1461 = vmul.f32 %v1023, %v1426
        %v1462 = vmul.f32 %v1028, %v1426
        %v1463 = vmul.f32 %v1033, %v1426
        %v1464 = vmul.f32 %v1038, %v1426
        %v1465 = vmul.f32 %v1043, %v1426
        %v1466 = vmul.f32 %v1048, %v1426
        %v1467 = vmul.f32 %v1053, %v1426
        %v1468 = vmul.f32 %v1058, %v1426
        %v1469 = vmul.f32 %v1063, %v1426
        %v1470 = vmul.f32 %v1068, %v1426
        %v1471 = vmul.f32 %v1073, %v1426
        %v1472 = vmul.f32 %v1078, %v1426
        %v1473 = vmul.f32 %v1083, %v1426
        %v1474 = vmul.f32 %v1088, %v1426
        %v1475 = vmul.f32 %v1093, %v1426
        %v1476 = vmul.f32 %v1098, %v1426
        %v1477 = vmul.f32 %v1103, %v1426
        %v1478 = vmul.f32 %v1108, %v1426
        %v1479 = vmul.f32 %v1113, %v1426
        %v1480 = vmul.f32 %v1118, %v1426
        %v1481 = vmul.f32 %v1123, %v1426
        %v1482 = vmul.f32 %v1128, %v1426
        %v1483 = vmul.f32 %v1133, %v1426
        %v1484 = vmul.f32 %v1138, %v1426
        %v1485 = vmul.f32 %v1143, %v1426
        %v1486 = vmul.f32 %v1148, %v1426
        %v1487 = vmul.f32 %v1153, %v1426
        %v1488 = vmul.f32 %v1158, %v1426
        %v1489 = vmul.f32 %v1163, %v1426
        %v1490 = vmul.f32 %v1168, %v1426
        %v1491 = vmul.f32 %v1173, %v1426
        %v1492 = vmul.f32 %v1178, %v1426
        %v1493 = vmul.f32 %v1183, %v1426
        %v1494 = vmul.f32 %v1188, %v1426
        %v1495 = vmul.f32 %v1193, %v1426
        %v1496 = vmul.f32 %v1198, %v1426
        %v1497 = vmul.f32 %v1203, %v1426
        %v1498 = vmul.f32 %v1208, %v1426
        %v1499 = vmul.f32 %v1213, %v1426
        %v1500 = vmul.f32 %v1218, %v1426
        %v1501 = vmul.f32 %v1223, %v1426
        %v1502 = vmul.f32 %v1228, %v1426
        %v1503 = vmul.f32 %v1233, %v1426
        %v1504 = vmul.f32 %v1238, %v1426
        %v1505 = vmul.f32 %v1243, %v1426
        %v1506 = vmul.f32 %v1248, %v1426
        %v1507 = vmul.f32 %v1253, %v1426
        %v1508 = vmul.f32 %v1258, %v1426
        %v1509 = vmul.f32 %v1263, %v1426
        %v1510 = vmul.f32 %v1268, %v1426
        %v1511 = vmul.f32 %v1273, %v1426
        %v1512 = vmul.f32 %v1278, %v1426
        %v1513 = vmul.f32 %v1283, %v1426
        %v1514 = vmul.f32 %v1288, %v1426
        %v1515 = vmul.f32 %v1293, %v1426
        %v1516 = vmul.f32 %v1298, %v1426
        %v1517 = vmul.f32 %v1303, %v1426
        %v1518 = vmul.f32 %v1308, %v1426
        %v1519 = vmul.f32 %v1313, %v1426
        %v1520 = vmul.f32 %v1318, %v1426
        %v1521 = vmul.f32 %v1323, %v1426
        %v1522 = vmul.f32 %v1328, %v1426
        %v1523 = vmul.f32 %v1333, %v1426
        %v1524 = vmul.f32 %v1338, %v1426
        %v1525 = vmul.f32 %v1343, %v1426
        %v1526 = vmul.f32 %v1348, %v1426
        %v1527 = vmul.f32 %v1353, %v1426
        %v1528 = vmul.f32 %v1358, %v1426
        %v1529 = vmul.f32 %v1363, %v1426
        %v1530 = vmul.f32 %v1368, %v1426
        %v1531 = vmul.f32 %v1373, %v1426
        %v1532 = vmul.f32 %v1378, %v1426
        %v1533 = vmul.f32 %v1383, %v1426
        %v1534 = vmul.f32 %v1388, %v1426
        %v1535 = vmul.f32 %v1393, %v1426
        %v1536 = vmul.f32 %v1398, %v1426
        %v1537 = vmul.f32 %v1403, %v1426
        %v1538 = vmul.f32 %v1408, %v1426
        %v1539 = vmul.f32 %v1413, %v1426
        %v1540 = vmul.f32 %v1418, %v1426
        %v1541 = vld [vmem:[%s3] sm:$0x1]
        %v1543 = vlaneseq
        %v1544 = vshrl.u32 %v1543, 7
        %v1545 = vsub.s32 0, %v1544
        %v1546 = vrot.slane %v1541, %v1545
        %v1548 = vadd.f32 %v1428, %v1546
        %v1549 = vadd.f32 %v1429, %v1546
        %v1550 = vadd.f32 %v1430, %v1546
        %v1551 = vadd.f32 %v1431, %v1546
        %v1552 = vadd.f32 %v1432, %v1546
        %v1553 = vadd.f32 %v1433, %v1546
        %v1554 = vadd.f32 %v1434, %v1546
        %v1555 = vadd.f32 %v1435, %v1546
        %v1556 = vadd.f32 %v1436, %v1546
        %v1557 = vadd.f32 %v1437, %v1546
        %v1558 = vadd.f32 %v1438, %v1546
        %v1559 = vadd.f32 %v1439, %v1546
        %v1560 = vadd.f32 %v1440, %v1546
        %v1561 = vadd.f32 %v1441, %v1546
        %v1562 = vadd.f32 %v1442, %v1546
        %v1563 = vadd.f32 %v1443, %v1546
        %v1564 = vadd.f32 %v1444, %v1546
        %v1565 = vadd.f32 %v1445, %v1546
        %v1566 = vadd.f32 %v1446, %v1546
        %v1567 = vadd.f32 %v1447, %v1546
        %v1568 = vadd.f32 %v1448, %v1546
        %v1569 = vadd.f32 %v1449, %v1546
        %v1570 = vadd.f32 %v1450, %v1546
        %v1571 = vadd.f32 %v1451, %v1546
        %v1572 = vadd.f32 %v1452, %v1546
        %v1573 = vadd.f32 %v1453, %v1546
        %v1574 = vadd.f32 %v1454, %v1546
        %v1575 = vadd.f32 %v1455, %v1546
        %v1576 = vadd.f32 %v1456, %v1546
        %v1577 = vadd.f32 %v1457, %v1546
        %v1578 = vadd.f32 %v1458, %v1546
        %v1579 = vadd.f32 %v1459, %v1546
        %v1580 = vadd.f32 %v1460, %v1546
        %v1581 = vadd.f32 %v1461, %v1546
        %v1582 = vadd.f32 %v1462, %v1546
        %v1583 = vadd.f32 %v1463, %v1546
        %v1584 = vadd.f32 %v1464, %v1546
        %v1585 = vadd.f32 %v1465, %v1546
        %v1586 = vadd.f32 %v1466, %v1546
        %v1587 = vadd.f32 %v1467, %v1546
        %v1588 = vadd.f32 %v1468, %v1546
        %v1589 = vadd.f32 %v1469, %v1546
        %v1590 = vadd.f32 %v1470, %v1546
        %v1591 = vadd.f32 %v1471, %v1546
        %v1592 = vadd.f32 %v1472, %v1546
        %v1593 = vadd.f32 %v1473, %v1546
        %v1594 = vadd.f32 %v1474, %v1546
        %v1595 = vadd.f32 %v1475, %v1546
        %v1596 = vadd.f32 %v1476, %v1546
        %v1597 = vadd.f32 %v1477, %v1546
        %v1598 = vadd.f32 %v1478, %v1546
        %v1599 = vadd.f32 %v1479, %v1546
        %v1600 = vadd.f32 %v1480, %v1546
        %v1601 = vadd.f32 %v1481, %v1546
        %v1602 = vadd.f32 %v1482, %v1546
        %v1603 = vadd.f32 %v1483, %v1546
        %v1604 = vadd.f32 %v1484, %v1546
        %v1605 = vadd.f32 %v1485, %v1546
        %v1606 = vadd.f32 %v1486, %v1546
        %v1607 = vadd.f32 %v1487, %v1546
        %v1608 = vadd.f32 %v1488, %v1546
        %v1609 = vadd.f32 %v1489, %v1546
        %v1610 = vadd.f32 %v1490, %v1546
        %v1611 = vadd.f32 %v1491, %v1546
        %v1612 = vadd.f32 %v1492, %v1546
        %v1613 = vadd.f32 %v1493, %v1546
        %v1614 = vadd.f32 %v1494, %v1546
        %v1615 = vadd.f32 %v1495, %v1546
        %v1616 = vadd.f32 %v1496, %v1546
        %v1617 = vadd.f32 %v1497, %v1546
        %v1618 = vadd.f32 %v1498, %v1546
        %v1619 = vadd.f32 %v1499, %v1546
        %v1620 = vadd.f32 %v1500, %v1546
        %v1621 = vadd.f32 %v1501, %v1546
        %v1622 = vadd.f32 %v1502, %v1546
        %v1623 = vadd.f32 %v1503, %v1546
        %v1624 = vadd.f32 %v1504, %v1546
        %v1625 = vadd.f32 %v1505, %v1546
        %v1626 = vadd.f32 %v1506, %v1546
        %v1627 = vadd.f32 %v1507, %v1546
        %v1628 = vadd.f32 %v1508, %v1546
        %v1629 = vadd.f32 %v1509, %v1546
        %v1630 = vadd.f32 %v1510, %v1546
        %v1631 = vadd.f32 %v1511, %v1546
        %v1632 = vadd.f32 %v1512, %v1546
        %v1633 = vadd.f32 %v1513, %v1546
        %v1634 = vadd.f32 %v1514, %v1546
        %v1635 = vadd.f32 %v1515, %v1546
        %v1636 = vadd.f32 %v1516, %v1546
        %v1637 = vadd.f32 %v1517, %v1546
        %v1638 = vadd.f32 %v1518, %v1546
        %v1639 = vadd.f32 %v1519, %v1546
        %v1640 = vadd.f32 %v1520, %v1546
        %v1641 = vadd.f32 %v1521, %v1546
        %v1642 = vadd.f32 %v1522, %v1546
        %v1643 = vadd.f32 %v1523, %v1546
        %v1644 = vadd.f32 %v1524, %v1546
        %v1645 = vadd.f32 %v1525, %v1546
        %v1646 = vadd.f32 %v1526, %v1546
        %v1647 = vadd.f32 %v1527, %v1546
        %v1648 = vadd.f32 %v1528, %v1546
        %v1649 = vadd.f32 %v1529, %v1546
        %v1650 = vadd.f32 %v1530, %v1546
        %v1651 = vadd.f32 %v1531, %v1546
        %v1652 = vadd.f32 %v1532, %v1546
        %v1653 = vadd.f32 %v1533, %v1546
        %v1654 = vadd.f32 %v1534, %v1546
        %v1655 = vadd.f32 %v1535, %v1546
        %v1656 = vadd.f32 %v1536, %v1546
        %v1657 = vadd.f32 %v1537, %v1546
        %v1658 = vadd.f32 %v1538, %v1546
        %v1659 = vadd.f32 %v1539, %v1546
        %v1660 = vadd.f32 %v1540, %v1546
        %v1661 = vmax.f32 %v1548, 0.0
        %v1662 = vmax.f32 %v1549, 0.0
        %v1663 = vmax.f32 %v1550, 0.0
        %v1664 = vmax.f32 %v1551, 0.0
        %v1665 = vmax.f32 %v1552, 0.0
        %v1666 = vmax.f32 %v1553, 0.0
        %v1667 = vmax.f32 %v1554, 0.0
        %v1668 = vmax.f32 %v1555, 0.0
        %v1669 = vmax.f32 %v1556, 0.0
        %v1670 = vmax.f32 %v1557, 0.0
        %v1671 = vmax.f32 %v1558, 0.0
        %v1672 = vmax.f32 %v1559, 0.0
        %v1673 = vmax.f32 %v1560, 0.0
        %v1674 = vmax.f32 %v1561, 0.0
        %v1675 = vmax.f32 %v1562, 0.0
        %v1676 = vmax.f32 %v1563, 0.0
        %v1677 = vmax.f32 %v1564, 0.0
        %v1678 = vmax.f32 %v1565, 0.0
        %v1679 = vmax.f32 %v1566, 0.0
        %v1680 = vmax.f32 %v1567, 0.0
        %v1681 = vmax.f32 %v1568, 0.0
        %v1682 = vmax.f32 %v1569, 0.0
        %v1683 = vmax.f32 %v1570, 0.0
        %v1684 = vmax.f32 %v1571, 0.0
        %v1685 = vmax.f32 %v1572, 0.0
        %v1686 = vmax.f32 %v1573, 0.0
        %v1687 = vmax.f32 %v1574, 0.0
        %v1688 = vmax.f32 %v1575, 0.0
        %v1689 = vmax.f32 %v1576, 0.0
        %v1690 = vmax.f32 %v1577, 0.0
        %v1691 = vmax.f32 %v1578, 0.0
        %v1692 = vmax.f32 %v1579, 0.0
        %v1693 = vmax.f32 %v1580, 0.0
        %v1694 = vmax.f32 %v1581, 0.0
        %v1695 = vmax.f32 %v1582, 0.0
        %v1696 = vmax.f32 %v1583, 0.0
        %v1697 = vmax.f32 %v1584, 0.0
        %v1698 = vmax.f32 %v1585, 0.0
        %v1699 = vmax.f32 %v1586, 0.0
        %v1700 = vmax.f32 %v1587, 0.0
        %v1701 = vmax.f32 %v1588, 0.0
        %v1702 = vmax.f32 %v1589, 0.0
        %v1703 = vmax.f32 %v1590, 0.0
        %v1704 = vmax.f32 %v1591, 0.0
        %v1705 = vmax.f32 %v1592, 0.0
        %v1706 = vmax.f32 %v1593, 0.0
        %v1707 = vmax.f32 %v1594, 0.0
        %v1708 = vmax.f32 %v1595, 0.0
        %v1709 = vmax.f32 %v1596, 0.0
        %v1710 = vmax.f32 %v1597, 0.0
        %v1711 = vmax.f32 %v1598, 0.0
        %v1712 = vmax.f32 %v1599, 0.0
        %v1713 = vmax.f32 %v1600, 0.0
        %v1714 = vmax.f32 %v1601, 0.0
        %v1715 = vmax.f32 %v1602, 0.0
        %v1716 = vmax.f32 %v1603, 0.0
        %v1717 = vmax.f32 %v1604, 0.0
        %v1718 = vmax.f32 %v1605, 0.0
        %v1719 = vmax.f32 %v1606, 0.0
        %v1720 = vmax.f32 %v1607, 0.0
        %v1721 = vmax.f32 %v1608, 0.0
        %v1722 = vmax.f32 %v1609, 0.0
        %v1723 = vmax.f32 %v1610, 0.0
        %v1724 = vmax.f32 %v1611, 0.0
        %v1725 = vmax.f32 %v1612, 0.0
        %v1726 = vmax.f32 %v1613, 0.0
        %v1727 = vmax.f32 %v1614, 0.0
        %v1728 = vmax.f32 %v1615, 0.0
        %v1729 = vmax.f32 %v1616, 0.0
        %v1730 = vmax.f32 %v1617, 0.0
        %v1731 = vmax.f32 %v1618, 0.0
        %v1732 = vmax.f32 %v1619, 0.0
        %v1733 = vmax.f32 %v1620, 0.0
        %v1734 = vmax.f32 %v1621, 0.0
        %v1735 = vmax.f32 %v1622, 0.0
        %v1736 = vmax.f32 %v1623, 0.0
        %v1737 = vmax.f32 %v1624, 0.0
        %v1738 = vmax.f32 %v1625, 0.0
        %v1739 = vmax.f32 %v1626, 0.0
        %v1740 = vmax.f32 %v1627, 0.0
        %v1741 = vmax.f32 %v1628, 0.0
        %v1742 = vmax.f32 %v1629, 0.0
        %v1743 = vmax.f32 %v1630, 0.0
        %v1744 = vmax.f32 %v1631, 0.0
        %v1745 = vmax.f32 %v1632, 0.0
        %v1746 = vmax.f32 %v1633, 0.0
        %v1747 = vmax.f32 %v1634, 0.0
        %v1748 = vmax.f32 %v1635, 0.0
        %v1749 = vmax.f32 %v1636, 0.0
        %v1750 = vmax.f32 %v1637, 0.0
        %v1751 = vmax.f32 %v1638, 0.0
        %v1752 = vmax.f32 %v1639, 0.0
        %v1753 = vmax.f32 %v1640, 0.0
        %v1754 = vmax.f32 %v1641, 0.0
        %v1755 = vmax.f32 %v1642, 0.0
        %v1756 = vmax.f32 %v1643, 0.0
        %v1757 = vmax.f32 %v1644, 0.0
        %v1758 = vmax.f32 %v1645, 0.0
        %v1759 = vmax.f32 %v1646, 0.0
        %v1760 = vmax.f32 %v1647, 0.0
        %v1761 = vmax.f32 %v1648, 0.0
        %v1762 = vmax.f32 %v1649, 0.0
        %v1763 = vmax.f32 %v1650, 0.0
        %v1764 = vmax.f32 %v1651, 0.0
        %v1765 = vmax.f32 %v1652, 0.0
        %v1766 = vmax.f32 %v1653, 0.0
        %v1767 = vmax.f32 %v1654, 0.0
        %v1768 = vmax.f32 %v1655, 0.0
        %v1769 = vmax.f32 %v1656, 0.0
        %v1770 = vmax.f32 %v1657, 0.0
        %v1771 = vmax.f32 %v1658, 0.0
        %v1772 = vmax.f32 %v1659, 0.0
        %v1773 = vmax.f32 %v1660, 0.0
        %vm1774 = vcmask 523264
        %1775 = vst.msk [vmem:[#allocation2] sm:$0xff] %vm1774, %v1661
        %1776 = vst.msk [vmem:[#allocation2 + $0x8] sm:$0xff] %vm1774, %v1662
        %1777 = vst.msk [vmem:[#allocation2 + $0x10] sm:$0xff] %vm1774, %v1663
        %1778 = vst.msk [vmem:[#allocation2 + $0x18] sm:$0xff] %vm1774, %v1664
        %1779 = vst.msk [vmem:[#allocation2 + $0x20] sm:$0xff] %vm1774, %v1665
        %1780 = vst.msk [vmem:[#allocation2 + $0x28] sm:$0xff] %vm1774, %v1666
        %1781 = vst.msk [vmem:[#allocation2 + $0x30] sm:$0xff] %vm1774, %v1667
        %1782 = vst.msk [vmem:[#allocation2 + $0x38] sm:$0xff] %vm1774, %v1668
        %1783 = vst.msk [vmem:[#allocation2 + $0x40] sm:$0xff] %vm1774, %v1669
        %1784 = vst.msk [vmem:[#allocation2 + $0x48] sm:$0xff] %vm1774, %v1670
        %1785 = vst.msk [vmem:[#allocation2 + $0x50] sm:$0xff] %vm1774, %v1671
        %1786 = vst.msk [vmem:[#allocation2 + $0x58] sm:$0xff] %vm1774, %v1672
        %1787 = vst.msk [vmem:[#allocation2 + $0x60] sm:$0xff] %vm1774, %v1673
        %1788 = vst.msk [vmem:[#allocation2 + $0x68] sm:$0xff] %vm1774, %v1674
        %1789 = vst.msk [vmem:[#allocation2 + $0x70] sm:$0xff] %vm1774, %v1675
        %1790 = vst.msk [vmem:[#allocation2 + $0x78] sm:$0xff] %vm1774, %v1676
        %1791 = vst.msk [vmem:[#allocation2 + $0x80] sm:$0xff] %vm1774, %v1677
        %1792 = vst.msk [vmem:[#allocation2 + $0x88] sm:$0xff] %vm1774, %v1678
        %1793 = vst.msk [vmem:[#allocation2 + $0x90] sm:$0xff] %vm1774, %v1679
        %1794 = vst.msk [vmem:[#allocation2 + $0x98] sm:$0xff] %vm1774, %v1680
        %1795 = vst.msk [vmem:[#allocation2 + $0xa0] sm:$0xff] %vm1774, %v1681
        %1796 = vst.msk [vmem:[#allocation2 + $0xa8] sm:$0xff] %vm1774, %v1682
        %1797 = vst.msk [vmem:[#allocation2 + $0xb0] sm:$0xff] %vm1774, %v1683
        %1798 = vst.msk [vmem:[#allocation2 + $0xb8] sm:$0xff] %vm1774, %v1684
        %1799 = vst.msk [vmem:[#allocation2 + $0xc0] sm:$0xff] %vm1774, %v1685
        %1800 = vst.msk [vmem:[#allocation2 + $0xc8] sm:$0xff] %vm1774, %v1686
        %1801 = vst.msk [vmem:[#allocation2 + $0xd0] sm:$0xff] %vm1774, %v1687
        %1802 = vst.msk [vmem:[#allocation2 + $0xd8] sm:$0xff] %vm1774, %v1688
        %1803 = vst.msk [vmem:[#allocation2 + $0xe0] sm:$0xff] %vm1774, %v1689
        %1804 = vst.msk [vmem:[#allocation2 + $0xe8] sm:$0xff] %vm1774, %v1690
        %1805 = vst.msk [vmem:[#allocation2 + $0xf0] sm:$0xff] %vm1774, %v1691
        %1806 = vst.msk [vmem:[#allocation2 + $0xf8] sm:$0xff] %vm1774, %v1692
        %1807 = vst.msk [vmem:[#allocation2 + $0x100] sm:$0xff] %vm1774, %v1693
        %1808 = vst.msk [vmem:[#allocation2 + $0x108] sm:$0xff] %vm1774, %v1694
        %1809 = vst.msk [vmem:[#allocation2 + $0x110] sm:$0xff] %vm1774, %v1695
        %1810 = vst.msk [vmem:[#allocation2 + $0x118] sm:$0xff] %vm1774, %v1696
        %1811 = vst.msk [vmem:[#allocation2 + $0x120] sm:$0xff] %vm1774, %v1697
        %1812 = vst.msk [vmem:[#allocation2 + $0x128] sm:$0xff] %vm1774, %v1698
        %1813 = vst.msk [vmem:[#allocation2 + $0x130] sm:$0xff] %vm1774, %v1699
        %1814 = vst.msk [vmem:[#allocation2 + $0x138] sm:$0xff] %vm1774, %v1700
        %1815 = vst.msk [vmem:[#allocation2 + $0x140] sm:$0xff] %vm1774, %v1701
        %1816 = vst.msk [vmem:[#allocation2 + $0x148] sm:$0xff] %vm1774, %v1702
        %1817 = vst.msk [vmem:[#allocation2 + $0x150] sm:$0xff] %vm1774, %v1703
        %1818 = vst.msk [vmem:[#allocation2 + $0x158] sm:$0xff] %vm1774, %v1704
        %1819 = vst.msk [vmem:[#allocation2 + $0x160] sm:$0xff] %vm1774, %v1705
        %1820 = vst.msk [vmem:[#allocation2 + $0x168] sm:$0xff] %vm1774, %v1706
        %1821 = vst.msk [vmem:[#allocation2 + $0x170] sm:$0xff] %vm1774, %v1707
        %1822 = vst.msk [vmem:[#allocation2 + $0x178] sm:$0xff] %vm1774, %v1708
        %1823 = vst.msk [vmem:[#allocation2 + $0x180] sm:$0xff] %vm1774, %v1709
        %1824 = vst.msk [vmem:[#allocation2 + $0x188] sm:$0xff] %vm1774, %v1710
        %1825 = vst.msk [vmem:[#allocation2 + $0x190] sm:$0xff] %vm1774, %v1711
        %1826 = vst.msk [vmem:[#allocation2 + $0x198] sm:$0xff] %vm1774, %v1712
        %1827 = vst.msk [vmem:[#allocation2 + $0x1a0] sm:$0xff] %vm1774, %v1713
        %1828 = vst.msk [vmem:[#allocation2 + $0x1a8] sm:$0xff] %vm1774, %v1714
        %1829 = vst.msk [vmem:[#allocation2 + $0x1b0] sm:$0xff] %vm1774, %v1715
        %1830 = vst.msk [vmem:[#allocation2 + $0x1b8] sm:$0xff] %vm1774, %v1716
        %1831 = vst.msk [vmem:[#allocation2 + $0x1c0] sm:$0xff] %vm1774, %v1717
        %1832 = vst.msk [vmem:[#allocation2 + $0x1c8] sm:$0xff] %vm1774, %v1718
        %1833 = vst.msk [vmem:[#allocation2 + $0x1d0] sm:$0xff] %vm1774, %v1719
        %1834 = vst.msk [vmem:[#allocation2 + $0x1d8] sm:$0xff] %vm1774, %v1720
        %1835 = vst.msk [vmem:[#allocation2 + $0x1e0] sm:$0xff] %vm1774, %v1721
        %1836 = vst.msk [vmem:[#allocation2 + $0x1e8] sm:$0xff] %vm1774, %v1722
        %1837 = vst.msk [vmem:[#allocation2 + $0x1f0] sm:$0xff] %vm1774, %v1723
        %1838 = vst.msk [vmem:[#allocation2 + $0x1f8] sm:$0xff] %vm1774, %v1724
        %1839 = vst.msk [vmem:[#allocation2 + $0x200] sm:$0xff] %vm1774, %v1725
        %1840 = vst.msk [vmem:[#allocation2 + $0x208] sm:$0xff] %vm1774, %v1726
        %1841 = vst.msk [vmem:[#allocation2 + $0x210] sm:$0xff] %vm1774, %v1727
        %1842 = vst.msk [vmem:[#allocation2 + $0x218] sm:$0xff] %vm1774, %v1728
        %1843 = vst.msk [vmem:[#allocation2 + $0x220] sm:$0xff] %vm1774, %v1729
        %1844 = vst.msk [vmem:[#allocation2 + $0x228] sm:$0xff] %vm1774, %v1730
        %1845 = vst.msk [vmem:[#allocation2 + $0x230] sm:$0xff] %vm1774, %v1731
        %1846 = vst.msk [vmem:[#allocation2 + $0x238] sm:$0xff] %vm1774, %v1732
        %1847 = vst.msk [vmem:[#allocation2 + $0x240] sm:$0xff] %vm1774, %v1733
        %1848 = vst.msk [vmem:[#allocation2 + $0x248] sm:$0xff] %vm1774, %v1734
        %1849 = vst.msk [vmem:[#allocation2 + $0x250] sm:$0xff] %vm1774, %v1735
        %1850 = vst.msk [vmem:[#allocation2 + $0x258] sm:$0xff] %vm1774, %v1736
        %1851 = vst.msk [vmem:[#allocation2 + $0x260] sm:$0xff] %vm1774, %v1737
        %1852 = vst.msk [vmem:[#allocation2 + $0x268] sm:$0xff] %vm1774, %v1738
        %1853 = vst.msk [vmem:[#allocation2 + $0x270] sm:$0xff] %vm1774, %v1739
        %1854 = vst.msk [vmem:[#allocation2 + $0x278] sm:$0xff] %vm1774, %v1740
        %1855 = vst.msk [vmem:[#allocation2 + $0x280] sm:$0xff] %vm1774, %v1741
        %1856 = vst.msk [vmem:[#allocation2 + $0x288] sm:$0xff] %vm1774, %v1742
        %1857 = vst.msk [vmem:[#allocation2 + $0x290] sm:$0xff] %vm1774, %v1743
        %1858 = vst.msk [vmem:[#allocation2 + $0x298] sm:$0xff] %vm1774, %v1744
        %1859 = vst.msk [vmem:[#allocation2 + $0x2a0] sm:$0xff] %vm1774, %v1745
        %1860 = vst.msk [vmem:[#allocation2 + $0x2a8] sm:$0xff] %vm1774, %v1746
        %1861 = vst.msk [vmem:[#allocation2 + $0x2b0] sm:$0xff] %vm1774, %v1747
        %1862 = vst.msk [vmem:[#allocation2 + $0x2b8] sm:$0xff] %vm1774, %v1748
        %1863 = vst.msk [vmem:[#allocation2 + $0x2c0] sm:$0xff] %vm1774, %v1749
        %1864 = vst.msk [vmem:[#allocation2 + $0x2c8] sm:$0xff] %vm1774, %v1750
        %1865 = vst.msk [vmem:[#allocation2 + $0x2d0] sm:$0xff] %vm1774, %v1751
        %1866 = vst.msk [vmem:[#allocation2 + $0x2d8] sm:$0xff] %vm1774, %v1752
        %1867 = vst.msk [vmem:[#allocation2 + $0x2e0] sm:$0xff] %vm1774, %v1753
        %1868 = vst.msk [vmem:[#allocation2 + $0x2e8] sm:$0xff] %vm1774, %v1754
        %1869 = vst.msk [vmem:[#allocation2 + $0x2f0] sm:$0xff] %vm1774, %v1755
        %1870 = vst.msk [vmem:[#allocation2 + $0x2f8] sm:$0xff] %vm1774, %v1756
        %1871 = vst.msk [vmem:[#allocation2 + $0x300] sm:$0xff] %vm1774, %v1757
        %1872 = vst.msk [vmem:[#allocation2 + $0x308] sm:$0xff] %vm1774, %v1758
        %1873 = vst.msk [vmem:[#allocation2 + $0x310] sm:$0xff] %vm1774, %v1759
        %1874 = vst.msk [vmem:[#allocation2 + $0x318] sm:$0xff] %vm1774, %v1760
        %1875 = vst.msk [vmem:[#allocation2 + $0x320] sm:$0xff] %vm1774, %v1761
        %1876 = vst.msk [vmem:[#allocation2 + $0x328] sm:$0xff] %vm1774, %v1762
        %1877 = vst.msk [vmem:[#allocation2 + $0x330] sm:$0xff] %vm1774, %v1763
        %1878 = vst.msk [vmem:[#allocation2 + $0x338] sm:$0xff] %vm1774, %v1764
        %1879 = vst.msk [vmem:[#allocation2 + $0x340] sm:$0xff] %vm1774, %v1765
        %1880 = vst.msk [vmem:[#allocation2 + $0x348] sm:$0xff] %vm1774, %v1766
        %1881 = vst.msk [vmem:[#allocation2 + $0x350] sm:$0xff] %vm1774, %v1767
        %1882 = vst.msk [vmem:[#allocation2 + $0x358] sm:$0xff] %vm1774, %v1768
        %1883 = vst.msk [vmem:[#allocation2 + $0x360] sm:$0xff] %vm1774, %v1769
        %1884 = vst.msk [vmem:[#allocation2 + $0x368] sm:$0xff] %vm1774, %v1770
        %1885 = vst.msk [vmem:[#allocation2 + $0x370] sm:$0xff] %vm1774, %v1771
        %1886 = vst.msk [vmem:[#allocation2 + $0x378] sm:$0xff] %vm1774, %v1772
        %vm1887 = vcmask 519168
        %1888 = vst.msk [vmem:[#allocation2 + $0x380] sm:$0xf] %vm1887, %v1773
        %v1889 = vld [vmem:[#allocation2] sm:$0xff]
        %v1890 = vld [vmem:[#allocation2 + $0x8] sm:$0xff]
        %v1891 = vld [vmem:[#allocation2 + $0x10] sm:$0xff]
        %v1892 = vld [vmem:[#allocation2 + $0x18] sm:$0x3f]
        %v1893 = vld [vmem:[#allocation2 + $0x1e] sm:$0xff]
        %v1894 = vld [vmem:[#allocation2 + $0x26] sm:$0xff]
        %v1895 = vld [vmem:[#allocation2 + $0x2e] sm:$0xff]
        %v1896 = vld [vmem:[#allocation2 + $0x36] sm:$0x3f]
        %v1897 = vld [vmem:[#allocation2 + $0x3c] sm:$0xff]
        %v1898 = vld [vmem:[#allocation2 + $0x44] sm:$0xff]
        %v1899 = vld [vmem:[#allocation2 + $0x4c] sm:$0xff]
        %v1900 = vld [vmem:[#allocation2 + $0x54] sm:$0x3f]
        %v1901 = vmax.f32 %v1889, %v1893
        %v1902 = vmax.f32 %v1890, %v1894
        %v1903 = vmax.f32 %v1891, %v1895
        %v1904 = vmax.f32 %v1892, %v1896
        %v1905 = vmax.f32 %v1901, %v1897
        %v1906 = vmax.f32 %v1902, %v1898
        %v1907 = vmax.f32 %v1903, %v1899
        %v1908 = vmax.f32 %v1904, %v1900
        %vm1909 = vcmask 518144
        %v1910 = vsel %vm1909, %v1905, -inf
        %v1911 = vrot.slane %v1910, 4
        %v1912 = vmax.f32 %v1910, %v1911
        %v1913 = vrot.slane %v1912, 2
        %v1914 = vmax.f32 %v1912, %v1913
        %v1915 = vrot.slane %v1914, 1
        %v1916 = vmax.f32 %v1914, %v1915
        %vm1917 = vcmask 520194
        %v1918 = vsel %vm1917, %v1905, -inf
        %v1919 = vrot.slane %v1918, 4
        %v1920 = vmax.f32 %v1918, %v1919
        %v1921 = vrot.slane %v1920, 2
        %v1922 = vmax.f32 %v1920, %v1921
        %v1923 = vrot.slane %v1922, 1
        %v1924 = vmax.f32 %v1922, %v1923
        %vm1925 = vcmask 522244
        %v1926 = vsel %vm1925, %v1905, -inf
        %v1927 = vrot.slane %v1926, 4
        %v1928 = vmax.f32 %v1926, %v1927
        %v1929 = vrot.slane %v1928, 2
        %v1930 = vmax.f32 %v1928, %v1929
        %v1931 = vrot.slane %v1930, 1
        %v1932 = vmax.f32 %v1930, %v1931
        %vm1933 = vcmask 523270
        %v1934 = vsel %vm1933, %v1905, -inf
        %vm1935 = vcmask 516096
        %v1936 = vsel %vm1935, %v1906, -inf
        %v1937 = vmax.f32 %v1934, %v1936
        %v1938 = vrot.slane %v1937, 4
        %v1939 = vmax.f32 %v1937, %v1938
        %v1940 = vrot.slane %v1939, 2
        %v1941 = vmax.f32 %v1939, %v1940
        %v1942 = vrot.slane %v1941, 1
        %v1943 = vmax.f32 %v1941, %v1942
        %v1944 = vsel %vm1909, %v1906, -inf
        %v1945 = vrot.slane %v1944, 4
        %v1946 = vmax.f32 %v1944, %v1945
        %v1947 = vrot.slane %v1946, 2
        %v1948 = vmax.f32 %v1946, %v1947
        %v1949 = vrot.slane %v1948, 1
        %v1950 = vmax.f32 %v1948, %v1949
        %v1951 = vsel %vm1917, %v1906, -inf
        %v1952 = vrot.slane %v1951, 4
        %v1953 = vmax.f32 %v1951, %v1952
        %v1954 = vrot.slane %v1953, 2
        %v1955 = vmax.f32 %v1953, %v1954
        %v1956 = vrot.slane %v1955, 1
        %v1957 = vmax.f32 %v1955, %v1956
        %v1958 = vsel %vm1925, %v1906, -inf
        %v1959 = vrot.slane %v1958, 4
        %v1960 = vmax.f32 %v1958, %v1959
        %v1961 = vrot.slane %v1960, 2
        %v1962 = vmax.f32 %v1960, %v1961
        %v1963 = vrot.slane %v1962, 1
        %v1964 = vmax.f32 %v1962, %v1963
        %v1965 = vsel %vm1933, %v1906, -inf
        %v1966 = vsel %vm1935, %v1907, -inf
        %v1967 = vmax.f32 %v1965, %v1966
        %v1968 = vrot.slane %v1967, 4
        %v1969 = vmax.f32 %v1967, %v1968
        %v1970 = vrot.slane %v1969, 2
        %v1971 = vmax.f32 %v1969, %v1970
        %v1972 = vrot.slane %v1971, 1
        %v1973 = vmax.f32 %v1971, %v1972
        %v1974 = vsel %vm1909, %v1907, -inf
        %v1975 = vrot.slane %v1974, 4
        %v1976 = vmax.f32 %v1974, %v1975
        %v1977 = vrot.slane %v1976, 2
        %v1978 = vmax.f32 %v1976, %v1977
        %v1979 = vrot.slane %v1978, 1
        %v1980 = vmax.f32 %v1978, %v1979
        %v1981 = vsel %vm1917, %v1907, -inf
        %v1982 = vrot.slane %v1981, 4
        %v1983 = vmax.f32 %v1981, %v1982
        %v1984 = vrot.slane %v1983, 2
        %v1985 = vmax.f32 %v1983, %v1984
        %v1986 = vrot.slane %v1985, 1
        %v1987 = vmax.f32 %v1985, %v1986
        %v1988 = vsel %vm1925, %v1907, -inf
        %v1989 = vrot.slane %v1988, 4
        %v1990 = vmax.f32 %v1988, %v1989
        %v1991 = vrot.slane %v1990, 2
        %v1992 = vmax.f32 %v1990, %v1991
        %v1993 = vrot.slane %v1992, 1
        %v1994 = vmax.f32 %v1992, %v1993
        %v1995 = vsel %vm1933, %v1907, -inf
        %v1996 = vsel %vm1935, %v1908, -inf
        %v1997 = vmax.f32 %v1995, %v1996
        %v1998 = vrot.slane %v1997, 4
        %v1999 = vmax.f32 %v1997, %v1998
        %v2000 = vrot.slane %v1999, 2
        %v2001 = vmax.f32 %v1999, %v2000
        %v2002 = vrot.slane %v2001, 1
        %v2003 = vmax.f32 %v2001, %v2002
        %v2004 = vsel %vm1909, %v1908, -inf
        %v2005 = vrot.slane %v2004, 4
        %v2006 = vmax.f32 %v2004, %v2005
        %v2007 = vrot.slane %v2006, 2
        %v2008 = vmax.f32 %v2006, %v2007
        %v2009 = vrot.slane %v2008, 1
        %v2010 = vmax.f32 %v2008, %v2009
        %v2011 = vsel %vm1917, %v1908, -inf
        %v2012 = vrot.slane %v2011, 4
        %v2013 = vmax.f32 %v2011, %v2012
        %v2014 = vrot.slane %v2013, 2
        %v2015 = vmax.f32 %v2013, %v2014
        %v2016 = vrot.slane %v2015, 1
        %v2017 = vmax.f32 %v2015, %v2016
        %vm2018 = vcmask 1040384
        %v2019 = vsel %vm2018, %v1916, %v1924
        %vm2020 = vcmask 1041408
        %v2021 = vsel %vm2020, %v2019, %v1932
        %v2022 = vsel %vm787, %v2021, %v1943
        %vm2023 = vcmask 1043456
        %v2024 = vsel %vm2023, %v2022, %v1950
        %vm2025 = vcmask 1044480
        %v2026 = vsel %vm2025, %v2024, %v1957
        %vm2027 = vcmask 1045504
        %v2028 = vsel %vm2027, %v2026, %v1964
        %vm2029 = vcmask 1046528
        %v2030 = vsel %vm2029, %v2028, %v1973
        %v2031 = vsel %vm2018, %v1980, %v1987
        %v2032 = vsel %vm2020, %v2031, %v1994
        %v2033 = vsel %vm787, %v2032, %v2003
        %v2034 = vsel %vm2023, %v2033, %v2010
        %v2035 = vsel %vm2025, %v2034, %v2017
        %v2036 = vld [vmem:[#allocation2 + $0x5a] sm:$0xff]
        %v2037 = vld [vmem:[#allocation2 + $0x62] sm:$0xff]
        %v2038 = vld [vmem:[#allocation2 + $0x6a] sm:$0xff]
        %v2039 = vld [vmem:[#allocation2 + $0x72] sm:$0x3f]
        %v2040 = vld [vmem:[#allocation2 + $0x78] sm:$0xff]
        %v2041 = vld [vmem:[#allocation2 + $0x80] sm:$0xff]
        %v2042 = vld [vmem:[#allocation2 + $0x88] sm:$0xff]
        %v2043 = vld [vmem:[#allocation2 + $0x90] sm:$0x3f]
        %v2044 = vmax.f32 %v1897, %v2036
        %v2045 = vmax.f32 %v1898, %v2037
        %v2046 = vmax.f32 %v1899, %v2038
        %v2047 = vmax.f32 %v1900, %v2039
        %v2048 = vmax.f32 %v2044, %v2040
        %v2049 = vmax.f32 %v2045, %v2041
        %v2050 = vmax.f32 %v2046, %v2042
        %v2051 = vmax.f32 %v2047, %v2043
        %v2052 = vsel %vm1909, %v2048, -inf
        %v2053 = vrot.slane %v2052, 4
        %v2054 = vmax.f32 %v2052, %v2053
        %v2055 = vrot.slane %v2054, 2
        %v2056 = vmax.f32 %v2054, %v2055
        %v2057 = vrot.slane %v2056, 1
        %v2058 = vmax.f32 %v2056, %v2057
        %v2059 = vsel %vm1917, %v2048, -inf
        %v2060 = vrot.slane %v2059, 4
        %v2061 = vmax.f32 %v2059, %v2060
        %v2062 = vrot.slane %v2061, 2
        %v2063 = vmax.f32 %v2061, %v2062
        %v2064 = vrot.slane %v2063, 1
        %v2065 = vmax.f32 %v2063, %v2064
        %v2066 = vsel %vm1925, %v2048, -inf
        %v2067 = vrot.slane %v2066, 4
        %v2068 = vmax.f32 %v2066, %v2067
        %v2069 = vrot.slane %v2068, 2
        %v2070 = vmax.f32 %v2068, %v2069
        %v2071 = vrot.slane %v2070, 1
        %v2072 = vmax.f32 %v2070, %v2071
        %v2073 = vsel %vm1933, %v2048, -inf
        %v2074 = vsel %vm1935, %v2049, -inf
        %v2075 = vmax.f32 %v2073, %v2074
        %v2076 = vrot.slane %v2075, 4
        %v2077 = vmax.f32 %v2075, %v2076
        %v2078 = vrot.slane %v2077, 2
        %v2079 = vmax.f32 %v2077, %v2078
        %v2080 = vrot.slane %v2079, 1
        %v2081 = vmax.f32 %v2079, %v2080
        %v2082 = vsel %vm1909, %v2049, -inf
        %v2083 = vrot.slane %v2082, 4
        %v2084 = vmax.f32 %v2082, %v2083
        %v2085 = vrot.slane %v2084, 2
        %v2086 = vmax.f32 %v2084, %v2085
        %v2087 = vrot.slane %v2086, 1
        %v2088 = vmax.f32 %v2086, %v2087
        %v2089 = vsel %vm1917, %v2049, -inf
        %v2090 = vrot.slane %v2089, 4
        %v2091 = vmax.f32 %v2089, %v2090
        %v2092 = vrot.slane %v2091, 2
        %v2093 = vmax.f32 %v2091, %v2092
        %v2094 = vrot.slane %v2093, 1
        %v2095 = vmax.f32 %v2093, %v2094
        %v2096 = vsel %vm1925, %v2049, -inf
        %v2097 = vrot.slane %v2096, 4
        %v2098 = vmax.f32 %v2096, %v2097
        %v2099 = vrot.slane %v2098, 2
        %v2100 = vmax.f32 %v2098, %v2099
        %v2101 = vrot.slane %v2100, 1
        %v2102 = vmax.f32 %v2100, %v2101
        %v2103 = vsel %vm1933, %v2049, -inf
        %v2104 = vsel %vm1935, %v2050, -inf
        %v2105 = vmax.f32 %v2103, %v2104
        %v2106 = vrot.slane %v2105, 4
        %v2107 = vmax.f32 %v2105, %v2106
        %v2108 = vrot.slane %v2107, 2
        %v2109 = vmax.f32 %v2107, %v2108
        %v2110 = vrot.slane %v2109, 1
        %v2111 = vmax.f32 %v2109, %v2110
        %v2112 = vsel %vm1909, %v2050, -inf
        %v2113 = vrot.slane %v2112, 4
        %v2114 = vmax.f32 %v2112, %v2113
        %v2115 = vrot.slane %v2114, 2
        %v2116 = vmax.f32 %v2114, %v2115
        %v2117 = vrot.slane %v2116, 1
        %v2118 = vmax.f32 %v2116, %v2117
        %v2119 = vsel %vm1917, %v2050, -inf
        %v2120 = vrot.slane %v2119, 4
        %v2121 = vmax.f32 %v2119, %v2120
        %v2122 = vrot.slane %v2121, 2
        %v2123 = vmax.f32 %v2121, %v2122
        %v2124 = vrot.slane %v2123, 1
        %v2125 = vmax.f32 %v2123, %v2124
        %v2126 = vsel %vm1925, %v2050, -inf
        %v2127 = vrot.slane %v2126, 4
        %v2128 = vmax.f32 %v2126, %v2127
        %v2129 = vrot.slane %v2128, 2
        %v2130 = vmax.f32 %v2128, %v2129
        %v2131 = vrot.slane %v2130, 1
        %v2132 = vmax.f32 %v2130, %v2131
        %v2133 = vsel %vm1933, %v2050, -inf
        %v2134 = vsel %vm1935, %v2051, -inf
        %v2135 = vmax.f32 %v2133, %v2134
        %v2136 = vrot.slane %v2135, 4
        %v2137 = vmax.f32 %v2135, %v2136
        %v2138 = vrot.slane %v2137, 2
        %v2139 = vmax.f32 %v2137, %v2138
        %v2140 = vrot.slane %v2139, 1
        %v2141 = vmax.f32 %v2139, %v2140
        %v2142 = vsel %vm1909, %v2051, -inf
        %v2143 = vrot.slane %v2142, 4
        %v2144 = vmax.f32 %v2142, %v2143
        %v2145 = vrot.slane %v2144, 2
        %v2146 = vmax.f32 %v2144, %v2145
        %v2147 = vrot.slane %v2146, 1
        %v2148 = vmax.f32 %v2146, %v2147
        %v2149 = vsel %vm1917, %v2051, -inf
        %v2150 = vrot.slane %v2149, 4
        %v2151 = vmax.f32 %v2149, %v2150
        %v2152 = vrot.slane %v2151, 2
        %v2153 = vmax.f32 %v2151, %v2152
        %v2154 = vrot.slane %v2153, 1
        %v2155 = vmax.f32 %v2153, %v2154
        %v2156 = vsel %vm2018, %v2058, %v2065
        %v2157 = vsel %vm2020, %v2156, %v2072
        %v2158 = vsel %vm787, %v2157, %v2081
        %v2159 = vsel %vm2023, %v2158, %v2088
        %v2160 = vsel %vm2025, %v2159, %v2095
        %v2161 = vsel %vm2027, %v2160, %v2102
        %v2162 = vsel %vm2029, %v2161, %v2111
        %v2163 = vsel %vm2018, %v2118, %v2125
        %v2164 = vsel %vm2020, %v2163, %v2132
        %v2165 = vsel %vm787, %v2164, %v2141
        %v2166 = vsel %vm2023, %v2165, %v2148
        %v2167 = vsel %vm2025, %v2166, %v2155
        %v2168 = vld [vmem:[#allocation2 + $0x96] sm:$0xff]
        %v2169 = vld [vmem:[#allocation2 + $0x9e] sm:$0xff]
        %v2170 = vld [vmem:[#allocation2 + $0xa6] sm:$0xff]
        %v2171 = vld [vmem:[#allocation2 + $0xae] sm:$0x3f]
        %v2172 = vld [vmem:[#allocation2 + $0xb4] sm:$0xff]
        %v2173 = vld [vmem:[#allocation2 + $0xbc] sm:$0xff]
        %v2174 = vld [vmem:[#allocation2 + $0xc4] sm:$0xff]
        %v2175 = vld [vmem:[#allocation2 + $0xcc] sm:$0x3f]
        %v2176 = vmax.f32 %v2040, %v2168
        %v2177 = vmax.f32 %v2041, %v2169
        %v2178 = vmax.f32 %v2042, %v2170
        %v2179 = vmax.f32 %v2043, %v2171
        %v2180 = vmax.f32 %v2176, %v2172
        %v2181 = vmax.f32 %v2177, %v2173
        %v2182 = vmax.f32 %v2178, %v2174
        %v2183 = vmax.f32 %v2179, %v2175
        %v2184 = vsel %vm1909, %v2180, -inf
        %v2185 = vrot.slane %v2184, 4
        %v2186 = vmax.f32 %v2184, %v2185
        %v2187 = vrot.slane %v2186, 2
        %v2188 = vmax.f32 %v2186, %v2187
        %v2189 = vrot.slane %v2188, 1
        %v2190 = vmax.f32 %v2188, %v2189
        %v2191 = vsel %vm1917, %v2180, -inf
        %v2192 = vrot.slane %v2191, 4
        %v2193 = vmax.f32 %v2191, %v2192
        %v2194 = vrot.slane %v2193, 2
        %v2195 = vmax.f32 %v2193, %v2194
        %v2196 = vrot.slane %v2195, 1
        %v2197 = vmax.f32 %v2195, %v2196
        %v2198 = vsel %vm1925, %v2180, -inf
        %v2199 = vrot.slane %v2198, 4
        %v2200 = vmax.f32 %v2198, %v2199
        %v2201 = vrot.slane %v2200, 2
        %v2202 = vmax.f32 %v2200, %v2201
        %v2203 = vrot.slane %v2202, 1
        %v2204 = vmax.f32 %v2202, %v2203
        %v2205 = vsel %vm1933, %v2180, -inf
        %v2206 = vsel %vm1935, %v2181, -inf
        %v2207 = vmax.f32 %v2205, %v2206
        %v2208 = vrot.slane %v2207, 4
        %v2209 = vmax.f32 %v2207, %v2208
        %v2210 = vrot.slane %v2209, 2
        %v2211 = vmax.f32 %v2209, %v2210
        %v2212 = vrot.slane %v2211, 1
        %v2213 = vmax.f32 %v2211, %v2212
        %v2214 = vsel %vm1909, %v2181, -inf
        %v2215 = vrot.slane %v2214, 4
        %v2216 = vmax.f32 %v2214, %v2215
        %v2217 = vrot.slane %v2216, 2
        %v2218 = vmax.f32 %v2216, %v2217
        %v2219 = vrot.slane %v2218, 1
        %v2220 = vmax.f32 %v2218, %v2219
        %v2221 = vsel %vm1917, %v2181, -inf
        %v2222 = vrot.slane %v2221, 4
        %v2223 = vmax.f32 %v2221, %v2222
        %v2224 = vrot.slane %v2223, 2
        %v2225 = vmax.f32 %v2223, %v2224
        %v2226 = vrot.slane %v2225, 1
        %v2227 = vmax.f32 %v2225, %v2226
        %v2228 = vsel %vm1925, %v2181, -inf
        %v2229 = vrot.slane %v2228, 4
        %v2230 = vmax.f32 %v2228, %v2229
        %v2231 = vrot.slane %v2230, 2
        %v2232 = vmax.f32 %v2230, %v2231
        %v2233 = vrot.slane %v2232, 1
        %v2234 = vmax.f32 %v2232, %v2233
        %v2235 = vsel %vm1933, %v2181, -inf
        %v2236 = vsel %vm1935, %v2182, -inf
        %v2237 = vmax.f32 %v2235, %v2236
        %v2238 = vrot.slane %v2237, 4
        %v2239 = vmax.f32 %v2237, %v2238
        %v2240 = vrot.slane %v2239, 2
        %v2241 = vmax.f32 %v2239, %v2240
        %v2242 = vrot.slane %v2241, 1
        %v2243 = vmax.f32 %v2241, %v2242
        %v2244 = vsel %vm1909, %v2182, -inf
        %v2245 = vrot.slane %v2244, 4
        %v2246 = vmax.f32 %v2244, %v2245
        %v2247 = vrot.slane %v2246, 2
        %v2248 = vmax.f32 %v2246, %v2247
        %v2249 = vrot.slane %v2248, 1
        %v2250 = vmax.f32 %v2248, %v2249
        %v2251 = vsel %vm1917, %v2182, -inf
        %v2252 = vrot.slane %v2251, 4
        %v2253 = vmax.f32 %v2251, %v2252
        %v2254 = vrot.slane %v2253, 2
        %v2255 = vmax.f32 %v2253, %v2254
        %v2256 = vrot.slane %v2255, 1
        %v2257 = vmax.f32 %v2255, %v2256
        %v2258 = vsel %vm1925, %v2182, -inf
        %v2259 = vrot.slane %v2258, 4
        %v2260 = vmax.f32 %v2258, %v2259
        %v2261 = vrot.slane %v2260, 2
        %v2262 = vmax.f32 %v2260, %v2261
        %v2263 = vrot.slane %v2262, 1
        %v2264 = vmax.f32 %v2262, %v2263
        %v2265 = vsel %vm1933, %v2182, -inf
        %v2266 = vsel %vm1935, %v2183, -inf
        %v2267 = vmax.f32 %v2265, %v2266
        %v2268 = vrot.slane %v2267, 4
        %v2269 = vmax.f32 %v2267, %v2268
        %v2270 = vrot.slane %v2269, 2
        %v2271 = vmax.f32 %v2269, %v2270
        %v2272 = vrot.slane %v2271, 1
        %v2273 = vmax.f32 %v2271, %v2272
        %v2274 = vsel %vm1909, %v2183, -inf
        %v2275 = vrot.slane %v2274, 4
        %v2276 = vmax.f32 %v2274, %v2275
        %v2277 = vrot.slane %v2276, 2
        %v2278 = vmax.f32 %v2276, %v2277
        %v2279 = vrot.slane %v2278, 1
        %v2280 = vmax.f32 %v2278, %v2279
        %v2281 = vsel %vm1917, %v2183, -inf
        %v2282 = vrot.slane %v2281, 4
        %v2283 = vmax.f32 %v2281, %v2282
        %v2284 = vrot.slane %v2283, 2
        %v2285 = vmax.f32 %v2283, %v2284
        %v2286 = vrot.slane %v2285, 1
        %v2287 = vmax.f32 %v2285, %v2286
        %v2288 = vsel %vm2018, %v2190, %v2197
        %v2289 = vsel %vm2020, %v2288, %v2204
        %v2290 = vsel %vm787, %v2289, %v2213
        %v2291 = vsel %vm2023, %v2290, %v2220
        %v2292 = vsel %vm2025, %v2291, %v2227
        %v2293 = vsel %vm2027, %v2292, %v2234
        %v2294 = vsel %vm2029, %v2293, %v2243
        %v2295 = vsel %vm2018, %v2250, %v2257
        %v2296 = vsel %vm2020, %v2295, %v2264
        %v2297 = vsel %vm787, %v2296, %v2273
        %v2298 = vsel %vm2023, %v2297, %v2280
        %v2299 = vsel %vm2025, %v2298, %v2287
        %v2300 = vld [vmem:[#allocation2 + $0xd2] sm:$0xff]
        %v2301 = vld [vmem:[#allocation2 + $0xda] sm:$0xff]
        %v2302 = vld [vmem:[#allocation2 + $0xe2] sm:$0xff]
        %v2303 = vld [vmem:[#allocation2 + $0xea] sm:$0x3f]
        %v2304 = vld [vmem:[#allocation2 + $0xf0] sm:$0xff]
        %v2305 = vld [vmem:[#allocation2 + $0xf8] sm:$0xff]
        %v2306 = vld [vmem:[#allocation2 + $0x100] sm:$0xff]
        %v2307 = vld [vmem:[#allocation2 + $0x108] sm:$0x3f]
        %v2308 = vmax.f32 %v2172, %v2300
        %v2309 = vmax.f32 %v2173, %v2301
        %v2310 = vmax.f32 %v2174, %v2302
        %v2311 = vmax.f32 %v2175, %v2303
        %v2312 = vmax.f32 %v2308, %v2304
        %v2313 = vmax.f32 %v2309, %v2305
        %v2314 = vmax.f32 %v2310, %v2306
        %v2315 = vmax.f32 %v2311, %v2307
        %v2316 = vsel %vm1909, %v2312, -inf
        %v2317 = vrot.slane %v2316, 4
        %v2318 = vmax.f32 %v2316, %v2317
        %v2319 = vrot.slane %v2318, 2
        %v2320 = vmax.f32 %v2318, %v2319
        %v2321 = vrot.slane %v2320, 1
        %v2322 = vmax.f32 %v2320, %v2321
        %v2323 = vsel %vm1917, %v2312, -inf
        %v2324 = vrot.slane %v2323, 4
        %v2325 = vmax.f32 %v2323, %v2324
        %v2326 = vrot.slane %v2325, 2
        %v2327 = vmax.f32 %v2325, %v2326
        %v2328 = vrot.slane %v2327, 1
        %v2329 = vmax.f32 %v2327, %v2328
        %v2330 = vsel %vm1925, %v2312, -inf
        %v2331 = vrot.slane %v2330, 4
        %v2332 = vmax.f32 %v2330, %v2331
        %v2333 = vrot.slane %v2332, 2
        %v2334 = vmax.f32 %v2332, %v2333
        %v2335 = vrot.slane %v2334, 1
        %v2336 = vmax.f32 %v2334, %v2335
        %v2337 = vsel %vm1933, %v2312, -inf
        %v2338 = vsel %vm1935, %v2313, -inf
        %v2339 = vmax.f32 %v2337, %v2338
        %v2340 = vrot.slane %v2339, 4
        %v2341 = vmax.f32 %v2339, %v2340
        %v2342 = vrot.slane %v2341, 2
        %v2343 = vmax.f32 %v2341, %v2342
        %v2344 = vrot.slane %v2343, 1
        %v2345 = vmax.f32 %v2343, %v2344
        %v2346 = vsel %vm1909, %v2313, -inf
        %v2347 = vrot.slane %v2346, 4
        %v2348 = vmax.f32 %v2346, %v2347
        %v2349 = vrot.slane %v2348, 2
        %v2350 = vmax.f32 %v2348, %v2349
        %v2351 = vrot.slane %v2350, 1
        %v2352 = vmax.f32 %v2350, %v2351
        %v2353 = vsel %vm1917, %v2313, -inf
        %v2354 = vrot.slane %v2353, 4
        %v2355 = vmax.f32 %v2353, %v2354
        %v2356 = vrot.slane %v2355, 2
        %v2357 = vmax.f32 %v2355, %v2356
        %v2358 = vrot.slane %v2357, 1
        %v2359 = vmax.f32 %v2357, %v2358
        %v2360 = vsel %vm1925, %v2313, -inf
        %v2361 = vrot.slane %v2360, 4
        %v2362 = vmax.f32 %v2360, %v2361
        %v2363 = vrot.slane %v2362, 2
        %v2364 = vmax.f32 %v2362, %v2363
        %v2365 = vrot.slane %v2364, 1
        %v2366 = vmax.f32 %v2364, %v2365
        %v2367 = vsel %vm1933, %v2313, -inf
        %v2368 = vsel %vm1935, %v2314, -inf
        %v2369 = vmax.f32 %v2367, %v2368
        %v2370 = vrot.slane %v2369, 4
        %v2371 = vmax.f32 %v2369, %v2370
        %v2372 = vrot.slane %v2371, 2
        %v2373 = vmax.f32 %v2371, %v2372
        %v2374 = vrot.slane %v2373, 1
        %v2375 = vmax.f32 %v2373, %v2374
        %v2376 = vsel %vm1909, %v2314, -inf
        %v2377 = vrot.slane %v2376, 4
        %v2378 = vmax.f32 %v2376, %v2377
        %v2379 = vrot.slane %v2378, 2
        %v2380 = vmax.f32 %v2378, %v2379
        %v2381 = vrot.slane %v2380, 1
        %v2382 = vmax.f32 %v2380, %v2381
        %v2383 = vsel %vm1917, %v2314, -inf
        %v2384 = vrot.slane %v2383, 4
        %v2385 = vmax.f32 %v2383, %v2384
        %v2386 = vrot.slane %v2385, 2
        %v2387 = vmax.f32 %v2385, %v2386
        %v2388 = vrot.slane %v2387, 1
        %v2389 = vmax.f32 %v2387, %v2388
        %v2390 = vsel %vm1925, %v2314, -inf
        %v2391 = vrot.slane %v2390, 4
        %v2392 = vmax.f32 %v2390, %v2391
        %v2393 = vrot.slane %v2392, 2
        %v2394 = vmax.f32 %v2392, %v2393
        %v2395 = vrot.slane %v2394, 1
        %v2396 = vmax.f32 %v2394, %v2395
        %v2397 = vsel %vm1933, %v2314, -inf
        %v2398 = vsel %vm1935, %v2315, -inf
        %v2399 = vmax.f32 %v2397, %v2398
        %v2400 = vrot.slane %v2399, 4
        %v2401 = vmax.f32 %v2399, %v2400
        %v2402 = vrot.slane %v2401, 2
        %v2403 = vmax.f32 %v2401, %v2402
        %v2404 = vrot.slane %v2403, 1
        %v2405 = vmax.f32 %v2403, %v2404
        %v2406 = vsel %vm1909, %v2315, -inf
        %v2407 = vrot.slane %v2406, 4
        %v2408 = vmax.f32 %v2406, %v2407
        %v2409 = vrot.slane %v2408, 2
        %v2410 = vmax.f32 %v2408, %v2409
        %v2411 = vrot.slane %v2410, 1
        %v2412 = vmax.f32 %v2410, %v2411
        %v2413 = vsel %vm1917, %v2315, -inf
        %v2414 = vrot.slane %v2413, 4
        %v2415 = vmax.f32 %v2413, %v2414
        %v2416 = vrot.slane %v2415, 2
        %v2417 = vmax.f32 %v2415, %v2416
        %v2418 = vrot.slane %v2417, 1
        %v2419 = vmax.f32 %v2417, %v2418
        %v2420 = vsel %vm2018, %v2322, %v2329
        %v2421 = vsel %vm2020, %v2420, %v2336
        %v2422 = vsel %vm787, %v2421, %v2345
        %v2423 = vsel %vm2023, %v2422, %v2352
        %v2424 = vsel %vm2025, %v2423, %v2359
        %v2425 = vsel %vm2027, %v2424, %v2366
        %v2426 = vsel %vm2029, %v2425, %v2375
        %v2427 = vsel %vm2018, %v2382, %v2389
        %v2428 = vsel %vm2020, %v2427, %v2396
        %v2429 = vsel %vm787, %v2428, %v2405
        %v2430 = vsel %vm2023, %v2429, %v2412
        %v2431 = vsel %vm2025, %v2430, %v2419
        %v2432 = vld [vmem:[#allocation2 + $0x10e] sm:$0xff]
        %v2433 = vld [vmem:[#allocation2 + $0x116] sm:$0xff]
        %v2434 = vld [vmem:[#allocation2 + $0x11e] sm:$0xff]
        %v2435 = vld [vmem:[#allocation2 + $0x126] sm:$0x3f]
        %v2436 = vld [vmem:[#allocation2 + $0x12c] sm:$0xff]
        %v2437 = vld [vmem:[#allocation2 + $0x134] sm:$0xff]
        %v2438 = vld [vmem:[#allocation2 + $0x13c] sm:$0xff]
        %v2439 = vld [vmem:[#allocation2 + $0x144] sm:$0x3f]
        %v2440 = vmax.f32 %v2304, %v2432
        %v2441 = vmax.f32 %v2305, %v2433
        %v2442 = vmax.f32 %v2306, %v2434
        %v2443 = vmax.f32 %v2307, %v2435
        %v2444 = vmax.f32 %v2440, %v2436
        %v2445 = vmax.f32 %v2441, %v2437
        %v2446 = vmax.f32 %v2442, %v2438
        %v2447 = vmax.f32 %v2443, %v2439
        %v2448 = vsel %vm1909, %v2444, -inf
        %v2449 = vrot.slane %v2448, 4
        %v2450 = vmax.f32 %v2448, %v2449
        %v2451 = vrot.slane %v2450, 2
        %v2452 = vmax.f32 %v2450, %v2451
        %v2453 = vrot.slane %v2452, 1
        %v2454 = vmax.f32 %v2452, %v2453
        %v2455 = vsel %vm1917, %v2444, -inf
        %v2456 = vrot.slane %v2455, 4
        %v2457 = vmax.f32 %v2455, %v2456
        %v2458 = vrot.slane %v2457, 2
        %v2459 = vmax.f32 %v2457, %v2458
        %v2460 = vrot.slane %v2459, 1
        %v2461 = vmax.f32 %v2459, %v2460
        %v2462 = vsel %vm1925, %v2444, -inf
        %v2463 = vrot.slane %v2462, 4
        %v2464 = vmax.f32 %v2462, %v2463
        %v2465 = vrot.slane %v2464, 2
        %v2466 = vmax.f32 %v2464, %v2465
        %v2467 = vrot.slane %v2466, 1
        %v2468 = vmax.f32 %v2466, %v2467
        %v2469 = vsel %vm1933, %v2444, -inf
        %v2470 = vsel %vm1935, %v2445, -inf
        %v2471 = vmax.f32 %v2469, %v2470
        %v2472 = vrot.slane %v2471, 4
        %v2473 = vmax.f32 %v2471, %v2472
        %v2474 = vrot.slane %v2473, 2
        %v2475 = vmax.f32 %v2473, %v2474
        %v2476 = vrot.slane %v2475, 1
        %v2477 = vmax.f32 %v2475, %v2476
        %v2478 = vsel %vm1909, %v2445, -inf
        %v2479 = vrot.slane %v2478, 4
        %v2480 = vmax.f32 %v2478, %v2479
        %v2481 = vrot.slane %v2480, 2
        %v2482 = vmax.f32 %v2480, %v2481
        %v2483 = vrot.slane %v2482, 1
        %v2484 = vmax.f32 %v2482, %v2483
        %v2485 = vsel %vm1917, %v2445, -inf
        %v2486 = vrot.slane %v2485, 4
        %v2487 = vmax.f32 %v2485, %v2486
        %v2488 = vrot.slane %v2487, 2
        %v2489 = vmax.f32 %v2487, %v2488
        %v2490 = vrot.slane %v2489, 1
        %v2491 = vmax.f32 %v2489, %v2490
        %v2492 = vsel %vm1925, %v2445, -inf
        %v2493 = vrot.slane %v2492, 4
        %v2494 = vmax.f32 %v2492, %v2493
        %v2495 = vrot.slane %v2494, 2
        %v2496 = vmax.f32 %v2494, %v2495
        %v2497 = vrot.slane %v2496, 1
        %v2498 = vmax.f32 %v2496, %v2497
        %v2499 = vsel %vm1933, %v2445, -inf
        %v2500 = vsel %vm1935, %v2446, -inf
        %v2501 = vmax.f32 %v2499, %v2500
        %v2502 = vrot.slane %v2501, 4
        %v2503 = vmax.f32 %v2501, %v2502
        %v2504 = vrot.slane %v2503, 2
        %v2505 = vmax.f32 %v2503, %v2504
        %v2506 = vrot.slane %v2505, 1
        %v2507 = vmax.f32 %v2505, %v2506
        %v2508 = vsel %vm1909, %v2446, -inf
        %v2509 = vrot.slane %v2508, 4
        %v2510 = vmax.f32 %v2508, %v2509
        %v2511 = vrot.slane %v2510, 2
        %v2512 = vmax.f32 %v2510, %v2511
        %v2513 = vrot.slane %v2512, 1
        %v2514 = vmax.f32 %v2512, %v2513
        %v2515 = vsel %vm1917, %v2446, -inf
        %v2516 = vrot.slane %v2515, 4
        %v2517 = vmax.f32 %v2515, %v2516
        %v2518 = vrot.slane %v2517, 2
        %v2519 = vmax.f32 %v2517, %v2518
        %v2520 = vrot.slane %v2519, 1
        %v2521 = vmax.f32 %v2519, %v2520
        %v2522 = vsel %vm1925, %v2446, -inf
        %v2523 = vrot.slane %v2522, 4
        %v2524 = vmax.f32 %v2522, %v2523
        %v2525 = vrot.slane %v2524, 2
        %v2526 = vmax.f32 %v2524, %v2525
        %v2527 = vrot.slane %v2526, 1
        %v2528 = vmax.f32 %v2526, %v2527
        %v2529 = vsel %vm1933, %v2446, -inf
        %v2530 = vsel %vm1935, %v2447, -inf
        %v2531 = vmax.f32 %v2529, %v2530
        %v2532 = vrot.slane %v2531, 4
        %v2533 = vmax.f32 %v2531, %v2532
        %v2534 = vrot.slane %v2533, 2
        %v2535 = vmax.f32 %v2533, %v2534
        %v2536 = vrot.slane %v2535, 1
        %v2537 = vmax.f32 %v2535, %v2536
        %v2538 = vsel %vm1909, %v2447, -inf
        %v2539 = vrot.slane %v2538, 4
        %v2540 = vmax.f32 %v2538, %v2539
        %v2541 = vrot.slane %v2540, 2
        %v2542 = vmax.f32 %v2540, %v2541
        %v2543 = vrot.slane %v2542, 1
        %v2544 = vmax.f32 %v2542, %v2543
        %v2545 = vsel %vm1917, %v2447, -inf
        %v2546 = vrot.slane %v2545, 4
        %v2547 = vmax.f32 %v2545, %v2546
        %v2548 = vrot.slane %v2547, 2
        %v2549 = vmax.f32 %v2547, %v2548
        %v2550 = vrot.slane %v2549, 1
        %v2551 = vmax.f32 %v2549, %v2550
        %v2552 = vsel %vm2018, %v2454, %v2461
        %v2553 = vsel %vm2020, %v2552, %v2468
        %v2554 = vsel %vm787, %v2553, %v2477
        %v2555 = vsel %vm2023, %v2554, %v2484
        %v2556 = vsel %vm2025, %v2555, %v2491
        %v2557 = vsel %vm2027, %v2556, %v2498
        %v2558 = vsel %vm2029, %v2557, %v2507
        %v2559 = vsel %vm2018, %v2514, %v2521
        %v2560 = vsel %vm2020, %v2559, %v2528
        %v2561 = vsel %vm787, %v2560, %v2537
        %v2562 = vsel %vm2023, %v2561, %v2544
        %v2563 = vsel %vm2025, %v2562, %v2551
        %v2564 = vld [vmem:[#allocation2 + $0x14a] sm:$0xff]
        %v2565 = vld [vmem:[#allocation2 + $0x152] sm:$0xff]
        %v2566 = vld [vmem:[#allocation2 + $0x15a] sm:$0xff]
        %v2567 = vld [vmem:[#allocation2 + $0x162] sm:$0x3f]
        %v2568 = vld [vmem:[#allocation2 + $0x168] sm:$0xff]
        %v2569 = vld [vmem:[#allocation2 + $0x170] sm:$0xff]
        %v2570 = vld [vmem:[#allocation2 + $0x178] sm:$0xff]
        %v2571 = vld [vmem:[#allocation2 + $0x180] sm:$0x3f]
        %v2572 = vmax.f32 %v2436, %v2564
        %v2573 = vmax.f32 %v2437, %v2565
        %v2574 = vmax.f32 %v2438, %v2566
        %v2575 = vmax.f32 %v2439, %v2567
        %v2576 = vmax.f32 %v2572, %v2568
        %v2577 = vmax.f32 %v2573, %v2569
        %v2578 = vmax.f32 %v2574, %v2570
        %v2579 = vmax.f32 %v2575, %v2571
        %v2580 = vsel %vm1909, %v2576, -inf
        %v2581 = vrot.slane %v2580, 4
        %v2582 = vmax.f32 %v2580, %v2581
        %v2583 = vrot.slane %v2582, 2
        %v2584 = vmax.f32 %v2582, %v2583
        %v2585 = vrot.slane %v2584, 1
        %v2586 = vmax.f32 %v2584, %v2585
        %v2587 = vsel %vm1917, %v2576, -inf
        %v2588 = vrot.slane %v2587, 4
        %v2589 = vmax.f32 %v2587, %v2588
        %v2590 = vrot.slane %v2589, 2
        %v2591 = vmax.f32 %v2589, %v2590
        %v2592 = vrot.slane %v2591, 1
        %v2593 = vmax.f32 %v2591, %v2592
        %v2594 = vsel %vm1925, %v2576, -inf
        %v2595 = vrot.slane %v2594, 4
        %v2596 = vmax.f32 %v2594, %v2595
        %v2597 = vrot.slane %v2596, 2
        %v2598 = vmax.f32 %v2596, %v2597
        %v2599 = vrot.slane %v2598, 1
        %v2600 = vmax.f32 %v2598, %v2599
        %v2601 = vsel %vm1933, %v2576, -inf
        %v2602 = vsel %vm1935, %v2577, -inf
        %v2603 = vmax.f32 %v2601, %v2602
        %v2604 = vrot.slane %v2603, 4
        %v2605 = vmax.f32 %v2603, %v2604
        %v2606 = vrot.slane %v2605, 2
        %v2607 = vmax.f32 %v2605, %v2606
        %v2608 = vrot.slane %v2607, 1
        %v2609 = vmax.f32 %v2607, %v2608
        %v2610 = vsel %vm1909, %v2577, -inf
        %v2611 = vrot.slane %v2610, 4
        %v2612 = vmax.f32 %v2610, %v2611
        %v2613 = vrot.slane %v2612, 2
        %v2614 = vmax.f32 %v2612, %v2613
        %v2615 = vrot.slane %v2614, 1
        %v2616 = vmax.f32 %v2614, %v2615
        %v2617 = vsel %vm1917, %v2577, -inf
        %v2618 = vrot.slane %v2617, 4
        %v2619 = vmax.f32 %v2617, %v2618
        %v2620 = vrot.slane %v2619, 2
        %v2621 = vmax.f32 %v2619, %v2620
        %v2622 = vrot.slane %v2621, 1
        %v2623 = vmax.f32 %v2621, %v2622
        %v2624 = vsel %vm1925, %v2577, -inf
        %v2625 = vrot.slane %v2624, 4
        %v2626 = vmax.f32 %v2624, %v2625
        %v2627 = vrot.slane %v2626, 2
        %v2628 = vmax.f32 %v2626, %v2627
        %v2629 = vrot.slane %v2628, 1
        %v2630 = vmax.f32 %v2628, %v2629
        %v2631 = vsel %vm1933, %v2577, -inf
        %v2632 = vsel %vm1935, %v2578, -inf
        %v2633 = vmax.f32 %v2631, %v2632
        %v2634 = vrot.slane %v2633, 4
        %v2635 = vmax.f32 %v2633, %v2634
        %v2636 = vrot.slane %v2635, 2
        %v2637 = vmax.f32 %v2635, %v2636
        %v2638 = vrot.slane %v2637, 1
        %v2639 = vmax.f32 %v2637, %v2638
        %v2640 = vsel %vm1909, %v2578, -inf
        %v2641 = vrot.slane %v2640, 4
        %v2642 = vmax.f32 %v2640, %v2641
        %v2643 = vrot.slane %v2642, 2
        %v2644 = vmax.f32 %v2642, %v2643
        %v2645 = vrot.slane %v2644, 1
        %v2646 = vmax.f32 %v2644, %v2645
        %v2647 = vsel %vm1917, %v2578, -inf
        %v2648 = vrot.slane %v2647, 4
        %v2649 = vmax.f32 %v2647, %v2648
        %v2650 = vrot.slane %v2649, 2
        %v2651 = vmax.f32 %v2649, %v2650
        %v2652 = vrot.slane %v2651, 1
        %v2653 = vmax.f32 %v2651, %v2652
        %v2654 = vsel %vm1925, %v2578, -inf
        %v2655 = vrot.slane %v2654, 4
        %v2656 = vmax.f32 %v2654, %v2655
        %v2657 = vrot.slane %v2656, 2
        %v2658 = vmax.f32 %v2656, %v2657
        %v2659 = vrot.slane %v2658, 1
        %v2660 = vmax.f32 %v2658, %v2659
        %v2661 = vsel %vm1933, %v2578, -inf
        %v2662 = vsel %vm1935, %v2579, -inf
        %v2663 = vmax.f32 %v2661, %v2662
        %v2664 = vrot.slane %v2663, 4
        %v2665 = vmax.f32 %v2663, %v2664
        %v2666 = vrot.slane %v2665, 2
        %v2667 = vmax.f32 %v2665, %v2666
        %v2668 = vrot.slane %v2667, 1
        %v2669 = vmax.f32 %v2667, %v2668
        %v2670 = vsel %vm1909, %v2579, -inf
        %v2671 = vrot.slane %v2670, 4
        %v2672 = vmax.f32 %v2670, %v2671
        %v2673 = vrot.slane %v2672, 2
        %v2674 = vmax.f32 %v2672, %v2673
        %v2675 = vrot.slane %v2674, 1
        %v2676 = vmax.f32 %v2674, %v2675
        %v2677 = vsel %vm1917, %v2579, -inf
        %v2678 = vrot.slane %v2677, 4
        %v2679 = vmax.f32 %v2677, %v2678
        %v2680 = vrot.slane %v2679, 2
        %v2681 = vmax.f32 %v2679, %v2680
        %v2682 = vrot.slane %v2681, 1
        %v2683 = vmax.f32 %v2681, %v2682
        %v2684 = vsel %vm2018, %v2586, %v2593
        %v2685 = vsel %vm2020, %v2684, %v2600
        %v2686 = vsel %vm787, %v2685, %v2609
        %v2687 = vsel %vm2023, %v2686, %v2616
        %v2688 = vsel %vm2025, %v2687, %v2623
        %v2689 = vsel %vm2027, %v2688, %v2630
        %v2690 = vsel %vm2029, %v2689, %v2639
        %v2691 = vsel %vm2018, %v2646, %v2653
        %v2692 = vsel %vm2020, %v2691, %v2660
        %v2693 = vsel %vm787, %v2692, %v2669
        %v2694 = vsel %vm2023, %v2693, %v2676
        %v2695 = vsel %vm2025, %v2694, %v2683
        %v2696 = vld [vmem:[#allocation2 + $0x186] sm:$0xff]
        %v2697 = vld [vmem:[#allocation2 + $0x18e] sm:$0xff]
        %v2698 = vld [vmem:[#allocation2 + $0x196] sm:$0xff]
        %v2699 = vld [vmem:[#allocation2 + $0x19e] sm:$0x3f]
        %v2700 = vld [vmem:[#allocation2 + $0x1a4] sm:$0xff]
        %v2701 = vld [vmem:[#allocation2 + $0x1ac] sm:$0xff]
        %v2702 = vld [vmem:[#allocation2 + $0x1b4] sm:$0xff]
        %v2703 = vld [vmem:[#allocation2 + $0x1bc] sm:$0x3f]
        %v2704 = vmax.f32 %v2568, %v2696
        %v2705 = vmax.f32 %v2569, %v2697
        %v2706 = vmax.f32 %v2570, %v2698
        %v2707 = vmax.f32 %v2571, %v2699
        %v2708 = vmax.f32 %v2704, %v2700
        %v2709 = vmax.f32 %v2705, %v2701
        %v2710 = vmax.f32 %v2706, %v2702
        %v2711 = vmax.f32 %v2707, %v2703
        %v2712 = vsel %vm1909, %v2708, -inf
        %v2713 = vrot.slane %v2712, 4
        %v2714 = vmax.f32 %v2712, %v2713
        %v2715 = vrot.slane %v2714, 2
        %v2716 = vmax.f32 %v2714, %v2715
        %v2717 = vrot.slane %v2716, 1
        %v2718 = vmax.f32 %v2716, %v2717
        %v2719 = vsel %vm1917, %v2708, -inf
        %v2720 = vrot.slane %v2719, 4
        %v2721 = vmax.f32 %v2719, %v2720
        %v2722 = vrot.slane %v2721, 2
        %v2723 = vmax.f32 %v2721, %v2722
        %v2724 = vrot.slane %v2723, 1
        %v2725 = vmax.f32 %v2723, %v2724
        %v2726 = vsel %vm1925, %v2708, -inf
        %v2727 = vrot.slane %v2726, 4
        %v2728 = vmax.f32 %v2726, %v2727
        %v2729 = vrot.slane %v2728, 2
        %v2730 = vmax.f32 %v2728, %v2729
        %v2731 = vrot.slane %v2730, 1
        %v2732 = vmax.f32 %v2730, %v2731
        %v2733 = vsel %vm1933, %v2708, -inf
        %v2734 = vsel %vm1935, %v2709, -inf
        %v2735 = vmax.f32 %v2733, %v2734
        %v2736 = vrot.slane %v2735, 4
        %v2737 = vmax.f32 %v2735, %v2736
        %v2738 = vrot.slane %v2737, 2
        %v2739 = vmax.f32 %v2737, %v2738
        %v2740 = vrot.slane %v2739, 1
        %v2741 = vmax.f32 %v2739, %v2740
        %v2742 = vsel %vm1909, %v2709, -inf
        %v2743 = vrot.slane %v2742, 4
        %v2744 = vmax.f32 %v2742, %v2743
        %v2745 = vrot.slane %v2744, 2
        %v2746 = vmax.f32 %v2744, %v2745
        %v2747 = vrot.slane %v2746, 1
        %v2748 = vmax.f32 %v2746, %v2747
        %v2749 = vsel %vm1917, %v2709, -inf
        %v2750 = vrot.slane %v2749, 4
        %v2751 = vmax.f32 %v2749, %v2750
        %v2752 = vrot.slane %v2751, 2
        %v2753 = vmax.f32 %v2751, %v2752
        %v2754 = vrot.slane %v2753, 1
        %v2755 = vmax.f32 %v2753, %v2754
        %v2756 = vsel %vm1925, %v2709, -inf
        %v2757 = vrot.slane %v2756, 4
        %v2758 = vmax.f32 %v2756, %v2757
        %v2759 = vrot.slane %v2758, 2
        %v2760 = vmax.f32 %v2758, %v2759
        %v2761 = vrot.slane %v2760, 1
        %v2762 = vmax.f32 %v2760, %v2761
        %v2763 = vsel %vm1933, %v2709, -inf
        %v2764 = vsel %vm1935, %v2710, -inf
        %v2765 = vmax.f32 %v2763, %v2764
        %v2766 = vrot.slane %v2765, 4
        %v2767 = vmax.f32 %v2765, %v2766
        %v2768 = vrot.slane %v2767, 2
        %v2769 = vmax.f32 %v2767, %v2768
        %v2770 = vrot.slane %v2769, 1
        %v2771 = vmax.f32 %v2769, %v2770
        %v2772 = vsel %vm1909, %v2710, -inf
        %v2773 = vrot.slane %v2772, 4
        %v2774 = vmax.f32 %v2772, %v2773
        %v2775 = vrot.slane %v2774, 2
        %v2776 = vmax.f32 %v2774, %v2775
        %v2777 = vrot.slane %v2776, 1
        %v2778 = vmax.f32 %v2776, %v2777
        %v2779 = vsel %vm1917, %v2710, -inf
        %v2780 = vrot.slane %v2779, 4
        %v2781 = vmax.f32 %v2779, %v2780
        %v2782 = vrot.slane %v2781, 2
        %v2783 = vmax.f32 %v2781, %v2782
        %v2784 = vrot.slane %v2783, 1
        %v2785 = vmax.f32 %v2783, %v2784
        %v2786 = vsel %vm1925, %v2710, -inf
        %v2787 = vrot.slane %v2786, 4
        %v2788 = vmax.f32 %v2786, %v2787
        %v2789 = vrot.slane %v2788, 2
        %v2790 = vmax.f32 %v2788, %v2789
        %v2791 = vrot.slane %v2790, 1
        %v2792 = vmax.f32 %v2790, %v2791
        %v2793 = vsel %vm1933, %v2710, -inf
        %v2794 = vsel %vm1935, %v2711, -inf
        %v2795 = vmax.f32 %v2793, %v2794
        %v2796 = vrot.slane %v2795, 4
        %v2797 = vmax.f32 %v2795, %v2796
        %v2798 = vrot.slane %v2797, 2
        %v2799 = vmax.f32 %v2797, %v2798
        %v2800 = vrot.slane %v2799, 1
        %v2801 = vmax.f32 %v2799, %v2800
        %v2802 = vsel %vm1909, %v2711, -inf
        %v2803 = vrot.slane %v2802, 4
        %v2804 = vmax.f32 %v2802, %v2803
        %v2805 = vrot.slane %v2804, 2
        %v2806 = vmax.f32 %v2804, %v2805
        %v2807 = vrot.slane %v2806, 1
        %v2808 = vmax.f32 %v2806, %v2807
        %v2809 = vsel %vm1917, %v2711, -inf
        %v2810 = vrot.slane %v2809, 4
        %v2811 = vmax.f32 %v2809, %v2810
        %v2812 = vrot.slane %v2811, 2
        %v2813 = vmax.f32 %v2811, %v2812
        %v2814 = vrot.slane %v2813, 1
        %v2815 = vmax.f32 %v2813, %v2814
        %v2816 = vsel %vm2018, %v2718, %v2725
        %v2817 = vsel %vm2020, %v2816, %v2732
        %v2818 = vsel %vm787, %v2817, %v2741
        %v2819 = vsel %vm2023, %v2818, %v2748
        %v2820 = vsel %vm2025, %v2819, %v2755
        %v2821 = vsel %vm2027, %v2820, %v2762
        %v2822 = vsel %vm2029, %v2821, %v2771
        %v2823 = vsel %vm2018, %v2778, %v2785
        %v2824 = vsel %vm2020, %v2823, %v2792
        %v2825 = vsel %vm787, %v2824, %v2801
        %v2826 = vsel %vm2023, %v2825, %v2808
        %v2827 = vsel %vm2025, %v2826, %v2815
        %v2828 = vld [vmem:[#allocation2 + $0x1c2] sm:$0xff]
        %v2829 = vld [vmem:[#allocation2 + $0x1ca] sm:$0xff]
        %v2830 = vld [vmem:[#allocation2 + $0x1d2] sm:$0xff]
        %v2831 = vld [vmem:[#allocation2 + $0x1da] sm:$0x3f]
        %v2832 = vld [vmem:[#allocation2 + $0x1e0] sm:$0xff]
        %v2833 = vld [vmem:[#allocation2 + $0x1e8] sm:$0xff]
        %v2834 = vld [vmem:[#allocation2 + $0x1f0] sm:$0xff]
        %v2835 = vld [vmem:[#allocation2 + $0x1f8] sm:$0x3f]
        %v2836 = vmax.f32 %v2700, %v2828
        %v2837 = vmax.f32 %v2701, %v2829
        %v2838 = vmax.f32 %v2702, %v2830
        %v2839 = vmax.f32 %v2703, %v2831
        %v2840 = vmax.f32 %v2836, %v2832
        %v2841 = vmax.f32 %v2837, %v2833
        %v2842 = vmax.f32 %v2838, %v2834
        %v2843 = vmax.f32 %v2839, %v2835
        %v2844 = vsel %vm1909, %v2840, -inf
        %v2845 = vrot.slane %v2844, 4
        %v2846 = vmax.f32 %v2844, %v2845
        %v2847 = vrot.slane %v2846, 2
        %v2848 = vmax.f32 %v2846, %v2847
        %v2849 = vrot.slane %v2848, 1
        %v2850 = vmax.f32 %v2848, %v2849
        %v2851 = vsel %vm1917, %v2840, -inf
        %v2852 = vrot.slane %v2851, 4
        %v2853 = vmax.f32 %v2851, %v2852
        %v2854 = vrot.slane %v2853, 2
        %v2855 = vmax.f32 %v2853, %v2854
        %v2856 = vrot.slane %v2855, 1
        %v2857 = vmax.f32 %v2855, %v2856
        %v2858 = vsel %vm1925, %v2840, -inf
        %v2859 = vrot.slane %v2858, 4
        %v2860 = vmax.f32 %v2858, %v2859
        %v2861 = vrot.slane %v2860, 2
        %v2862 = vmax.f32 %v2860, %v2861
        %v2863 = vrot.slane %v2862, 1
        %v2864 = vmax.f32 %v2862, %v2863
        %v2865 = vsel %vm1933, %v2840, -inf
        %v2866 = vsel %vm1935, %v2841, -inf
        %v2867 = vmax.f32 %v2865, %v2866
        %v2868 = vrot.slane %v2867, 4
        %v2869 = vmax.f32 %v2867, %v2868
        %v2870 = vrot.slane %v2869, 2
        %v2871 = vmax.f32 %v2869, %v2870
        %v2872 = vrot.slane %v2871, 1
        %v2873 = vmax.f32 %v2871, %v2872
        %v2874 = vsel %vm1909, %v2841, -inf
        %v2875 = vrot.slane %v2874, 4
        %v2876 = vmax.f32 %v2874, %v2875
        %v2877 = vrot.slane %v2876, 2
        %v2878 = vmax.f32 %v2876, %v2877
        %v2879 = vrot.slane %v2878, 1
        %v2880 = vmax.f32 %v2878, %v2879
        %v2881 = vsel %vm1917, %v2841, -inf
        %v2882 = vrot.slane %v2881, 4
        %v2883 = vmax.f32 %v2881, %v2882
        %v2884 = vrot.slane %v2883, 2
        %v2885 = vmax.f32 %v2883, %v2884
        %v2886 = vrot.slane %v2885, 1
        %v2887 = vmax.f32 %v2885, %v2886
        %v2888 = vsel %vm1925, %v2841, -inf
        %v2889 = vrot.slane %v2888, 4
        %v2890 = vmax.f32 %v2888, %v2889
        %v2891 = vrot.slane %v2890, 2
        %v2892 = vmax.f32 %v2890, %v2891
        %v2893 = vrot.slane %v2892, 1
        %v2894 = vmax.f32 %v2892, %v2893
        %v2895 = vsel %vm1933, %v2841, -inf
        %v2896 = vsel %vm1935, %v2842, -inf
        %v2897 = vmax.f32 %v2895, %v2896
        %v2898 = vrot.slane %v2897, 4
        %v2899 = vmax.f32 %v2897, %v2898
        %v2900 = vrot.slane %v2899, 2
        %v2901 = vmax.f32 %v2899, %v2900
        %v2902 = vrot.slane %v2901, 1
        %v2903 = vmax.f32 %v2901, %v2902
        %v2904 = vsel %vm1909, %v2842, -inf
        %v2905 = vrot.slane %v2904, 4
        %v2906 = vmax.f32 %v2904, %v2905
        %v2907 = vrot.slane %v2906, 2
        %v2908 = vmax.f32 %v2906, %v2907
        %v2909 = vrot.slane %v2908, 1
        %v2910 = vmax.f32 %v2908, %v2909
        %v2911 = vsel %vm1917, %v2842, -inf
        %v2912 = vrot.slane %v2911, 4
        %v2913 = vmax.f32 %v2911, %v2912
        %v2914 = vrot.slane %v2913, 2
        %v2915 = vmax.f32 %v2913, %v2914
        %v2916 = vrot.slane %v2915, 1
        %v2917 = vmax.f32 %v2915, %v2916
        %v2918 = vsel %vm1925, %v2842, -inf
        %v2919 = vrot.slane %v2918, 4
        %v2920 = vmax.f32 %v2918, %v2919
        %v2921 = vrot.slane %v2920, 2
        %v2922 = vmax.f32 %v2920, %v2921
        %v2923 = vrot.slane %v2922, 1
        %v2924 = vmax.f32 %v2922, %v2923
        %v2925 = vsel %vm1933, %v2842, -inf
        %v2926 = vsel %vm1935, %v2843, -inf
        %v2927 = vmax.f32 %v2925, %v2926
        %v2928 = vrot.slane %v2927, 4
        %v2929 = vmax.f32 %v2927, %v2928
        %v2930 = vrot.slane %v2929, 2
        %v2931 = vmax.f32 %v2929, %v2930
        %v2932 = vrot.slane %v2931, 1
        %v2933 = vmax.f32 %v2931, %v2932
        %v2934 = vsel %vm1909, %v2843, -inf
        %v2935 = vrot.slane %v2934, 4
        %v2936 = vmax.f32 %v2934, %v2935
        %v2937 = vrot.slane %v2936, 2
        %v2938 = vmax.f32 %v2936, %v2937
        %v2939 = vrot.slane %v2938, 1
        %v2940 = vmax.f32 %v2938, %v2939
        %v2941 = vsel %vm1917, %v2843, -inf
        %v2942 = vrot.slane %v2941, 4
        %v2943 = vmax.f32 %v2941, %v2942
        %v2944 = vrot.slane %v2943, 2
        %v2945 = vmax.f32 %v2943, %v2944
        %v2946 = vrot.slane %v2945, 1
        %v2947 = vmax.f32 %v2945, %v2946
        %v2948 = vsel %vm2018, %v2850, %v2857
        %v2949 = vsel %vm2020, %v2948, %v2864
        %v2950 = vsel %vm787, %v2949, %v2873
        %v2951 = vsel %vm2023, %v2950, %v2880
        %v2952 = vsel %vm2025, %v2951, %v2887
        %v2953 = vsel %vm2027, %v2952, %v2894
        %v2954 = vsel %vm2029, %v2953, %v2903
        %v2955 = vsel %vm2018, %v2910, %v2917
        %v2956 = vsel %vm2020, %v2955, %v2924
        %v2957 = vsel %vm787, %v2956, %v2933
        %v2958 = vsel %vm2023, %v2957, %v2940
        %v2959 = vsel %vm2025, %v2958, %v2947
        %v2960 = vld [vmem:[#allocation2 + $0x1fe] sm:$0xff]
        %v2961 = vld [vmem:[#allocation2 + $0x206] sm:$0xff]
        %v2962 = vld [vmem:[#allocation2 + $0x20e] sm:$0xff]
        %v2963 = vld [vmem:[#allocation2 + $0x216] sm:$0x3f]
        %v2964 = vld [vmem:[#allocation2 + $0x21c] sm:$0xff]
        %v2965 = vld [vmem:[#allocation2 + $0x224] sm:$0xff]
        %v2966 = vld [vmem:[#allocation2 + $0x22c] sm:$0xff]
        %v2967 = vld [vmem:[#allocation2 + $0x234] sm:$0x3f]
        %v2968 = vmax.f32 %v2832, %v2960
        %v2969 = vmax.f32 %v2833, %v2961
        %v2970 = vmax.f32 %v2834, %v2962
        %v2971 = vmax.f32 %v2835, %v2963
        %v2972 = vmax.f32 %v2968, %v2964
        %v2973 = vmax.f32 %v2969, %v2965
        %v2974 = vmax.f32 %v2970, %v2966
        %v2975 = vmax.f32 %v2971, %v2967
        %v2976 = vsel %vm1909, %v2972, -inf
        %v2977 = vrot.slane %v2976, 4
        %v2978 = vmax.f32 %v2976, %v2977
        %v2979 = vrot.slane %v2978, 2
        %v2980 = vmax.f32 %v2978, %v2979
        %v2981 = vrot.slane %v2980, 1
        %v2982 = vmax.f32 %v2980, %v2981
        %v2983 = vsel %vm1917, %v2972, -inf
        %v2984 = vrot.slane %v2983, 4
        %v2985 = vmax.f32 %v2983, %v2984
        %v2986 = vrot.slane %v2985, 2
        %v2987 = vmax.f32 %v2985, %v2986
        %v2988 = vrot.slane %v2987, 1
        %v2989 = vmax.f32 %v2987, %v2988
        %v2990 = vsel %vm1925, %v2972, -inf
        %v2991 = vrot.slane %v2990, 4
        %v2992 = vmax.f32 %v2990, %v2991
        %v2993 = vrot.slane %v2992, 2
        %v2994 = vmax.f32 %v2992, %v2993
        %v2995 = vrot.slane %v2994, 1
        %v2996 = vmax.f32 %v2994, %v2995
        %v2997 = vsel %vm1933, %v2972, -inf
        %v2998 = vsel %vm1935, %v2973, -inf
        %v2999 = vmax.f32 %v2997, %v2998
        %v3000 = vrot.slane %v2999, 4
        %v3001 = vmax.f32 %v2999, %v3000
        %v3002 = vrot.slane %v3001, 2
        %v3003 = vmax.f32 %v3001, %v3002
        %v3004 = vrot.slane %v3003, 1
        %v3005 = vmax.f32 %v3003, %v3004
        %v3006 = vsel %vm1909, %v2973, -inf
        %v3007 = vrot.slane %v3006, 4
        %v3008 = vmax.f32 %v3006, %v3007
        %v3009 = vrot.slane %v3008, 2
        %v3010 = vmax.f32 %v3008, %v3009
        %v3011 = vrot.slane %v3010, 1
        %v3012 = vmax.f32 %v3010, %v3011
        %v3013 = vsel %vm1917, %v2973, -inf
        %v3014 = vrot.slane %v3013, 4
        %v3015 = vmax.f32 %v3013, %v3014
        %v3016 = vrot.slane %v3015, 2
        %v3017 = vmax.f32 %v3015, %v3016
        %v3018 = vrot.slane %v3017, 1
        %v3019 = vmax.f32 %v3017, %v3018
        %v3020 = vsel %vm1925, %v2973, -inf
        %v3021 = vrot.slane %v3020, 4
        %v3022 = vmax.f32 %v3020, %v3021
        %v3023 = vrot.slane %v3022, 2
        %v3024 = vmax.f32 %v3022, %v3023
        %v3025 = vrot.slane %v3024, 1
        %v3026 = vmax.f32 %v3024, %v3025
        %v3027 = vsel %vm1933, %v2973, -inf
        %v3028 = vsel %vm1935, %v2974, -inf
        %v3029 = vmax.f32 %v3027, %v3028
        %v3030 = vrot.slane %v3029, 4
        %v3031 = vmax.f32 %v3029, %v3030
        %v3032 = vrot.slane %v3031, 2
        %v3033 = vmax.f32 %v3031, %v3032
        %v3034 = vrot.slane %v3033, 1
        %v3035 = vmax.f32 %v3033, %v3034
        %v3036 = vsel %vm1909, %v2974, -inf
        %v3037 = vrot.slane %v3036, 4
        %v3038 = vmax.f32 %v3036, %v3037
        %v3039 = vrot.slane %v3038, 2
        %v3040 = vmax.f32 %v3038, %v3039
        %v3041 = vrot.slane %v3040, 1
        %v3042 = vmax.f32 %v3040, %v3041
        %v3043 = vsel %vm1917, %v2974, -inf
        %v3044 = vrot.slane %v3043, 4
        %v3045 = vmax.f32 %v3043, %v3044
        %v3046 = vrot.slane %v3045, 2
        %v3047 = vmax.f32 %v3045, %v3046
        %v3048 = vrot.slane %v3047, 1
        %v3049 = vmax.f32 %v3047, %v3048
        %v3050 = vsel %vm1925, %v2974, -inf
        %v3051 = vrot.slane %v3050, 4
        %v3052 = vmax.f32 %v3050, %v3051
        %v3053 = vrot.slane %v3052, 2
        %v3054 = vmax.f32 %v3052, %v3053
        %v3055 = vrot.slane %v3054, 1
        %v3056 = vmax.f32 %v3054, %v3055
        %v3057 = vsel %vm1933, %v2974, -inf
        %v3058 = vsel %vm1935, %v2975, -inf
        %v3059 = vmax.f32 %v3057, %v3058
        %v3060 = vrot.slane %v3059, 4
        %v3061 = vmax.f32 %v3059, %v3060
        %v3062 = vrot.slane %v3061, 2
        %v3063 = vmax.f32 %v3061, %v3062
        %v3064 = vrot.slane %v3063, 1
        %v3065 = vmax.f32 %v3063, %v3064
        %v3066 = vsel %vm1909, %v2975, -inf
        %v3067 = vrot.slane %v3066, 4
        %v3068 = vmax.f32 %v3066, %v3067
        %v3069 = vrot.slane %v3068, 2
        %v3070 = vmax.f32 %v3068, %v3069
        %v3071 = vrot.slane %v3070, 1
        %v3072 = vmax.f32 %v3070, %v3071
        %v3073 = vsel %vm1917, %v2975, -inf
        %v3074 = vrot.slane %v3073, 4
        %v3075 = vmax.f32 %v3073, %v3074
        %v3076 = vrot.slane %v3075, 2
        %v3077 = vmax.f32 %v3075, %v3076
        %v3078 = vrot.slane %v3077, 1
        %v3079 = vmax.f32 %v3077, %v3078
        %v3080 = vsel %vm2018, %v2982, %v2989
        %v3081 = vsel %vm2020, %v3080, %v2996
        %v3082 = vsel %vm787, %v3081, %v3005
        %v3083 = vsel %vm2023, %v3082, %v3012
        %v3084 = vsel %vm2025, %v3083, %v3019
        %v3085 = vsel %vm2027, %v3084, %v3026
        %v3086 = vsel %vm2029, %v3085, %v3035
        %v3087 = vsel %vm2018, %v3042, %v3049
        %v3088 = vsel %vm2020, %v3087, %v3056
        %v3089 = vsel %vm787, %v3088, %v3065
        %v3090 = vsel %vm2023, %v3089, %v3072
        %v3091 = vsel %vm2025, %v3090, %v3079
        %v3092 = vld [vmem:[#allocation2 + $0x23a] sm:$0xff]
        %v3093 = vld [vmem:[#allocation2 + $0x242] sm:$0xff]
        %v3094 = vld [vmem:[#allocation2 + $0x24a] sm:$0xff]
        %v3095 = vld [vmem:[#allocation2 + $0x252] sm:$0x3f]
        %v3096 = vld [vmem:[#allocation2 + $0x258] sm:$0xff]
        %v3097 = vld [vmem:[#allocation2 + $0x260] sm:$0xff]
        %v3098 = vld [vmem:[#allocation2 + $0x268] sm:$0xff]
        %v3099 = vld [vmem:[#allocation2 + $0x270] sm:$0x3f]
        %v3100 = vmax.f32 %v2964, %v3092
        %v3101 = vmax.f32 %v2965, %v3093
        %v3102 = vmax.f32 %v2966, %v3094
        %v3103 = vmax.f32 %v2967, %v3095
        %v3104 = vmax.f32 %v3100, %v3096
        %v3105 = vmax.f32 %v3101, %v3097
        %v3106 = vmax.f32 %v3102, %v3098
        %v3107 = vmax.f32 %v3103, %v3099
        %v3108 = vsel %vm1909, %v3104, -inf
        %v3109 = vrot.slane %v3108, 4
        %v3110 = vmax.f32 %v3108, %v3109
        %v3111 = vrot.slane %v3110, 2
        %v3112 = vmax.f32 %v3110, %v3111
        %v3113 = vrot.slane %v3112, 1
        %v3114 = vmax.f32 %v3112, %v3113
        %v3115 = vsel %vm1917, %v3104, -inf
        %v3116 = vrot.slane %v3115, 4
        %v3117 = vmax.f32 %v3115, %v3116
        %v3118 = vrot.slane %v3117, 2
        %v3119 = vmax.f32 %v3117, %v3118
        %v3120 = vrot.slane %v3119, 1
        %v3121 = vmax.f32 %v3119, %v3120
        %v3122 = vsel %vm1925, %v3104, -inf
        %v3123 = vrot.slane %v3122, 4
        %v3124 = vmax.f32 %v3122, %v3123
        %v3125 = vrot.slane %v3124, 2
        %v3126 = vmax.f32 %v3124, %v3125
        %v3127 = vrot.slane %v3126, 1
        %v3128 = vmax.f32 %v3126, %v3127
        %v3129 = vsel %vm1933, %v3104, -inf
        %v3130 = vsel %vm1935, %v3105, -inf
        %v3131 = vmax.f32 %v3129, %v3130
        %v3132 = vrot.slane %v3131, 4
        %v3133 = vmax.f32 %v3131, %v3132
        %v3134 = vrot.slane %v3133, 2
        %v3135 = vmax.f32 %v3133, %v3134
        %v3136 = vrot.slane %v3135, 1
        %v3137 = vmax.f32 %v3135, %v3136
        %v3138 = vsel %vm1909, %v3105, -inf
        %v3139 = vrot.slane %v3138, 4
        %v3140 = vmax.f32 %v3138, %v3139
        %v3141 = vrot.slane %v3140, 2
        %v3142 = vmax.f32 %v3140, %v3141
        %v3143 = vrot.slane %v3142, 1
        %v3144 = vmax.f32 %v3142, %v3143
        %v3145 = vsel %vm1917, %v3105, -inf
        %v3146 = vrot.slane %v3145, 4
        %v3147 = vmax.f32 %v3145, %v3146
        %v3148 = vrot.slane %v3147, 2
        %v3149 = vmax.f32 %v3147, %v3148
        %v3150 = vrot.slane %v3149, 1
        %v3151 = vmax.f32 %v3149, %v3150
        %v3152 = vsel %vm1925, %v3105, -inf
        %v3153 = vrot.slane %v3152, 4
        %v3154 = vmax.f32 %v3152, %v3153
        %v3155 = vrot.slane %v3154, 2
        %v3156 = vmax.f32 %v3154, %v3155
        %v3157 = vrot.slane %v3156, 1
        %v3158 = vmax.f32 %v3156, %v3157
        %v3159 = vsel %vm1933, %v3105, -inf
        %v3160 = vsel %vm1935, %v3106, -inf
        %v3161 = vmax.f32 %v3159, %v3160
        %v3162 = vrot.slane %v3161, 4
        %v3163 = vmax.f32 %v3161, %v3162
        %v3164 = vrot.slane %v3163, 2
        %v3165 = vmax.f32 %v3163, %v3164
        %v3166 = vrot.slane %v3165, 1
        %v3167 = vmax.f32 %v3165, %v3166
        %v3168 = vsel %vm1909, %v3106, -inf
        %v3169 = vrot.slane %v3168, 4
        %v3170 = vmax.f32 %v3168, %v3169
        %v3171 = vrot.slane %v3170, 2
        %v3172 = vmax.f32 %v3170, %v3171
        %v3173 = vrot.slane %v3172, 1
        %v3174 = vmax.f32 %v3172, %v3173
        %v3175 = vsel %vm1917, %v3106, -inf
        %v3176 = vrot.slane %v3175, 4
        %v3177 = vmax.f32 %v3175, %v3176
        %v3178 = vrot.slane %v3177, 2
        %v3179 = vmax.f32 %v3177, %v3178
        %v3180 = vrot.slane %v3179, 1
        %v3181 = vmax.f32 %v3179, %v3180
        %v3182 = vsel %vm1925, %v3106, -inf
        %v3183 = vrot.slane %v3182, 4
        %v3184 = vmax.f32 %v3182, %v3183
        %v3185 = vrot.slane %v3184, 2
        %v3186 = vmax.f32 %v3184, %v3185
        %v3187 = vrot.slane %v3186, 1
        %v3188 = vmax.f32 %v3186, %v3187
        %v3189 = vsel %vm1933, %v3106, -inf
        %v3190 = vsel %vm1935, %v3107, -inf
        %v3191 = vmax.f32 %v3189, %v3190
        %v3192 = vrot.slane %v3191, 4
        %v3193 = vmax.f32 %v3191, %v3192
        %v3194 = vrot.slane %v3193, 2
        %v3195 = vmax.f32 %v3193, %v3194
        %v3196 = vrot.slane %v3195, 1
        %v3197 = vmax.f32 %v3195, %v3196
        %v3198 = vsel %vm1909, %v3107, -inf
        %v3199 = vrot.slane %v3198, 4
        %v3200 = vmax.f32 %v3198, %v3199
        %v3201 = vrot.slane %v3200, 2
        %v3202 = vmax.f32 %v3200, %v3201
        %v3203 = vrot.slane %v3202, 1
        %v3204 = vmax.f32 %v3202, %v3203
        %v3205 = vsel %vm1917, %v3107, -inf
        %v3206 = vrot.slane %v3205, 4
        %v3207 = vmax.f32 %v3205, %v3206
        %v3208 = vrot.slane %v3207, 2
        %v3209 = vmax.f32 %v3207, %v3208
        %v3210 = vrot.slane %v3209, 1
        %v3211 = vmax.f32 %v3209, %v3210
        %v3212 = vsel %vm2018, %v3114, %v3121
        %v3213 = vsel %vm2020, %v3212, %v3128
        %v3214 = vsel %vm787, %v3213, %v3137
        %v3215 = vsel %vm2023, %v3214, %v3144
        %v3216 = vsel %vm2025, %v3215, %v3151
        %v3217 = vsel %vm2027, %v3216, %v3158
        %v3218 = vsel %vm2029, %v3217, %v3167
        %v3219 = vsel %vm2018, %v3174, %v3181
        %v3220 = vsel %vm2020, %v3219, %v3188
        %v3221 = vsel %vm787, %v3220, %v3197
        %v3222 = vsel %vm2023, %v3221, %v3204
        %v3223 = vsel %vm2025, %v3222, %v3211
        %v3224 = vld [vmem:[#allocation2 + $0x276] sm:$0xff]
        %v3225 = vld [vmem:[#allocation2 + $0x27e] sm:$0xff]
        %v3226 = vld [vmem:[#allocation2 + $0x286] sm:$0xff]
        %v3227 = vld [vmem:[#allocation2 + $0x28e] sm:$0x3f]
        %v3228 = vld [vmem:[#allocation2 + $0x294] sm:$0xff]
        %v3229 = vld [vmem:[#allocation2 + $0x29c] sm:$0xff]
        %v3230 = vld [vmem:[#allocation2 + $0x2a4] sm:$0xff]
        %v3231 = vld [vmem:[#allocation2 + $0x2ac] sm:$0x3f]
        %v3232 = vmax.f32 %v3096, %v3224
        %v3233 = vmax.f32 %v3097, %v3225
        %v3234 = vmax.f32 %v3098, %v3226
        %v3235 = vmax.f32 %v3099, %v3227
        %v3236 = vmax.f32 %v3232, %v3228
        %v3237 = vmax.f32 %v3233, %v3229
        %v3238 = vmax.f32 %v3234, %v3230
        %v3239 = vmax.f32 %v3235, %v3231
        %v3240 = vsel %vm1909, %v3236, -inf
        %v3241 = vrot.slane %v3240, 4
        %v3242 = vmax.f32 %v3240, %v3241
        %v3243 = vrot.slane %v3242, 2
        %v3244 = vmax.f32 %v3242, %v3243
        %v3245 = vrot.slane %v3244, 1
        %v3246 = vmax.f32 %v3244, %v3245
        %v3247 = vsel %vm1917, %v3236, -inf
        %v3248 = vrot.slane %v3247, 4
        %v3249 = vmax.f32 %v3247, %v3248
        %v3250 = vrot.slane %v3249, 2
        %v3251 = vmax.f32 %v3249, %v3250
        %v3252 = vrot.slane %v3251, 1
        %v3253 = vmax.f32 %v3251, %v3252
        %v3254 = vsel %vm1925, %v3236, -inf
        %v3255 = vrot.slane %v3254, 4
        %v3256 = vmax.f32 %v3254, %v3255
        %v3257 = vrot.slane %v3256, 2
        %v3258 = vmax.f32 %v3256, %v3257
        %v3259 = vrot.slane %v3258, 1
        %v3260 = vmax.f32 %v3258, %v3259
        %v3261 = vsel %vm1933, %v3236, -inf
        %v3262 = vsel %vm1935, %v3237, -inf
        %v3263 = vmax.f32 %v3261, %v3262
        %v3264 = vrot.slane %v3263, 4
        %v3265 = vmax.f32 %v3263, %v3264
        %v3266 = vrot.slane %v3265, 2
        %v3267 = vmax.f32 %v3265, %v3266
        %v3268 = vrot.slane %v3267, 1
        %v3269 = vmax.f32 %v3267, %v3268
        %v3270 = vsel %vm1909, %v3237, -inf
        %v3271 = vrot.slane %v3270, 4
        %v3272 = vmax.f32 %v3270, %v3271
        %v3273 = vrot.slane %v3272, 2
        %v3274 = vmax.f32 %v3272, %v3273
        %v3275 = vrot.slane %v3274, 1
        %v3276 = vmax.f32 %v3274, %v3275
        %v3277 = vsel %vm1917, %v3237, -inf
        %v3278 = vrot.slane %v3277, 4
        %v3279 = vmax.f32 %v3277, %v3278
        %v3280 = vrot.slane %v3279, 2
        %v3281 = vmax.f32 %v3279, %v3280
        %v3282 = vrot.slane %v3281, 1
        %v3283 = vmax.f32 %v3281, %v3282
        %v3284 = vsel %vm1925, %v3237, -inf
        %v3285 = vrot.slane %v3284, 4
        %v3286 = vmax.f32 %v3284, %v3285
        %v3287 = vrot.slane %v3286, 2
        %v3288 = vmax.f32 %v3286, %v3287
        %v3289 = vrot.slane %v3288, 1
        %v3290 = vmax.f32 %v3288, %v3289
        %v3291 = vsel %vm1933, %v3237, -inf
        %v3292 = vsel %vm1935, %v3238, -inf
        %v3293 = vmax.f32 %v3291, %v3292
        %v3294 = vrot.slane %v3293, 4
        %v3295 = vmax.f32 %v3293, %v3294
        %v3296 = vrot.slane %v3295, 2
        %v3297 = vmax.f32 %v3295, %v3296
        %v3298 = vrot.slane %v3297, 1
        %v3299 = vmax.f32 %v3297, %v3298
        %v3300 = vsel %vm1909, %v3238, -inf
        %v3301 = vrot.slane %v3300, 4
        %v3302 = vmax.f32 %v3300, %v3301
        %v3303 = vrot.slane %v3302, 2
        %v3304 = vmax.f32 %v3302, %v3303
        %v3305 = vrot.slane %v3304, 1
        %v3306 = vmax.f32 %v3304, %v3305
        %v3307 = vsel %vm1917, %v3238, -inf
        %v3308 = vrot.slane %v3307, 4
        %v3309 = vmax.f32 %v3307, %v3308
        %v3310 = vrot.slane %v3309, 2
        %v3311 = vmax.f32 %v3309, %v3310
        %v3312 = vrot.slane %v3311, 1
        %v3313 = vmax.f32 %v3311, %v3312
        %v3314 = vsel %vm1925, %v3238, -inf
        %v3315 = vrot.slane %v3314, 4
        %v3316 = vmax.f32 %v3314, %v3315
        %v3317 = vrot.slane %v3316, 2
        %v3318 = vmax.f32 %v3316, %v3317
        %v3319 = vrot.slane %v3318, 1
        %v3320 = vmax.f32 %v3318, %v3319
        %v3321 = vsel %vm1933, %v3238, -inf
        %v3322 = vsel %vm1935, %v3239, -inf
        %v3323 = vmax.f32 %v3321, %v3322
        %v3324 = vrot.slane %v3323, 4
        %v3325 = vmax.f32 %v3323, %v3324
        %v3326 = vrot.slane %v3325, 2
        %v3327 = vmax.f32 %v3325, %v3326
        %v3328 = vrot.slane %v3327, 1
        %v3329 = vmax.f32 %v3327, %v3328
        %v3330 = vsel %vm1909, %v3239, -inf
        %v3331 = vrot.slane %v3330, 4
        %v3332 = vmax.f32 %v3330, %v3331
        %v3333 = vrot.slane %v3332, 2
        %v3334 = vmax.f32 %v3332, %v3333
        %v3335 = vrot.slane %v3334, 1
        %v3336 = vmax.f32 %v3334, %v3335
        %v3337 = vsel %vm1917, %v3239, -inf
        %v3338 = vrot.slane %v3337, 4
        %v3339 = vmax.f32 %v3337, %v3338
        %v3340 = vrot.slane %v3339, 2
        %v3341 = vmax.f32 %v3339, %v3340
        %v3342 = vrot.slane %v3341, 1
        %v3343 = vmax.f32 %v3341, %v3342
        %v3344 = vsel %vm2018, %v3246, %v3253
        %v3345 = vsel %vm2020, %v3344, %v3260
        %v3346 = vsel %vm787, %v3345, %v3269
        %v3347 = vsel %vm2023, %v3346, %v3276
        %v3348 = vsel %vm2025, %v3347, %v3283
        %v3349 = vsel %vm2027, %v3348, %v3290
        %v3350 = vsel %vm2029, %v3349, %v3299
        %v3351 = vsel %vm2018, %v3306, %v3313
        %v3352 = vsel %vm2020, %v3351, %v3320
        %v3353 = vsel %vm787, %v3352, %v3329
        %v3354 = vsel %vm2023, %v3353, %v3336
        %v3355 = vsel %vm2025, %v3354, %v3343
        %v3356 = vld [vmem:[#allocation2 + $0x2b2] sm:$0xff]
        %v3357 = vld [vmem:[#allocation2 + $0x2ba] sm:$0xff]
        %v3358 = vld [vmem:[#allocation2 + $0x2c2] sm:$0xff]
        %v3359 = vld [vmem:[#allocation2 + $0x2ca] sm:$0x3f]
        %v3360 = vld [vmem:[#allocation2 + $0x2d0] sm:$0xff]
        %v3361 = vld [vmem:[#allocation2 + $0x2d8] sm:$0xff]
        %v3362 = vld [vmem:[#allocation2 + $0x2e0] sm:$0xff]
        %v3363 = vld [vmem:[#allocation2 + $0x2e8] sm:$0x3f]
        %v3364 = vmax.f32 %v3228, %v3356
        %v3365 = vmax.f32 %v3229, %v3357
        %v3366 = vmax.f32 %v3230, %v3358
        %v3367 = vmax.f32 %v3231, %v3359
        %v3368 = vmax.f32 %v3364, %v3360
        %v3369 = vmax.f32 %v3365, %v3361
        %v3370 = vmax.f32 %v3366, %v3362
        %v3371 = vmax.f32 %v3367, %v3363
        %v3372 = vsel %vm1909, %v3368, -inf
        %v3373 = vrot.slane %v3372, 4
        %v3374 = vmax.f32 %v3372, %v3373
        %v3375 = vrot.slane %v3374, 2
        %v3376 = vmax.f32 %v3374, %v3375
        %v3377 = vrot.slane %v3376, 1
        %v3378 = vmax.f32 %v3376, %v3377
        %v3379 = vsel %vm1917, %v3368, -inf
        %v3380 = vrot.slane %v3379, 4
        %v3381 = vmax.f32 %v3379, %v3380
        %v3382 = vrot.slane %v3381, 2
        %v3383 = vmax.f32 %v3381, %v3382
        %v3384 = vrot.slane %v3383, 1
        %v3385 = vmax.f32 %v3383, %v3384
        %v3386 = vsel %vm1925, %v3368, -inf
        %v3387 = vrot.slane %v3386, 4
        %v3388 = vmax.f32 %v3386, %v3387
        %v3389 = vrot.slane %v3388, 2
        %v3390 = vmax.f32 %v3388, %v3389
        %v3391 = vrot.slane %v3390, 1
        %v3392 = vmax.f32 %v3390, %v3391
        %v3393 = vsel %vm1933, %v3368, -inf
        %v3394 = vsel %vm1935, %v3369, -inf
        %v3395 = vmax.f32 %v3393, %v3394
        %v3396 = vrot.slane %v3395, 4
        %v3397 = vmax.f32 %v3395, %v3396
        %v3398 = vrot.slane %v3397, 2
        %v3399 = vmax.f32 %v3397, %v3398
        %v3400 = vrot.slane %v3399, 1
        %v3401 = vmax.f32 %v3399, %v3400
        %v3402 = vsel %vm1909, %v3369, -inf
        %v3403 = vrot.slane %v3402, 4
        %v3404 = vmax.f32 %v3402, %v3403
        %v3405 = vrot.slane %v3404, 2
        %v3406 = vmax.f32 %v3404, %v3405
        %v3407 = vrot.slane %v3406, 1
        %v3408 = vmax.f32 %v3406, %v3407
        %v3409 = vsel %vm1917, %v3369, -inf
        %v3410 = vrot.slane %v3409, 4
        %v3411 = vmax.f32 %v3409, %v3410
        %v3412 = vrot.slane %v3411, 2
        %v3413 = vmax.f32 %v3411, %v3412
        %v3414 = vrot.slane %v3413, 1
        %v3415 = vmax.f32 %v3413, %v3414
        %v3416 = vsel %vm1925, %v3369, -inf
        %v3417 = vrot.slane %v3416, 4
        %v3418 = vmax.f32 %v3416, %v3417
        %v3419 = vrot.slane %v3418, 2
        %v3420 = vmax.f32 %v3418, %v3419
        %v3421 = vrot.slane %v3420, 1
        %v3422 = vmax.f32 %v3420, %v3421
        %v3423 = vsel %vm1933, %v3369, -inf
        %v3424 = vsel %vm1935, %v3370, -inf
        %v3425 = vmax.f32 %v3423, %v3424
        %v3426 = vrot.slane %v3425, 4
        %v3427 = vmax.f32 %v3425, %v3426
        %v3428 = vrot.slane %v3427, 2
        %v3429 = vmax.f32 %v3427, %v3428
        %v3430 = vrot.slane %v3429, 1
        %v3431 = vmax.f32 %v3429, %v3430
        %v3432 = vsel %vm1909, %v3370, -inf
        %v3433 = vrot.slane %v3432, 4
        %v3434 = vmax.f32 %v3432, %v3433
        %v3435 = vrot.slane %v3434, 2
        %v3436 = vmax.f32 %v3434, %v3435
        %v3437 = vrot.slane %v3436, 1
        %v3438 = vmax.f32 %v3436, %v3437
        %v3439 = vsel %vm1917, %v3370, -inf
        %v3440 = vrot.slane %v3439, 4
        %v3441 = vmax.f32 %v3439, %v3440
        %v3442 = vrot.slane %v3441, 2
        %v3443 = vmax.f32 %v3441, %v3442
        %v3444 = vrot.slane %v3443, 1
        %v3445 = vmax.f32 %v3443, %v3444
        %v3446 = vsel %vm1925, %v3370, -inf
        %v3447 = vrot.slane %v3446, 4
        %v3448 = vmax.f32 %v3446, %v3447
        %v3449 = vrot.slane %v3448, 2
        %v3450 = vmax.f32 %v3448, %v3449
        %v3451 = vrot.slane %v3450, 1
        %v3452 = vmax.f32 %v3450, %v3451
        %v3453 = vsel %vm1933, %v3370, -inf
        %v3454 = vsel %vm1935, %v3371, -inf
        %v3455 = vmax.f32 %v3453, %v3454
        %v3456 = vrot.slane %v3455, 4
        %v3457 = vmax.f32 %v3455, %v3456
        %v3458 = vrot.slane %v3457, 2
        %v3459 = vmax.f32 %v3457, %v3458
        %v3460 = vrot.slane %v3459, 1
        %v3461 = vmax.f32 %v3459, %v3460
        %v3462 = vsel %vm1909, %v3371, -inf
        %v3463 = vrot.slane %v3462, 4
        %v3464 = vmax.f32 %v3462, %v3463
        %v3465 = vrot.slane %v3464, 2
        %v3466 = vmax.f32 %v3464, %v3465
        %v3467 = vrot.slane %v3466, 1
        %v3468 = vmax.f32 %v3466, %v3467
        %v3469 = vsel %vm1917, %v3371, -inf
        %v3470 = vrot.slane %v3469, 4
        %v3471 = vmax.f32 %v3469, %v3470
        %v3472 = vrot.slane %v3471, 2
        %v3473 = vmax.f32 %v3471, %v3472
        %v3474 = vrot.slane %v3473, 1
        %v3475 = vmax.f32 %v3473, %v3474
        %v3476 = vsel %vm2018, %v3378, %v3385
        %v3477 = vsel %vm2020, %v3476, %v3392
        %v3478 = vsel %vm787, %v3477, %v3401
        %v3479 = vsel %vm2023, %v3478, %v3408
        %v3480 = vsel %vm2025, %v3479, %v3415
        %v3481 = vsel %vm2027, %v3480, %v3422
        %v3482 = vsel %vm2029, %v3481, %v3431
        %v3483 = vsel %vm2018, %v3438, %v3445
        %v3484 = vsel %vm2020, %v3483, %v3452
        %v3485 = vsel %vm787, %v3484, %v3461
        %v3486 = vsel %vm2023, %v3485, %v3468
        %v3487 = vsel %vm2025, %v3486, %v3475
        %v3488 = vld [vmem:[#allocation2 + $0x2ee] sm:$0xff]
        %v3489 = vld [vmem:[#allocation2 + $0x2f6] sm:$0xff]
        %v3490 = vld [vmem:[#allocation2 + $0x2fe] sm:$0xff]
        %v3491 = vld [vmem:[#allocation2 + $0x306] sm:$0x3f]
        %v3492 = vld [vmem:[#allocation2 + $0x30c] sm:$0xff]
        %v3493 = vld [vmem:[#allocation2 + $0x314] sm:$0xff]
        %v3494 = vld [vmem:[#allocation2 + $0x31c] sm:$0xff]
        %v3495 = vld [vmem:[#allocation2 + $0x324] sm:$0x3f]
        %v3496 = vmax.f32 %v3360, %v3488
        %v3497 = vmax.f32 %v3361, %v3489
        %v3498 = vmax.f32 %v3362, %v3490
        %v3499 = vmax.f32 %v3363, %v3491
        %v3500 = vmax.f32 %v3496, %v3492
        %v3501 = vmax.f32 %v3497, %v3493
        %v3502 = vmax.f32 %v3498, %v3494
        %v3503 = vmax.f32 %v3499, %v3495
        %v3504 = vsel %vm1909, %v3500, -inf
        %v3505 = vrot.slane %v3504, 4
        %v3506 = vmax.f32 %v3504, %v3505
        %v3507 = vrot.slane %v3506, 2
        %v3508 = vmax.f32 %v3506, %v3507
        %v3509 = vrot.slane %v3508, 1
        %v3510 = vmax.f32 %v3508, %v3509
        %v3511 = vsel %vm1917, %v3500, -inf
        %v3512 = vrot.slane %v3511, 4
        %v3513 = vmax.f32 %v3511, %v3512
        %v3514 = vrot.slane %v3513, 2
        %v3515 = vmax.f32 %v3513, %v3514
        %v3516 = vrot.slane %v3515, 1
        %v3517 = vmax.f32 %v3515, %v3516
        %v3518 = vsel %vm1925, %v3500, -inf
        %v3519 = vrot.slane %v3518, 4
        %v3520 = vmax.f32 %v3518, %v3519
        %v3521 = vrot.slane %v3520, 2
        %v3522 = vmax.f32 %v3520, %v3521
        %v3523 = vrot.slane %v3522, 1
        %v3524 = vmax.f32 %v3522, %v3523
        %v3525 = vsel %vm1933, %v3500, -inf
        %v3526 = vsel %vm1935, %v3501, -inf
        %v3527 = vmax.f32 %v3525, %v3526
        %v3528 = vrot.slane %v3527, 4
        %v3529 = vmax.f32 %v3527, %v3528
        %v3530 = vrot.slane %v3529, 2
        %v3531 = vmax.f32 %v3529, %v3530
        %v3532 = vrot.slane %v3531, 1
        %v3533 = vmax.f32 %v3531, %v3532
        %v3534 = vsel %vm1909, %v3501, -inf
        %v3535 = vrot.slane %v3534, 4
        %v3536 = vmax.f32 %v3534, %v3535
        %v3537 = vrot.slane %v3536, 2
        %v3538 = vmax.f32 %v3536, %v3537
        %v3539 = vrot.slane %v3538, 1
        %v3540 = vmax.f32 %v3538, %v3539
        %v3541 = vsel %vm1917, %v3501, -inf
        %v3542 = vrot.slane %v3541, 4
        %v3543 = vmax.f32 %v3541, %v3542
        %v3544 = vrot.slane %v3543, 2
        %v3545 = vmax.f32 %v3543, %v3544
        %v3546 = vrot.slane %v3545, 1
        %v3547 = vmax.f32 %v3545, %v3546
        %v3548 = vsel %vm1925, %v3501, -inf
        %v3549 = vrot.slane %v3548, 4
        %v3550 = vmax.f32 %v3548, %v3549
        %v3551 = vrot.slane %v3550, 2
        %v3552 = vmax.f32 %v3550, %v3551
        %v3553 = vrot.slane %v3552, 1
        %v3554 = vmax.f32 %v3552, %v3553
        %v3555 = vsel %vm1933, %v3501, -inf
        %v3556 = vsel %vm1935, %v3502, -inf
        %v3557 = vmax.f32 %v3555, %v3556
        %v3558 = vrot.slane %v3557, 4
        %v3559 = vmax.f32 %v3557, %v3558
        %v3560 = vrot.slane %v3559, 2
        %v3561 = vmax.f32 %v3559, %v3560
        %v3562 = vrot.slane %v3561, 1
        %v3563 = vmax.f32 %v3561, %v3562
        %v3564 = vsel %vm1909, %v3502, -inf
        %v3565 = vrot.slane %v3564, 4
        %v3566 = vmax.f32 %v3564, %v3565
        %v3567 = vrot.slane %v3566, 2
        %v3568 = vmax.f32 %v3566, %v3567
        %v3569 = vrot.slane %v3568, 1
        %v3570 = vmax.f32 %v3568, %v3569
        %v3571 = vsel %vm1917, %v3502, -inf
        %v3572 = vrot.slane %v3571, 4
        %v3573 = vmax.f32 %v3571, %v3572
        %v3574 = vrot.slane %v3573, 2
        %v3575 = vmax.f32 %v3573, %v3574
        %v3576 = vrot.slane %v3575, 1
        %v3577 = vmax.f32 %v3575, %v3576
        %v3578 = vsel %vm1925, %v3502, -inf
        %v3579 = vrot.slane %v3578, 4
        %v3580 = vmax.f32 %v3578, %v3579
        %v3581 = vrot.slane %v3580, 2
        %v3582 = vmax.f32 %v3580, %v3581
        %v3583 = vrot.slane %v3582, 1
        %v3584 = vmax.f32 %v3582, %v3583
        %v3585 = vsel %vm1933, %v3502, -inf
        %v3586 = vsel %vm1935, %v3503, -inf
        %v3587 = vmax.f32 %v3585, %v3586
        %v3588 = vrot.slane %v3587, 4
        %v3589 = vmax.f32 %v3587, %v3588
        %v3590 = vrot.slane %v3589, 2
        %v3591 = vmax.f32 %v3589, %v3590
        %v3592 = vrot.slane %v3591, 1
        %v3593 = vmax.f32 %v3591, %v3592
        %v3594 = vsel %vm1909, %v3503, -inf
        %v3595 = vrot.slane %v3594, 4
        %v3596 = vmax.f32 %v3594, %v3595
        %v3597 = vrot.slane %v3596, 2
        %v3598 = vmax.f32 %v3596, %v3597
        %v3599 = vrot.slane %v3598, 1
        %v3600 = vmax.f32 %v3598, %v3599
        %v3601 = vsel %vm1917, %v3503, -inf
        %v3602 = vrot.slane %v3601, 4
        %v3603 = vmax.f32 %v3601, %v3602
        %v3604 = vrot.slane %v3603, 2
        %v3605 = vmax.f32 %v3603, %v3604
        %v3606 = vrot.slane %v3605, 1
        %v3607 = vmax.f32 %v3605, %v3606
        %v3608 = vsel %vm2018, %v3510, %v3517
        %v3609 = vsel %vm2020, %v3608, %v3524
        %v3610 = vsel %vm787, %v3609, %v3533
        %v3611 = vsel %vm2023, %v3610, %v3540
        %v3612 = vsel %vm2025, %v3611, %v3547
        %v3613 = vsel %vm2027, %v3612, %v3554
        %v3614 = vsel %vm2029, %v3613, %v3563
        %v3615 = vsel %vm2018, %v3570, %v3577
        %v3616 = vsel %vm2020, %v3615, %v3584
        %v3617 = vsel %vm787, %v3616, %v3593
        %v3618 = vsel %vm2023, %v3617, %v3600
        %v3619 = vsel %vm2025, %v3618, %v3607
        %v3620 = vld [vmem:[#allocation2 + $0x32a] sm:$0xff]
        %v3621 = vld [vmem:[#allocation2 + $0x332] sm:$0xff]
        %v3622 = vld [vmem:[#allocation2 + $0x33a] sm:$0xff]
        %v3623 = vld [vmem:[#allocation2 + $0x342] sm:$0x3f]
        %v3624 = vld [vmem:[#allocation2 + $0x348] sm:$0xff]
        %v3625 = vld [vmem:[#allocation2 + $0x350] sm:$0xff]
        %v3626 = vld [vmem:[#allocation2 + $0x358] sm:$0xff]
        %v3627 = vld [vmem:[#allocation2 + $0x360] sm:$0x3f]
        %v3628 = vmax.f32 %v3492, %v3620
        %v3629 = vmax.f32 %v3493, %v3621
        %v3630 = vmax.f32 %v3494, %v3622
        %v3631 = vmax.f32 %v3495, %v3623
        %v3632 = vmax.f32 %v3628, %v3624
        %v3633 = vmax.f32 %v3629, %v3625
        %v3634 = vmax.f32 %v3630, %v3626
        %v3635 = vmax.f32 %v3631, %v3627
        %v3636 = vsel %vm1909, %v3632, -inf
        %v3637 = vrot.slane %v3636, 4
        %v3638 = vmax.f32 %v3636, %v3637
        %v3639 = vrot.slane %v3638, 2
        %v3640 = vmax.f32 %v3638, %v3639
        %v3641 = vrot.slane %v3640, 1
        %v3642 = vmax.f32 %v3640, %v3641
        %v3643 = vsel %vm1917, %v3632, -inf
        %v3644 = vrot.slane %v3643, 4
        %v3645 = vmax.f32 %v3643, %v3644
        %v3646 = vrot.slane %v3645, 2
        %v3647 = vmax.f32 %v3645, %v3646
        %v3648 = vrot.slane %v3647, 1
        %v3649 = vmax.f32 %v3647, %v3648
        %v3650 = vsel %vm1925, %v3632, -inf
        %v3651 = vrot.slane %v3650, 4
        %v3652 = vmax.f32 %v3650, %v3651
        %v3653 = vrot.slane %v3652, 2
        %v3654 = vmax.f32 %v3652, %v3653
        %v3655 = vrot.slane %v3654, 1
        %v3656 = vmax.f32 %v3654, %v3655
        %v3657 = vsel %vm1933, %v3632, -inf
        %v3658 = vsel %vm1935, %v3633, -inf
        %v3659 = vmax.f32 %v3657, %v3658
        %v3660 = vrot.slane %v3659, 4
        %v3661 = vmax.f32 %v3659, %v3660
        %v3662 = vrot.slane %v3661, 2
        %v3663 = vmax.f32 %v3661, %v3662
        %v3664 = vrot.slane %v3663, 1
        %v3665 = vmax.f32 %v3663, %v3664
        %v3666 = vsel %vm1909, %v3633, -inf
        %v3667 = vrot.slane %v3666, 4
        %v3668 = vmax.f32 %v3666, %v3667
        %v3669 = vrot.slane %v3668, 2
        %v3670 = vmax.f32 %v3668, %v3669
        %v3671 = vrot.slane %v3670, 1
        %v3672 = vmax.f32 %v3670, %v3671
        %v3673 = vsel %vm1917, %v3633, -inf
        %v3674 = vrot.slane %v3673, 4
        %v3675 = vmax.f32 %v3673, %v3674
        %v3676 = vrot.slane %v3675, 2
        %v3677 = vmax.f32 %v3675, %v3676
        %v3678 = vrot.slane %v3677, 1
        %v3679 = vmax.f32 %v3677, %v3678
        %v3680 = vsel %vm1925, %v3633, -inf
        %v3681 = vrot.slane %v3680, 4
        %v3682 = vmax.f32 %v3680, %v3681
        %v3683 = vrot.slane %v3682, 2
        %v3684 = vmax.f32 %v3682, %v3683
        %v3685 = vrot.slane %v3684, 1
        %v3686 = vmax.f32 %v3684, %v3685
        %v3687 = vsel %vm1933, %v3633, -inf
        %v3688 = vsel %vm1935, %v3634, -inf
        %v3689 = vmax.f32 %v3687, %v3688
        %v3690 = vrot.slane %v3689, 4
        %v3691 = vmax.f32 %v3689, %v3690
        %v3692 = vrot.slane %v3691, 2
        %v3693 = vmax.f32 %v3691, %v3692
        %v3694 = vrot.slane %v3693, 1
        %v3695 = vmax.f32 %v3693, %v3694
        %v3696 = vsel %vm1909, %v3634, -inf
        %v3697 = vrot.slane %v3696, 4
        %v3698 = vmax.f32 %v3696, %v3697
        %v3699 = vrot.slane %v3698, 2
        %v3700 = vmax.f32 %v3698, %v3699
        %v3701 = vrot.slane %v3700, 1
        %v3702 = vmax.f32 %v3700, %v3701
        %v3703 = vsel %vm1917, %v3634, -inf
        %v3704 = vrot.slane %v3703, 4
        %v3705 = vmax.f32 %v3703, %v3704
        %v3706 = vrot.slane %v3705, 2
        %v3707 = vmax.f32 %v3705, %v3706
        %v3708 = vrot.slane %v3707, 1
        %v3709 = vmax.f32 %v3707, %v3708
        %v3710 = vsel %vm1925, %v3634, -inf
        %v3711 = vrot.slane %v3710, 4
        %v3712 = vmax.f32 %v3710, %v3711
        %v3713 = vrot.slane %v3712, 2
        %v3714 = vmax.f32 %v3712, %v3713
        %v3715 = vrot.slane %v3714, 1
        %v3716 = vmax.f32 %v3714, %v3715
        %v3717 = vsel %vm1933, %v3634, -inf
        %v3718 = vsel %vm1935, %v3635, -inf
        %v3719 = vmax.f32 %v3717, %v3718
        %v3720 = vrot.slane %v3719, 4
        %v3721 = vmax.f32 %v3719, %v3720
        %v3722 = vrot.slane %v3721, 2
        %v3723 = vmax.f32 %v3721, %v3722
        %v3724 = vrot.slane %v3723, 1
        %v3725 = vmax.f32 %v3723, %v3724
        %v3726 = vsel %vm1909, %v3635, -inf
        %v3727 = vrot.slane %v3726, 4
        %v3728 = vmax.f32 %v3726, %v3727
        %v3729 = vrot.slane %v3728, 2
        %v3730 = vmax.f32 %v3728, %v3729
        %v3731 = vrot.slane %v3730, 1
        %v3732 = vmax.f32 %v3730, %v3731
        %v3733 = vsel %vm1917, %v3635, -inf
        %v3734 = vrot.slane %v3733, 4
        %v3735 = vmax.f32 %v3733, %v3734
        %v3736 = vrot.slane %v3735, 2
        %v3737 = vmax.f32 %v3735, %v3736
        %v3738 = vrot.slane %v3737, 1
        %v3739 = vmax.f32 %v3737, %v3738
        %v3740 = vsel %vm2018, %v3642, %v3649
        %v3741 = vsel %vm2020, %v3740, %v3656
        %v3742 = vsel %vm787, %v3741, %v3665
        %v3743 = vsel %vm2023, %v3742, %v3672
        %v3744 = vsel %vm2025, %v3743, %v3679
        %v3745 = vsel %vm2027, %v3744, %v3686
        %v3746 = vsel %vm2029, %v3745, %v3695
        %v3747 = vsel %vm2018, %v3702, %v3709
        %v3748 = vsel %vm2020, %v3747, %v3716
        %v3749 = vsel %vm787, %v3748, %v3725
        %v3750 = vsel %vm2023, %v3749, %v3732
        %v3751 = vsel %vm2025, %v3750, %v3739
        %3752 = vst.msk [vmem:[#allocation3] sm:$0xff] %vm1774, %v2030
        %vm3753 = vcmask 521216
        %3754 = vst.msk [vmem:[#allocation3 + $0x8] sm:$0x3f] %vm3753, %v2035
        %3755 = vst.msk [vmem:[#allocation3 + $0xe] sm:$0xff] %vm1774, %v2162
        %3756 = vst.msk [vmem:[#allocation3 + $0x16] sm:$0x3f] %vm3753, %v2167
        %3757 = vst.msk [vmem:[#allocation3 + $0x1c] sm:$0xff] %vm1774, %v2294
        %3758 = vst.msk [vmem:[#allocation3 + $0x24] sm:$0x3f] %vm3753, %v2299
        %3759 = vst.msk [vmem:[#allocation3 + $0x2a] sm:$0xff] %vm1774, %v2426
        %3760 = vst.msk [vmem:[#allocation3 + $0x32] sm:$0x3f] %vm3753, %v2431
        %3761 = vst.msk [vmem:[#allocation3 + $0x38] sm:$0xff] %vm1774, %v2558
        %3762 = vst.msk [vmem:[#allocation3 + $0x40] sm:$0x3f] %vm3753, %v2563
        %3763 = vst.msk [vmem:[#allocation3 + $0x46] sm:$0xff] %vm1774, %v2690
        %3764 = vst.msk [vmem:[#allocation3 + $0x4e] sm:$0x3f] %vm3753, %v2695
        %3765 = vst.msk [vmem:[#allocation3 + $0x54] sm:$0xff] %vm1774, %v2822
        %3766 = vst.msk [vmem:[#allocation3 + $0x5c] sm:$0x3f] %vm3753, %v2827
        %3767 = vst.msk [vmem:[#allocation3 + $0x62] sm:$0xff] %vm1774, %v2954
        %3768 = vst.msk [vmem:[#allocation3 + $0x6a] sm:$0x3f] %vm3753, %v2959
        %3769 = vst.msk [vmem:[#allocation3 + $0x70] sm:$0xff] %vm1774, %v3086
        %3770 = vst.msk [vmem:[#allocation3 + $0x78] sm:$0x3f] %vm3753, %v3091
        %3771 = vst.msk [vmem:[#allocation3 + $0x7e] sm:$0xff] %vm1774, %v3218
        %3772 = vst.msk [vmem:[#allocation3 + $0x86] sm:$0x3f] %vm3753, %v3223
        %3773 = vst.msk [vmem:[#allocation3 + $0x8c] sm:$0xff] %vm1774, %v3350
        %3774 = vst.msk [vmem:[#allocation3 + $0x94] sm:$0x3f] %vm3753, %v3355
        %3775 = vst.msk [vmem:[#allocation3 + $0x9a] sm:$0xff] %vm1774, %v3482
        %3776 = vst.msk [vmem:[#allocation3 + $0xa2] sm:$0x3f] %vm3753, %v3487
        %3777 = vst.msk [vmem:[#allocation3 + $0xa8] sm:$0xff] %vm1774, %v3614
        %3778 = vst.msk [vmem:[#allocation3 + $0xb0] sm:$0x3f] %vm3753, %v3619
        %3779 = vst.msk [vmem:[#allocation3 + $0xb6] sm:$0xff] %vm1774, %v3746
        %3780 = vst.msk [vmem:[#allocation3 + $0xbe] sm:$0x3f] %vm3753, %v3751
        %v3781 = vld [vmem:[#allocation3] sm:$0xff]
        %v3782 = vld [vmem:[#allocation3 + $0x8] sm:$0xf]
        %v3783 = vld [vmem:[#allocation3 + $0x1] sm:$0xff]
        %v3784 = vld [vmem:[#allocation3 + $0x9] sm:$0xf]
        %v3785 = vld [vmem:[#allocation3 + $0x2] sm:$0xff]
        %v3786 = vld [vmem:[#allocation3 + $0xa] sm:$0xf]
        %v3787 = vld [vmem:[#allocation3 + $0xe] sm:$0xff]
        %v3788 = vld [vmem:[#allocation3 + $0x16] sm:$0xf]
        %v3789 = vld [vmem:[#allocation3 + $0xf] sm:$0xff]
        %v3790 = vld [vmem:[#allocation3 + $0x17] sm:$0xf]
        %v3791 = vld [vmem:[#allocation3 + $0x10] sm:$0xff]
        %v3792 = vld [vmem:[#allocation3 + $0x18] sm:$0xf]
        %v3793 = vld [vmem:[#allocation3 + $0x1c] sm:$0xff]
        %v3794 = vld [vmem:[#allocation3 + $0x24] sm:$0xf]
        %v3795 = vld [vmem:[#allocation3 + $0x1d] sm:$0xff]
        %v3796 = vld [vmem:[#allocation3 + $0x25] sm:$0xf]
        %v3797 = vld [vmem:[#allocation3 + $0x1e] sm:$0xff]
        %v3798 = vld [vmem:[#allocation3 + $0x26] sm:$0xf]
        %3801 = vrot.lane.b32.xlu0 %v3783, 64
        %v3802 = vpop.permute.xlu0 %3801
        %3803 = vrot.lane.b32.xlu0 %v3784, 64
        %v3804 = vpop.permute.xlu0 %3803
        %3809 = vrot.lane.b32.xlu0 %v3787, 64
        %v3810 = vpop.permute.xlu0 %3809
        %3811 = vrot.lane.b32.xlu0 %v3788, 64
        %v3812 = vpop.permute.xlu0 %3811
        %3817 = vrot.lane.b32.xlu0 %v3791, 64
        %v3818 = vpop.permute.xlu0 %3817
        %3819 = vrot.lane.b32.xlu0 %v3792, 64
        %v3820 = vpop.permute.xlu0 %3819
        %3825 = vrot.lane.b32.xlu0 %v3795, 64
        %v3826 = vpop.permute.xlu0 %3825
        %3827 = vrot.lane.b32.xlu0 %v3796, 64
        %v3828 = vpop.permute.xlu0 %3827
        %v3831 = vsel %vm1774, %v3781, %v3802
        %v3832 = vsel %vm1774, %v3782, %v3804
        %v3833 = vsel %vm1774, %v3785, %v3810
        %v3834 = vsel %vm1774, %v3786, %v3812
        %v3835 = vsel %vm1774, %v3789, %v3818
        %v3836 = vsel %vm1774, %v3790, %v3820
        %v3837 = vsel %vm1774, %v3793, %v3826
        %v3838 = vsel %vm1774, %v3794, %v3828
        %3839 = vst [vmem:[#allocation4] sm:$0xff] %v3831
        %3840 = vst [vmem:[#allocation4 + $0x8] sm:$0xff] %v3833
        %3841 = vst [vmem:[#allocation4 + $0x10] sm:$0xff] %v3835
        %3842 = vst [vmem:[#allocation4 + $0x18] sm:$0xff] %v3837
        %3843 = vst.msk [vmem:[#allocation4 + $0x20] sm:$0xff] %vm1774, %v3797
        %3844 = vst [vmem:[#allocation4 + $0x28] sm:$0xf] %v3832
        %3845 = vst [vmem:[#allocation4 + $0x30] sm:$0xf] %v3834
        %3846 = vst [vmem:[#allocation4 + $0x38] sm:$0xf] %v3836
        %3847 = vst [vmem:[#allocation4 + $0x40] sm:$0xf] %v3838
        %3848 = vst.msk [vmem:[#allocation4 + $0x48] sm:$0xf] %vm1887, %v3798
        %v3849 = vld [vmem:[#allocation3 + $0xe] sm:$0xff]
        %v3850 = vld [vmem:[#allocation3 + $0x16] sm:$0xf]
        %v3851 = vld [vmem:[#allocation3 + $0xf] sm:$0xff]
        %v3852 = vld [vmem:[#allocation3 + $0x17] sm:$0xf]
        %v3853 = vld [vmem:[#allocation3 + $0x10] sm:$0xff]
        %v3854 = vld [vmem:[#allocation3 + $0x18] sm:$0xf]
        %v3855 = vld [vmem:[#allocation3 + $0x1c] sm:$0xff]
        %v3856 = vld [vmem:[#allocation3 + $0x24] sm:$0xf]
        %v3857 = vld [vmem:[#allocation3 + $0x1d] sm:$0xff]
        %v3858 = vld [vmem:[#allocation3 + $0x25] sm:$0xf]
        %v3859 = vld [vmem:[#allocation3 + $0x1e] sm:$0xff]
        %v3860 = vld [vmem:[#allocation3 + $0x26] sm:$0xf]
        %v3861 = vld [vmem:[#allocation3 + $0x2a] sm:$0xff]
        %v3862 = vld [vmem:[#allocation3 + $0x32] sm:$0xf]
        %v3863 = vld [vmem:[#allocation3 + $0x2b] sm:$0xff]
        %v3864 = vld [vmem:[#allocation3 + $0x33] sm:$0xf]
        %v3865 = vld [vmem:[#allocation3 + $0x2c] sm:$0xff]
        %v3866 = vld [vmem:[#allocation3 + $0x34] sm:$0xf]
        %3869 = vrot.lane.b32.xlu0 %v3851, 64
        %v3870 = vpop.permute.xlu0 %3869
        %3871 = vrot.lane.b32.xlu0 %v3852, 64
        %v3872 = vpop.permute.xlu0 %3871
        %3877 = vrot.lane.b32.xlu0 %v3855, 64
        %v3878 = vpop.permute.xlu0 %3877
        %3879 = vrot.lane.b32.xlu0 %v3856, 64
        %v3880 = vpop.permute.xlu0 %3879
        %3885 = vrot.lane.b32.xlu0 %v3859, 64
        %v3886 = vpop.permute.xlu0 %3885
        %3887 = vrot.lane.b32.xlu0 %v3860, 64
        %v3888 = vpop.permute.xlu0 %3887
        %3893 = vrot.lane.b32.xlu0 %v3863, 64
        %v3894 = vpop.permute.xlu0 %3893
        %3895 = vrot.lane.b32.xlu0 %v3864, 64
        %v3896 = vpop.permute.xlu0 %3895
        %v3899 = vsel %vm1774, %v3849, %v3870
        %v3900 = vsel %vm1774, %v3850, %v3872
        %v3901 = vsel %vm1774, %v3853, %v3878
        %v3902 = vsel %vm1774, %v3854, %v3880
        %v3903 = vsel %vm1774, %v3857, %v3886
        %v3904 = vsel %vm1774, %v3858, %v3888
        %v3905 = vsel %vm1774, %v3861, %v3894
        %v3906 = vsel %vm1774, %v3862, %v3896
        %v3917 = vrot.slane %v3899, 4
        %v3918 = vrot.slane %v3901, 4
        %v3919 = vrot.slane %v3903, 4
        %v3920 = vrot.slane %v3905, 4
        %v3921 = vrot.slane %v3865, 4
        %v3922 = vrot.slane %v3900, 4
        %v3923 = vsel %vm2023, %v3917, %v3922
        %v3924 = vrot.slane %v3902, 4
        %v3925 = vsel %vm2023, %v3918, %v3924
        %v3926 = vrot.slane %v3904, 4
        %v3927 = vsel %vm2023, %v3919, %v3926
        %v3928 = vrot.slane %v3906, 4
        %v3929 = vsel %vm2023, %v3920, %v3928
        %v3930 = vrot.slane %v3866, 4
        %v3931 = vsel %vm2023, %v3921, %v3930
        %3942 = vst [vmem:[#allocation4 + $0x28] sm:$0xf0] %v3917
        %3943 = vst [vmem:[#allocation4 + $0x30] sm:$0xf0] %v3918
        %3944 = vst [vmem:[#allocation4 + $0x38] sm:$0xf0] %v3919
        %3945 = vst [vmem:[#allocation4 + $0x40] sm:$0xf0] %v3920
        %vm3946 = vcmask 523268
        %3947 = vst.msk [vmem:[#allocation4 + $0x48] sm:$0xf0] %vm3946, %v3921
        %3948 = vst [vmem:[#allocation4 + $0x50] sm:$0xff] %v3923
        %3949 = vst [vmem:[#allocation4 + $0x58] sm:$0xff] %v3925
        %3950 = vst [vmem:[#allocation4 + $0x60] sm:$0xff] %v3927
        %3951 = vst [vmem:[#allocation4 + $0x68] sm:$0xff] %v3929
        %3952 = vst.msk [vmem:[#allocation4 + $0x70] sm:$0xff] %vm1774, %v3931
        %v3953 = vld [vmem:[#allocation3 + $0x1c] sm:$0xff]
        %v3954 = vld [vmem:[#allocation3 + $0x24] sm:$0xf]
        %v3955 = vld [vmem:[#allocation3 + $0x1d] sm:$0xff]
        %v3956 = vld [vmem:[#allocation3 + $0x25] sm:$0xf]
        %v3957 = vld [vmem:[#allocation3 + $0x1e] sm:$0xff]
        %v3958 = vld [vmem:[#allocation3 + $0x26] sm:$0xf]
        %v3959 = vld [vmem:[#allocation3 + $0x2a] sm:$0xff]
        %v3960 = vld [vmem:[#allocation3 + $0x32] sm:$0xf]
        %v3961 = vld [vmem:[#allocation3 + $0x2b] sm:$0xff]
        %v3962 = vld [vmem:[#allocation3 + $0x33] sm:$0xf]
        %v3963 = vld [vmem:[#allocation3 + $0x2c] sm:$0xff]
        %v3964 = vld [vmem:[#allocation3 + $0x34] sm:$0xf]
        %v3965 = vld [vmem:[#allocation3 + $0x38] sm:$0xff]
        %v3966 = vld [vmem:[#allocation3 + $0x40] sm:$0xf]
        %v3967 = vld [vmem:[#allocation3 + $0x39] sm:$0xff]
        %v3968 = vld [vmem:[#allocation3 + $0x41] sm:$0xf]
        %v3969 = vld [vmem:[#allocation3 + $0x3a] sm:$0xff]
        %v3970 = vld [vmem:[#allocation3 + $0x42] sm:$0xf]
        %3973 = vrot.lane.b32.xlu0 %v3955, 64
        %v3974 = vpop.permute.xlu0 %3973
        %3975 = vrot.lane.b32.xlu0 %v3956, 64
        %v3976 = vpop.permute.xlu0 %3975
        %3981 = vrot.lane.b32.xlu0 %v3959, 64
        %v3982 = vpop.permute.xlu0 %3981
        %3983 = vrot.lane.b32.xlu0 %v3960, 64
        %v3984 = vpop.permute.xlu0 %3983
        %3989 = vrot.lane.b32.xlu0 %v3963, 64
        %v3990 = vpop.permute.xlu0 %3989
        %3991 = vrot.lane.b32.xlu0 %v3964, 64
        %v3992 = vpop.permute.xlu0 %3991
        %3997 = vrot.lane.b32.xlu0 %v3967, 64
        %v3998 = vpop.permute.xlu0 %3997
        %3999 = vrot.lane.b32.xlu0 %v3968, 64
        %v4000 = vpop.permute.xlu0 %3999
        %v4003 = vsel %vm1774, %v3953, %v3974
        %v4004 = vsel %vm1774, %v3954, %v3976
        %v4005 = vsel %vm1774, %v3957, %v3982
        %v4006 = vsel %vm1774, %v3958, %v3984
        %v4007 = vsel %vm1774, %v3961, %v3990
        %v4008 = vsel %vm1774, %v3962, %v3992
        %v4009 = vsel %vm1774, %v3965, %v3998
        %v4010 = vsel %vm1774, %v3966, %v4000
        %4011 = vst [vmem:[#allocation4 + $0x78] sm:$0xff] %v4003
        %4012 = vst [vmem:[#allocation4 + $0x80] sm:$0xff] %v4005
        %4013 = vst [vmem:[#allocation4 + $0x88] sm:$0xff] %v4007
        %4014 = vst [vmem:[#allocation4 + $0x90] sm:$0xff] %v4009
        %4015 = vst.msk [vmem:[#allocation4 + $0x98] sm:$0xff] %vm1774, %v3969
        %4016 = vst [vmem:[#allocation4 + $0xa0] sm:$0xf] %v4004
        %4017 = vst [vmem:[#allocation4 + $0xa8] sm:$0xf] %v4006
        %4018 = vst [vmem:[#allocation4 + $0xb0] sm:$0xf] %v4008
        %4019 = vst [vmem:[#allocation4 + $0xb8] sm:$0xf] %v4010
        %4020 = vst.msk [vmem:[#allocation4 + $0xc0] sm:$0xf] %vm1887, %v3970
        %v4021 = vld [vmem:[#allocation3 + $0x2a] sm:$0xff]
        %v4022 = vld [vmem:[#allocation3 + $0x32] sm:$0xf]
        %v4023 = vld [vmem:[#allocation3 + $0x2b] sm:$0xff]
        %v4024 = vld [vmem:[#allocation3 + $0x33] sm:$0xf]
        %v4025 = vld [vmem:[#allocation3 + $0x2c] sm:$0xff]
        %v4026 = vld [vmem:[#allocation3 + $0x34] sm:$0xf]
        %v4027 = vld [vmem:[#allocation3 + $0x38] sm:$0xff]
        %v4028 = vld [vmem:[#allocation3 + $0x40] sm:$0xf]
        %v4029 = vld [vmem:[#allocation3 + $0x39] sm:$0xff]
        %v4030 = vld [vmem:[#allocation3 + $0x41] sm:$0xf]
        %v4031 = vld [vmem:[#allocation3 + $0x3a] sm:$0xff]
        %v4032 = vld [vmem:[#allocation3 + $0x42] sm:$0xf]
        %v4033 = vld [vmem:[#allocation3 + $0x46] sm:$0xff]
        %v4034 = vld [vmem:[#allocation3 + $0x4e] sm:$0xf]
        %v4035 = vld [vmem:[#allocation3 + $0x47] sm:$0xff]
        %v4036 = vld [vmem:[#allocation3 + $0x4f] sm:$0xf]
        %v4037 = vld [vmem:[#allocation3 + $0x48] sm:$0xff]
        %v4038 = vld [vmem:[#allocation3 + $0x50] sm:$0xf]
        %4041 = vrot.lane.b32.xlu0 %v4023, 64
        %v4042 = vpop.permute.xlu0 %4041
        %4043 = vrot.lane.b32.xlu0 %v4024, 64
        %v4044 = vpop.permute.xlu0 %4043
        %4049 = vrot.lane.b32.xlu0 %v4027, 64
        %v4050 = vpop.permute.xlu0 %4049
        %4051 = vrot.lane.b32.xlu0 %v4028, 64
        %v4052 = vpop.permute.xlu0 %4051
        %4057 = vrot.lane.b32.xlu0 %v4031, 64
        %v4058 = vpop.permute.xlu0 %4057
        %4059 = vrot.lane.b32.xlu0 %v4032, 64
        %v4060 = vpop.permute.xlu0 %4059
        %4065 = vrot.lane.b32.xlu0 %v4035, 64
        %v4066 = vpop.permute.xlu0 %4065
        %4067 = vrot.lane.b32.xlu0 %v4036, 64
        %v4068 = vpop.permute.xlu0 %4067
        %v4071 = vsel %vm1774, %v4021, %v4042
        %v4072 = vsel %vm1774, %v4022, %v4044
        %v4073 = vsel %vm1774, %v4025, %v4050
        %v4074 = vsel %vm1774, %v4026, %v4052
        %v4075 = vsel %vm1774, %v4029, %v4058
        %v4076 = vsel %vm1774, %v4030, %v4060
        %v4077 = vsel %vm1774, %v4033, %v4066
        %v4078 = vsel %vm1774, %v4034, %v4068
        %v4089 = vrot.slane %v4071, 4
        %v4090 = vrot.slane %v4073, 4
        %v4091 = vrot.slane %v4075, 4
        %v4092 = vrot.slane %v4077, 4
        %v4093 = vrot.slane %v4037, 4
        %v4094 = vrot.slane %v4072, 4
        %v4095 = vsel %vm2023, %v4089, %v4094
        %v4096 = vrot.slane %v4074, 4
        %v4097 = vsel %vm2023, %v4090, %v4096
        %v4098 = vrot.slane %v4076, 4
        %v4099 = vsel %vm2023, %v4091, %v4098
        %v4100 = vrot.slane %v4078, 4
        %v4101 = vsel %vm2023, %v4092, %v4100
        %v4102 = vrot.slane %v4038, 4
        %v4103 = vsel %vm2023, %v4093, %v4102
        %4114 = vst [vmem:[#allocation4 + $0xa0] sm:$0xf0] %v4089
        %4115 = vst [vmem:[#allocation4 + $0xa8] sm:$0xf0] %v4090
        %4116 = vst [vmem:[#allocation4 + $0xb0] sm:$0xf0] %v4091
        %4117 = vst [vmem:[#allocation4 + $0xb8] sm:$0xf0] %v4092
        %4118 = vst.msk [vmem:[#allocation4 + $0xc0] sm:$0xf0] %vm3946, %v4093
        %4119 = vst [vmem:[#allocation4 + $0xc8] sm:$0xff] %v4095
        %4120 = vst [vmem:[#allocation4 + $0xd0] sm:$0xff] %v4097
        %4121 = vst [vmem:[#allocation4 + $0xd8] sm:$0xff] %v4099
        %4122 = vst [vmem:[#allocation4 + $0xe0] sm:$0xff] %v4101
        %4123 = vst.msk [vmem:[#allocation4 + $0xe8] sm:$0xff] %vm1774, %v4103
        %v4124 = vld [vmem:[#allocation3 + $0x38] sm:$0xff]
        %v4125 = vld [vmem:[#allocation3 + $0x40] sm:$0xf]
        %v4126 = vld [vmem:[#allocation3 + $0x39] sm:$0xff]
        %v4127 = vld [vmem:[#allocation3 + $0x41] sm:$0xf]
        %v4128 = vld [vmem:[#allocation3 + $0x3a] sm:$0xff]
        %v4129 = vld [vmem:[#allocation3 + $0x42] sm:$0xf]
        %v4130 = vld [vmem:[#allocation3 + $0x46] sm:$0xff]
        %v4131 = vld [vmem:[#allocation3 + $0x4e] sm:$0xf]
        %v4132 = vld [vmem:[#allocation3 + $0x47] sm:$0xff]
        %v4133 = vld [vmem:[#allocation3 + $0x4f] sm:$0xf]
        %v4134 = vld [vmem:[#allocation3 + $0x48] sm:$0xff]
        %v4135 = vld [vmem:[#allocation3 + $0x50] sm:$0xf]
        %v4136 = vld [vmem:[#allocation3 + $0x54] sm:$0xff]
        %v4137 = vld [vmem:[#allocation3 + $0x5c] sm:$0xf]
        %v4138 = vld [vmem:[#allocation3 + $0x55] sm:$0xff]
        %v4139 = vld [vmem:[#allocation3 + $0x5d] sm:$0xf]
        %v4140 = vld [vmem:[#allocation3 + $0x56] sm:$0xff]
        %v4141 = vld [vmem:[#allocation3 + $0x5e] sm:$0xf]
        %4144 = vrot.lane.b32.xlu0 %v4126, 64
        %v4145 = vpop.permute.xlu0 %4144
        %4146 = vrot.lane.b32.xlu0 %v4127, 64
        %v4147 = vpop.permute.xlu0 %4146
        %4152 = vrot.lane.b32.xlu0 %v4130, 64
        %v4153 = vpop.permute.xlu0 %4152
        %4154 = vrot.lane.b32.xlu0 %v4131, 64
        %v4155 = vpop.permute.xlu0 %4154
        %4160 = vrot.lane.b32.xlu0 %v4134, 64
        %v4161 = vpop.permute.xlu0 %4160
        %4162 = vrot.lane.b32.xlu0 %v4135, 64
        %v4163 = vpop.permute.xlu0 %4162
        %4168 = vrot.lane.b32.xlu0 %v4138, 64
        %v4169 = vpop.permute.xlu0 %4168
        %4170 = vrot.lane.b32.xlu0 %v4139, 64
        %v4171 = vpop.permute.xlu0 %4170
        %v4174 = vsel %vm1774, %v4124, %v4145
        %v4175 = vsel %vm1774, %v4125, %v4147
        %v4176 = vsel %vm1774, %v4128, %v4153
        %v4177 = vsel %vm1774, %v4129, %v4155
        %v4178 = vsel %vm1774, %v4132, %v4161
        %v4179 = vsel %vm1774, %v4133, %v4163
        %v4180 = vsel %vm1774, %v4136, %v4169
        %v4181 = vsel %vm1774, %v4137, %v4171
        %4182 = vst [vmem:[#allocation4 + $0xf0] sm:$0xff] %v4174
        %4183 = vst [vmem:[#allocation4 + $0xf8] sm:$0xff] %v4176
        %4184 = vst [vmem:[#allocation4 + $0x100] sm:$0xff] %v4178
        %4185 = vst [vmem:[#allocation4 + $0x108] sm:$0xff] %v4180
        %4186 = vst.msk [vmem:[#allocation4 + $0x110] sm:$0xff] %vm1774, %v4140
        %4187 = vst [vmem:[#allocation4 + $0x118] sm:$0xf] %v4175
        %4188 = vst [vmem:[#allocation4 + $0x120] sm:$0xf] %v4177
        %4189 = vst [vmem:[#allocation4 + $0x128] sm:$0xf] %v4179
        %4190 = vst [vmem:[#allocation4 + $0x130] sm:$0xf] %v4181
        %4191 = vst.msk [vmem:[#allocation4 + $0x138] sm:$0xf] %vm1887, %v4141
        %v4192 = vld [vmem:[#allocation3 + $0x46] sm:$0xff]
        %v4193 = vld [vmem:[#allocation3 + $0x4e] sm:$0xf]
        %v4194 = vld [vmem:[#allocation3 + $0x47] sm:$0xff]
        %v4195 = vld [vmem:[#allocation3 + $0x4f] sm:$0xf]
        %v4196 = vld [vmem:[#allocation3 + $0x48] sm:$0xff]
        %v4197 = vld [vmem:[#allocation3 + $0x50] sm:$0xf]
        %v4198 = vld [vmem:[#allocation3 + $0x54] sm:$0xff]
        %v4199 = vld [vmem:[#allocation3 + $0x5c] sm:$0xf]
        %v4200 = vld [vmem:[#allocation3 + $0x55] sm:$0xff]
        %v4201 = vld [vmem:[#allocation3 + $0x5d] sm:$0xf]
        %v4202 = vld [vmem:[#allocation3 + $0x56] sm:$0xff]
        %v4203 = vld [vmem:[#allocation3 + $0x5e] sm:$0xf]
        %v4204 = vld [vmem:[#allocation3 + $0x62] sm:$0xff]
        %v4205 = vld [vmem:[#allocation3 + $0x6a] sm:$0xf]
        %v4206 = vld [vmem:[#allocation3 + $0x63] sm:$0xff]
        %v4207 = vld [vmem:[#allocation3 + $0x6b] sm:$0xf]
        %v4208 = vld [vmem:[#allocation3 + $0x64] sm:$0xff]
        %v4209 = vld [vmem:[#allocation3 + $0x6c] sm:$0xf]
        %4212 = vrot.lane.b32.xlu0 %v4194, 64
        %v4213 = vpop.permute.xlu0 %4212
        %4214 = vrot.lane.b32.xlu0 %v4195, 64
        %v4215 = vpop.permute.xlu0 %4214
        %4220 = vrot.lane.b32.xlu0 %v4198, 64
        %v4221 = vpop.permute.xlu0 %4220
        %4222 = vrot.lane.b32.xlu0 %v4199, 64
        %v4223 = vpop.permute.xlu0 %4222
        %4228 = vrot.lane.b32.xlu0 %v4202, 64
        %v4229 = vpop.permute.xlu0 %4228
        %4230 = vrot.lane.b32.xlu0 %v4203, 64
        %v4231 = vpop.permute.xlu0 %4230
        %4236 = vrot.lane.b32.xlu0 %v4206, 64
        %v4237 = vpop.permute.xlu0 %4236
        %4238 = vrot.lane.b32.xlu0 %v4207, 64
        %v4239 = vpop.permute.xlu0 %4238
        %v4242 = vsel %vm1774, %v4192, %v4213
        %v4243 = vsel %vm1774, %v4193, %v4215
        %v4244 = vsel %vm1774, %v4196, %v4221
        %v4245 = vsel %vm1774, %v4197, %v4223
        %v4246 = vsel %vm1774, %v4200, %v4229
        %v4247 = vsel %vm1774, %v4201, %v4231
        %v4248 = vsel %vm1774, %v4204, %v4237
        %v4249 = vsel %vm1774, %v4205, %v4239
        %v4260 = vrot.slane %v4242, 4
        %v4261 = vrot.slane %v4244, 4
        %v4262 = vrot.slane %v4246, 4
        %v4263 = vrot.slane %v4248, 4
        %v4264 = vrot.slane %v4208, 4
        %v4265 = vrot.slane %v4243, 4
        %v4266 = vsel %vm2023, %v4260, %v4265
        %v4267 = vrot.slane %v4245, 4
        %v4268 = vsel %vm2023, %v4261, %v4267
        %v4269 = vrot.slane %v4247, 4
        %v4270 = vsel %vm2023, %v4262, %v4269
        %v4271 = vrot.slane %v4249, 4
        %v4272 = vsel %vm2023, %v4263, %v4271
        %v4273 = vrot.slane %v4209, 4
        %v4274 = vsel %vm2023, %v4264, %v4273
        %4285 = vst [vmem:[#allocation4 + $0x118] sm:$0xf0] %v4260
        %4286 = vst [vmem:[#allocation4 + $0x120] sm:$0xf0] %v4261
        %4287 = vst [vmem:[#allocation4 + $0x128] sm:$0xf0] %v4262
        %4288 = vst [vmem:[#allocation4 + $0x130] sm:$0xf0] %v4263
        %4289 = vst.msk [vmem:[#allocation4 + $0x138] sm:$0xf0] %vm3946, %v4264
        %4290 = vst [vmem:[#allocation4 + $0x140] sm:$0xff] %v4266
        %4291 = vst [vmem:[#allocation4 + $0x148] sm:$0xff] %v4268
        %4292 = vst [vmem:[#allocation4 + $0x150] sm:$0xff] %v4270
        %4293 = vst [vmem:[#allocation4 + $0x158] sm:$0xff] %v4272
        %4294 = vst.msk [vmem:[#allocation4 + $0x160] sm:$0xff] %vm1774, %v4274
        %v4295 = vld [vmem:[#allocation3 + $0x54] sm:$0xff]
        %v4296 = vld [vmem:[#allocation3 + $0x5c] sm:$0xf]
        %v4297 = vld [vmem:[#allocation3 + $0x55] sm:$0xff]
        %v4298 = vld [vmem:[#allocation3 + $0x5d] sm:$0xf]
        %v4299 = vld [vmem:[#allocation3 + $0x56] sm:$0xff]
        %v4300 = vld [vmem:[#allocation3 + $0x5e] sm:$0xf]
        %v4301 = vld [vmem:[#allocation3 + $0x62] sm:$0xff]
        %v4302 = vld [vmem:[#allocation3 + $0x6a] sm:$0xf]
        %v4303 = vld [vmem:[#allocation3 + $0x63] sm:$0xff]
        %v4304 = vld [vmem:[#allocation3 + $0x6b] sm:$0xf]
        %v4305 = vld [vmem:[#allocation3 + $0x64] sm:$0xff]
        %v4306 = vld [vmem:[#allocation3 + $0x6c] sm:$0xf]
        %v4307 = vld [vmem:[#allocation3 + $0x70] sm:$0xff]
        %v4308 = vld [vmem:[#allocation3 + $0x78] sm:$0xf]
        %v4309 = vld [vmem:[#allocation3 + $0x71] sm:$0xff]
        %v4310 = vld [vmem:[#allocation3 + $0x79] sm:$0xf]
        %v4311 = vld [vmem:[#allocation3 + $0x72] sm:$0xff]
        %v4312 = vld [vmem:[#allocation3 + $0x7a] sm:$0xf]
        %4315 = vrot.lane.b32.xlu0 %v4297, 64
        %v4316 = vpop.permute.xlu0 %4315
        %4317 = vrot.lane.b32.xlu0 %v4298, 64
        %v4318 = vpop.permute.xlu0 %4317
        %4323 = vrot.lane.b32.xlu0 %v4301, 64
        %v4324 = vpop.permute.xlu0 %4323
        %4325 = vrot.lane.b32.xlu0 %v4302, 64
        %v4326 = vpop.permute.xlu0 %4325
        %4331 = vrot.lane.b32.xlu0 %v4305, 64
        %v4332 = vpop.permute.xlu0 %4331
        %4333 = vrot.lane.b32.xlu0 %v4306, 64
        %v4334 = vpop.permute.xlu0 %4333
        %4339 = vrot.lane.b32.xlu0 %v4309, 64
        %v4340 = vpop.permute.xlu0 %4339
        %4341 = vrot.lane.b32.xlu0 %v4310, 64
        %v4342 = vpop.permute.xlu0 %4341
        %v4345 = vsel %vm1774, %v4295, %v4316
        %v4346 = vsel %vm1774, %v4296, %v4318
        %v4347 = vsel %vm1774, %v4299, %v4324
        %v4348 = vsel %vm1774, %v4300, %v4326
        %v4349 = vsel %vm1774, %v4303, %v4332
        %v4350 = vsel %vm1774, %v4304, %v4334
        %v4351 = vsel %vm1774, %v4307, %v4340
        %v4352 = vsel %vm1774, %v4308, %v4342
        %4353 = vst [vmem:[#allocation4 + $0x168] sm:$0xff] %v4345
        %4354 = vst [vmem:[#allocation4 + $0x170] sm:$0xff] %v4347
        %4355 = vst [vmem:[#allocation4 + $0x178] sm:$0xff] %v4349
        %4356 = vst [vmem:[#allocation4 + $0x180] sm:$0xff] %v4351
        %4357 = vst.msk [vmem:[#allocation4 + $0x188] sm:$0xff] %vm1774, %v4311
        %4358 = vst [vmem:[#allocation4 + $0x190] sm:$0xf] %v4346
        %4359 = vst [vmem:[#allocation4 + $0x198] sm:$0xf] %v4348
        %4360 = vst [vmem:[#allocation4 + $0x1a0] sm:$0xf] %v4350
        %4361 = vst [vmem:[#allocation4 + $0x1a8] sm:$0xf] %v4352
        %4362 = vst.msk [vmem:[#allocation4 + $0x1b0] sm:$0xf] %vm1887, %v4312
        %v4363 = vld [vmem:[#allocation3 + $0x62] sm:$0xff]
        %v4364 = vld [vmem:[#allocation3 + $0x6a] sm:$0xf]
        %v4365 = vld [vmem:[#allocation3 + $0x63] sm:$0xff]
        %v4366 = vld [vmem:[#allocation3 + $0x6b] sm:$0xf]
        %v4367 = vld [vmem:[#allocation3 + $0x64] sm:$0xff]
        %v4368 = vld [vmem:[#allocation3 + $0x6c] sm:$0xf]
        %v4369 = vld [vmem:[#allocation3 + $0x70] sm:$0xff]
        %v4370 = vld [vmem:[#allocation3 + $0x78] sm:$0xf]
        %v4371 = vld [vmem:[#allocation3 + $0x71] sm:$0xff]
        %v4372 = vld [vmem:[#allocation3 + $0x79] sm:$0xf]
        %v4373 = vld [vmem:[#allocation3 + $0x72] sm:$0xff]
        %v4374 = vld [vmem:[#allocation3 + $0x7a] sm:$0xf]
        %v4375 = vld [vmem:[#allocation3 + $0x7e] sm:$0xff]
        %v4376 = vld [vmem:[#allocation3 + $0x86] sm:$0xf]
        %v4377 = vld [vmem:[#allocation3 + $0x7f] sm:$0xff]
        %v4378 = vld [vmem:[#allocation3 + $0x87] sm:$0xf]
        %v4379 = vld [vmem:[#allocation3 + $0x80] sm:$0xff]
        %v4380 = vld [vmem:[#allocation3 + $0x88] sm:$0xf]
        %4383 = vrot.lane.b32.xlu0 %v4365, 64
        %v4384 = vpop.permute.xlu0 %4383
        %4385 = vrot.lane.b32.xlu0 %v4366, 64
        %v4386 = vpop.permute.xlu0 %4385
        %4391 = vrot.lane.b32.xlu0 %v4369, 64
        %v4392 = vpop.permute.xlu0 %4391
        %4393 = vrot.lane.b32.xlu0 %v4370, 64
        %v4394 = vpop.permute.xlu0 %4393
        %4399 = vrot.lane.b32.xlu0 %v4373, 64
        %v4400 = vpop.permute.xlu0 %4399
        %4401 = vrot.lane.b32.xlu0 %v4374, 64
        %v4402 = vpop.permute.xlu0 %4401
        %4407 = vrot.lane.b32.xlu0 %v4377, 64
        %v4408 = vpop.permute.xlu0 %4407
        %4409 = vrot.lane.b32.xlu0 %v4378, 64
        %v4410 = vpop.permute.xlu0 %4409
        %v4413 = vsel %vm1774, %v4363, %v4384
        %v4414 = vsel %vm1774, %v4364, %v4386
        %v4415 = vsel %vm1774, %v4367, %v4392
        %v4416 = vsel %vm1774, %v4368, %v4394
        %v4417 = vsel %vm1774, %v4371, %v4400
        %v4418 = vsel %vm1774, %v4372, %v4402
        %v4419 = vsel %vm1774, %v4375, %v4408
        %v4420 = vsel %vm1774, %v4376, %v4410
        %v4431 = vrot.slane %v4413, 4
        %v4432 = vrot.slane %v4415, 4
        %v4433 = vrot.slane %v4417, 4
        %v4434 = vrot.slane %v4419, 4
        %v4435 = vrot.slane %v4379, 4
        %v4436 = vrot.slane %v4414, 4
        %v4437 = vsel %vm2023, %v4431, %v4436
        %v4438 = vrot.slane %v4416, 4
        %v4439 = vsel %vm2023, %v4432, %v4438
        %v4440 = vrot.slane %v4418, 4
        %v4441 = vsel %vm2023, %v4433, %v4440
        %v4442 = vrot.slane %v4420, 4
        %v4443 = vsel %vm2023, %v4434, %v4442
        %v4444 = vrot.slane %v4380, 4
        %v4445 = vsel %vm2023, %v4435, %v4444
        %4456 = vst [vmem:[#allocation4 + $0x190] sm:$0xf0] %v4431
        %4457 = vst [vmem:[#allocation4 + $0x198] sm:$0xf0] %v4432
        %4458 = vst [vmem:[#allocation4 + $0x1a0] sm:$0xf0] %v4433
        %4459 = vst [vmem:[#allocation4 + $0x1a8] sm:$0xf0] %v4434
        %4460 = vst.msk [vmem:[#allocation4 + $0x1b0] sm:$0xf0] %vm3946, %v4435
        %4461 = vst [vmem:[#allocation4 + $0x1b8] sm:$0xff] %v4437
        %4462 = vst [vmem:[#allocation4 + $0x1c0] sm:$0xff] %v4439
        %4463 = vst [vmem:[#allocation4 + $0x1c8] sm:$0xff] %v4441
        %4464 = vst [vmem:[#allocation4 + $0x1d0] sm:$0xff] %v4443
        %4465 = vst.msk [vmem:[#allocation4 + $0x1d8] sm:$0xff] %vm1774, %v4445
        %v4466 = vld [vmem:[#allocation3 + $0x70] sm:$0xff]
        %v4467 = vld [vmem:[#allocation3 + $0x78] sm:$0xf]
        %v4468 = vld [vmem:[#allocation3 + $0x71] sm:$0xff]
        %v4469 = vld [vmem:[#allocation3 + $0x79] sm:$0xf]
        %v4470 = vld [vmem:[#allocation3 + $0x72] sm:$0xff]
        %v4471 = vld [vmem:[#allocation3 + $0x7a] sm:$0xf]
        %v4472 = vld [vmem:[#allocation3 + $0x7e] sm:$0xff]
        %v4473 = vld [vmem:[#allocation3 + $0x86] sm:$0xf]
        %v4474 = vld [vmem:[#allocation3 + $0x7f] sm:$0xff]
        %v4475 = vld [vmem:[#allocation3 + $0x87] sm:$0xf]
        %v4476 = vld [vmem:[#allocation3 + $0x80] sm:$0xff]
        %v4477 = vld [vmem:[#allocation3 + $0x88] sm:$0xf]
        %v4478 = vld [vmem:[#allocation3 + $0x8c] sm:$0xff]
        %v4479 = vld [vmem:[#allocation3 + $0x94] sm:$0xf]
        %v4480 = vld [vmem:[#allocation3 + $0x8d] sm:$0xff]
        %v4481 = vld [vmem:[#allocation3 + $0x95] sm:$0xf]
        %v4482 = vld [vmem:[#allocation3 + $0x8e] sm:$0xff]
        %v4483 = vld [vmem:[#allocation3 + $0x96] sm:$0xf]
        %4486 = vrot.lane.b32.xlu0 %v4468, 64
        %v4487 = vpop.permute.xlu0 %4486
        %4488 = vrot.lane.b32.xlu0 %v4469, 64
        %v4489 = vpop.permute.xlu0 %4488
        %4494 = vrot.lane.b32.xlu0 %v4472, 64
        %v4495 = vpop.permute.xlu0 %4494
        %4496 = vrot.lane.b32.xlu0 %v4473, 64
        %v4497 = vpop.permute.xlu0 %4496
        %4502 = vrot.lane.b32.xlu0 %v4476, 64
        %v4503 = vpop.permute.xlu0 %4502
        %4504 = vrot.lane.b32.xlu0 %v4477, 64
        %v4505 = vpop.permute.xlu0 %4504
        %4510 = vrot.lane.b32.xlu0 %v4480, 64
        %v4511 = vpop.permute.xlu0 %4510
        %4512 = vrot.lane.b32.xlu0 %v4481, 64
        %v4513 = vpop.permute.xlu0 %4512
        %v4516 = vsel %vm1774, %v4466, %v4487
        %v4517 = vsel %vm1774, %v4467, %v4489
        %v4518 = vsel %vm1774, %v4470, %v4495
        %v4519 = vsel %vm1774, %v4471, %v4497
        %v4520 = vsel %vm1774, %v4474, %v4503
        %v4521 = vsel %vm1774, %v4475, %v4505
        %v4522 = vsel %vm1774, %v4478, %v4511
        %v4523 = vsel %vm1774, %v4479, %v4513
        %4524 = vst [vmem:[#allocation4 + $0x1e0] sm:$0xff] %v4516
        %4525 = vst [vmem:[#allocation4 + $0x1e8] sm:$0xff] %v4518
        %4526 = vst [vmem:[#allocation4 + $0x1f0] sm:$0xff] %v4520
        %4527 = vst [vmem:[#allocation4 + $0x1f8] sm:$0xff] %v4522
        %4528 = vst.msk [vmem:[#allocation4 + $0x200] sm:$0xff] %vm1774, %v4482
        %4529 = vst [vmem:[#allocation4 + $0x208] sm:$0xf] %v4517
        %4530 = vst [vmem:[#allocation4 + $0x210] sm:$0xf] %v4519
        %4531 = vst [vmem:[#allocation4 + $0x218] sm:$0xf] %v4521
        %4532 = vst [vmem:[#allocation4 + $0x220] sm:$0xf] %v4523
        %4533 = vst.msk [vmem:[#allocation4 + $0x228] sm:$0xf] %vm1887, %v4483
        %v4534 = vld [vmem:[#allocation3 + $0x7e] sm:$0xff]
        %v4535 = vld [vmem:[#allocation3 + $0x86] sm:$0xf]
        %v4536 = vld [vmem:[#allocation3 + $0x7f] sm:$0xff]
        %v4537 = vld [vmem:[#allocation3 + $0x87] sm:$0xf]
        %v4538 = vld [vmem:[#allocation3 + $0x80] sm:$0xff]
        %v4539 = vld [vmem:[#allocation3 + $0x88] sm:$0xf]
        %v4540 = vld [vmem:[#allocation3 + $0x8c] sm:$0xff]
        %v4541 = vld [vmem:[#allocation3 + $0x94] sm:$0xf]
        %v4542 = vld [vmem:[#allocation3 + $0x8d] sm:$0xff]
        %v4543 = vld [vmem:[#allocation3 + $0x95] sm:$0xf]
        %v4544 = vld [vmem:[#allocation3 + $0x8e] sm:$0xff]
        %v4545 = vld [vmem:[#allocation3 + $0x96] sm:$0xf]
        %v4546 = vld [vmem:[#allocation3 + $0x9a] sm:$0xff]
        %v4547 = vld [vmem:[#allocation3 + $0xa2] sm:$0xf]
        %v4548 = vld [vmem:[#allocation3 + $0x9b] sm:$0xff]
        %v4549 = vld [vmem:[#allocation3 + $0xa3] sm:$0xf]
        %v4550 = vld [vmem:[#allocation3 + $0x9c] sm:$0xff]
        %v4551 = vld [vmem:[#allocation3 + $0xa4] sm:$0xf]
        %4554 = vrot.lane.b32.xlu0 %v4536, 64
        %v4555 = vpop.permute.xlu0 %4554
        %4556 = vrot.lane.b32.xlu0 %v4537, 64
        %v4557 = vpop.permute.xlu0 %4556
        %4562 = vrot.lane.b32.xlu0 %v4540, 64
        %v4563 = vpop.permute.xlu0 %4562
        %4564 = vrot.lane.b32.xlu0 %v4541, 64
        %v4565 = vpop.permute.xlu0 %4564
        %4570 = vrot.lane.b32.xlu0 %v4544, 64
        %v4571 = vpop.permute.xlu0 %4570
        %4572 = vrot.lane.b32.xlu0 %v4545, 64
        %v4573 = vpop.permute.xlu0 %4572
        %4578 = vrot.lane.b32.xlu0 %v4548, 64
        %v4579 = vpop.permute.xlu0 %4578
        %4580 = vrot.lane.b32.xlu0 %v4549, 64
        %v4581 = vpop.permute.xlu0 %4580
        %v4584 = vsel %vm1774, %v4534, %v4555
        %v4585 = vsel %vm1774, %v4535, %v4557
        %v4586 = vsel %vm1774, %v4538, %v4563
        %v4587 = vsel %vm1774, %v4539, %v4565
        %v4588 = vsel %vm1774, %v4542, %v4571
        %v4589 = vsel %vm1774, %v4543, %v4573
        %v4590 = vsel %vm1774, %v4546, %v4579
        %v4591 = vsel %vm1774, %v4547, %v4581
        %v4602 = vrot.slane %v4584, 4
        %v4603 = vrot.slane %v4586, 4
        %v4604 = vrot.slane %v4588, 4
        %v4605 = vrot.slane %v4590, 4
        %v4606 = vrot.slane %v4550, 4
        %v4607 = vrot.slane %v4585, 4
        %v4608 = vsel %vm2023, %v4602, %v4607
        %v4609 = vrot.slane %v4587, 4
        %v4610 = vsel %vm2023, %v4603, %v4609
        %v4611 = vrot.slane %v4589, 4
        %v4612 = vsel %vm2023, %v4604, %v4611
        %v4613 = vrot.slane %v4591, 4
        %v4614 = vsel %vm2023, %v4605, %v4613
        %v4615 = vrot.slane %v4551, 4
        %v4616 = vsel %vm2023, %v4606, %v4615
        %4627 = vst [vmem:[#allocation4 + $0x208] sm:$0xf0] %v4602
        %4628 = vst [vmem:[#allocation4 + $0x210] sm:$0xf0] %v4603
        %4629 = vst [vmem:[#allocation4 + $0x218] sm:$0xf0] %v4604
        %4630 = vst [vmem:[#allocation4 + $0x220] sm:$0xf0] %v4605
        %4631 = vst.msk [vmem:[#allocation4 + $0x228] sm:$0xf0] %vm3946, %v4606
        %4632 = vst [vmem:[#allocation4 + $0x230] sm:$0xff] %v4608
        %4633 = vst [vmem:[#allocation4 + $0x238] sm:$0xff] %v4610
        %4634 = vst [vmem:[#allocation4 + $0x240] sm:$0xff] %v4612
        %4635 = vst [vmem:[#allocation4 + $0x248] sm:$0xff] %v4614
        %4636 = vst.msk [vmem:[#allocation4 + $0x250] sm:$0xff] %vm1774, %v4616
        %v4637 = vld [vmem:[#allocation3 + $0x8c] sm:$0xff]
        %v4638 = vld [vmem:[#allocation3 + $0x94] sm:$0xf]
        %v4639 = vld [vmem:[#allocation3 + $0x8d] sm:$0xff]
        %v4640 = vld [vmem:[#allocation3 + $0x95] sm:$0xf]
        %v4641 = vld [vmem:[#allocation3 + $0x8e] sm:$0xff]
        %v4642 = vld [vmem:[#allocation3 + $0x96] sm:$0xf]
        %v4643 = vld [vmem:[#allocation3 + $0x9a] sm:$0xff]
        %v4644 = vld [vmem:[#allocation3 + $0xa2] sm:$0xf]
        %v4645 = vld [vmem:[#allocation3 + $0x9b] sm:$0xff]
        %v4646 = vld [vmem:[#allocation3 + $0xa3] sm:$0xf]
        %v4647 = vld [vmem:[#allocation3 + $0x9c] sm:$0xff]
        %v4648 = vld [vmem:[#allocation3 + $0xa4] sm:$0xf]
        %v4649 = vld [vmem:[#allocation3 + $0xa8] sm:$0xff]
        %v4650 = vld [vmem:[#allocation3 + $0xb0] sm:$0xf]
        %v4651 = vld [vmem:[#allocation3 + $0xa9] sm:$0xff]
        %v4652 = vld [vmem:[#allocation3 + $0xb1] sm:$0xf]
        %v4653 = vld [vmem:[#allocation3 + $0xaa] sm:$0xff]
        %v4654 = vld [vmem:[#allocation3 + $0xb2] sm:$0xf]
        %4657 = vrot.lane.b32.xlu0 %v4639, 64
        %v4658 = vpop.permute.xlu0 %4657
        %4659 = vrot.lane.b32.xlu0 %v4640, 64
        %v4660 = vpop.permute.xlu0 %4659
        %4665 = vrot.lane.b32.xlu0 %v4643, 64
        %v4666 = vpop.permute.xlu0 %4665
        %4667 = vrot.lane.b32.xlu0 %v4644, 64
        %v4668 = vpop.permute.xlu0 %4667
        %4673 = vrot.lane.b32.xlu0 %v4647, 64
        %v4674 = vpop.permute.xlu0 %4673
        %4675 = vrot.lane.b32.xlu0 %v4648, 64
        %v4676 = vpop.permute.xlu0 %4675
        %4681 = vrot.lane.b32.xlu0 %v4651, 64
        %v4682 = vpop.permute.xlu0 %4681
        %4683 = vrot.lane.b32.xlu0 %v4652, 64
        %v4684 = vpop.permute.xlu0 %4683
        %v4687 = vsel %vm1774, %v4637, %v4658
        %v4688 = vsel %vm1774, %v4638, %v4660
        %v4689 = vsel %vm1774, %v4641, %v4666
        %v4690 = vsel %vm1774, %v4642, %v4668
        %v4691 = vsel %vm1774, %v4645, %v4674
        %v4692 = vsel %vm1774, %v4646, %v4676
        %v4693 = vsel %vm1774, %v4649, %v4682
        %v4694 = vsel %vm1774, %v4650, %v4684
        %4695 = vst [vmem:[#allocation4 + $0x258] sm:$0xff] %v4687
        %4696 = vst [vmem:[#allocation4 + $0x260] sm:$0xff] %v4689
        %4697 = vst [vmem:[#allocation4 + $0x268] sm:$0xff] %v4691
        %4698 = vst [vmem:[#allocation4 + $0x270] sm:$0xff] %v4693
        %4699 = vst.msk [vmem:[#allocation4 + $0x278] sm:$0xff] %vm1774, %v4653
        %4700 = vst [vmem:[#allocation4 + $0x280] sm:$0xf] %v4688
        %4701 = vst [vmem:[#allocation4 + $0x288] sm:$0xf] %v4690
        %4702 = vst [vmem:[#allocation4 + $0x290] sm:$0xf] %v4692
        %4703 = vst [vmem:[#allocation4 + $0x298] sm:$0xf] %v4694
        %4704 = vst.msk [vmem:[#allocation4 + $0x2a0] sm:$0xf] %vm1887, %v4654
        %v4705 = vld [vmem:[#allocation3 + $0x9a] sm:$0xff]
        %v4706 = vld [vmem:[#allocation3 + $0xa2] sm:$0xf]
        %v4707 = vld [vmem:[#allocation3 + $0x9b] sm:$0xff]
        %v4708 = vld [vmem:[#allocation3 + $0xa3] sm:$0xf]
        %v4709 = vld [vmem:[#allocation3 + $0x9c] sm:$0xff]
        %v4710 = vld [vmem:[#allocation3 + $0xa4] sm:$0xf]
        %v4711 = vld [vmem:[#allocation3 + $0xa8] sm:$0xff]
        %v4712 = vld [vmem:[#allocation3 + $0xb0] sm:$0xf]
        %v4713 = vld [vmem:[#allocation3 + $0xa9] sm:$0xff]
        %v4714 = vld [vmem:[#allocation3 + $0xb1] sm:$0xf]
        %v4715 = vld [vmem:[#allocation3 + $0xaa] sm:$0xff]
        %v4716 = vld [vmem:[#allocation3 + $0xb2] sm:$0xf]
        %v4717 = vld [vmem:[#allocation3 + $0xb6] sm:$0xff]
        %v4718 = vld [vmem:[#allocation3 + $0xbe] sm:$0xf]
        %v4719 = vld [vmem:[#allocation3 + $0xb7] sm:$0xff]
        %v4720 = vld [vmem:[#allocation3 + $0xbf] sm:$0xf]
        %v4721 = vld [vmem:[#allocation3 + $0xb8] sm:$0xff]
        %v4722 = vld [vmem:[#allocation3 + $0xc0] sm:$0xf]
        %4725 = vrot.lane.b32.xlu0 %v4707, 64
        %v4726 = vpop.permute.xlu0 %4725
        %4727 = vrot.lane.b32.xlu0 %v4708, 64
        %v4728 = vpop.permute.xlu0 %4727
        %4733 = vrot.lane.b32.xlu0 %v4711, 64
        %v4734 = vpop.permute.xlu0 %4733
        %4735 = vrot.lane.b32.xlu0 %v4712, 64
        %v4736 = vpop.permute.xlu0 %4735
        %4741 = vrot.lane.b32.xlu0 %v4715, 64
        %v4742 = vpop.permute.xlu0 %4741
        %4743 = vrot.lane.b32.xlu0 %v4716, 64
        %v4744 = vpop.permute.xlu0 %4743
        %4749 = vrot.lane.b32.xlu0 %v4719, 64
        %v4750 = vpop.permute.xlu0 %4749
        %4751 = vrot.lane.b32.xlu0 %v4720, 64
        %v4752 = vpop.permute.xlu0 %4751
        %v4755 = vsel %vm1774, %v4705, %v4726
        %v4756 = vsel %vm1774, %v4706, %v4728
        %v4757 = vsel %vm1774, %v4709, %v4734
        %v4758 = vsel %vm1774, %v4710, %v4736
        %v4759 = vsel %vm1774, %v4713, %v4742
        %v4760 = vsel %vm1774, %v4714, %v4744
        %v4761 = vsel %vm1774, %v4717, %v4750
        %v4762 = vsel %vm1774, %v4718, %v4752
        %v4773 = vrot.slane %v4755, 4
        %v4774 = vrot.slane %v4757, 4
        %v4775 = vrot.slane %v4759, 4
        %v4776 = vrot.slane %v4761, 4
        %v4777 = vrot.slane %v4721, 4
        %v4778 = vrot.slane %v4756, 4
        %v4779 = vsel %vm2023, %v4773, %v4778
        %v4780 = vrot.slane %v4758, 4
        %v4781 = vsel %vm2023, %v4774, %v4780
        %v4782 = vrot.slane %v4760, 4
        %v4783 = vsel %vm2023, %v4775, %v4782
        %v4784 = vrot.slane %v4762, 4
        %v4785 = vsel %vm2023, %v4776, %v4784
        %v4786 = vrot.slane %v4722, 4
        %v4787 = vsel %vm2023, %v4777, %v4786
        %4798 = vst [vmem:[#allocation4 + $0x280] sm:$0xf0] %v4773
        %4799 = vst [vmem:[#allocation4 + $0x288] sm:$0xf0] %v4774
        %4800 = vst [vmem:[#allocation4 + $0x290] sm:$0xf0] %v4775
        %4801 = vst [vmem:[#allocation4 + $0x298] sm:$0xf0] %v4776
        %4802 = vst.msk [vmem:[#allocation4 + $0x2a0] sm:$0xf0] %vm3946, %v4777
        %4803 = vst [vmem:[#allocation4 + $0x2a8] sm:$0xff] %v4779
        %4804 = vst [vmem:[#allocation4 + $0x2b0] sm:$0xff] %v4781
        %4805 = vst [vmem:[#allocation4 + $0x2b8] sm:$0xff] %v4783
        %4806 = vst [vmem:[#allocation4 + $0x2c0] sm:$0xff] %v4785
        %4807 = vst.msk [vmem:[#allocation4 + $0x2c8] sm:$0xff] %vm1774, %v4787
        %v4808 = vld [vmem:[#allocation4] sm:$0xff]
        %v4809 = vld [vmem:[#allocation4 + $0x8] sm:$0xff]
        %v4810 = vld [vmem:[#allocation4 + $0x10] sm:$0xff]
        %v4811 = vld [vmem:[#allocation4 + $0x18] sm:$0xff]
        %v4812 = vld [vmem:[#allocation4 + $0x20] sm:$0xff]
        %v4813 = vld [vmem:[#allocation4 + $0x28] sm:$0xff]
        %v4814 = vld [vmem:[#allocation4 + $0x30] sm:$0xff]
        %v4815 = vld [vmem:[#allocation4 + $0x38] sm:$0xff]
        %v4816 = vld [vmem:[#allocation4 + $0x40] sm:$0xff]
        %v4817 = vld [vmem:[#allocation4 + $0x48] sm:$0xff]
        %v4818 = vld [vmem:[#allocation4 + $0x50] sm:$0xff]
        %v4819 = vld [vmem:[#allocation4 + $0x58] sm:$0xff]
        %v4820 = vld [vmem:[#allocation4 + $0x60] sm:$0xff]
        %v4821 = vld [vmem:[#allocation4 + $0x68] sm:$0xff]
        %v4822 = vld [vmem:[#allocation4 + $0x70] sm:$0xff]
        %v4823 = vld [vmem:[#allocation4 + $0x78] sm:$0xff]
        %v4824 = vld [vmem:[#allocation4 + $0x80] sm:$0xff]
        %v4825 = vld [vmem:[#allocation4 + $0x88] sm:$0xff]
        %v4826 = vld [vmem:[#allocation4 + $0x90] sm:$0xff]
        %v4827 = vld [vmem:[#allocation4 + $0x98] sm:$0xff]
        %v4828 = vld [vmem:[#allocation4 + $0xa0] sm:$0xff]
        %v4829 = vld [vmem:[#allocation4 + $0xa8] sm:$0xff]
        %v4830 = vld [vmem:[#allocation4 + $0xb0] sm:$0xff]
        %v4831 = vld [vmem:[#allocation4 + $0xb8] sm:$0xff]
        %v4832 = vld [vmem:[#allocation4 + $0xc0] sm:$0xff]
        %v4833 = vld [vmem:[#allocation4 + $0xc8] sm:$0xff]
        %v4834 = vld [vmem:[#allocation4 + $0xd0] sm:$0xff]
        %v4835 = vld [vmem:[#allocation4 + $0xd8] sm:$0xff]
        %v4836 = vld [vmem:[#allocation4 + $0xe0] sm:$0xff]
        %v4837 = vld [vmem:[#allocation4 + $0xe8] sm:$0xff]
        %v4838 = vld [vmem:[#allocation4 + $0xf0] sm:$0xff]
        %v4839 = vld [vmem:[#allocation4 + $0xf8] sm:$0xff]
        %v4840 = vld [vmem:[#allocation4 + $0x100] sm:$0xff]
        %v4841 = vld [vmem:[#allocation4 + $0x108] sm:$0xff]
        %v4842 = vld [vmem:[#allocation4 + $0x110] sm:$0xff]
        %v4843 = vld [vmem:[#allocation4 + $0x118] sm:$0xff]
        %v4844 = vld [vmem:[#allocation4 + $0x120] sm:$0xff]
        %v4845 = vld [vmem:[#allocation4 + $0x128] sm:$0xff]
        %v4846 = vld [vmem:[#allocation4 + $0x130] sm:$0xff]
        %v4847 = vld [vmem:[#allocation4 + $0x138] sm:$0xff]
        %v4848 = vld [vmem:[#allocation4 + $0x140] sm:$0xff]
        %v4849 = vld [vmem:[#allocation4 + $0x148] sm:$0xff]
        %v4850 = vld [vmem:[#allocation4 + $0x150] sm:$0xff]
        %v4851 = vld [vmem:[#allocation4 + $0x158] sm:$0xff]
        %v4852 = vld [vmem:[#allocation4 + $0x160] sm:$0xff]
        %v4853 = vld [vmem:[#allocation4 + $0x168] sm:$0xff]
        %v4854 = vld [vmem:[#allocation4 + $0x170] sm:$0xff]
        %v4855 = vld [vmem:[#allocation4 + $0x178] sm:$0xff]
        %v4856 = vld [vmem:[#allocation4 + $0x180] sm:$0xff]
        %v4857 = vld [vmem:[#allocation4 + $0x188] sm:$0xff]
        %v4858 = vld [vmem:[#allocation4 + $0x190] sm:$0xff]
        %v4859 = vld [vmem:[#allocation4 + $0x198] sm:$0xff]
        %v4860 = vld [vmem:[#allocation4 + $0x1a0] sm:$0xff]
        %v4861 = vld [vmem:[#allocation4 + $0x1a8] sm:$0xff]
        %v4862 = vld [vmem:[#allocation4 + $0x1b0] sm:$0xff]
        %v4863 = vld [vmem:[#allocation4 + $0x1b8] sm:$0xff]
        %v4864 = vld [vmem:[#allocation4 + $0x1c0] sm:$0xff]
        %v4865 = vld [vmem:[#allocation4 + $0x1c8] sm:$0xff]
        %v4866 = vld [vmem:[#allocation4 + $0x1d0] sm:$0xff]
        %v4867 = vld [vmem:[#allocation4 + $0x1d8] sm:$0xff]
        %v4868 = vld [vmem:[#allocation4 + $0x1e0] sm:$0xff]
        %v4869 = vld [vmem:[#allocation4 + $0x1e8] sm:$0xff]
        %v4870 = vld [vmem:[#allocation4 + $0x1f0] sm:$0xff]
        %v4871 = vld [vmem:[#allocation4 + $0x1f8] sm:$0xff]
        %v4872 = vld [vmem:[#allocation4 + $0x200] sm:$0xff]
        %v4873 = vld [vmem:[#allocation4 + $0x208] sm:$0xff]
        %v4874 = vld [vmem:[#allocation4 + $0x210] sm:$0xff]
        %v4875 = vld [vmem:[#allocation4 + $0x218] sm:$0xff]
        %v4876 = vld [vmem:[#allocation4 + $0x220] sm:$0xff]
        %v4877 = vld [vmem:[#allocation4 + $0x228] sm:$0xff]
        %v4878 = vld [vmem:[#allocation4 + $0x230] sm:$0xff]
        %v4879 = vld [vmem:[#allocation4 + $0x238] sm:$0xff]
        %v4880 = vld [vmem:[#allocation4 + $0x240] sm:$0xff]
        %v4881 = vld [vmem:[#allocation4 + $0x248] sm:$0xff]
        %v4882 = vld [vmem:[#allocation4 + $0x250] sm:$0xff]
        %v4883 = vld [vmem:[#allocation4 + $0x258] sm:$0xff]
        %v4884 = vld [vmem:[#allocation4 + $0x260] sm:$0xff]
        %v4885 = vld [vmem:[#allocation4 + $0x268] sm:$0xff]
        %v4886 = vld [vmem:[#allocation4 + $0x270] sm:$0xff]
        %v4887 = vld [vmem:[#allocation4 + $0x278] sm:$0xff]
        %v4888 = vld [vmem:[#allocation4 + $0x280] sm:$0xff]
        %v4889 = vld [vmem:[#allocation4 + $0x288] sm:$0xff]
        %v4890 = vld [vmem:[#allocation4 + $0x290] sm:$0xff]
        %v4891 = vld [vmem:[#allocation4 + $0x298] sm:$0xff]
        %v4892 = vld [vmem:[#allocation4 + $0x2a0] sm:$0xff]
        %v4893 = vld [vmem:[#allocation4 + $0x2a8] sm:$0xff]
        %v4894 = vld [vmem:[#allocation4 + $0x2b0] sm:$0xff]
        %v4895 = vld [vmem:[#allocation4 + $0x2b8] sm:$0xff]
        %v4896 = vld [vmem:[#allocation4 + $0x2c0] sm:$0xff]
        %v4897 = vld [vmem:[#allocation4 + $0x2c8] sm:$0xff]
        %v4898 = vld [vmem:[%s4] sm:$0xff]
        %v4899 = vld [vmem:[%s4 + $0x8] sm:$0xff]
        %v4900 = vld [vmem:[%s4 + $0x10] sm:$0xff]
        %v4901 = vld [vmem:[%s4 + $0x18] sm:$0xff]
        %v4902 = vld [vmem:[%s4 + $0x20] sm:$0xff]
        %v4903 = vld [vmem:[%s4 + $0x28] sm:$0xff]
        %v4904 = vld [vmem:[%s4 + $0x30] sm:$0xff]
        %v4905 = vld [vmem:[%s4 + $0x38] sm:$0xff]
        %v4906 = vld [vmem:[%s4 + $0x40] sm:$0xff]
        %v4907 = vld [vmem:[%s4 + $0x48] sm:$0xff]
        %v4908 = vld [vmem:[%s4 + $0x50] sm:$0xff]
        %v4909 = vld [vmem:[%s4 + $0x58] sm:$0xff]
        %v4910 = vld [vmem:[%s4 + $0x60] sm:$0xff]
        %v4911 = vld [vmem:[%s4 + $0x68] sm:$0xff]
        %v4912 = vld [vmem:[%s4 + $0x70] sm:$0xff]
        %v4913 = vld [vmem:[%s4 + $0x78] sm:$0xff]
        %v4914 = vld [vmem:[%s4 + $0x80] sm:$0xff]
        %v4915 = vld [vmem:[%s4 + $0x88] sm:$0xff]
        %v4916 = vld [vmem:[%s4 + $0x90] sm:$0xff]
        %v4917 = vld [vmem:[%s4 + $0x98] sm:$0xff]
        %v4918 = vld [vmem:[%s4 + $0xa0] sm:$0xff]
        %v4919 = vld [vmem:[%s4 + $0xa8] sm:$0xff]
        %v4920 = vld [vmem:[%s4 + $0xb0] sm:$0xff]
        %v4921 = vld [vmem:[%s4 + $0xb8] sm:$0xff]
        %v4922 = vld [vmem:[%s4 + $0xc0] sm:$0xff]
        %v4923 = vld [vmem:[%s4 + $0xc8] sm:$0xff]
        %v4924 = vld [vmem:[%s4 + $0xd0] sm:$0xff]
        %v4925 = vld [vmem:[%s4 + $0xd8] sm:$0xff]
        %v4926 = vld [vmem:[%s4 + $0xe0] sm:$0xff]
        %v4927 = vld [vmem:[%s4 + $0xe8] sm:$0xff]
        %v4928 = vld [vmem:[%s4 + $0xf0] sm:$0xff]
        %v4929 = vld [vmem:[%s4 + $0xf8] sm:$0xff]
        %v4930 = vld [vmem:[%s4 + $0x100] sm:$0xff]
        %v4931 = vld [vmem:[%s4 + $0x108] sm:$0xff]
        %v4932 = vld [vmem:[%s4 + $0x110] sm:$0xff]
        %v4933 = vld [vmem:[%s4 + $0x118] sm:$0xff]
        %v4934 = vld [vmem:[%s4 + $0x120] sm:$0xff]
        %v4935 = vld [vmem:[%s4 + $0x128] sm:$0xff]
        %v4936 = vld [vmem:[%s4 + $0x130] sm:$0xff]
        %v4937 = vld [vmem:[%s4 + $0x138] sm:$0xff]
        %v4938 = vld [vmem:[%s4 + $0x140] sm:$0xff]
        %v4939 = vld [vmem:[%s4 + $0x148] sm:$0xff]
        %v4940 = vld [vmem:[%s4 + $0x150] sm:$0xff]
        %v4941 = vld [vmem:[%s4 + $0x158] sm:$0xff]
        %v4942 = vld [vmem:[%s4 + $0x160] sm:$0xff]
        %v4943 = vld [vmem:[%s4 + $0x168] sm:$0xff]
        %v4944 = vld [vmem:[%s4 + $0x170] sm:$0xff]
        %v4945 = vld [vmem:[%s4 + $0x178] sm:$0xff]
        %v4946 = vld [vmem:[%s4 + $0x180] sm:$0xff]
        %v4947 = vld [vmem:[%s4 + $0x188] sm:$0xff]
        %v4948 = vld [vmem:[%s4 + $0x190] sm:$0xff]
        %v4949 = vld [vmem:[%s4 + $0x198] sm:$0xff]
        %v4950 = vld [vmem:[%s4 + $0x1a0] sm:$0xff]
        %v4951 = vld [vmem:[%s4 + $0x1a8] sm:$0xff]
        %v4952 = vld [vmem:[%s4 + $0x1b0] sm:$0xff]
        %v4953 = vld [vmem:[%s4 + $0x1b8] sm:$0xff]
        %v4954 = vld [vmem:[%s4 + $0x1c0] sm:$0xff]
        %v4955 = vld [vmem:[%s4 + $0x1c8] sm:$0xff]
        %v4956 = vld [vmem:[%s4 + $0x1d0] sm:$0xff]
        %v4957 = vld [vmem:[%s4 + $0x1d8] sm:$0xff]
        %v4958 = vld [vmem:[%s4 + $0x1e0] sm:$0xff]
        %v4959 = vld [vmem:[%s4 + $0x1e8] sm:$0xff]
        %v4960 = vld [vmem:[%s4 + $0x1f0] sm:$0xff]
        %v4961 = vld [vmem:[%s4 + $0x1f8] sm:$0xff]
        %v4962 = vld [vmem:[%s4 + $0x200] sm:$0xff]
        %v4963 = vld [vmem:[%s4 + $0x208] sm:$0xff]
        %v4964 = vld [vmem:[%s4 + $0x210] sm:$0xff]
        %v4965 = vld [vmem:[%s4 + $0x218] sm:$0xff]
        %v4966 = vld [vmem:[%s4 + $0x220] sm:$0xff]
        %v4967 = vld [vmem:[%s4 + $0x228] sm:$0xff]
        %v4968 = vld [vmem:[%s4 + $0x230] sm:$0xff]
        %v4969 = vld [vmem:[%s4 + $0x238] sm:$0xff]
        %v4971 = vsel %vm1774, %v4812, 0
        %v4974 = vsel %vm1774, %v4817, 0
        %v4977 = vsel %vm1774, %v4822, 0
        %v4980 = vsel %vm1774, %v4827, 0
        %v4983 = vsel %vm1774, %v4832, 0
        %v4986 = vsel %vm1774, %v4837, 0
        %v4989 = vsel %vm1774, %v4842, 0
        %v4992 = vsel %vm1774, %v4847, 0
        %v4995 = vsel %vm1774, %v4852, 0
        %v4998 = vsel %vm1774, %v4857, 0
        %v5001 = vsel %vm1774, %v4862, 0
        %v5004 = vsel %vm1774, %v4867, 0
        %v5007 = vsel %vm1774, %v4872, 0
        %v5010 = vsel %vm1774, %v4877, 0
        %v5013 = vsel %vm1774, %v4882, 0
        %v5016 = vsel %vm1774, %v4887, 0
        %v5019 = vsel %vm1774, %v4892, 0
        %v5022 = vsel %vm1774, %v4897, 0
        %5024 = vmatprep.subr.mxu0 0.0
        %5025 = vmatpush1.msra.mxu0 %v4913
        %5026 = vmatprep.subr.mxu0 0.0
        %5027 = vmatpush1.msra.mxu0 %v4912
        %5028 = vmatprep.subr.mxu0 0.0
        %5029 = vmatpush1.msra.mxu0 %v4911
        %5030 = vmatprep.subr.mxu0 0.0
        %5031 = vmatpush1.msra.mxu0 %v4910
        %5032 = vmatprep.subr.mxu0 0.0
        %5033 = vmatpush1.msra.mxu0 %v4909
        %5034 = vmatprep.subr.mxu0 0.0
        %5035 = vmatpush1.msra.mxu0 %v4908
        %5036 = vmatprep.subr.mxu0 0.0
        %5037 = vmatpush1.msra.mxu0 %v4907
        %5038 = vmatprep.subr.mxu0 0.0
        %5039 = vmatpush1.msra.mxu0 %v4906
        %5040 = vmatprep.subr.mxu0 0.0
        %5041 = vmatpush1.msra.mxu0 %v4905
        %5042 = vmatprep.subr.mxu0 0.0
        %5043 = vmatpush1.msra.mxu0 %v4904
        %5044 = vmatprep.subr.mxu0 0.0
        %5045 = vmatpush1.msra.mxu0 %v4903
        %5046 = vmatprep.subr.mxu0 0.0
        %5047 = vmatpush1.msra.mxu0 %v4902
        %5048 = vmatprep.subr.mxu0 0.0
        %5049 = vmatpush1.msra.mxu0 %v4901
        %5050 = vmatprep.subr.mxu0 0.0
        %5051 = vmatpush1.msra.mxu0 %v4900
        %5052 = vmatprep.subr.mxu0 0.0
        %5053 = vmatpush1.msra.mxu0 %v4899
        %5054 = vmatprep.subr.mxu0 0.0
        %5055 = vmatpush1.msra.mxu0 %v4898
        %5056 = vmatprep.subr.mxu0 0.0
        %5057 = vmatpush2.msra.mxu0 %v4929
        %5058 = vmatprep.subr.mxu0 0.0
        %5059 = vmatpush2.msra.mxu0 %v4928
        %5060 = vmatprep.subr.mxu0 0.0
        %5061 = vmatpush2.msra.mxu0 %v4927
        %5062 = vmatprep.subr.mxu0 0.0
        %5063 = vmatpush2.msra.mxu0 %v4926
        %5064 = vmatprep.subr.mxu0 0.0
        %5065 = vmatpush2.msra.mxu0 %v4925
        %5066 = vmatprep.subr.mxu0 0.0
        %5067 = vmatpush2.msra.mxu0 %v4924
        %5068 = vmatprep.subr.mxu0 0.0
        %5069 = vmatpush2.msra.mxu0 %v4923
        %5070 = vmatprep.subr.mxu0 0.0
        %5071 = vmatpush2.msra.mxu0 %v4922
        %5072 = vmatprep.subr.mxu0 0.0
        %5073 = vmatpush2.msra.mxu0 %v4921
        %5074 = vmatprep.subr.mxu0 0.0
        %5075 = vmatpush2.msra.mxu0 %v4920
        %5076 = vmatprep.subr.mxu0 0.0
        %5077 = vmatpush2.msra.mxu0 %v4919
        %5078 = vmatprep.subr.mxu0 0.0
        %5079 = vmatpush2.msra.mxu0 %v4918
        %5080 = vmatprep.subr.mxu0 0.0
        %5081 = vmatpush2.msra.mxu0 %v4917
        %5082 = vmatprep.subr.mxu0 0.0
        %5083 = vmatpush2.msra.mxu0 %v4916
        %5084 = vmatprep.subr.mxu0 0.0
        %5085 = vmatpush2.msra.mxu0 %v4915
        %5086 = vmatprep.subr.mxu0 0.0
        %5087 = vmatpush2.msra.mxu0 %v4914
        %5088 = vmatprep.mubr.f32.mxu0 %v4809
        %5089 = vmatmul.mubr.f32.gmra.mxu0 %v4808
        %v5090 = vpop.f32.mrf.mxu0
        %v5091 = vadd.f32 0.0, %v5090
        %v5092 = vpop.f32.mrf.mxu0
        %5093 = vmatprep.mubr.f32.mxu0 %v4814
        %5094 = vmatmul.mubr.f32.gmra.mxu0 %v4813
        %v5095 = vpop.f32.mrf.mxu0
        %v5096 = vadd.f32 0.0, %v5095
        %v5097 = vpop.f32.mrf.mxu0
        %5098 = vmatprep.mubr.f32.mxu0 %v4819
        %5099 = vmatmul.mubr.f32.gmra.mxu0 %v4818
        %v5100 = vpop.f32.mrf.mxu0
        %v5101 = vadd.f32 0.0, %v5100
        %v5102 = vpop.f32.mrf.mxu0
        %5103 = vmatprep.mubr.f32.mxu0 %v4824
        %5104 = vmatmul.mubr.f32.gmra.mxu0 %v4823
        %v5105 = vpop.f32.mrf.mxu0
        %v5106 = vadd.f32 0.0, %v5105
        %v5107 = vpop.f32.mrf.mxu0
        %5108 = vmatprep.mubr.f32.mxu0 %v4829
        %5109 = vmatmul.mubr.f32.gmra.mxu0 %v4828
        %v5110 = vpop.f32.mrf.mxu0
        %v5111 = vadd.f32 0.0, %v5110
        %v5112 = vpop.f32.mrf.mxu0
        %5113 = vmatprep.mubr.f32.mxu0 %v4834
        %5114 = vmatmul.mubr.f32.gmra.mxu0 %v4833
        %v5115 = vpop.f32.mrf.mxu0
        %v5116 = vadd.f32 0.0, %v5115
        %v5117 = vpop.f32.mrf.mxu0
        %5118 = vmatprep.mubr.f32.mxu0 %v4839
        %5119 = vmatmul.mubr.f32.gmra.mxu0 %v4838
        %v5120 = vpop.f32.mrf.mxu0
        %v5121 = vadd.f32 0.0, %v5120
        %v5122 = vpop.f32.mrf.mxu0
        %5123 = vmatprep.mubr.f32.mxu0 %v4844
        %5124 = vmatmul.mubr.f32.gmra.mxu0 %v4843
        %v5125 = vpop.f32.mrf.mxu0
        %v5126 = vadd.f32 0.0, %v5125
        %v5127 = vpop.f32.mrf.mxu0
        %5128 = vmatprep.mubr.f32.mxu0 %v4849
        %5129 = vmatmul.mubr.f32.gmra.mxu0 %v4848
        %v5130 = vpop.f32.mrf.mxu0
        %v5131 = vadd.f32 0.0, %v5130
        %v5132 = vpop.f32.mrf.mxu0
        %5133 = vmatprep.mubr.f32.mxu0 %v4854
        %5134 = vmatmul.mubr.f32.gmra.mxu0 %v4853
        %v5135 = vpop.f32.mrf.mxu0
        %v5136 = vadd.f32 0.0, %v5135
        %v5137 = vpop.f32.mrf.mxu0
        %5138 = vmatprep.mubr.f32.mxu0 %v4859
        %5139 = vmatmul.mubr.f32.gmra.mxu0 %v4858
        %v5140 = vpop.f32.mrf.mxu0
        %v5141 = vadd.f32 0.0, %v5140
        %v5142 = vpop.f32.mrf.mxu0
        %5143 = vmatprep.mubr.f32.mxu0 %v4864
        %5144 = vmatmul.mubr.f32.gmra.mxu0 %v4863
        %v5145 = vpop.f32.mrf.mxu0
        %v5146 = vadd.f32 0.0, %v5145
        %v5147 = vpop.f32.mrf.mxu0
        %5148 = vmatprep.mubr.f32.mxu0 %v4869
        %5149 = vmatmul.mubr.f32.gmra.mxu0 %v4868
        %v5150 = vpop.f32.mrf.mxu0
        %v5151 = vadd.f32 0.0, %v5150
        %v5152 = vpop.f32.mrf.mxu0
        %5153 = vmatprep.mubr.f32.mxu0 %v4874
        %5154 = vmatmul.mubr.f32.gmra.mxu0 %v4873
        %v5155 = vpop.f32.mrf.mxu0
        %v5156 = vadd.f32 0.0, %v5155
        %v5157 = vpop.f32.mrf.mxu0
        %5158 = vmatprep.mubr.f32.mxu0 %v4879
        %5159 = vmatmul.mubr.f32.gmra.mxu0 %v4878
        %v5160 = vpop.f32.mrf.mxu0
        %v5161 = vadd.f32 0.0, %v5160
        %v5162 = vpop.f32.mrf.mxu0
        %5163 = vmatprep.mubr.f32.mxu0 %v4884
        %5164 = vmatmul.mubr.f32.gmra.mxu0 %v4883
        %v5165 = vpop.f32.mrf.mxu0
        %v5166 = vadd.f32 0.0, %v5165
        %v5167 = vpop.f32.mrf.mxu0
        %5168 = vmatprep.mubr.f32.mxu0 %v4889
        %5169 = vmatmul.mubr.f32.gmra.mxu0 %v4888
        %v5170 = vpop.f32.mrf.mxu0
        %v5171 = vadd.f32 0.0, %v5170
        %v5172 = vpop.f32.mrf.mxu0
        %5173 = vmatprep.mubr.f32.mxu0 %v4894
        %5174 = vmatmul.mubr.f32.gmra.mxu0 %v4893
        %v5175 = vpop.f32.mrf.mxu0
        %v5176 = vadd.f32 0.0, %v5175
        %v5177 = vpop.f32.mrf.mxu0
        %5178 = vdwg.mxu0
        %5179 = vmatprep.subr.mxu0 0.0
        %5180 = vmatpush1.msra.mxu0 %v4945
        %5181 = vmatprep.subr.mxu0 0.0
        %5182 = vmatpush1.msra.mxu0 %v4944
        %5183 = vmatprep.subr.mxu0 0.0
        %5184 = vmatpush1.msra.mxu0 %v4943
        %5185 = vmatprep.subr.mxu0 0.0
        %5186 = vmatpush1.msra.mxu0 %v4942
        %5187 = vmatprep.subr.mxu0 0.0
        %5188 = vmatpush1.msra.mxu0 %v4941
        %5189 = vmatprep.subr.mxu0 0.0
        %5190 = vmatpush1.msra.mxu0 %v4940
        %5191 = vmatprep.subr.mxu0 0.0
        %5192 = vmatpush1.msra.mxu0 %v4939
        %5193 = vmatprep.subr.mxu0 0.0
        %5194 = vmatpush1.msra.mxu0 %v4938
        %5195 = vmatprep.subr.mxu0 0.0
        %5196 = vmatpush1.msra.mxu0 %v4937
        %5197 = vmatprep.subr.mxu0 0.0
        %5198 = vmatpush1.msra.mxu0 %v4936
        %5199 = vmatprep.subr.mxu0 0.0
        %5200 = vmatpush1.msra.mxu0 %v4935
        %5201 = vmatprep.subr.mxu0 0.0
        %5202 = vmatpush1.msra.mxu0 %v4934
        %5203 = vmatprep.subr.mxu0 0.0
        %5204 = vmatpush1.msra.mxu0 %v4933
        %5205 = vmatprep.subr.mxu0 0.0
        %5206 = vmatpush1.msra.mxu0 %v4932
        %5207 = vmatprep.subr.mxu0 0.0
        %5208 = vmatpush1.msra.mxu0 %v4931
        %5209 = vmatprep.subr.mxu0 0.0
        %5210 = vmatpush1.msra.mxu0 %v4930
        %5211 = vmatprep.subr.mxu0 0.0
        %5212 = vmatpush2.msra.mxu0 %v4961
        %5213 = vmatprep.subr.mxu0 0.0
        %5214 = vmatpush2.msra.mxu0 %v4960
        %5215 = vmatprep.subr.mxu0 0.0
        %5216 = vmatpush2.msra.mxu0 %v4959
        %5217 = vmatprep.subr.mxu0 0.0
        %5218 = vmatpush2.msra.mxu0 %v4958
        %5219 = vmatprep.subr.mxu0 0.0
        %5220 = vmatpush2.msra.mxu0 %v4957
        %5221 = vmatprep.subr.mxu0 0.0
        %5222 = vmatpush2.msra.mxu0 %v4956
        %5223 = vmatprep.subr.mxu0 0.0
        %5224 = vmatpush2.msra.mxu0 %v4955
        %5225 = vmatprep.subr.mxu0 0.0
        %5226 = vmatpush2.msra.mxu0 %v4954
        %5227 = vmatprep.subr.mxu0 0.0
        %5228 = vmatpush2.msra.mxu0 %v4953
        %5229 = vmatprep.subr.mxu0 0.0
        %5230 = vmatpush2.msra.mxu0 %v4952
        %5231 = vmatprep.subr.mxu0 0.0
        %5232 = vmatpush2.msra.mxu0 %v4951
        %5233 = vmatprep.subr.mxu0 0.0
        %5234 = vmatpush2.msra.mxu0 %v4950
        %5235 = vmatprep.subr.mxu0 0.0
        %5236 = vmatpush2.msra.mxu0 %v4949
        %5237 = vmatprep.subr.mxu0 0.0
        %5238 = vmatpush2.msra.mxu0 %v4948
        %5239 = vmatprep.subr.mxu0 0.0
        %5240 = vmatpush2.msra.mxu0 %v4947
        %5241 = vmatprep.subr.mxu0 0.0
        %5242 = vmatpush2.msra.mxu0 %v4946
        %5243 = vmatprep.mubr.f32.mxu0 %v4811
        %5244 = vmatmul.mubr.f32.gmra.mxu0 %v4810
        %v5245 = vpop.f32.mrf.mxu0
        %v5246 = vadd.f32 %v5091, %v5245
        %v5247 = vpop.f32.mrf.mxu0
        %5248 = vmatprep.mubr.f32.mxu0 %v4816
        %5249 = vmatmul.mubr.f32.gmra.mxu0 %v4815
        %v5250 = vpop.f32.mrf.mxu0
        %v5251 = vadd.f32 %v5096, %v5250
        %v5252 = vpop.f32.mrf.mxu0
        %5253 = vmatprep.mubr.f32.mxu0 %v4821
        %5254 = vmatmul.mubr.f32.gmra.mxu0 %v4820
        %v5255 = vpop.f32.mrf.mxu0
        %v5256 = vadd.f32 %v5101, %v5255
        %v5257 = vpop.f32.mrf.mxu0
        %5258 = vmatprep.mubr.f32.mxu0 %v4826
        %5259 = vmatmul.mubr.f32.gmra.mxu0 %v4825
        %v5260 = vpop.f32.mrf.mxu0
        %v5261 = vadd.f32 %v5106, %v5260
        %v5262 = vpop.f32.mrf.mxu0
        %5263 = vmatprep.mubr.f32.mxu0 %v4831
        %5264 = vmatmul.mubr.f32.gmra.mxu0 %v4830
        %v5265 = vpop.f32.mrf.mxu0
        %v5266 = vadd.f32 %v5111, %v5265
        %v5267 = vpop.f32.mrf.mxu0
        %5268 = vmatprep.mubr.f32.mxu0 %v4836
        %5269 = vmatmul.mubr.f32.gmra.mxu0 %v4835
        %v5270 = vpop.f32.mrf.mxu0
        %v5271 = vadd.f32 %v5116, %v5270
        %v5272 = vpop.f32.mrf.mxu0
        %5273 = vmatprep.mubr.f32.mxu0 %v4841
        %5274 = vmatmul.mubr.f32.gmra.mxu0 %v4840
        %v5275 = vpop.f32.mrf.mxu0
        %v5276 = vadd.f32 %v5121, %v5275
        %v5277 = vpop.f32.mrf.mxu0
        %5278 = vmatprep.mubr.f32.mxu0 %v4846
        %5279 = vmatmul.mubr.f32.gmra.mxu0 %v4845
        %v5280 = vpop.f32.mrf.mxu0
        %v5281 = vadd.f32 %v5126, %v5280
        %v5282 = vpop.f32.mrf.mxu0
        %5283 = vmatprep.mubr.f32.mxu0 %v4851
        %5284 = vmatmul.mubr.f32.gmra.mxu0 %v4850
        %v5285 = vpop.f32.mrf.mxu0
        %v5286 = vadd.f32 %v5131, %v5285
        %v5287 = vpop.f32.mrf.mxu0
        %5288 = vmatprep.mubr.f32.mxu0 %v4856
        %5289 = vmatmul.mubr.f32.gmra.mxu0 %v4855
        %v5290 = vpop.f32.mrf.mxu0
        %v5291 = vadd.f32 %v5136, %v5290
        %v5292 = vpop.f32.mrf.mxu0
        %5293 = vmatprep.mubr.f32.mxu0 %v4861
        %5294 = vmatmul.mubr.f32.gmra.mxu0 %v4860
        %v5295 = vpop.f32.mrf.mxu0
        %v5296 = vadd.f32 %v5141, %v5295
        %v5297 = vpop.f32.mrf.mxu0
        %5298 = vmatprep.mubr.f32.mxu0 %v4866
        %5299 = vmatmul.mubr.f32.gmra.mxu0 %v4865
        %v5300 = vpop.f32.mrf.mxu0
        %v5301 = vadd.f32 %v5146, %v5300
        %v5302 = vpop.f32.mrf.mxu0
        %5303 = vmatprep.mubr.f32.mxu0 %v4871
        %5304 = vmatmul.mubr.f32.gmra.mxu0 %v4870
        %v5305 = vpop.f32.mrf.mxu0
        %v5306 = vadd.f32 %v5151, %v5305
        %v5307 = vpop.f32.mrf.mxu0
        %5308 = vmatprep.mubr.f32.mxu0 %v4876
        %5309 = vmatmul.mubr.f32.gmra.mxu0 %v4875
        %v5310 = vpop.f32.mrf.mxu0
        %v5311 = vadd.f32 %v5156, %v5310
        %v5312 = vpop.f32.mrf.mxu0
        %5313 = vmatprep.mubr.f32.mxu0 %v4881
        %5314 = vmatmul.mubr.f32.gmra.mxu0 %v4880
        %v5315 = vpop.f32.mrf.mxu0
        %v5316 = vadd.f32 %v5161, %v5315
        %v5317 = vpop.f32.mrf.mxu0
        %5318 = vmatprep.mubr.f32.mxu0 %v4886
        %5319 = vmatmul.mubr.f32.gmra.mxu0 %v4885
        %v5320 = vpop.f32.mrf.mxu0
        %v5321 = vadd.f32 %v5166, %v5320
        %v5322 = vpop.f32.mrf.mxu0
        %5323 = vmatprep.mubr.f32.mxu0 %v4891
        %5324 = vmatmul.mubr.f32.gmra.mxu0 %v4890
        %v5325 = vpop.f32.mrf.mxu0
        %v5326 = vadd.f32 %v5171, %v5325
        %v5327 = vpop.f32.mrf.mxu0
        %5328 = vmatprep.mubr.f32.mxu0 %v4896
        %5329 = vmatmul.mubr.f32.gmra.mxu0 %v4895
        %v5330 = vpop.f32.mrf.mxu0
        %v5331 = vadd.f32 %v5176, %v5330
        %v5332 = vpop.f32.mrf.mxu0
        %5333 = vdwg.mxu0
        %5334 = vmatprep.subr.mxu0 0.0
        %5335 = vmatpush1.msra.mxu0 0.0
        %5336 = vmatprep.subr.mxu0 0.0
        %5337 = vmatpush1.msra.mxu0 0.0
        %5338 = vmatprep.subr.mxu0 0.0
        %5339 = vmatpush1.msra.mxu0 0.0
        %5340 = vmatprep.subr.mxu0 0.0
        %5341 = vmatpush1.msra.mxu0 0.0
        %5342 = vmatprep.subr.mxu0 0.0
        %5343 = vmatpush1.msra.mxu0 0.0
        %5344 = vmatprep.subr.mxu0 0.0
        %5345 = vmatpush1.msra.mxu0 0.0
        %5346 = vmatprep.subr.mxu0 0.0
        %5347 = vmatpush1.msra.mxu0 0.0
        %5348 = vmatprep.subr.mxu0 0.0
        %5349 = vmatpush1.msra.mxu0 0.0
        %5350 = vmatprep.subr.mxu0 0.0
        %5351 = vmatpush1.msra.mxu0 %v4969
        %5352 = vmatprep.subr.mxu0 0.0
        %5353 = vmatpush1.msra.mxu0 %v4968
        %5354 = vmatprep.subr.mxu0 0.0
        %5355 = vmatpush1.msra.mxu0 %v4967
        %5356 = vmatprep.subr.mxu0 0.0
        %5357 = vmatpush1.msra.mxu0 %v4966
        %5358 = vmatprep.subr.mxu0 0.0
        %5359 = vmatpush1.msra.mxu0 %v4965
        %5360 = vmatprep.subr.mxu0 0.0
        %5361 = vmatpush1.msra.mxu0 %v4964
        %5362 = vmatprep.subr.mxu0 0.0
        %5363 = vmatpush1.msra.mxu0 %v4963
        %5364 = vmatprep.subr.mxu0 0.0
        %5365 = vmatpush1.msra.mxu0 %v4962
        %5366 = vmatprep.subr.mxu0 0.0
        %5367 = vmatpush2.msra.mxu0 0.0
        %5368 = vmatprep.subr.mxu0 0.0
        %5369 = vmatpush2.msra.mxu0 0.0
        %5370 = vmatprep.subr.mxu0 0.0
        %5371 = vmatpush2.msra.mxu0 0.0
        %5372 = vmatprep.subr.mxu0 0.0
        %5373 = vmatpush2.msra.mxu0 0.0
        %5374 = vmatprep.subr.mxu0 0.0
        %5375 = vmatpush2.msra.mxu0 0.0
        %5376 = vmatprep.subr.mxu0 0.0
        %5377 = vmatpush2.msra.mxu0 0.0
        %5378 = vmatprep.subr.mxu0 0.0
        %5379 = vmatpush2.msra.mxu0 0.0
        %5380 = vmatprep.subr.mxu0 0.0
        %5381 = vmatpush2.msra.mxu0 0.0
        %5382 = vmatprep.subr.mxu0 0.0
        %5383 = vmatpush2.msra.mxu0 0.0
        %5384 = vmatprep.subr.mxu0 0.0
        %5385 = vmatpush2.msra.mxu0 0.0
        %5386 = vmatprep.subr.mxu0 0.0
        %5387 = vmatpush2.msra.mxu0 0.0
        %5388 = vmatprep.subr.mxu0 0.0
        %5389 = vmatpush2.msra.mxu0 0.0
        %5390 = vmatprep.subr.mxu0 0.0
        %5391 = vmatpush2.msra.mxu0 0.0
        %5392 = vmatprep.subr.mxu0 0.0
        %5393 = vmatpush2.msra.mxu0 0.0
        %5394 = vmatprep.subr.mxu0 0.0
        %5395 = vmatpush2.msra.mxu0 0.0
        %5396 = vmatprep.subr.mxu0 0.0
        %5397 = vmatpush2.msra.mxu0 0.0
        %5398 = vmatprep.mubr.f32.mxu0 0.0
        %5399 = vmatmul.mubr.f32.gmra.mxu0 %v4971
        %v5400 = vpop.f32.mrf.mxu0
        %v5401 = vadd.f32 %v5246, %v5400
        %v5402 = vpop.f32.mrf.mxu0
        %5403 = vmatprep.mubr.f32.mxu0 0.0
        %5404 = vmatmul.mubr.f32.gmra.mxu0 %v4974
        %v5405 = vpop.f32.mrf.mxu0
        %v5406 = vadd.f32 %v5251, %v5405
        %v5407 = vpop.f32.mrf.mxu0
        %5408 = vmatprep.mubr.f32.mxu0 0.0
        %5409 = vmatmul.mubr.f32.gmra.mxu0 %v4977
        %v5410 = vpop.f32.mrf.mxu0
        %v5411 = vadd.f32 %v5256, %v5410
        %v5412 = vpop.f32.mrf.mxu0
        %5413 = vmatprep.mubr.f32.mxu0 0.0
        %5414 = vmatmul.mubr.f32.gmra.mxu0 %v4980
        %v5415 = vpop.f32.mrf.mxu0
        %v5416 = vadd.f32 %v5261, %v5415
        %v5417 = vpop.f32.mrf.mxu0
        %5418 = vmatprep.mubr.f32.mxu0 0.0
        %5419 = vmatmul.mubr.f32.gmra.mxu0 %v4983
        %v5420 = vpop.f32.mrf.mxu0
        %v5421 = vadd.f32 %v5266, %v5420
        %v5422 = vpop.f32.mrf.mxu0
        %5423 = vmatprep.mubr.f32.mxu0 0.0
        %5424 = vmatmul.mubr.f32.gmra.mxu0 %v4986
        %v5425 = vpop.f32.mrf.mxu0
        %v5426 = vadd.f32 %v5271, %v5425
        %v5427 = vpop.f32.mrf.mxu0
        %5428 = vmatprep.mubr.f32.mxu0 0.0
        %5429 = vmatmul.mubr.f32.gmra.mxu0 %v4989
        %v5430 = vpop.f32.mrf.mxu0
        %v5431 = vadd.f32 %v5276, %v5430
        %v5432 = vpop.f32.mrf.mxu0
        %5433 = vmatprep.mubr.f32.mxu0 0.0
        %5434 = vmatmul.mubr.f32.gmra.mxu0 %v4992
        %v5435 = vpop.f32.mrf.mxu0
        %v5436 = vadd.f32 %v5281, %v5435
        %v5437 = vpop.f32.mrf.mxu0
        %5438 = vmatprep.mubr.f32.mxu0 0.0
        %5439 = vmatmul.mubr.f32.gmra.mxu0 %v4995
        %v5440 = vpop.f32.mrf.mxu0
        %v5441 = vadd.f32 %v5286, %v5440
        %v5442 = vpop.f32.mrf.mxu0
        %5443 = vmatprep.mubr.f32.mxu0 0.0
        %5444 = vmatmul.mubr.f32.gmra.mxu0 %v4998
        %v5445 = vpop.f32.mrf.mxu0
        %v5446 = vadd.f32 %v5291, %v5445
        %v5447 = vpop.f32.mrf.mxu0
        %5448 = vmatprep.mubr.f32.mxu0 0.0
        %5449 = vmatmul.mubr.f32.gmra.mxu0 %v5001
        %v5450 = vpop.f32.mrf.mxu0
        %v5451 = vadd.f32 %v5296, %v5450
        %v5452 = vpop.f32.mrf.mxu0
        %5453 = vmatprep.mubr.f32.mxu0 0.0
        %5454 = vmatmul.mubr.f32.gmra.mxu0 %v5004
        %v5455 = vpop.f32.mrf.mxu0
        %v5456 = vadd.f32 %v5301, %v5455
        %v5457 = vpop.f32.mrf.mxu0
        %5458 = vmatprep.mubr.f32.mxu0 0.0
        %5459 = vmatmul.mubr.f32.gmra.mxu0 %v5007
        %v5460 = vpop.f32.mrf.mxu0
        %v5461 = vadd.f32 %v5306, %v5460
        %v5462 = vpop.f32.mrf.mxu0
        %5463 = vmatprep.mubr.f32.mxu0 0.0
        %5464 = vmatmul.mubr.f32.gmra.mxu0 %v5010
        %v5465 = vpop.f32.mrf.mxu0
        %v5466 = vadd.f32 %v5311, %v5465
        %v5467 = vpop.f32.mrf.mxu0
        %5468 = vmatprep.mubr.f32.mxu0 0.0
        %5469 = vmatmul.mubr.f32.gmra.mxu0 %v5013
        %v5470 = vpop.f32.mrf.mxu0
        %v5471 = vadd.f32 %v5316, %v5470
        %v5472 = vpop.f32.mrf.mxu0
        %5473 = vmatprep.mubr.f32.mxu0 0.0
        %5474 = vmatmul.mubr.f32.gmra.mxu0 %v5016
        %v5475 = vpop.f32.mrf.mxu0
        %v5476 = vadd.f32 %v5321, %v5475
        %v5477 = vpop.f32.mrf.mxu0
        %5478 = vmatprep.mubr.f32.mxu0 0.0
        %5479 = vmatmul.mubr.f32.gmra.mxu0 %v5019
        %v5480 = vpop.f32.mrf.mxu0
        %v5481 = vadd.f32 %v5326, %v5480
        %v5482 = vpop.f32.mrf.mxu0
        %5483 = vmatprep.mubr.f32.mxu0 0.0
        %5484 = vmatmul.mubr.f32.gmra.mxu0 %v5022
        %v5485 = vpop.f32.mrf.mxu0
        %v5486 = vadd.f32 %v5331, %v5485
        %v5487 = vpop.f32.mrf.mxu0
        %5488 = vdwg.mxu0
        %v5489 = vld [vmem:[%s5] sm:$0x1]
        %v5491 = vlaneseq
        %v5492 = vshrl.u32 %v5491, 7
        %v5493 = vsub.s32 0, %v5492
        %v5494 = vrot.slane %v5489, %v5493
        %v5496 = vmul.f32 %v5401, %v5494
        %v5497 = vmul.f32 %v5406, %v5494
        %v5498 = vmul.f32 %v5411, %v5494
        %v5499 = vmul.f32 %v5416, %v5494
        %v5500 = vmul.f32 %v5421, %v5494
        %v5501 = vmul.f32 %v5426, %v5494
        %v5502 = vmul.f32 %v5431, %v5494
        %v5503 = vmul.f32 %v5436, %v5494
        %v5504 = vmul.f32 %v5441, %v5494
        %v5505 = vmul.f32 %v5446, %v5494
        %v5506 = vmul.f32 %v5451, %v5494
        %v5507 = vmul.f32 %v5456, %v5494
        %v5508 = vmul.f32 %v5461, %v5494
        %v5509 = vmul.f32 %v5466, %v5494
        %v5510 = vmul.f32 %v5471, %v5494
        %v5511 = vmul.f32 %v5476, %v5494
        %v5512 = vmul.f32 %v5481, %v5494
        %v5513 = vmul.f32 %v5486, %v5494
        %v5514 = vld [vmem:[%s6] sm:$0x1]
        %v5516 = vlaneseq
        %v5517 = vshrl.u32 %v5516, 7
        %v5518 = vsub.s32 0, %v5517
        %v5519 = vrot.slane %v5514, %v5518
        %v5521 = vadd.f32 %v5496, %v5519
        %v5522 = vadd.f32 %v5497, %v5519
        %v5523 = vadd.f32 %v5498, %v5519
        %v5524 = vadd.f32 %v5499, %v5519
        %v5525 = vadd.f32 %v5500, %v5519
        %v5526 = vadd.f32 %v5501, %v5519
        %v5527 = vadd.f32 %v5502, %v5519
        %v5528 = vadd.f32 %v5503, %v5519
        %v5529 = vadd.f32 %v5504, %v5519
        %v5530 = vadd.f32 %v5505, %v5519
        %v5531 = vadd.f32 %v5506, %v5519
        %v5532 = vadd.f32 %v5507, %v5519
        %v5533 = vadd.f32 %v5508, %v5519
        %v5534 = vadd.f32 %v5509, %v5519
        %v5535 = vadd.f32 %v5510, %v5519
        %v5536 = vadd.f32 %v5511, %v5519
        %v5537 = vadd.f32 %v5512, %v5519
        %v5538 = vadd.f32 %v5513, %v5519
        %v5539 = vmax.f32 %v5521, 0.0
        %v5540 = vmax.f32 %v5522, 0.0
        %v5541 = vmax.f32 %v5523, 0.0
        %v5542 = vmax.f32 %v5524, 0.0
        %v5543 = vmax.f32 %v5525, 0.0
        %v5544 = vmax.f32 %v5526, 0.0
        %v5545 = vmax.f32 %v5527, 0.0
        %v5546 = vmax.f32 %v5528, 0.0
        %v5547 = vmax.f32 %v5529, 0.0
        %v5548 = vmax.f32 %v5530, 0.0
        %v5549 = vmax.f32 %v5531, 0.0
        %v5550 = vmax.f32 %v5532, 0.0
        %v5551 = vmax.f32 %v5533, 0.0
        %v5552 = vmax.f32 %v5534, 0.0
        %v5553 = vmax.f32 %v5535, 0.0
        %v5554 = vmax.f32 %v5536, 0.0
        %v5555 = vmax.f32 %v5537, 0.0
        %v5556 = vmax.f32 %v5538, 0.0
        %5557 = vst [vmem:[#allocation5] sm:$0xff] %v5539
        %5558 = vst [vmem:[#allocation5 + $0x8] sm:$0xff] %v5540
        %5559 = vst [vmem:[#allocation5 + $0x10] sm:$0xff] %v5541
        %5560 = vst [vmem:[#allocation5 + $0x18] sm:$0xff] %v5542
        %5561 = vst [vmem:[#allocation5 + $0x20] sm:$0xff] %v5543
        %5562 = vst [vmem:[#allocation5 + $0x28] sm:$0xff] %v5544
        %5563 = vst [vmem:[#allocation5 + $0x30] sm:$0xff] %v5545
        %5564 = vst [vmem:[#allocation5 + $0x38] sm:$0xff] %v5546
        %5565 = vst [vmem:[#allocation5 + $0x40] sm:$0xff] %v5547
        %5566 = vst [vmem:[#allocation5 + $0x48] sm:$0xff] %v5548
        %5567 = vst [vmem:[#allocation5 + $0x50] sm:$0xff] %v5549
        %5568 = vst [vmem:[#allocation5 + $0x58] sm:$0xff] %v5550
        %5569 = vst [vmem:[#allocation5 + $0x60] sm:$0xff] %v5551
        %5570 = vst [vmem:[#allocation5 + $0x68] sm:$0xff] %v5552
        %5571 = vst [vmem:[#allocation5 + $0x70] sm:$0xff] %v5553
        %5572 = vst [vmem:[#allocation5 + $0x78] sm:$0xff] %v5554
        %5573 = vst [vmem:[#allocation5 + $0x80] sm:$0xff] %v5555
        %5574 = vst [vmem:[#allocation5 + $0x88] sm:$0xff] %v5556
        %v5575 = vld [vmem:[#allocation5] sm:$0xff]
        %v5576 = vld [vmem:[#allocation5 + $0x8] sm:$0xf]
        %v5577 = vld [vmem:[#allocation5 + $0xc] sm:$0xff]
        %v5578 = vld [vmem:[#allocation5 + $0x14] sm:$0xf]
        %v5579 = vld [vmem:[#allocation5 + $0x18] sm:$0xff]
        %v5580 = vld [vmem:[#allocation5 + $0x20] sm:$0xf]
        %v5581 = vmax.f32 %v5575, %v5577
        %v5582 = vmax.f32 %v5576, %v5578
        %v5583 = vmax.f32 %v5581, %v5579
        %v5584 = vmax.f32 %v5582, %v5580
        %v5585 = vsel %vm787, %v5583, -inf
        %v5586 = vrot.slane %v5585, 4
        %v5587 = vmax.f32 %v5585, %v5586
        %v5588 = vrot.slane %v5587, 2
        %v5589 = vmax.f32 %v5587, %v5588
        %v5590 = vrot.slane %v5589, 1
        %v5591 = vmax.f32 %v5589, %v5590
        %vm5592 = vcmask 1044482
        %v5593 = vsel %vm5592, %v5583, -inf
        %v5594 = vrot.slane %v5593, 4
        %v5595 = vmax.f32 %v5593, %v5594
        %v5596 = vrot.slane %v5595, 2
        %v5597 = vmax.f32 %v5595, %v5596
        %v5598 = vrot.slane %v5597, 1
        %v5599 = vmax.f32 %v5597, %v5598
        %vm5600 = vcmask 1046532
        %v5601 = vsel %vm5600, %v5583, -inf
        %v5602 = vrot.slane %v5601, 4
        %v5603 = vmax.f32 %v5601, %v5602
        %v5604 = vrot.slane %v5603, 2
        %v5605 = vmax.f32 %v5603, %v5604
        %v5606 = vrot.slane %v5605, 1
        %v5607 = vmax.f32 %v5605, %v5606
        %vm5608 = vcmask 1047558
        %v5609 = vsel %vm5608, %v5583, -inf
        %v5610 = vsel %vm2018, %v5584, -inf
        %v5611 = vmax.f32 %v5609, %v5610
        %v5612 = vrot.slane %v5611, 4
        %v5613 = vmax.f32 %v5611, %v5612
        %v5614 = vrot.slane %v5613, 2
        %v5615 = vmax.f32 %v5613, %v5614
        %v5616 = vrot.slane %v5615, 1
        %v5617 = vmax.f32 %v5615, %v5616
        %v5618 = vsel %vm787, %v5584, -inf
        %v5619 = vrot.slane %v5618, 4
        %v5620 = vmax.f32 %v5618, %v5619
        %v5621 = vrot.slane %v5620, 2
        %v5622 = vmax.f32 %v5620, %v5621
        %v5623 = vrot.slane %v5622, 1
        %v5624 = vmax.f32 %v5622, %v5623
        %v5625 = vsel %vm2018, %v5591, %v5599
        %v5626 = vsel %vm2020, %v5625, %v5607
        %v5627 = vsel %vm787, %v5626, %v5617
        %v5628 = vsel %vm2023, %v5627, %v5624
        %v5629 = vld [vmem:[#allocation5 + $0x24] sm:$0xff]
        %v5630 = vld [vmem:[#allocation5 + $0x2c] sm:$0xf]
        %v5631 = vld [vmem:[#allocation5 + $0x30] sm:$0xff]
        %v5632 = vld [vmem:[#allocation5 + $0x38] sm:$0xf]
        %v5633 = vmax.f32 %v5579, %v5629
        %v5634 = vmax.f32 %v5580, %v5630
        %v5635 = vmax.f32 %v5633, %v5631
        %v5636 = vmax.f32 %v5634, %v5632
        %v5637 = vsel %vm787, %v5635, -inf
        %v5638 = vrot.slane %v5637, 4
        %v5639 = vmax.f32 %v5637, %v5638
        %v5640 = vrot.slane %v5639, 2
        %v5641 = vmax.f32 %v5639, %v5640
        %v5642 = vrot.slane %v5641, 1
        %v5643 = vmax.f32 %v5641, %v5642
        %v5644 = vsel %vm5592, %v5635, -inf
        %v5645 = vrot.slane %v5644, 4
        %v5646 = vmax.f32 %v5644, %v5645
        %v5647 = vrot.slane %v5646, 2
        %v5648 = vmax.f32 %v5646, %v5647
        %v5649 = vrot.slane %v5648, 1
        %v5650 = vmax.f32 %v5648, %v5649
        %v5651 = vsel %vm5600, %v5635, -inf
        %v5652 = vrot.slane %v5651, 4
        %v5653 = vmax.f32 %v5651, %v5652
        %v5654 = vrot.slane %v5653, 2
        %v5655 = vmax.f32 %v5653, %v5654
        %v5656 = vrot.slane %v5655, 1
        %v5657 = vmax.f32 %v5655, %v5656
        %v5658 = vsel %vm5608, %v5635, -inf
        %v5659 = vsel %vm2018, %v5636, -inf
        %v5660 = vmax.f32 %v5658, %v5659
        %v5661 = vrot.slane %v5660, 4
        %v5662 = vmax.f32 %v5660, %v5661
        %v5663 = vrot.slane %v5662, 2
        %v5664 = vmax.f32 %v5662, %v5663
        %v5665 = vrot.slane %v5664, 1
        %v5666 = vmax.f32 %v5664, %v5665
        %v5667 = vsel %vm787, %v5636, -inf
        %v5668 = vrot.slane %v5667, 4
        %v5669 = vmax.f32 %v5667, %v5668
        %v5670 = vrot.slane %v5669, 2
        %v5671 = vmax.f32 %v5669, %v5670
        %v5672 = vrot.slane %v5671, 1
        %v5673 = vmax.f32 %v5671, %v5672
        %v5674 = vsel %vm2018, %v5643, %v5650
        %v5675 = vsel %vm2020, %v5674, %v5657
        %v5676 = vsel %vm787, %v5675, %v5666
        %v5677 = vsel %vm2023, %v5676, %v5673
        %v5678 = vld [vmem:[#allocation5 + $0x3c] sm:$0xff]
        %v5679 = vld [vmem:[#allocation5 + $0x44] sm:$0xf]
        %v5680 = vld [vmem:[#allocation5 + $0x48] sm:$0xff]
        %v5681 = vld [vmem:[#allocation5 + $0x50] sm:$0xf]
        %v5682 = vmax.f32 %v5631, %v5678
        %v5683 = vmax.f32 %v5632, %v5679
        %v5684 = vmax.f32 %v5682, %v5680
        %v5685 = vmax.f32 %v5683, %v5681
        %v5686 = vsel %vm787, %v5684, -inf
        %v5687 = vrot.slane %v5686, 4
        %v5688 = vmax.f32 %v5686, %v5687
        %v5689 = vrot.slane %v5688, 2
        %v5690 = vmax.f32 %v5688, %v5689
        %v5691 = vrot.slane %v5690, 1
        %v5692 = vmax.f32 %v5690, %v5691
        %v5693 = vsel %vm5592, %v5684, -inf
        %v5694 = vrot.slane %v5693, 4
        %v5695 = vmax.f32 %v5693, %v5694
        %v5696 = vrot.slane %v5695, 2
        %v5697 = vmax.f32 %v5695, %v5696
        %v5698 = vrot.slane %v5697, 1
        %v5699 = vmax.f32 %v5697, %v5698
        %v5700 = vsel %vm5600, %v5684, -inf
        %v5701 = vrot.slane %v5700, 4
        %v5702 = vmax.f32 %v5700, %v5701
        %v5703 = vrot.slane %v5702, 2
        %v5704 = vmax.f32 %v5702, %v5703
        %v5705 = vrot.slane %v5704, 1
        %v5706 = vmax.f32 %v5704, %v5705
        %v5707 = vsel %vm5608, %v5684, -inf
        %v5708 = vsel %vm2018, %v5685, -inf
        %v5709 = vmax.f32 %v5707, %v5708
        %v5710 = vrot.slane %v5709, 4
        %v5711 = vmax.f32 %v5709, %v5710
        %v5712 = vrot.slane %v5711, 2
        %v5713 = vmax.f32 %v5711, %v5712
        %v5714 = vrot.slane %v5713, 1
        %v5715 = vmax.f32 %v5713, %v5714
        %v5716 = vsel %vm787, %v5685, -inf
        %v5717 = vrot.slane %v5716, 4
        %v5718 = vmax.f32 %v5716, %v5717
        %v5719 = vrot.slane %v5718, 2
        %v5720 = vmax.f32 %v5718, %v5719
        %v5721 = vrot.slane %v5720, 1
        %v5722 = vmax.f32 %v5720, %v5721
        %v5723 = vsel %vm2018, %v5692, %v5699
        %v5724 = vsel %vm2020, %v5723, %v5706
        %v5725 = vsel %vm787, %v5724, %v5715
        %v5726 = vsel %vm2023, %v5725, %v5722
        %v5727 = vld [vmem:[#allocation5 + $0x54] sm:$0xff]
        %v5728 = vld [vmem:[#allocation5 + $0x5c] sm:$0xf]
        %v5729 = vld [vmem:[#allocation5 + $0x60] sm:$0xff]
        %v5730 = vld [vmem:[#allocation5 + $0x68] sm:$0xf]
        %v5731 = vmax.f32 %v5680, %v5727
        %v5732 = vmax.f32 %v5681, %v5728
        %v5733 = vmax.f32 %v5731, %v5729
        %v5734 = vmax.f32 %v5732, %v5730
        %v5735 = vsel %vm787, %v5733, -inf
        %v5736 = vrot.slane %v5735, 4
        %v5737 = vmax.f32 %v5735, %v5736
        %v5738 = vrot.slane %v5737, 2
        %v5739 = vmax.f32 %v5737, %v5738
        %v5740 = vrot.slane %v5739, 1
        %v5741 = vmax.f32 %v5739, %v5740
        %v5742 = vsel %vm5592, %v5733, -inf
        %v5743 = vrot.slane %v5742, 4
        %v5744 = vmax.f32 %v5742, %v5743
        %v5745 = vrot.slane %v5744, 2
        %v5746 = vmax.f32 %v5744, %v5745
        %v5747 = vrot.slane %v5746, 1
        %v5748 = vmax.f32 %v5746, %v5747
        %v5749 = vsel %vm5600, %v5733, -inf
        %v5750 = vrot.slane %v5749, 4
        %v5751 = vmax.f32 %v5749, %v5750
        %v5752 = vrot.slane %v5751, 2
        %v5753 = vmax.f32 %v5751, %v5752
        %v5754 = vrot.slane %v5753, 1
        %v5755 = vmax.f32 %v5753, %v5754
        %v5756 = vsel %vm5608, %v5733, -inf
        %v5757 = vsel %vm2018, %v5734, -inf
        %v5758 = vmax.f32 %v5756, %v5757
        %v5759 = vrot.slane %v5758, 4
        %v5760 = vmax.f32 %v5758, %v5759
        %v5761 = vrot.slane %v5760, 2
        %v5762 = vmax.f32 %v5760, %v5761
        %v5763 = vrot.slane %v5762, 1
        %v5764 = vmax.f32 %v5762, %v5763
        %v5765 = vsel %vm787, %v5734, -inf
        %v5766 = vrot.slane %v5765, 4
        %v5767 = vmax.f32 %v5765, %v5766
        %v5768 = vrot.slane %v5767, 2
        %v5769 = vmax.f32 %v5767, %v5768
        %v5770 = vrot.slane %v5769, 1
        %v5771 = vmax.f32 %v5769, %v5770
        %v5772 = vsel %vm2018, %v5741, %v5748
        %v5773 = vsel %vm2020, %v5772, %v5755
        %v5774 = vsel %vm787, %v5773, %v5764
        %v5775 = vsel %vm2023, %v5774, %v5771
        %v5776 = vld [vmem:[#allocation5 + $0x6c] sm:$0xff]
        %v5777 = vld [vmem:[#allocation5 + $0x74] sm:$0xf]
        %v5778 = vld [vmem:[#allocation5 + $0x78] sm:$0xff]
        %v5779 = vld [vmem:[#allocation5 + $0x80] sm:$0xf]
        %v5780 = vmax.f32 %v5729, %v5776
        %v5781 = vmax.f32 %v5730, %v5777
        %v5782 = vmax.f32 %v5780, %v5778
        %v5783 = vmax.f32 %v5781, %v5779
        %v5784 = vsel %vm787, %v5782, -inf
        %v5785 = vrot.slane %v5784, 4
        %v5786 = vmax.f32 %v5784, %v5785
        %v5787 = vrot.slane %v5786, 2
        %v5788 = vmax.f32 %v5786, %v5787
        %v5789 = vrot.slane %v5788, 1
        %v5790 = vmax.f32 %v5788, %v5789
        %v5791 = vsel %vm5592, %v5782, -inf
        %v5792 = vrot.slane %v5791, 4
        %v5793 = vmax.f32 %v5791, %v5792
        %v5794 = vrot.slane %v5793, 2
        %v5795 = vmax.f32 %v5793, %v5794
        %v5796 = vrot.slane %v5795, 1
        %v5797 = vmax.f32 %v5795, %v5796
        %v5798 = vsel %vm5600, %v5782, -inf
        %v5799 = vrot.slane %v5798, 4
        %v5800 = vmax.f32 %v5798, %v5799
        %v5801 = vrot.slane %v5800, 2
        %v5802 = vmax.f32 %v5800, %v5801
        %v5803 = vrot.slane %v5802, 1
        %v5804 = vmax.f32 %v5802, %v5803
        %v5805 = vsel %vm5608, %v5782, -inf
        %v5806 = vsel %vm2018, %v5783, -inf
        %v5807 = vmax.f32 %v5805, %v5806
        %v5808 = vrot.slane %v5807, 4
        %v5809 = vmax.f32 %v5807, %v5808
        %v5810 = vrot.slane %v5809, 2
        %v5811 = vmax.f32 %v5809, %v5810
        %v5812 = vrot.slane %v5811, 1
        %v5813 = vmax.f32 %v5811, %v5812
        %v5814 = vsel %vm787, %v5783, -inf
        %v5815 = vrot.slane %v5814, 4
        %v5816 = vmax.f32 %v5814, %v5815
        %v5817 = vrot.slane %v5816, 2
        %v5818 = vmax.f32 %v5816, %v5817
        %v5819 = vrot.slane %v5818, 1
        %v5820 = vmax.f32 %v5818, %v5819
        %v5821 = vsel %vm2018, %v5790, %v5797
        %v5822 = vsel %vm2020, %v5821, %v5804
        %v5823 = vsel %vm787, %v5822, %v5813
        %v5824 = vsel %vm2023, %v5823, %v5820
        %v5826 = vrot.slane %v5628, 1
        %v5828 = vrot.slane %v5628, 2
        %v5830 = vrot.slane %v5628, 3
        %v5832 = vrot.slane %v5628, 4
        %v5835 = vrot.slane %v5677, 1
        %v5837 = vrot.slane %v5677, 2
        %v5839 = vrot.slane %v5677, 3
        %v5841 = vrot.slane %v5677, 4
        %v5844 = vrot.slane %v5726, 1
        %v5846 = vrot.slane %v5726, 2
        %v5848 = vrot.slane %v5726, 3
        %v5850 = vrot.slane %v5726, 4
        %v5853 = vrot.slane %v5775, 1
        %v5854 = vrot.slane %v5775, 2
        %v5855 = vrot.slane %v5775, 3
        %v5857 = vrot.slane %v5824, 7
        %v5858 = vrot.slane %v5824, 1
        %v5859 = vrot.slane %v5824, 2
        %v5860 = vrot.slane %v5824, 3
        %v5861 = vrot.slane %v5853, 1
        %v5862 = vrot.slane %v5854, 1
        %v5863 = vrot.slane %v5855, 1
        %v5864 = vrot.slane %v5857, 1
        %v5865 = vrot.slane %v5858, 1
        %v5866 = vrot.slane %v5859, 1
        %v5867 = vrot.slane %v5860, 1
        %v5877 = vld [vmem:[%s7] sm:$0xff]
        %v5878 = vld [vmem:[%s7 + $0x8] sm:$0xff]
        %v5879 = vld [vmem:[%s7 + $0x10] sm:$0xff]
        %v5880 = vld [vmem:[%s7 + $0x18] sm:$0xff]
        %v5881 = vld [vmem:[%s7 + $0x20] sm:$0xff]
        %v5882 = vld [vmem:[%s7 + $0x28] sm:$0xff]
        %v5883 = vld [vmem:[%s7 + $0x30] sm:$0xff]
        %v5884 = vld [vmem:[%s7 + $0x38] sm:$0xff]
        %v5885 = vld [vmem:[%s7 + $0x40] sm:$0xff]
        %v5886 = vld [vmem:[%s7 + $0x48] sm:$0xff]
        %v5887 = vld [vmem:[%s7 + $0x50] sm:$0xff]
        %v5888 = vld [vmem:[%s7 + $0x58] sm:$0xff]
        %v5889 = vld [vmem:[%s7 + $0x60] sm:$0xff]
        %v5890 = vld [vmem:[%s7 + $0x68] sm:$0xff]
        %v5891 = vld [vmem:[%s7 + $0x70] sm:$0xff]
        %v5892 = vld [vmem:[%s7 + $0x78] sm:$0xff]
        %v5893 = vld [vmem:[%s7 + $0x80] sm:$0xff]
        %v5894 = vld [vmem:[%s7 + $0x88] sm:$0xff]
        %v5895 = vld [vmem:[%s7 + $0x90] sm:$0xff]
        %v5896 = vld [vmem:[%s7 + $0x98] sm:$0xff]
        %v5897 = vld [vmem:[%s7 + $0xa0] sm:$0xff]
        %v5898 = vld [vmem:[%s7 + $0xa8] sm:$0xff]
        %v5899 = vld [vmem:[%s7 + $0xb0] sm:$0xff]
        %v5900 = vld [vmem:[%s7 + $0xb8] sm:$0xff]
        %v5901 = vld [vmem:[%s7 + $0xc0] sm:$0xff]
        %v5902 = vld [vmem:[%s7 + $0xc8] sm:$0xff]
        %v5903 = vld [vmem:[%s7 + $0xd0] sm:$0xff]
        %v5904 = vld [vmem:[%s7 + $0xd8] sm:$0xff]
        %v5905 = vld [vmem:[%s7 + $0xe0] sm:$0xff]
        %v5906 = vld [vmem:[%s7 + $0xe8] sm:$0xff]
        %v5907 = vld [vmem:[%s7 + $0xf0] sm:$0xff]
        %v5908 = vld [vmem:[%s7 + $0xf8] sm:$0xff]
        %v5909 = vld [vmem:[%s7 + $0x100] sm:$0xff]
        %v5910 = vld [vmem:[%s7 + $0x108] sm:$0xff]
        %v5911 = vld [vmem:[%s7 + $0x110] sm:$0xff]
        %v5912 = vld [vmem:[%s7 + $0x118] sm:$0xff]
        %v5913 = vld [vmem:[%s7 + $0x120] sm:$0xff]
        %v5914 = vld [vmem:[%s7 + $0x128] sm:$0xff]
        %v5915 = vld [vmem:[%s7 + $0x130] sm:$0xff]
        %v5916 = vld [vmem:[%s7 + $0x138] sm:$0xff]
        %v5917 = vld [vmem:[%s7 + $0x140] sm:$0xff]
        %v5918 = vld [vmem:[%s7 + $0x148] sm:$0xff]
        %v5919 = vld [vmem:[%s7 + $0x150] sm:$0xff]
        %v5920 = vld [vmem:[%s7 + $0x158] sm:$0xff]
        %v5921 = vld [vmem:[%s7 + $0x160] sm:$0xff]
        %v5922 = vld [vmem:[%s7 + $0x168] sm:$0xff]
        %v5923 = vld [vmem:[%s7 + $0x170] sm:$0xff]
        %v5924 = vld [vmem:[%s7 + $0x178] sm:$0xff]
        %v5925 = vld [vmem:[%s7 + $0x180] sm:$0xff]
        %v5926 = vld [vmem:[%s7 + $0x188] sm:$0xff]
        %v5927 = vld [vmem:[%s7 + $0x190] sm:$0xff]
        %v5928 = vld [vmem:[%s7 + $0x198] sm:$0xff]
        %v5929 = vld [vmem:[%s7 + $0x1a0] sm:$0xff]
        %v5930 = vld [vmem:[%s7 + $0x1a8] sm:$0xff]
        %v5931 = vld [vmem:[%s7 + $0x1b0] sm:$0xff]
        %v5932 = vld [vmem:[%s7 + $0x1b8] sm:$0xff]
        %v5933 = vld [vmem:[%s7 + $0x1c0] sm:$0xff]
        %v5934 = vld [vmem:[%s7 + $0x1c8] sm:$0xff]
        %v5935 = vld [vmem:[%s7 + $0x1d0] sm:$0xff]
        %v5936 = vld [vmem:[%s7 + $0x1d8] sm:$0xff]
        %v5937 = vld [vmem:[%s7 + $0x1e0] sm:$0xff]
        %v5938 = vld [vmem:[%s7 + $0x1e8] sm:$0xff]
        %v5939 = vld [vmem:[%s7 + $0x1f0] sm:$0xff]
        %v5940 = vld [vmem:[%s7 + $0x1f8] sm:$0xff]
        %v5941 = vld [vmem:[%s7 + $0x200] sm:$0xff]
        %v5942 = vld [vmem:[%s7 + $0x208] sm:$0xff]
        %v5943 = vld [vmem:[%s7 + $0x210] sm:$0xff]
        %v5944 = vld [vmem:[%s7 + $0x218] sm:$0xff]
        %v5945 = vld [vmem:[%s7 + $0x220] sm:$0xff]
        %v5946 = vld [vmem:[%s7 + $0x228] sm:$0xff]
        %v5947 = vld [vmem:[%s7 + $0x230] sm:$0xff]
        %v5948 = vld [vmem:[%s7 + $0x238] sm:$0xff]
        %v5949 = vld [vmem:[%s7 + $0x240] sm:$0xff]
        %v5950 = vld [vmem:[%s7 + $0x248] sm:$0xff]
        %v5951 = vld [vmem:[%s7 + $0x250] sm:$0xff]
        %v5952 = vld [vmem:[%s7 + $0x258] sm:$0xff]
        %v5953 = vld [vmem:[%s7 + $0x260] sm:$0xff]
        %v5954 = vld [vmem:[%s7 + $0x268] sm:$0xff]
        %v5955 = vld [vmem:[%s7 + $0x270] sm:$0xff]
        %v5956 = vld [vmem:[%s7 + $0x278] sm:$0xff]
        %v5957 = vld [vmem:[%s7 + $0x280] sm:$0xff]
        %v5958 = vld [vmem:[%s7 + $0x288] sm:$0xff]
        %v5959 = vld [vmem:[%s7 + $0x290] sm:$0xff]
        %v5960 = vld [vmem:[%s7 + $0x298] sm:$0xff]
        %v5961 = vld [vmem:[%s7 + $0x2a0] sm:$0xff]
        %v5962 = vld [vmem:[%s7 + $0x2a8] sm:$0xff]
        %v5963 = vld [vmem:[%s7 + $0x2b0] sm:$0xff]
        %v5964 = vld [vmem:[%s7 + $0x2b8] sm:$0xff]
        %v5965 = vld [vmem:[%s7 + $0x2c0] sm:$0xff]
        %v5966 = vld [vmem:[%s7 + $0x2c8] sm:$0xff]
        %v5967 = vld [vmem:[%s7 + $0x2d0] sm:$0xff]
        %v5968 = vld [vmem:[%s7 + $0x2d8] sm:$0xff]
        %v5969 = vld [vmem:[%s7 + $0x2e0] sm:$0xff]
        %v5970 = vld [vmem:[%s7 + $0x2e8] sm:$0xff]
        %v5971 = vld [vmem:[%s7 + $0x2f0] sm:$0xff]
        %v5972 = vld [vmem:[%s7 + $0x2f8] sm:$0xff]
        %v5973 = vld [vmem:[%s7 + $0x300] sm:$0xff]
        %v5974 = vld [vmem:[%s7 + $0x308] sm:$0xff]
        %v5975 = vld [vmem:[%s7 + $0x310] sm:$0xff]
        %v5976 = vld [vmem:[%s7 + $0x318] sm:$0xff]
        %v5977 = vld [vmem:[%s7 + $0x320] sm:$0xff]
        %v5978 = vld [vmem:[%s7 + $0x328] sm:$0xff]
        %v5979 = vld [vmem:[%s7 + $0x330] sm:$0xff]
        %v5980 = vld [vmem:[%s7 + $0x338] sm:$0xff]
        %v5981 = vld [vmem:[%s7 + $0x340] sm:$0xff]
        %v5982 = vld [vmem:[%s7 + $0x348] sm:$0xff]
        %v5983 = vld [vmem:[%s7 + $0x350] sm:$0xff]
        %v5984 = vld [vmem:[%s7 + $0x358] sm:$0xff]
        %v5985 = vld [vmem:[%s7 + $0x360] sm:$0xff]
        %v5986 = vld [vmem:[%s7 + $0x368] sm:$0xff]
        %v5987 = vld [vmem:[%s7 + $0x370] sm:$0xff]
        %v5988 = vld [vmem:[%s7 + $0x378] sm:$0xff]
        %v5989 = vld [vmem:[%s7 + $0x380] sm:$0xff]
        %v5990 = vld [vmem:[%s7 + $0x388] sm:$0xff]
        %v5991 = vld [vmem:[%s7 + $0x390] sm:$0xff]
        %v5992 = vld [vmem:[%s7 + $0x398] sm:$0xff]
        %v5993 = vld [vmem:[%s7 + $0x3a0] sm:$0xff]
        %v5994 = vld [vmem:[%s7 + $0x3a8] sm:$0xff]
        %v5995 = vld [vmem:[%s7 + $0x3b0] sm:$0xff]
        %v5996 = vld [vmem:[%s7 + $0x3b8] sm:$0xff]
        %v5997 = vld [vmem:[%s7 + $0x3c0] sm:$0xff]
        %v5998 = vld [vmem:[%s7 + $0x3c8] sm:$0xff]
        %v5999 = vld [vmem:[%s7 + $0x3d0] sm:$0xff]
        %v6000 = vld [vmem:[%s7 + $0x3d8] sm:$0xff]
        %v6001 = vld [vmem:[%s7 + $0x3e0] sm:$0xff]
        %v6002 = vld [vmem:[%s7 + $0x3e8] sm:$0xff]
        %v6003 = vld [vmem:[%s7 + $0x3f0] sm:$0xff]
        %v6004 = vld [vmem:[%s7 + $0x3f8] sm:$0xff]
        %v6005 = vld [vmem:[%s7 + $0x400] sm:$0xff]
        %v6006 = vld [vmem:[%s7 + $0x408] sm:$0xff]
        %v6007 = vld [vmem:[%s7 + $0x410] sm:$0xff]
        %v6008 = vld [vmem:[%s7 + $0x418] sm:$0xff]
        %v6009 = vld [vmem:[%s7 + $0x420] sm:$0xff]
        %v6010 = vld [vmem:[%s7 + $0x428] sm:$0xff]
        %v6011 = vld [vmem:[%s7 + $0x430] sm:$0xff]
        %v6012 = vld [vmem:[%s7 + $0x438] sm:$0xff]
        %v6013 = vld [vmem:[%s7 + $0x440] sm:$0xff]
        %v6014 = vld [vmem:[%s7 + $0x448] sm:$0xff]
        %v6015 = vld [vmem:[%s7 + $0x450] sm:$0xff]
        %v6016 = vld [vmem:[%s7 + $0x458] sm:$0xff]
        %v6017 = vld [vmem:[%s7 + $0x460] sm:$0xff]
        %v6018 = vld [vmem:[%s7 + $0x468] sm:$0xff]
        %v6019 = vld [vmem:[%s7 + $0x470] sm:$0xff]
        %v6020 = vld [vmem:[%s7 + $0x478] sm:$0xff]
        %v6021 = vld [vmem:[%s7 + $0x480] sm:$0xff]
        %v6022 = vld [vmem:[%s7 + $0x488] sm:$0xff]
        %v6023 = vld [vmem:[%s7 + $0x490] sm:$0xff]
        %v6024 = vld [vmem:[%s7 + $0x498] sm:$0xff]
        %v6025 = vld [vmem:[%s7 + $0x4a0] sm:$0xff]
        %v6026 = vld [vmem:[%s7 + $0x4a8] sm:$0xff]
        %v6027 = vld [vmem:[%s7 + $0x4b0] sm:$0xff]
        %v6028 = vld [vmem:[%s7 + $0x4b8] sm:$0xff]
        %v6029 = vld [vmem:[%s7 + $0x4c0] sm:$0xff]
        %v6030 = vld [vmem:[%s7 + $0x4c8] sm:$0xff]
        %v6031 = vld [vmem:[%s7 + $0x4d0] sm:$0xff]
        %v6032 = vld [vmem:[%s7 + $0x4d8] sm:$0xff]
        %v6033 = vld [vmem:[%s7 + $0x4e0] sm:$0xff]
        %v6034 = vld [vmem:[%s7 + $0x4e8] sm:$0xff]
        %v6035 = vld [vmem:[%s7 + $0x4f0] sm:$0xff]
        %v6036 = vld [vmem:[%s7 + $0x4f8] sm:$0xff]
        %v6037 = vld [vmem:[%s7 + $0x500] sm:$0xff]
        %v6038 = vld [vmem:[%s7 + $0x508] sm:$0xff]
        %v6039 = vld [vmem:[%s7 + $0x510] sm:$0xff]
        %v6040 = vld [vmem:[%s7 + $0x518] sm:$0xff]
        %v6041 = vld [vmem:[%s7 + $0x520] sm:$0xff]
        %v6042 = vld [vmem:[%s7 + $0x528] sm:$0xff]
        %v6043 = vld [vmem:[%s7 + $0x530] sm:$0xff]
        %v6044 = vld [vmem:[%s7 + $0x538] sm:$0xff]
        %v6045 = vld [vmem:[%s7 + $0x540] sm:$0xff]
        %v6046 = vld [vmem:[%s7 + $0x548] sm:$0xff]
        %v6047 = vld [vmem:[%s7 + $0x550] sm:$0xff]
        %v6048 = vld [vmem:[%s7 + $0x558] sm:$0xff]
        %v6049 = vld [vmem:[%s7 + $0x560] sm:$0xff]
        %v6050 = vld [vmem:[%s7 + $0x568] sm:$0xff]
        %v6051 = vld [vmem:[%s7 + $0x570] sm:$0xff]
        %v6052 = vld [vmem:[%s7 + $0x578] sm:$0xff]
        %v6053 = vld [vmem:[%s7 + $0x580] sm:$0xff]
        %v6054 = vld [vmem:[%s7 + $0x588] sm:$0xff]
        %v6055 = vld [vmem:[%s7 + $0x590] sm:$0xff]
        %v6056 = vld [vmem:[%s7 + $0x598] sm:$0xff]
        %v6057 = vld [vmem:[%s7 + $0x5a0] sm:$0xff]
        %v6058 = vld [vmem:[%s7 + $0x5a8] sm:$0xff]
        %v6059 = vld [vmem:[%s7 + $0x5b0] sm:$0xff]
        %v6060 = vld [vmem:[%s7 + $0x5b8] sm:$0xff]
        %v6061 = vld [vmem:[%s7 + $0x5c0] sm:$0xff]
        %v6062 = vld [vmem:[%s7 + $0x5c8] sm:$0xff]
        %v6063 = vld [vmem:[%s7 + $0x5d0] sm:$0xff]
        %v6064 = vld [vmem:[%s7 + $0x5d8] sm:$0xff]
        %v6065 = vld [vmem:[%s7 + $0x5e0] sm:$0xff]
        %v6066 = vld [vmem:[%s7 + $0x5e8] sm:$0xff]
        %v6067 = vld [vmem:[%s7 + $0x5f0] sm:$0xff]
        %v6068 = vld [vmem:[%s7 + $0x5f8] sm:$0xff]
        %v6069 = vld [vmem:[%s7 + $0x600] sm:$0xff]
        %v6070 = vld [vmem:[%s7 + $0x608] sm:$0xff]
        %v6071 = vld [vmem:[%s7 + $0x610] sm:$0xff]
        %v6072 = vld [vmem:[%s7 + $0x618] sm:$0xff]
        %v6073 = vld [vmem:[%s7 + $0x620] sm:$0xff]
        %v6074 = vld [vmem:[%s7 + $0x628] sm:$0xff]
        %v6075 = vld [vmem:[%s7 + $0x630] sm:$0xff]
        %v6076 = vld [vmem:[%s7 + $0x638] sm:$0xff]
        %v6077 = vld [vmem:[%s7 + $0x640] sm:$0xff]
        %v6078 = vld [vmem:[%s7 + $0x648] sm:$0xff]
        %v6079 = vld [vmem:[%s7 + $0x650] sm:$0xff]
        %v6080 = vld [vmem:[%s7 + $0x658] sm:$0xff]
        %v6081 = vld [vmem:[%s7 + $0x660] sm:$0xff]
        %v6082 = vld [vmem:[%s7 + $0x668] sm:$0xff]
        %v6083 = vld [vmem:[%s7 + $0x670] sm:$0xff]
        %v6084 = vld [vmem:[%s7 + $0x678] sm:$0xff]
        %v6085 = vld [vmem:[%s7 + $0x680] sm:$0xff]
        %v6086 = vld [vmem:[%s7 + $0x688] sm:$0xff]
        %v6087 = vld [vmem:[%s7 + $0x690] sm:$0xff]
        %v6088 = vld [vmem:[%s7 + $0x698] sm:$0xff]
        %v6089 = vld [vmem:[%s7 + $0x6a0] sm:$0xff]
        %v6090 = vld [vmem:[%s7 + $0x6a8] sm:$0xff]
        %v6091 = vld [vmem:[%s7 + $0x6b0] sm:$0xff]
        %v6092 = vld [vmem:[%s7 + $0x6b8] sm:$0xff]
        %v6093 = vld [vmem:[%s7 + $0x6c0] sm:$0xff]
        %v6094 = vld [vmem:[%s7 + $0x6c8] sm:$0xff]
        %v6095 = vld [vmem:[%s7 + $0x6d0] sm:$0xff]
        %v6096 = vld [vmem:[%s7 + $0x6d8] sm:$0xff]
        %v6097 = vld [vmem:[%s7 + $0x6e0] sm:$0xff]
        %v6098 = vld [vmem:[%s7 + $0x6e8] sm:$0xff]
        %v6099 = vld [vmem:[%s7 + $0x6f0] sm:$0xff]
        %v6100 = vld [vmem:[%s7 + $0x6f8] sm:$0xff]
        %v6101 = vld [vmem:[%s7 + $0x700] sm:$0xff]
        %v6102 = vld [vmem:[%s7 + $0x708] sm:$0xff]
        %v6103 = vld [vmem:[%s7 + $0x710] sm:$0xff]
        %v6104 = vld [vmem:[%s7 + $0x718] sm:$0xff]
        %v6105 = vld [vmem:[%s7 + $0x720] sm:$0xff]
        %v6106 = vld [vmem:[%s7 + $0x728] sm:$0xff]
        %v6107 = vld [vmem:[%s7 + $0x730] sm:$0xff]
        %v6108 = vld [vmem:[%s7 + $0x738] sm:$0xff]
        %v6109 = vld [vmem:[%s7 + $0x740] sm:$0xff]
        %v6110 = vld [vmem:[%s7 + $0x748] sm:$0xff]
        %v6111 = vld [vmem:[%s7 + $0x750] sm:$0xff]
        %v6112 = vld [vmem:[%s7 + $0x758] sm:$0xff]
        %v6113 = vld [vmem:[%s7 + $0x760] sm:$0xff]
        %v6114 = vld [vmem:[%s7 + $0x768] sm:$0xff]
        %v6115 = vld [vmem:[%s7 + $0x770] sm:$0xff]
        %v6116 = vld [vmem:[%s7 + $0x778] sm:$0xff]
        %v6117 = vld [vmem:[%s7 + $0x780] sm:$0xff]
        %v6118 = vld [vmem:[%s7 + $0x788] sm:$0xff]
        %v6119 = vld [vmem:[%s7 + $0x790] sm:$0xff]
        %v6120 = vld [vmem:[%s7 + $0x798] sm:$0xff]
        %v6121 = vld [vmem:[%s7 + $0x7a0] sm:$0xff]
        %v6122 = vld [vmem:[%s7 + $0x7a8] sm:$0xff]
        %v6123 = vld [vmem:[%s7 + $0x7b0] sm:$0xff]
        %v6124 = vld [vmem:[%s7 + $0x7b8] sm:$0xff]
        %v6125 = vld [vmem:[%s7 + $0x7c0] sm:$0xff]
        %v6126 = vld [vmem:[%s7 + $0x7c8] sm:$0xff]
        %v6127 = vld [vmem:[%s7 + $0x7d0] sm:$0xff]
        %v6128 = vld [vmem:[%s7 + $0x7d8] sm:$0xff]
        %v6129 = vld [vmem:[%s7 + $0x7e0] sm:$0xff]
        %v6130 = vld [vmem:[%s7 + $0x7e8] sm:$0xff]
        %v6131 = vld [vmem:[%s7 + $0x7f0] sm:$0xff]
        %v6132 = vld [vmem:[%s7 + $0x7f8] sm:$0xff]
        %v6133 = vld [vmem:[%s7 + $0x800] sm:$0xff]
        %v6134 = vld [vmem:[%s7 + $0x808] sm:$0xff]
        %v6135 = vld [vmem:[%s7 + $0x810] sm:$0xff]
        %v6136 = vld [vmem:[%s7 + $0x818] sm:$0xff]
        %v6137 = vld [vmem:[%s7 + $0x820] sm:$0xff]
        %v6138 = vld [vmem:[%s7 + $0x828] sm:$0xff]
        %v6139 = vld [vmem:[%s7 + $0x830] sm:$0xff]
        %v6140 = vld [vmem:[%s7 + $0x838] sm:$0xff]
        %v6141 = vld [vmem:[%s7 + $0x840] sm:$0xff]
        %v6142 = vld [vmem:[%s7 + $0x848] sm:$0xff]
        %v6143 = vld [vmem:[%s7 + $0x850] sm:$0xff]
        %v6144 = vld [vmem:[%s7 + $0x858] sm:$0xff]
        %v6145 = vld [vmem:[%s7 + $0x860] sm:$0xff]
        %v6146 = vld [vmem:[%s7 + $0x868] sm:$0xff]
        %v6147 = vld [vmem:[%s7 + $0x870] sm:$0xff]
        %v6148 = vld [vmem:[%s7 + $0x878] sm:$0xff]
        %v6149 = vld [vmem:[%s7 + $0x880] sm:$0xff]
        %v6150 = vld [vmem:[%s7 + $0x888] sm:$0xff]
        %v6151 = vld [vmem:[%s7 + $0x890] sm:$0xff]
        %v6152 = vld [vmem:[%s7 + $0x898] sm:$0xff]
        %v6153 = vld [vmem:[%s7 + $0x8a0] sm:$0xff]
        %v6154 = vld [vmem:[%s7 + $0x8a8] sm:$0xff]
        %v6155 = vld [vmem:[%s7 + $0x8b0] sm:$0xff]
        %v6156 = vld [vmem:[%s7 + $0x8b8] sm:$0xff]
        %v6157 = vld [vmem:[%s7 + $0x8c0] sm:$0xff]
        %v6158 = vld [vmem:[%s7 + $0x8c8] sm:$0xff]
        %v6159 = vld [vmem:[%s7 + $0x8d0] sm:$0xff]
        %v6160 = vld [vmem:[%s7 + $0x8d8] sm:$0xff]
        %v6161 = vld [vmem:[%s7 + $0x8e0] sm:$0xff]
        %v6162 = vld [vmem:[%s7 + $0x8e8] sm:$0xff]
        %v6163 = vld [vmem:[%s7 + $0x8f0] sm:$0xff]
        %v6164 = vld [vmem:[%s7 + $0x8f8] sm:$0xff]
        %v6165 = vld [vmem:[%s7 + $0x900] sm:$0xff]
        %v6166 = vld [vmem:[%s7 + $0x908] sm:$0xff]
        %v6167 = vld [vmem:[%s7 + $0x910] sm:$0xff]
        %v6168 = vld [vmem:[%s7 + $0x918] sm:$0xff]
        %v6169 = vld [vmem:[%s7 + $0x920] sm:$0xff]
        %v6170 = vld [vmem:[%s7 + $0x928] sm:$0xff]
        %v6171 = vld [vmem:[%s7 + $0x930] sm:$0xff]
        %v6172 = vld [vmem:[%s7 + $0x938] sm:$0xff]
        %v6173 = vld [vmem:[%s7 + $0x940] sm:$0xff]
        %v6174 = vld [vmem:[%s7 + $0x948] sm:$0xff]
        %v6175 = vld [vmem:[%s7 + $0x950] sm:$0xff]
        %v6176 = vld [vmem:[%s7 + $0x958] sm:$0xff]
        %v6177 = vld [vmem:[%s7 + $0x960] sm:$0xff]
        %v6178 = vld [vmem:[%s7 + $0x968] sm:$0xff]
        %v6179 = vld [vmem:[%s7 + $0x970] sm:$0xff]
        %v6180 = vld [vmem:[%s7 + $0x978] sm:$0xff]
        %v6181 = vld [vmem:[%s7 + $0x980] sm:$0xff]
        %v6182 = vld [vmem:[%s7 + $0x988] sm:$0xff]
        %v6183 = vld [vmem:[%s7 + $0x990] sm:$0xff]
        %v6184 = vld [vmem:[%s7 + $0x998] sm:$0xff]
        %v6185 = vld [vmem:[%s7 + $0x9a0] sm:$0xff]
        %v6186 = vld [vmem:[%s7 + $0x9a8] sm:$0xff]
        %v6187 = vld [vmem:[%s7 + $0x9b0] sm:$0xff]
        %v6188 = vld [vmem:[%s7 + $0x9b8] sm:$0xff]
        %v6189 = vld [vmem:[%s7 + $0x9c0] sm:$0xff]
        %v6190 = vld [vmem:[%s7 + $0x9c8] sm:$0xff]
        %v6191 = vld [vmem:[%s7 + $0x9d0] sm:$0xff]
        %v6192 = vld [vmem:[%s7 + $0x9d8] sm:$0xff]
        %v6193 = vld [vmem:[%s7 + $0x9e0] sm:$0xff]
        %v6194 = vld [vmem:[%s7 + $0x9e8] sm:$0xff]
        %v6195 = vld [vmem:[%s7 + $0x9f0] sm:$0xff]
        %v6196 = vld [vmem:[%s7 + $0x9f8] sm:$0xff]
        %v6197 = vld [vmem:[%s7 + $0xa00] sm:$0xff]
        %v6198 = vld [vmem:[%s7 + $0xa08] sm:$0xff]
        %v6199 = vld [vmem:[%s7 + $0xa10] sm:$0xff]
        %v6200 = vld [vmem:[%s7 + $0xa18] sm:$0xff]
        %v6201 = vld [vmem:[%s7 + $0xa20] sm:$0xff]
        %v6202 = vld [vmem:[%s7 + $0xa28] sm:$0xff]
        %v6203 = vld [vmem:[%s7 + $0xa30] sm:$0xff]
        %v6204 = vld [vmem:[%s7 + $0xa38] sm:$0xff]
        %v6205 = vld [vmem:[%s7 + $0xa40] sm:$0xff]
        %v6206 = vld [vmem:[%s7 + $0xa48] sm:$0xff]
        %v6207 = vld [vmem:[%s7 + $0xa50] sm:$0xff]
        %v6208 = vld [vmem:[%s7 + $0xa58] sm:$0xff]
        %v6209 = vld [vmem:[%s7 + $0xa60] sm:$0xff]
        %v6210 = vld [vmem:[%s7 + $0xa68] sm:$0xff]
        %v6211 = vld [vmem:[%s7 + $0xa70] sm:$0xff]
        %v6212 = vld [vmem:[%s7 + $0xa78] sm:$0xff]
        %v6213 = vld [vmem:[%s7 + $0xa80] sm:$0xff]
        %v6214 = vld [vmem:[%s7 + $0xa88] sm:$0xff]
        %v6215 = vld [vmem:[%s7 + $0xa90] sm:$0xff]
        %v6216 = vld [vmem:[%s7 + $0xa98] sm:$0xff]
        %v6217 = vld [vmem:[%s7 + $0xaa0] sm:$0xff]
        %v6218 = vld [vmem:[%s7 + $0xaa8] sm:$0xff]
        %v6219 = vld [vmem:[%s7 + $0xab0] sm:$0xff]
        %v6220 = vld [vmem:[%s7 + $0xab8] sm:$0xff]
        %v6221 = vld [vmem:[%s7 + $0xac0] sm:$0xff]
        %v6222 = vld [vmem:[%s7 + $0xac8] sm:$0xff]
        %v6223 = vld [vmem:[%s7 + $0xad0] sm:$0xff]
        %v6224 = vld [vmem:[%s7 + $0xad8] sm:$0xff]
        %v6225 = vld [vmem:[%s7 + $0xae0] sm:$0xff]
        %v6226 = vld [vmem:[%s7 + $0xae8] sm:$0xff]
        %v6227 = vld [vmem:[%s7 + $0xaf0] sm:$0xff]
        %v6228 = vld [vmem:[%s7 + $0xaf8] sm:$0xff]
        %v6229 = vld [vmem:[%s7 + $0xb00] sm:$0xff]
        %v6230 = vld [vmem:[%s7 + $0xb08] sm:$0xff]
        %v6231 = vld [vmem:[%s7 + $0xb10] sm:$0xff]
        %v6232 = vld [vmem:[%s7 + $0xb18] sm:$0xff]
        %v6233 = vld [vmem:[%s7 + $0xb20] sm:$0xff]
        %v6234 = vld [vmem:[%s7 + $0xb28] sm:$0xff]
        %v6235 = vld [vmem:[%s7 + $0xb30] sm:$0xff]
        %v6236 = vld [vmem:[%s7 + $0xb38] sm:$0xff]
        %v6237 = vld [vmem:[%s7 + $0xb40] sm:$0xff]
        %v6238 = vld [vmem:[%s7 + $0xb48] sm:$0xff]
        %v6239 = vld [vmem:[%s7 + $0xb50] sm:$0xff]
        %v6240 = vld [vmem:[%s7 + $0xb58] sm:$0xff]
        %v6241 = vld [vmem:[%s7 + $0xb60] sm:$0xff]
        %v6242 = vld [vmem:[%s7 + $0xb68] sm:$0xff]
        %v6243 = vld [vmem:[%s7 + $0xb70] sm:$0xff]
        %v6244 = vld [vmem:[%s7 + $0xb78] sm:$0xff]
        %v6245 = vld [vmem:[%s7 + $0xb80] sm:$0xff]
        %v6246 = vld [vmem:[%s7 + $0xb88] sm:$0xff]
        %v6247 = vld [vmem:[%s7 + $0xb90] sm:$0xff]
        %v6248 = vld [vmem:[%s7 + $0xb98] sm:$0xff]
        %v6249 = vld [vmem:[%s7 + $0xba0] sm:$0xff]
        %v6250 = vld [vmem:[%s7 + $0xba8] sm:$0xff]
        %v6251 = vld [vmem:[%s7 + $0xbb0] sm:$0xff]
        %v6252 = vld [vmem:[%s7 + $0xbb8] sm:$0xff]
        %v6253 = vld [vmem:[%s7 + $0xbc0] sm:$0xff]
        %v6254 = vld [vmem:[%s7 + $0xbc8] sm:$0xff]
        %v6255 = vld [vmem:[%s7 + $0xbd0] sm:$0xff]
        %v6256 = vld [vmem:[%s7 + $0xbd8] sm:$0xff]
        %v6257 = vld [vmem:[%s7 + $0xbe0] sm:$0xff]
        %v6258 = vld [vmem:[%s7 + $0xbe8] sm:$0xff]
        %v6259 = vld [vmem:[%s7 + $0xbf0] sm:$0xff]
        %v6260 = vld [vmem:[%s7 + $0xbf8] sm:$0xff]
        %v6261 = vld [vmem:[%s7 + $0xc00] sm:$0xff]
        %v6262 = vld [vmem:[%s7 + $0xc08] sm:$0xff]
        %v6263 = vld [vmem:[%s7 + $0xc10] sm:$0xff]
        %v6264 = vld [vmem:[%s7 + $0xc18] sm:$0xff]
        %v6265 = vld [vmem:[%s7 + $0xc20] sm:$0xff]
        %v6266 = vld [vmem:[%s7 + $0xc28] sm:$0xff]
        %v6267 = vld [vmem:[%s7 + $0xc30] sm:$0xff]
        %v6268 = vld [vmem:[%s7 + $0xc38] sm:$0xff]
        %v6269 = vld [vmem:[%s7 + $0xc40] sm:$0xff]
        %v6270 = vld [vmem:[%s7 + $0xc48] sm:$0xff]
        %v6271 = vld [vmem:[%s7 + $0xc50] sm:$0xff]
        %v6272 = vld [vmem:[%s7 + $0xc58] sm:$0xff]
        %v6273 = vld [vmem:[%s7 + $0xc60] sm:$0xff]
        %v6274 = vld [vmem:[%s7 + $0xc68] sm:$0xff]
        %v6275 = vld [vmem:[%s7 + $0xc70] sm:$0xff]
        %v6276 = vld [vmem:[%s7 + $0xc78] sm:$0xff]
        %v6277 = vld [vmem:[%s8] sm:$0x1]
        %6278 = vmatprep.subr.mxu0 0.0
        %6279 = vmatpush1.msra.mxu0 %v5892
        %6280 = vmatprep.subr.mxu0 0.0
        %6281 = vmatpush1.msra.mxu0 %v5891
        %6282 = vmatprep.subr.mxu0 0.0
        %6283 = vmatpush1.msra.mxu0 %v5890
        %6284 = vmatprep.subr.mxu0 0.0
        %6285 = vmatpush1.msra.mxu0 %v5889
        %6286 = vmatprep.subr.mxu0 0.0
        %6287 = vmatpush1.msra.mxu0 %v5888
        %6288 = vmatprep.subr.mxu0 0.0
        %6289 = vmatpush1.msra.mxu0 %v5887
        %6290 = vmatprep.subr.mxu0 0.0
        %6291 = vmatpush1.msra.mxu0 %v5886
        %6292 = vmatprep.subr.mxu0 0.0
        %6293 = vmatpush1.msra.mxu0 %v5885
        %6294 = vmatprep.subr.mxu0 0.0
        %6295 = vmatpush1.msra.mxu0 %v5884
        %6296 = vmatprep.subr.mxu0 0.0
        %6297 = vmatpush1.msra.mxu0 %v5883
        %6298 = vmatprep.subr.mxu0 0.0
        %6299 = vmatpush1.msra.mxu0 %v5882
        %6300 = vmatprep.subr.mxu0 0.0
        %6301 = vmatpush1.msra.mxu0 %v5881
        %6302 = vmatprep.subr.mxu0 0.0
        %6303 = vmatpush1.msra.mxu0 %v5880
        %6304 = vmatprep.subr.mxu0 0.0
        %6305 = vmatpush1.msra.mxu0 %v5879
        %6306 = vmatprep.subr.mxu0 0.0
        %6307 = vmatpush1.msra.mxu0 %v5878
        %6308 = vmatprep.subr.mxu0 0.0
        %6309 = vmatpush1.msra.mxu0 %v5877
        %6310 = vmatprep.subr.mxu0 0.0
        %6311 = vmatpush2.msra.mxu0 %v5908
        %6312 = vmatprep.subr.mxu0 0.0
        %6313 = vmatpush2.msra.mxu0 %v5907
        %6314 = vmatprep.subr.mxu0 0.0
        %6315 = vmatpush2.msra.mxu0 %v5906
        %6316 = vmatprep.subr.mxu0 0.0
        %6317 = vmatpush2.msra.mxu0 %v5905
        %6318 = vmatprep.subr.mxu0 0.0
        %6319 = vmatpush2.msra.mxu0 %v5904
        %6320 = vmatprep.subr.mxu0 0.0
        %6321 = vmatpush2.msra.mxu0 %v5903
        %6322 = vmatprep.subr.mxu0 0.0
        %6323 = vmatpush2.msra.mxu0 %v5902
        %6324 = vmatprep.subr.mxu0 0.0
        %6325 = vmatpush2.msra.mxu0 %v5901
        %6326 = vmatprep.subr.mxu0 0.0
        %6327 = vmatpush2.msra.mxu0 %v5900
        %6328 = vmatprep.subr.mxu0 0.0
        %6329 = vmatpush2.msra.mxu0 %v5899
        %6330 = vmatprep.subr.mxu0 0.0
        %6331 = vmatpush2.msra.mxu0 %v5898
        %6332 = vmatprep.subr.mxu0 0.0
        %6333 = vmatpush2.msra.mxu0 %v5897
        %6334 = vmatprep.subr.mxu0 0.0
        %6335 = vmatpush2.msra.mxu0 %v5896
        %6336 = vmatprep.subr.mxu0 0.0
        %6337 = vmatpush2.msra.mxu0 %v5895
        %6338 = vmatprep.subr.mxu0 0.0
        %6339 = vmatpush2.msra.mxu0 %v5894
        %6340 = vmatprep.subr.mxu0 0.0
        %6341 = vmatpush2.msra.mxu0 %v5893
        %6342 = vmatprep.mubr.f32.mxu0 %v5826
        %6343 = vmatmul.mubr.f32.gmra.mxu0 %v5628
        %v6344 = vpop.f32.mrf.mxu0
        %v6345 = vadd.f32 %v6277, %v6344
        %v6346 = vpop.f32.mrf.mxu0
        %6347 = vdwg.mxu0
        %6348 = vmatprep.subr.mxu0 0.0
        %6349 = vmatpush1.msra.mxu0 %v5924
        %6350 = vmatprep.subr.mxu0 0.0
        %6351 = vmatpush1.msra.mxu0 %v5923
        %6352 = vmatprep.subr.mxu0 0.0
        %6353 = vmatpush1.msra.mxu0 %v5922
        %6354 = vmatprep.subr.mxu0 0.0
        %6355 = vmatpush1.msra.mxu0 %v5921
        %6356 = vmatprep.subr.mxu0 0.0
        %6357 = vmatpush1.msra.mxu0 %v5920
        %6358 = vmatprep.subr.mxu0 0.0
        %6359 = vmatpush1.msra.mxu0 %v5919
        %6360 = vmatprep.subr.mxu0 0.0
        %6361 = vmatpush1.msra.mxu0 %v5918
        %6362 = vmatprep.subr.mxu0 0.0
        %6363 = vmatpush1.msra.mxu0 %v5917
        %6364 = vmatprep.subr.mxu0 0.0
        %6365 = vmatpush1.msra.mxu0 %v5916
        %6366 = vmatprep.subr.mxu0 0.0
        %6367 = vmatpush1.msra.mxu0 %v5915
        %6368 = vmatprep.subr.mxu0 0.0
        %6369 = vmatpush1.msra.mxu0 %v5914
        %6370 = vmatprep.subr.mxu0 0.0
        %6371 = vmatpush1.msra.mxu0 %v5913
        %6372 = vmatprep.subr.mxu0 0.0
        %6373 = vmatpush1.msra.mxu0 %v5912
        %6374 = vmatprep.subr.mxu0 0.0
        %6375 = vmatpush1.msra.mxu0 %v5911
        %6376 = vmatprep.subr.mxu0 0.0
        %6377 = vmatpush1.msra.mxu0 %v5910
        %6378 = vmatprep.subr.mxu0 0.0
        %6379 = vmatpush1.msra.mxu0 %v5909
        %6380 = vmatprep.subr.mxu0 0.0
        %6381 = vmatpush2.msra.mxu0 %v5940
        %6382 = vmatprep.subr.mxu0 0.0
        %6383 = vmatpush2.msra.mxu0 %v5939
        %6384 = vmatprep.subr.mxu0 0.0
        %6385 = vmatpush2.msra.mxu0 %v5938
        %6386 = vmatprep.subr.mxu0 0.0
        %6387 = vmatpush2.msra.mxu0 %v5937
        %6388 = vmatprep.subr.mxu0 0.0
        %6389 = vmatpush2.msra.mxu0 %v5936
        %6390 = vmatprep.subr.mxu0 0.0
        %6391 = vmatpush2.msra.mxu0 %v5935
        %6392 = vmatprep.subr.mxu0 0.0
        %6393 = vmatpush2.msra.mxu0 %v5934
        %6394 = vmatprep.subr.mxu0 0.0
        %6395 = vmatpush2.msra.mxu0 %v5933
        %6396 = vmatprep.subr.mxu0 0.0
        %6397 = vmatpush2.msra.mxu0 %v5932
        %6398 = vmatprep.subr.mxu0 0.0
        %6399 = vmatpush2.msra.mxu0 %v5931
        %6400 = vmatprep.subr.mxu0 0.0
        %6401 = vmatpush2.msra.mxu0 %v5930
        %6402 = vmatprep.subr.mxu0 0.0
        %6403 = vmatpush2.msra.mxu0 %v5929
        %6404 = vmatprep.subr.mxu0 0.0
        %6405 = vmatpush2.msra.mxu0 %v5928
        %6406 = vmatprep.subr.mxu0 0.0
        %6407 = vmatpush2.msra.mxu0 %v5927
        %6408 = vmatprep.subr.mxu0 0.0
        %6409 = vmatpush2.msra.mxu0 %v5926
        %6410 = vmatprep.subr.mxu0 0.0
        %6411 = vmatpush2.msra.mxu0 %v5925
        %6412 = vmatprep.mubr.f32.mxu0 %v5830
        %6413 = vmatmul.mubr.f32.gmra.mxu0 %v5828
        %v6414 = vpop.f32.mrf.mxu0
        %v6415 = vadd.f32 %v6345, %v6414
        %v6416 = vpop.f32.mrf.mxu0
        %6417 = vdwg.mxu0
        %6418 = vmatprep.subr.mxu0 0.0
        %6419 = vmatpush1.msra.mxu0 %v5956
        %6420 = vmatprep.subr.mxu0 0.0
        %6421 = vmatpush1.msra.mxu0 %v5955
        %6422 = vmatprep.subr.mxu0 0.0
        %6423 = vmatpush1.msra.mxu0 %v5954
        %6424 = vmatprep.subr.mxu0 0.0
        %6425 = vmatpush1.msra.mxu0 %v5953
        %6426 = vmatprep.subr.mxu0 0.0
        %6427 = vmatpush1.msra.mxu0 %v5952
        %6428 = vmatprep.subr.mxu0 0.0
        %6429 = vmatpush1.msra.mxu0 %v5951
        %6430 = vmatprep.subr.mxu0 0.0
        %6431 = vmatpush1.msra.mxu0 %v5950
        %6432 = vmatprep.subr.mxu0 0.0
        %6433 = vmatpush1.msra.mxu0 %v5949
        %6434 = vmatprep.subr.mxu0 0.0
        %6435 = vmatpush1.msra.mxu0 %v5948
        %6436 = vmatprep.subr.mxu0 0.0
        %6437 = vmatpush1.msra.mxu0 %v5947
        %6438 = vmatprep.subr.mxu0 0.0
        %6439 = vmatpush1.msra.mxu0 %v5946
        %6440 = vmatprep.subr.mxu0 0.0
        %6441 = vmatpush1.msra.mxu0 %v5945
        %6442 = vmatprep.subr.mxu0 0.0
        %6443 = vmatpush1.msra.mxu0 %v5944
        %6444 = vmatprep.subr.mxu0 0.0
        %6445 = vmatpush1.msra.mxu0 %v5943
        %6446 = vmatprep.subr.mxu0 0.0
        %6447 = vmatpush1.msra.mxu0 %v5942
        %6448 = vmatprep.subr.mxu0 0.0
        %6449 = vmatpush1.msra.mxu0 %v5941
        %6450 = vmatprep.subr.mxu0 0.0
        %6451 = vmatpush2.msra.mxu0 %v5972
        %6452 = vmatprep.subr.mxu0 0.0
        %6453 = vmatpush2.msra.mxu0 %v5971
        %6454 = vmatprep.subr.mxu0 0.0
        %6455 = vmatpush2.msra.mxu0 %v5970
        %6456 = vmatprep.subr.mxu0 0.0
        %6457 = vmatpush2.msra.mxu0 %v5969
        %6458 = vmatprep.subr.mxu0 0.0
        %6459 = vmatpush2.msra.mxu0 %v5968
        %6460 = vmatprep.subr.mxu0 0.0
        %6461 = vmatpush2.msra.mxu0 %v5967
        %6462 = vmatprep.subr.mxu0 0.0
        %6463 = vmatpush2.msra.mxu0 %v5966
        %6464 = vmatprep.subr.mxu0 0.0
        %6465 = vmatpush2.msra.mxu0 %v5965
        %6466 = vmatprep.subr.mxu0 0.0
        %6467 = vmatpush2.msra.mxu0 %v5964
        %6468 = vmatprep.subr.mxu0 0.0
        %6469 = vmatpush2.msra.mxu0 %v5963
        %6470 = vmatprep.subr.mxu0 0.0
        %6471 = vmatpush2.msra.mxu0 %v5962
        %6472 = vmatprep.subr.mxu0 0.0
        %6473 = vmatpush2.msra.mxu0 %v5961
        %6474 = vmatprep.subr.mxu0 0.0
        %6475 = vmatpush2.msra.mxu0 %v5960
        %6476 = vmatprep.subr.mxu0 0.0
        %6477 = vmatpush2.msra.mxu0 %v5959
        %6478 = vmatprep.subr.mxu0 0.0
        %6479 = vmatpush2.msra.mxu0 %v5958
        %6480 = vmatprep.subr.mxu0 0.0
        %6481 = vmatpush2.msra.mxu0 %v5957
        %6482 = vmatprep.mubr.f32.mxu0 %v5677
        %6483 = vmatmul.mubr.f32.gmra.mxu0 %v5832
        %v6484 = vpop.f32.mrf.mxu0
        %v6485 = vadd.f32 %v6415, %v6484
        %v6486 = vpop.f32.mrf.mxu0
        %6487 = vdwg.mxu0
        %6488 = vmatprep.subr.mxu0 0.0
        %6489 = vmatpush1.msra.mxu0 %v5988
        %6490 = vmatprep.subr.mxu0 0.0
        %6491 = vmatpush1.msra.mxu0 %v5987
        %6492 = vmatprep.subr.mxu0 0.0
        %6493 = vmatpush1.msra.mxu0 %v5986
        %6494 = vmatprep.subr.mxu0 0.0
        %6495 = vmatpush1.msra.mxu0 %v5985
        %6496 = vmatprep.subr.mxu0 0.0
        %6497 = vmatpush1.msra.mxu0 %v5984
        %6498 = vmatprep.subr.mxu0 0.0
        %6499 = vmatpush1.msra.mxu0 %v5983
        %6500 = vmatprep.subr.mxu0 0.0
        %6501 = vmatpush1.msra.mxu0 %v5982
        %6502 = vmatprep.subr.mxu0 0.0
        %6503 = vmatpush1.msra.mxu0 %v5981
        %6504 = vmatprep.subr.mxu0 0.0
        %6505 = vmatpush1.msra.mxu0 %v5980
        %6506 = vmatprep.subr.mxu0 0.0
        %6507 = vmatpush1.msra.mxu0 %v5979
        %6508 = vmatprep.subr.mxu0 0.0
        %6509 = vmatpush1.msra.mxu0 %v5978
        %6510 = vmatprep.subr.mxu0 0.0
        %6511 = vmatpush1.msra.mxu0 %v5977
        %6512 = vmatprep.subr.mxu0 0.0
        %6513 = vmatpush1.msra.mxu0 %v5976
        %6514 = vmatprep.subr.mxu0 0.0
        %6515 = vmatpush1.msra.mxu0 %v5975
        %6516 = vmatprep.subr.mxu0 0.0
        %6517 = vmatpush1.msra.mxu0 %v5974
        %6518 = vmatprep.subr.mxu0 0.0
        %6519 = vmatpush1.msra.mxu0 %v5973
        %6520 = vmatprep.subr.mxu0 0.0
        %6521 = vmatpush2.msra.mxu0 %v6004
        %6522 = vmatprep.subr.mxu0 0.0
        %6523 = vmatpush2.msra.mxu0 %v6003
        %6524 = vmatprep.subr.mxu0 0.0
        %6525 = vmatpush2.msra.mxu0 %v6002
        %6526 = vmatprep.subr.mxu0 0.0
        %6527 = vmatpush2.msra.mxu0 %v6001
        %6528 = vmatprep.subr.mxu0 0.0
        %6529 = vmatpush2.msra.mxu0 %v6000
        %6530 = vmatprep.subr.mxu0 0.0
        %6531 = vmatpush2.msra.mxu0 %v5999
        %6532 = vmatprep.subr.mxu0 0.0
        %6533 = vmatpush2.msra.mxu0 %v5998
        %6534 = vmatprep.subr.mxu0 0.0
        %6535 = vmatpush2.msra.mxu0 %v5997
        %6536 = vmatprep.subr.mxu0 0.0
        %6537 = vmatpush2.msra.mxu0 %v5996
        %6538 = vmatprep.subr.mxu0 0.0
        %6539 = vmatpush2.msra.mxu0 %v5995
        %6540 = vmatprep.subr.mxu0 0.0
        %6541 = vmatpush2.msra.mxu0 %v5994
        %6542 = vmatprep.subr.mxu0 0.0
        %6543 = vmatpush2.msra.mxu0 %v5993
        %6544 = vmatprep.subr.mxu0 0.0
        %6545 = vmatpush2.msra.mxu0 %v5992
        %6546 = vmatprep.subr.mxu0 0.0
        %6547 = vmatpush2.msra.mxu0 %v5991
        %6548 = vmatprep.subr.mxu0 0.0
        %6549 = vmatpush2.msra.mxu0 %v5990
        %6550 = vmatprep.subr.mxu0 0.0
        %6551 = vmatpush2.msra.mxu0 %v5989
        %6552 = vmatprep.mubr.f32.mxu0 %v5837
        %6553 = vmatmul.mubr.f32.gmra.mxu0 %v5835
        %v6554 = vpop.f32.mrf.mxu0
        %v6555 = vadd.f32 %v6485, %v6554
        %v6556 = vpop.f32.mrf.mxu0
        %6557 = vdwg.mxu0
        %6558 = vmatprep.subr.mxu0 0.0
        %6559 = vmatpush1.msra.mxu0 %v6020
        %6560 = vmatprep.subr.mxu0 0.0
        %6561 = vmatpush1.msra.mxu0 %v6019
        %6562 = vmatprep.subr.mxu0 0.0
        %6563 = vmatpush1.msra.mxu0 %v6018
        %6564 = vmatprep.subr.mxu0 0.0
        %6565 = vmatpush1.msra.mxu0 %v6017
        %6566 = vmatprep.subr.mxu0 0.0
        %6567 = vmatpush1.msra.mxu0 %v6016
        %6568 = vmatprep.subr.mxu0 0.0
        %6569 = vmatpush1.msra.mxu0 %v6015
        %6570 = vmatprep.subr.mxu0 0.0
        %6571 = vmatpush1.msra.mxu0 %v6014
        %6572 = vmatprep.subr.mxu0 0.0
        %6573 = vmatpush1.msra.mxu0 %v6013
        %6574 = vmatprep.subr.mxu0 0.0
        %6575 = vmatpush1.msra.mxu0 %v6012
        %6576 = vmatprep.subr.mxu0 0.0
        %6577 = vmatpush1.msra.mxu0 %v6011
        %6578 = vmatprep.subr.mxu0 0.0
        %6579 = vmatpush1.msra.mxu0 %v6010
        %6580 = vmatprep.subr.mxu0 0.0
        %6581 = vmatpush1.msra.mxu0 %v6009
        %6582 = vmatprep.subr.mxu0 0.0
        %6583 = vmatpush1.msra.mxu0 %v6008
        %6584 = vmatprep.subr.mxu0 0.0
        %6585 = vmatpush1.msra.mxu0 %v6007
        %6586 = vmatprep.subr.mxu0 0.0
        %6587 = vmatpush1.msra.mxu0 %v6006
        %6588 = vmatprep.subr.mxu0 0.0
        %6589 = vmatpush1.msra.mxu0 %v6005
        %6590 = vmatprep.subr.mxu0 0.0
        %6591 = vmatpush2.msra.mxu0 %v6036
        %6592 = vmatprep.subr.mxu0 0.0
        %6593 = vmatpush2.msra.mxu0 %v6035
        %6594 = vmatprep.subr.mxu0 0.0
        %6595 = vmatpush2.msra.mxu0 %v6034
        %6596 = vmatprep.subr.mxu0 0.0
        %6597 = vmatpush2.msra.mxu0 %v6033
        %6598 = vmatprep.subr.mxu0 0.0
        %6599 = vmatpush2.msra.mxu0 %v6032
        %6600 = vmatprep.subr.mxu0 0.0
        %6601 = vmatpush2.msra.mxu0 %v6031
        %6602 = vmatprep.subr.mxu0 0.0
        %6603 = vmatpush2.msra.mxu0 %v6030
        %6604 = vmatprep.subr.mxu0 0.0
        %6605 = vmatpush2.msra.mxu0 %v6029
        %6606 = vmatprep.subr.mxu0 0.0
        %6607 = vmatpush2.msra.mxu0 %v6028
        %6608 = vmatprep.subr.mxu0 0.0
        %6609 = vmatpush2.msra.mxu0 %v6027
        %6610 = vmatprep.subr.mxu0 0.0
        %6611 = vmatpush2.msra.mxu0 %v6026
        %6612 = vmatprep.subr.mxu0 0.0
        %6613 = vmatpush2.msra.mxu0 %v6025
        %6614 = vmatprep.subr.mxu0 0.0
        %6615 = vmatpush2.msra.mxu0 %v6024
        %6616 = vmatprep.subr.mxu0 0.0
        %6617 = vmatpush2.msra.mxu0 %v6023
        %6618 = vmatprep.subr.mxu0 0.0
        %6619 = vmatpush2.msra.mxu0 %v6022
        %6620 = vmatprep.subr.mxu0 0.0
        %6621 = vmatpush2.msra.mxu0 %v6021
        %6622 = vmatprep.mubr.f32.mxu0 %v5841
        %6623 = vmatmul.mubr.f32.gmra.mxu0 %v5839
        %v6624 = vpop.f32.mrf.mxu0
        %v6625 = vadd.f32 %v6555, %v6624
        %v6626 = vpop.f32.mrf.mxu0
        %6627 = vdwg.mxu0
        %6628 = vmatprep.subr.mxu0 0.0
        %6629 = vmatpush1.msra.mxu0 %v6052
        %6630 = vmatprep.subr.mxu0 0.0
        %6631 = vmatpush1.msra.mxu0 %v6051
        %6632 = vmatprep.subr.mxu0 0.0
        %6633 = vmatpush1.msra.mxu0 %v6050
        %6634 = vmatprep.subr.mxu0 0.0
        %6635 = vmatpush1.msra.mxu0 %v6049
        %6636 = vmatprep.subr.mxu0 0.0
        %6637 = vmatpush1.msra.mxu0 %v6048
        %6638 = vmatprep.subr.mxu0 0.0
        %6639 = vmatpush1.msra.mxu0 %v6047
        %6640 = vmatprep.subr.mxu0 0.0
        %6641 = vmatpush1.msra.mxu0 %v6046
        %6642 = vmatprep.subr.mxu0 0.0
        %6643 = vmatpush1.msra.mxu0 %v6045
        %6644 = vmatprep.subr.mxu0 0.0
        %6645 = vmatpush1.msra.mxu0 %v6044
        %6646 = vmatprep.subr.mxu0 0.0
        %6647 = vmatpush1.msra.mxu0 %v6043
        %6648 = vmatprep.subr.mxu0 0.0
        %6649 = vmatpush1.msra.mxu0 %v6042
        %6650 = vmatprep.subr.mxu0 0.0
        %6651 = vmatpush1.msra.mxu0 %v6041
        %6652 = vmatprep.subr.mxu0 0.0
        %6653 = vmatpush1.msra.mxu0 %v6040
        %6654 = vmatprep.subr.mxu0 0.0
        %6655 = vmatpush1.msra.mxu0 %v6039
        %6656 = vmatprep.subr.mxu0 0.0
        %6657 = vmatpush1.msra.mxu0 %v6038
        %6658 = vmatprep.subr.mxu0 0.0
        %6659 = vmatpush1.msra.mxu0 %v6037
        %6660 = vmatprep.subr.mxu0 0.0
        %6661 = vmatpush2.msra.mxu0 %v6068
        %6662 = vmatprep.subr.mxu0 0.0
        %6663 = vmatpush2.msra.mxu0 %v6067
        %6664 = vmatprep.subr.mxu0 0.0
        %6665 = vmatpush2.msra.mxu0 %v6066
        %6666 = vmatprep.subr.mxu0 0.0
        %6667 = vmatpush2.msra.mxu0 %v6065
        %6668 = vmatprep.subr.mxu0 0.0
        %6669 = vmatpush2.msra.mxu0 %v6064
        %6670 = vmatprep.subr.mxu0 0.0
        %6671 = vmatpush2.msra.mxu0 %v6063
        %6672 = vmatprep.subr.mxu0 0.0
        %6673 = vmatpush2.msra.mxu0 %v6062
        %6674 = vmatprep.subr.mxu0 0.0
        %6675 = vmatpush2.msra.mxu0 %v6061
        %6676 = vmatprep.subr.mxu0 0.0
        %6677 = vmatpush2.msra.mxu0 %v6060
        %6678 = vmatprep.subr.mxu0 0.0
        %6679 = vmatpush2.msra.mxu0 %v6059
        %6680 = vmatprep.subr.mxu0 0.0
        %6681 = vmatpush2.msra.mxu0 %v6058
        %6682 = vmatprep.subr.mxu0 0.0
        %6683 = vmatpush2.msra.mxu0 %v6057
        %6684 = vmatprep.subr.mxu0 0.0
        %6685 = vmatpush2.msra.mxu0 %v6056
        %6686 = vmatprep.subr.mxu0 0.0
        %6687 = vmatpush2.msra.mxu0 %v6055
        %6688 = vmatprep.subr.mxu0 0.0
        %6689 = vmatpush2.msra.mxu0 %v6054
        %6690 = vmatprep.subr.mxu0 0.0
        %6691 = vmatpush2.msra.mxu0 %v6053
        %6692 = vmatprep.mubr.f32.mxu0 %v5844
        %6693 = vmatmul.mubr.f32.gmra.mxu0 %v5726
        %v6694 = vpop.f32.mrf.mxu0
        %v6695 = vadd.f32 %v6625, %v6694
        %v6696 = vpop.f32.mrf.mxu0
        %6697 = vdwg.mxu0
        %6698 = vmatprep.subr.mxu0 0.0
        %6699 = vmatpush1.msra.mxu0 %v6084
        %6700 = vmatprep.subr.mxu0 0.0
        %6701 = vmatpush1.msra.mxu0 %v6083
        %6702 = vmatprep.subr.mxu0 0.0
        %6703 = vmatpush1.msra.mxu0 %v6082
        %6704 = vmatprep.subr.mxu0 0.0
        %6705 = vmatpush1.msra.mxu0 %v6081
        %6706 = vmatprep.subr.mxu0 0.0
        %6707 = vmatpush1.msra.mxu0 %v6080
        %6708 = vmatprep.subr.mxu0 0.0
        %6709 = vmatpush1.msra.mxu0 %v6079
        %6710 = vmatprep.subr.mxu0 0.0
        %6711 = vmatpush1.msra.mxu0 %v6078
        %6712 = vmatprep.subr.mxu0 0.0
        %6713 = vmatpush1.msra.mxu0 %v6077
        %6714 = vmatprep.subr.mxu0 0.0
        %6715 = vmatpush1.msra.mxu0 %v6076
        %6716 = vmatprep.subr.mxu0 0.0
        %6717 = vmatpush1.msra.mxu0 %v6075
        %6718 = vmatprep.subr.mxu0 0.0
        %6719 = vmatpush1.msra.mxu0 %v6074
        %6720 = vmatprep.subr.mxu0 0.0
        %6721 = vmatpush1.msra.mxu0 %v6073
        %6722 = vmatprep.subr.mxu0 0.0
        %6723 = vmatpush1.msra.mxu0 %v6072
        %6724 = vmatprep.subr.mxu0 0.0
        %6725 = vmatpush1.msra.mxu0 %v6071
        %6726 = vmatprep.subr.mxu0 0.0
        %6727 = vmatpush1.msra.mxu0 %v6070
        %6728 = vmatprep.subr.mxu0 0.0
        %6729 = vmatpush1.msra.mxu0 %v6069
        %6730 = vmatprep.subr.mxu0 0.0
        %6731 = vmatpush2.msra.mxu0 %v6100
        %6732 = vmatprep.subr.mxu0 0.0
        %6733 = vmatpush2.msra.mxu0 %v6099
        %6734 = vmatprep.subr.mxu0 0.0
        %6735 = vmatpush2.msra.mxu0 %v6098
        %6736 = vmatprep.subr.mxu0 0.0
        %6737 = vmatpush2.msra.mxu0 %v6097
        %6738 = vmatprep.subr.mxu0 0.0
        %6739 = vmatpush2.msra.mxu0 %v6096
        %6740 = vmatprep.subr.mxu0 0.0
        %6741 = vmatpush2.msra.mxu0 %v6095
        %6742 = vmatprep.subr.mxu0 0.0
        %6743 = vmatpush2.msra.mxu0 %v6094
        %6744 = vmatprep.subr.mxu0 0.0
        %6745 = vmatpush2.msra.mxu0 %v6093
        %6746 = vmatprep.subr.mxu0 0.0
        %6747 = vmatpush2.msra.mxu0 %v6092
        %6748 = vmatprep.subr.mxu0 0.0
        %6749 = vmatpush2.msra.mxu0 %v6091
        %6750 = vmatprep.subr.mxu0 0.0
        %6751 = vmatpush2.msra.mxu0 %v6090
        %6752 = vmatprep.subr.mxu0 0.0
        %6753 = vmatpush2.msra.mxu0 %v6089
        %6754 = vmatprep.subr.mxu0 0.0
        %6755 = vmatpush2.msra.mxu0 %v6088
        %6756 = vmatprep.subr.mxu0 0.0
        %6757 = vmatpush2.msra.mxu0 %v6087
        %6758 = vmatprep.subr.mxu0 0.0
        %6759 = vmatpush2.msra.mxu0 %v6086
        %6760 = vmatprep.subr.mxu0 0.0
        %6761 = vmatpush2.msra.mxu0 %v6085
        %6762 = vmatprep.mubr.f32.mxu0 %v5848
        %6763 = vmatmul.mubr.f32.gmra.mxu0 %v5846
        %v6764 = vpop.f32.mrf.mxu0
        %v6765 = vadd.f32 %v6695, %v6764
        %v6766 = vpop.f32.mrf.mxu0
        %6767 = vdwg.mxu0
        %6768 = vmatprep.subr.mxu0 0.0
        %6769 = vmatpush1.msra.mxu0 %v6116
        %6770 = vmatprep.subr.mxu0 0.0
        %6771 = vmatpush1.msra.mxu0 %v6115
        %6772 = vmatprep.subr.mxu0 0.0
        %6773 = vmatpush1.msra.mxu0 %v6114
        %6774 = vmatprep.subr.mxu0 0.0
        %6775 = vmatpush1.msra.mxu0 %v6113
        %6776 = vmatprep.subr.mxu0 0.0
        %6777 = vmatpush1.msra.mxu0 %v6112
        %6778 = vmatprep.subr.mxu0 0.0
        %6779 = vmatpush1.msra.mxu0 %v6111
        %6780 = vmatprep.subr.mxu0 0.0
        %6781 = vmatpush1.msra.mxu0 %v6110
        %6782 = vmatprep.subr.mxu0 0.0
        %6783 = vmatpush1.msra.mxu0 %v6109
        %6784 = vmatprep.subr.mxu0 0.0
        %6785 = vmatpush1.msra.mxu0 %v6108
        %6786 = vmatprep.subr.mxu0 0.0
        %6787 = vmatpush1.msra.mxu0 %v6107
        %6788 = vmatprep.subr.mxu0 0.0
        %6789 = vmatpush1.msra.mxu0 %v6106
        %6790 = vmatprep.subr.mxu0 0.0
        %6791 = vmatpush1.msra.mxu0 %v6105
        %6792 = vmatprep.subr.mxu0 0.0
        %6793 = vmatpush1.msra.mxu0 %v6104
        %6794 = vmatprep.subr.mxu0 0.0
        %6795 = vmatpush1.msra.mxu0 %v6103
        %6796 = vmatprep.subr.mxu0 0.0
        %6797 = vmatpush1.msra.mxu0 %v6102
        %6798 = vmatprep.subr.mxu0 0.0
        %6799 = vmatpush1.msra.mxu0 %v6101
        %6800 = vmatprep.subr.mxu0 0.0
        %6801 = vmatpush2.msra.mxu0 %v6132
        %6802 = vmatprep.subr.mxu0 0.0
        %6803 = vmatpush2.msra.mxu0 %v6131
        %6804 = vmatprep.subr.mxu0 0.0
        %6805 = vmatpush2.msra.mxu0 %v6130
        %6806 = vmatprep.subr.mxu0 0.0
        %6807 = vmatpush2.msra.mxu0 %v6129
        %6808 = vmatprep.subr.mxu0 0.0
        %6809 = vmatpush2.msra.mxu0 %v6128
        %6810 = vmatprep.subr.mxu0 0.0
        %6811 = vmatpush2.msra.mxu0 %v6127
        %6812 = vmatprep.subr.mxu0 0.0
        %6813 = vmatpush2.msra.mxu0 %v6126
        %6814 = vmatprep.subr.mxu0 0.0
        %6815 = vmatpush2.msra.mxu0 %v6125
        %6816 = vmatprep.subr.mxu0 0.0
        %6817 = vmatpush2.msra.mxu0 %v6124
        %6818 = vmatprep.subr.mxu0 0.0
        %6819 = vmatpush2.msra.mxu0 %v6123
        %6820 = vmatprep.subr.mxu0 0.0
        %6821 = vmatpush2.msra.mxu0 %v6122
        %6822 = vmatprep.subr.mxu0 0.0
        %6823 = vmatpush2.msra.mxu0 %v6121
        %6824 = vmatprep.subr.mxu0 0.0
        %6825 = vmatpush2.msra.mxu0 %v6120
        %6826 = vmatprep.subr.mxu0 0.0
        %6827 = vmatpush2.msra.mxu0 %v6119
        %6828 = vmatprep.subr.mxu0 0.0
        %6829 = vmatpush2.msra.mxu0 %v6118
        %6830 = vmatprep.subr.mxu0 0.0
        %6831 = vmatpush2.msra.mxu0 %v6117
        %6832 = vmatprep.mubr.f32.mxu0 %v5775
        %6833 = vmatmul.mubr.f32.gmra.mxu0 %v5850
        %v6834 = vpop.f32.mrf.mxu0
        %v6835 = vadd.f32 %v6765, %v6834
        %v6836 = vpop.f32.mrf.mxu0
        %6837 = vdwg.mxu0
        %6838 = vmatprep.subr.mxu0 0.0
        %6839 = vmatpush1.msra.mxu0 %v6148
        %6840 = vmatprep.subr.mxu0 0.0
        %6841 = vmatpush1.msra.mxu0 %v6147
        %6842 = vmatprep.subr.mxu0 0.0
        %6843 = vmatpush1.msra.mxu0 %v6146
        %6844 = vmatprep.subr.mxu0 0.0
        %6845 = vmatpush1.msra.mxu0 %v6145
        %6846 = vmatprep.subr.mxu0 0.0
        %6847 = vmatpush1.msra.mxu0 %v6144
        %6848 = vmatprep.subr.mxu0 0.0
        %6849 = vmatpush1.msra.mxu0 %v6143
        %6850 = vmatprep.subr.mxu0 0.0
        %6851 = vmatpush1.msra.mxu0 %v6142
        %6852 = vmatprep.subr.mxu0 0.0
        %6853 = vmatpush1.msra.mxu0 %v6141
        %6854 = vmatprep.subr.mxu0 0.0
        %6855 = vmatpush1.msra.mxu0 %v6140
        %6856 = vmatprep.subr.mxu0 0.0
        %6857 = vmatpush1.msra.mxu0 %v6139
        %6858 = vmatprep.subr.mxu0 0.0
        %6859 = vmatpush1.msra.mxu0 %v6138
        %6860 = vmatprep.subr.mxu0 0.0
        %6861 = vmatpush1.msra.mxu0 %v6137
        %6862 = vmatprep.subr.mxu0 0.0
        %6863 = vmatpush1.msra.mxu0 %v6136
        %6864 = vmatprep.subr.mxu0 0.0
        %6865 = vmatpush1.msra.mxu0 %v6135
        %6866 = vmatprep.subr.mxu0 0.0
        %6867 = vmatpush1.msra.mxu0 %v6134
        %6868 = vmatprep.subr.mxu0 0.0
        %6869 = vmatpush1.msra.mxu0 %v6133
        %6870 = vmatprep.subr.mxu0 0.0
        %6871 = vmatpush2.msra.mxu0 %v6164
        %6872 = vmatprep.subr.mxu0 0.0
        %6873 = vmatpush2.msra.mxu0 %v6163
        %6874 = vmatprep.subr.mxu0 0.0
        %6875 = vmatpush2.msra.mxu0 %v6162
        %6876 = vmatprep.subr.mxu0 0.0
        %6877 = vmatpush2.msra.mxu0 %v6161
        %6878 = vmatprep.subr.mxu0 0.0
        %6879 = vmatpush2.msra.mxu0 %v6160
        %6880 = vmatprep.subr.mxu0 0.0
        %6881 = vmatpush2.msra.mxu0 %v6159
        %6882 = vmatprep.subr.mxu0 0.0
        %6883 = vmatpush2.msra.mxu0 %v6158
        %6884 = vmatprep.subr.mxu0 0.0
        %6885 = vmatpush2.msra.mxu0 %v6157
        %6886 = vmatprep.subr.mxu0 0.0
        %6887 = vmatpush2.msra.mxu0 %v6156
        %6888 = vmatprep.subr.mxu0 0.0
        %6889 = vmatpush2.msra.mxu0 %v6155
        %6890 = vmatprep.subr.mxu0 0.0
        %6891 = vmatpush2.msra.mxu0 %v6154
        %6892 = vmatprep.subr.mxu0 0.0
        %6893 = vmatpush2.msra.mxu0 %v6153
        %6894 = vmatprep.subr.mxu0 0.0
        %6895 = vmatpush2.msra.mxu0 %v6152
        %6896 = vmatprep.subr.mxu0 0.0
        %6897 = vmatpush2.msra.mxu0 %v6151
        %6898 = vmatprep.subr.mxu0 0.0
        %6899 = vmatpush2.msra.mxu0 %v6150
        %6900 = vmatprep.subr.mxu0 0.0
        %6901 = vmatpush2.msra.mxu0 %v6149
        %6902 = vmatprep.mubr.f32.mxu0 %v5861
        %6903 = vmatmul.mubr.f32.gmra.mxu0 %v5853
        %v6904 = vpop.f32.mrf.mxu0
        %v6905 = vadd.f32 %v6835, %v6904
        %v6906 = vpop.f32.mrf.mxu0
        %6907 = vdwg.mxu0
        %6908 = vmatprep.subr.mxu0 0.0
        %6909 = vmatpush1.msra.mxu0 %v6180
        %6910 = vmatprep.subr.mxu0 0.0
        %6911 = vmatpush1.msra.mxu0 %v6179
        %6912 = vmatprep.subr.mxu0 0.0
        %6913 = vmatpush1.msra.mxu0 %v6178
        %6914 = vmatprep.subr.mxu0 0.0
        %6915 = vmatpush1.msra.mxu0 %v6177
        %6916 = vmatprep.subr.mxu0 0.0
        %6917 = vmatpush1.msra.mxu0 %v6176
        %6918 = vmatprep.subr.mxu0 0.0
        %6919 = vmatpush1.msra.mxu0 %v6175
        %6920 = vmatprep.subr.mxu0 0.0
        %6921 = vmatpush1.msra.mxu0 %v6174
        %6922 = vmatprep.subr.mxu0 0.0
        %6923 = vmatpush1.msra.mxu0 %v6173
        %6924 = vmatprep.subr.mxu0 0.0
        %6925 = vmatpush1.msra.mxu0 %v6172
        %6926 = vmatprep.subr.mxu0 0.0
        %6927 = vmatpush1.msra.mxu0 %v6171
        %6928 = vmatprep.subr.mxu0 0.0
        %6929 = vmatpush1.msra.mxu0 %v6170
        %6930 = vmatprep.subr.mxu0 0.0
        %6931 = vmatpush1.msra.mxu0 %v6169
        %6932 = vmatprep.subr.mxu0 0.0
        %6933 = vmatpush1.msra.mxu0 %v6168
        %6934 = vmatprep.subr.mxu0 0.0
        %6935 = vmatpush1.msra.mxu0 %v6167
        %6936 = vmatprep.subr.mxu0 0.0
        %6937 = vmatpush1.msra.mxu0 %v6166
        %6938 = vmatprep.subr.mxu0 0.0
        %6939 = vmatpush1.msra.mxu0 %v6165
        %6940 = vmatprep.subr.mxu0 0.0
        %6941 = vmatpush2.msra.mxu0 %v6196
        %6942 = vmatprep.subr.mxu0 0.0
        %6943 = vmatpush2.msra.mxu0 %v6195
        %6944 = vmatprep.subr.mxu0 0.0
        %6945 = vmatpush2.msra.mxu0 %v6194
        %6946 = vmatprep.subr.mxu0 0.0
        %6947 = vmatpush2.msra.mxu0 %v6193
        %6948 = vmatprep.subr.mxu0 0.0
        %6949 = vmatpush2.msra.mxu0 %v6192
        %6950 = vmatprep.subr.mxu0 0.0
        %6951 = vmatpush2.msra.mxu0 %v6191
        %6952 = vmatprep.subr.mxu0 0.0
        %6953 = vmatpush2.msra.mxu0 %v6190
        %6954 = vmatprep.subr.mxu0 0.0
        %6955 = vmatpush2.msra.mxu0 %v6189
        %6956 = vmatprep.subr.mxu0 0.0
        %6957 = vmatpush2.msra.mxu0 %v6188
        %6958 = vmatprep.subr.mxu0 0.0
        %6959 = vmatpush2.msra.mxu0 %v6187
        %6960 = vmatprep.subr.mxu0 0.0
        %6961 = vmatpush2.msra.mxu0 %v6186
        %6962 = vmatprep.subr.mxu0 0.0
        %6963 = vmatpush2.msra.mxu0 %v6185
        %6964 = vmatprep.subr.mxu0 0.0
        %6965 = vmatpush2.msra.mxu0 %v6184
        %6966 = vmatprep.subr.mxu0 0.0
        %6967 = vmatpush2.msra.mxu0 %v6183
        %6968 = vmatprep.subr.mxu0 0.0
        %6969 = vmatpush2.msra.mxu0 %v6182
        %6970 = vmatprep.subr.mxu0 0.0
        %6971 = vmatpush2.msra.mxu0 %v6181
        %6972 = vmatprep.mubr.f32.mxu0 %v5863
        %6973 = vmatmul.mubr.f32.gmra.mxu0 %v5862
        %v6974 = vpop.f32.mrf.mxu0
        %v6975 = vadd.f32 %v6905, %v6974
        %v6976 = vpop.f32.mrf.mxu0
        %6977 = vdwg.mxu0
        %6978 = vmatprep.subr.mxu0 0.0
        %6979 = vmatpush1.msra.mxu0 %v6212
        %6980 = vmatprep.subr.mxu0 0.0
        %6981 = vmatpush1.msra.mxu0 %v6211
        %6982 = vmatprep.subr.mxu0 0.0
        %6983 = vmatpush1.msra.mxu0 %v6210
        %6984 = vmatprep.subr.mxu0 0.0
        %6985 = vmatpush1.msra.mxu0 %v6209
        %6986 = vmatprep.subr.mxu0 0.0
        %6987 = vmatpush1.msra.mxu0 %v6208
        %6988 = vmatprep.subr.mxu0 0.0
        %6989 = vmatpush1.msra.mxu0 %v6207
        %6990 = vmatprep.subr.mxu0 0.0
        %6991 = vmatpush1.msra.mxu0 %v6206
        %6992 = vmatprep.subr.mxu0 0.0
        %6993 = vmatpush1.msra.mxu0 %v6205
        %6994 = vmatprep.subr.mxu0 0.0
        %6995 = vmatpush1.msra.mxu0 %v6204
        %6996 = vmatprep.subr.mxu0 0.0
        %6997 = vmatpush1.msra.mxu0 %v6203
        %6998 = vmatprep.subr.mxu0 0.0
        %6999 = vmatpush1.msra.mxu0 %v6202
        %7000 = vmatprep.subr.mxu0 0.0
        %7001 = vmatpush1.msra.mxu0 %v6201
        %7002 = vmatprep.subr.mxu0 0.0
        %7003 = vmatpush1.msra.mxu0 %v6200
        %7004 = vmatprep.subr.mxu0 0.0
        %7005 = vmatpush1.msra.mxu0 %v6199
        %7006 = vmatprep.subr.mxu0 0.0
        %7007 = vmatpush1.msra.mxu0 %v6198
        %7008 = vmatprep.subr.mxu0 0.0
        %7009 = vmatpush1.msra.mxu0 %v6197
        %7010 = vmatprep.subr.mxu0 0.0
        %7011 = vmatpush2.msra.mxu0 %v6228
        %7012 = vmatprep.subr.mxu0 0.0
        %7013 = vmatpush2.msra.mxu0 %v6227
        %7014 = vmatprep.subr.mxu0 0.0
        %7015 = vmatpush2.msra.mxu0 %v6226
        %7016 = vmatprep.subr.mxu0 0.0
        %7017 = vmatpush2.msra.mxu0 %v6225
        %7018 = vmatprep.subr.mxu0 0.0
        %7019 = vmatpush2.msra.mxu0 %v6224
        %7020 = vmatprep.subr.mxu0 0.0
        %7021 = vmatpush2.msra.mxu0 %v6223
        %7022 = vmatprep.subr.mxu0 0.0
        %7023 = vmatpush2.msra.mxu0 %v6222
        %7024 = vmatprep.subr.mxu0 0.0
        %7025 = vmatpush2.msra.mxu0 %v6221
        %7026 = vmatprep.subr.mxu0 0.0
        %7027 = vmatpush2.msra.mxu0 %v6220
        %7028 = vmatprep.subr.mxu0 0.0
        %7029 = vmatpush2.msra.mxu0 %v6219
        %7030 = vmatprep.subr.mxu0 0.0
        %7031 = vmatpush2.msra.mxu0 %v6218
        %7032 = vmatprep.subr.mxu0 0.0
        %7033 = vmatpush2.msra.mxu0 %v6217
        %7034 = vmatprep.subr.mxu0 0.0
        %7035 = vmatpush2.msra.mxu0 %v6216
        %7036 = vmatprep.subr.mxu0 0.0
        %7037 = vmatpush2.msra.mxu0 %v6215
        %7038 = vmatprep.subr.mxu0 0.0
        %7039 = vmatpush2.msra.mxu0 %v6214
        %7040 = vmatprep.subr.mxu0 0.0
        %7041 = vmatpush2.msra.mxu0 %v6213
        %7042 = vmatprep.mubr.f32.mxu0 %v5858
        %7043 = vmatmul.mubr.f32.gmra.mxu0 %v5864
        %v7044 = vpop.f32.mrf.mxu0
        %v7045 = vadd.f32 %v6975, %v7044
        %v7046 = vpop.f32.mrf.mxu0
        %7047 = vdwg.mxu0
        %7048 = vmatprep.subr.mxu0 0.0
        %7049 = vmatpush1.msra.mxu0 %v6244
        %7050 = vmatprep.subr.mxu0 0.0
        %7051 = vmatpush1.msra.mxu0 %v6243
        %7052 = vmatprep.subr.mxu0 0.0
        %7053 = vmatpush1.msra.mxu0 %v6242
        %7054 = vmatprep.subr.mxu0 0.0
        %7055 = vmatpush1.msra.mxu0 %v6241
        %7056 = vmatprep.subr.mxu0 0.0
        %7057 = vmatpush1.msra.mxu0 %v6240
        %7058 = vmatprep.subr.mxu0 0.0
        %7059 = vmatpush1.msra.mxu0 %v6239
        %7060 = vmatprep.subr.mxu0 0.0
        %7061 = vmatpush1.msra.mxu0 %v6238
        %7062 = vmatprep.subr.mxu0 0.0
        %7063 = vmatpush1.msra.mxu0 %v6237
        %7064 = vmatprep.subr.mxu0 0.0
        %7065 = vmatpush1.msra.mxu0 %v6236
        %7066 = vmatprep.subr.mxu0 0.0
        %7067 = vmatpush1.msra.mxu0 %v6235
        %7068 = vmatprep.subr.mxu0 0.0
        %7069 = vmatpush1.msra.mxu0 %v6234
        %7070 = vmatprep.subr.mxu0 0.0
        %7071 = vmatpush1.msra.mxu0 %v6233
        %7072 = vmatprep.subr.mxu0 0.0
        %7073 = vmatpush1.msra.mxu0 %v6232
        %7074 = vmatprep.subr.mxu0 0.0
        %7075 = vmatpush1.msra.mxu0 %v6231
        %7076 = vmatprep.subr.mxu0 0.0
        %7077 = vmatpush1.msra.mxu0 %v6230
        %7078 = vmatprep.subr.mxu0 0.0
        %7079 = vmatpush1.msra.mxu0 %v6229
        %7080 = vmatprep.subr.mxu0 0.0
        %7081 = vmatpush2.msra.mxu0 %v6260
        %7082 = vmatprep.subr.mxu0 0.0
        %7083 = vmatpush2.msra.mxu0 %v6259
        %7084 = vmatprep.subr.mxu0 0.0
        %7085 = vmatpush2.msra.mxu0 %v6258
        %7086 = vmatprep.subr.mxu0 0.0
        %7087 = vmatpush2.msra.mxu0 %v6257
        %7088 = vmatprep.subr.mxu0 0.0
        %7089 = vmatpush2.msra.mxu0 %v6256
        %7090 = vmatprep.subr.mxu0 0.0
        %7091 = vmatpush2.msra.mxu0 %v6255
        %7092 = vmatprep.subr.mxu0 0.0
        %7093 = vmatpush2.msra.mxu0 %v6254
        %7094 = vmatprep.subr.mxu0 0.0
        %7095 = vmatpush2.msra.mxu0 %v6253
        %7096 = vmatprep.subr.mxu0 0.0
        %7097 = vmatpush2.msra.mxu0 %v6252
        %7098 = vmatprep.subr.mxu0 0.0
        %7099 = vmatpush2.msra.mxu0 %v6251
        %7100 = vmatprep.subr.mxu0 0.0
        %7101 = vmatpush2.msra.mxu0 %v6250
        %7102 = vmatprep.subr.mxu0 0.0
        %7103 = vmatpush2.msra.mxu0 %v6249
        %7104 = vmatprep.subr.mxu0 0.0
        %7105 = vmatpush2.msra.mxu0 %v6248
        %7106 = vmatprep.subr.mxu0 0.0
        %7107 = vmatpush2.msra.mxu0 %v6247
        %7108 = vmatprep.subr.mxu0 0.0
        %7109 = vmatpush2.msra.mxu0 %v6246
        %7110 = vmatprep.subr.mxu0 0.0
        %7111 = vmatpush2.msra.mxu0 %v6245
        %7112 = vmatprep.mubr.f32.mxu0 %v5866
        %7113 = vmatmul.mubr.f32.gmra.mxu0 %v5865
        %v7114 = vpop.f32.mrf.mxu0
        %v7115 = vadd.f32 %v7045, %v7114
        %v7116 = vpop.f32.mrf.mxu0
        %7117 = vdwg.mxu0
        %7118 = vmatprep.subr.mxu0 0.0
        %7119 = vmatpush1.msra.mxu0 %v6276
        %7120 = vmatprep.subr.mxu0 0.0
        %7121 = vmatpush1.msra.mxu0 %v6275
        %7122 = vmatprep.subr.mxu0 0.0
        %7123 = vmatpush1.msra.mxu0 %v6274
        %7124 = vmatprep.subr.mxu0 0.0
        %7125 = vmatpush1.msra.mxu0 %v6273
        %7126 = vmatprep.subr.mxu0 0.0
        %7127 = vmatpush1.msra.mxu0 %v6272
        %7128 = vmatprep.subr.mxu0 0.0
        %7129 = vmatpush1.msra.mxu0 %v6271
        %7130 = vmatprep.subr.mxu0 0.0
        %7131 = vmatpush1.msra.mxu0 %v6270
        %7132 = vmatprep.subr.mxu0 0.0
        %7133 = vmatpush1.msra.mxu0 %v6269
        %7134 = vmatprep.subr.mxu0 0.0
        %7135 = vmatpush1.msra.mxu0 %v6268
        %7136 = vmatprep.subr.mxu0 0.0
        %7137 = vmatpush1.msra.mxu0 %v6267
        %7138 = vmatprep.subr.mxu0 0.0
        %7139 = vmatpush1.msra.mxu0 %v6266
        %7140 = vmatprep.subr.mxu0 0.0
        %7141 = vmatpush1.msra.mxu0 %v6265
        %7142 = vmatprep.subr.mxu0 0.0
        %7143 = vmatpush1.msra.mxu0 %v6264
        %7144 = vmatprep.subr.mxu0 0.0
        %7145 = vmatpush1.msra.mxu0 %v6263
        %7146 = vmatprep.subr.mxu0 0.0
        %7147 = vmatpush1.msra.mxu0 %v6262
        %7148 = vmatprep.subr.mxu0 0.0
        %7149 = vmatpush1.msra.mxu0 %v6261
        %7150 = vmatprep.subr.mxu0 0.0
        %7151 = vmatpush2.msra.mxu0 0.0
        %7152 = vmatprep.subr.mxu0 0.0
        %7153 = vmatpush2.msra.mxu0 0.0
        %7154 = vmatprep.subr.mxu0 0.0
        %7155 = vmatpush2.msra.mxu0 0.0
        %7156 = vmatprep.subr.mxu0 0.0
        %7157 = vmatpush2.msra.mxu0 0.0
        %7158 = vmatprep.subr.mxu0 0.0
        %7159 = vmatpush2.msra.mxu0 0.0
        %7160 = vmatprep.subr.mxu0 0.0
        %7161 = vmatpush2.msra.mxu0 0.0
        %7162 = vmatprep.subr.mxu0 0.0
        %7163 = vmatpush2.msra.mxu0 0.0
        %7164 = vmatprep.subr.mxu0 0.0
        %7165 = vmatpush2.msra.mxu0 0.0
        %7166 = vmatprep.subr.mxu0 0.0
        %7167 = vmatpush2.msra.mxu0 0.0
        %7168 = vmatprep.subr.mxu0 0.0
        %7169 = vmatpush2.msra.mxu0 0.0
        %7170 = vmatprep.subr.mxu0 0.0
        %7171 = vmatpush2.msra.mxu0 0.0
        %7172 = vmatprep.subr.mxu0 0.0
        %7173 = vmatpush2.msra.mxu0 0.0
        %7174 = vmatprep.subr.mxu0 0.0
        %7175 = vmatpush2.msra.mxu0 0.0
        %7176 = vmatprep.subr.mxu0 0.0
        %7177 = vmatpush2.msra.mxu0 0.0
        %7178 = vmatprep.subr.mxu0 0.0
        %7179 = vmatpush2.msra.mxu0 0.0
        %7180 = vmatprep.subr.mxu0 0.0
        %7181 = vmatpush2.msra.mxu0 0.0
        %7182 = vmatprep.mubr.f32.mxu0 0.0
        %7183 = vmatmul.mubr.f32.gmra.mxu0 %v5867
        %v7184 = vpop.f32.mrf.mxu0
        %v7185 = vadd.f32 %v7115, %v7184
        %v7186 = vpop.f32.mrf.mxu0
        %7187 = vdwg.mxu0
        %vm7188 = vcmask 73728
        %v7189 = vsel %vm7188, %v7185, -inf
        %7190 = vmax.xlane.f32.xlu0 %v7189
        %v7191 = vpop.xlane.xlu0 %7190
        %v7192 = vsub.f32 %v7185, %v7191
        %v7193 = vmul.f32 %v7192, 1.442695
        %v7194 = vpow.pop %v7193
        %v7195 = vsel %vm7188, %v7194, 0.0
        %7196 = vadd.xlane.f32.xlu0 %v7195
        %v7197 = vpop.xlane.xlu0 %7196
        %v7198 = vrcp.pop %v7197
        %v7199 = vmul.f32 %v7194, %v7198
        %7200 = vst.msk [vmem:[%s324] sm:$0x1] %vm7188, %v7199
        %s7201 = sand.u32 %s225, 1
        %s7202 = scalar_lea.sflag [#allocation7], %s7201
        %s7203 = sand.u32 %s225, 1
        %s7204 = scalar_lea.vmem [#allocation6], %s7203
        // Predicated region
        $region57: #{plain_cnn_pallas.1} parent=55 // pred_check
          %p7205 = pneg %p235
        $region58: #{plain_cnn_pallas.1} parent=55 // pred_check_branch
          %7207 = sbr.rel (%p7205) target = $region60
        $region59: #{plain_cnn_pallas.1} parent=55 // pred_region
          %s7209 = ssub.s32 16, 16
          %7210 = vsyncadd %s7202, %s7209
          %s7211 = smul.addr %s23, 16
          %s7212 = scalar_lea.hbm %s9, %s7211
          %s7214 = sshll.u32 %s7204, 4
          %s7215 = int_to_ptr.vmem [resolvable:$true] %s7214
          %7217 = dma.vmem_to_hbm [thread:$0]  %s7215, 16, %s7212, %s7202
        $region60: #{plain_cnn_pallas.1} parent=55 // pred_fallthru
          _
      $region56: #{plain_cnn_pallas.1} parent=5 // pred_fallthru
        _
      %p7218 = scmp.le.s32.totalorder 2, %s18
      // Predicated region
      $region61: #{plain_cnn_pallas.1} parent=5 // pred_check
        %p7219 = pneg %p7218
      $region62: #{plain_cnn_pallas.1} parent=5 // pred_check_branch
        %7221 = sbr.rel (%p7219) target = $region64
      $region63: #{plain_cnn_pallas.1} parent=5 // pred_region
        %s7222 = ssub.s32 %s18, 2
        // Predicated region
        $region65: #{plain_cnn_pallas.1} parent=63 // pred_check
          %p7223 = pneg %p241
        $region66: #{plain_cnn_pallas.1} parent=63 // pred_check_branch
          %7225 = sbr.rel (%p7223) target = $region68
        $region67: #{plain_cnn_pallas.1} parent=63 // pred_region
          %s7226 = sand.u32 %s226, 1
          %s7227 = scalar_lea.sflag [#allocation7], %s7226
          %s7228 = sand.u32 %s226, 1
          %s7229 = scalar_lea.vmem [#allocation6], %s7228
          %7230 = dma.done %s7227, 16
        $region68: #{plain_cnn_pallas.1} parent=63 // pred_fallthru
          _
      $region64: #{plain_cnn_pallas.1} parent=5 // pred_fallthru
        _
    $region6: #{plain_cnn_pallas.1} parent=1 // loop_footer
      %s22 = sadd.s32 1, %s18
    $region7: #{plain_cnn_pallas.1} parent=1 // loop_footer_branch
      %17 = sbr.rel target = $region3
    $region8: #{plain_cnn_pallas.1} parent=1 // loop_exit
      _
    %7231 = vsyncpa [#allocation7], 1
    %s7232 = scalar_lea.sflag [#allocation7], 1
    %7233 = vsyncpa %s7232, 1

</llo_original>
